<compile_context>
chip_gen: v7x
topology: tpu7x:2x2x1
jax: 0.10.0
libtpu: 0.0.40
codegen_flags: <defaults>
</compile_context>

<pallas_src>
import jax
import jax.numpy as jnp
from jax.experimental import pallas as pl
from jax.experimental.pallas import tpu as pltpu

LANE = 128


def _round_up(n, m=LANE):
    return ((n + m - 1) // m) * m


def _pad_axis(x, target, axis):
    pad = target - x.shape[axis]
    if pad <= 0:
        return x
    widths = [(0, 0)] * x.ndim
    widths[axis] = (0, pad)
    return jnp.pad(x, widths)


def seq2seq_kernel(
    enc_emb_ref,   # (S_enc, B, Ep)   f32
    dec_emb_ref,   # (S_dec, B, Ep)   f32
    enc_len_ref,   # (B, 1)           int32
    w_ih_e_ref,    # (Ep, 3*Hp)       encoder GRU input weights, gates [r|z|n] fused on lanes
    w_hh_e_ref,    # (Hp, 3*Hp)
    b_ih_e_ref,    # (1, 3*Hp)
    b_hh_e_ref,    # (1, 3*Hp)
    w_ih_d_ref,    # (Ep+Hp, 3*Hp)    decoder GRU input weights acting on concat([x, ctx])
    w_hh_d_ref,    # (Hp, 3*Hp)
    b_ih_d_ref,    # (1, 3*Hp)
    b_hh_d_ref,    # (1, 3*Hp)
    wk_ref,        # (Hp, Hp)         attention "k" linear (pre-transposed)
    bk_ref,        # (1, Hp)
    wq_ref,        # (Hp, Hp)         attention "q" linear (pre-transposed)
    bq_ref,        # (1, Hp)
    wl_ref,        # (Hp, Op)         logits linear (pre-transposed)
    bl_ref,        # (1, Op)
    out_ref,       # (S_dec*B, Op)    f32
    enc_out_scr,   # VMEM (B, S_enc, Hp)   batch-major padded encoder outputs
    dec_h_scr,     # VMEM (S_dec*B, Hp)    stacked decoder hidden states
):
    S_enc, B, _ = enc_emb_ref.shape
    S_dec = dec_emb_ref.shape[0]
    Hp = w_hh_e_ref.shape[0]

    # ---- hoist loop-invariant parameter reads (loops are unrolled; traced once) ----------
    w_ih_e = w_ih_e_ref[...]
    w_hh_e = w_hh_e_ref[...]
    b_ih_e = b_ih_e_ref[...]
    b_hh_e = b_hh_e_ref[...]
    w_ih_d = w_ih_d_ref[...]
    w_hh_d = w_hh_d_ref[...]
    b_ih_d = b_ih_d_ref[...]
    b_hh_d = b_hh_d_ref[...]
    wk = wk_ref[...]
    bk = bk_ref[...]
    wq = wq_ref[...]
    bq = bq_ref[...]
    wl = wl_ref[...]
    bl = bl_ref[...]
    enc_len = enc_len_ref[...]                                    # (B, 1) int32

    def gru_cell(gi, h, w_hh, b_hh):
        # gi: (B, 3*Hp) fused input-side pre-activations in PyTorch gate order [r|z|n]
        gh = jnp.dot(h, w_hh, preferred_element_type=jnp.float32) + b_hh
        r = jax.nn.sigmoid(gi[:, 0 * Hp:1 * Hp] + gh[:, 0 * Hp:1 * Hp])
        z = jax.nn.sigmoid(gi[:, 1 * Hp:2 * Hp] + gh[:, 1 * Hp:2 * Hp])
        n = jnp.tanh(gi[:, 2 * Hp:3 * Hp] + r * gh[:, 2 * Hp:3 * Hp])
        return (1.0 - z) * n + z * h

    # ---------------- encoder GRU (pack_padded_sequence semantics via length masking) -----
    # Fully unrolled Python loop (S_enc is small & static) -> static indices, scheduler
    # overlap across steps.
    h = jnp.zeros((B, Hp), jnp.float32)
    for t in range(S_enc):
        x = enc_emb_ref[t]                                        # (B, Ep)
        gi = jnp.dot(x, w_ih_e, preferred_element_type=jnp.float32) + b_ih_e
        h_new = gru_cell(gi, h, w_hh_e, b_hh_e)
        valid = enc_len > t                                       # (B, 1) bool
        # hidden only advances on valid timesteps -> final h == hidden at last valid step
        h = jnp.where(valid, h_new, h)
        out_t = jnp.where(valid, h_new, 0.0)                      # padded outputs are zero
        enc_out_scr[:, pl.ds(t, 1), :] = out_t[:, None, :]        # batch-major storage

    enc_out_b = enc_out_scr[...]                                  # (B, S_enc, Hp)

    # Attention keys hoisted out of both recurrences: one wide lane-dense matmul.
    enc_flat = enc_out_b.reshape(B * S_enc, Hp)
    k_b = (jnp.dot(enc_flat, wk, preferred_element_type=jnp.float32) + bk
           ).reshape(B, S_enc, Hp)                                # (B, S_enc, Hp)

    # ---------------- decoder loop: attention -> context -> GRU step ----------------------
    for t in range(S_dec):
        q = jnp.dot(h, wq, preferred_element_type=jnp.float32) + bq           # (B, Hp)
        # scores laid out (B, S_enc): S_enc on the lane axis, softmax along lanes.
        scores = jnp.sum(k_b * q[:, None, :], axis=-1)                        # (B, S_enc)
        m = jnp.max(scores, axis=-1, keepdims=True)
        e = jnp.exp(scores - m)
        attn = e * pl.reciprocal(jnp.sum(e, axis=-1, keepdims=True), approx=True)
        # context via MXU batched contraction: (B,1,S) x (B,S,Hp) -> (B,1,Hp)
        ctx = jnp.einsum('bqs,bsh->bqh', attn[:, None, :], enc_out_b,
                         preferred_element_type=jnp.float32)[:, 0, :]         # (B, Hp)

        x = dec_emb_ref[t]                                                    # (B, Ep)
        xc = jnp.concatenate([x, ctx], axis=-1)                               # (B, Ep+Hp)
        gi = jnp.dot(xc, w_ih_d, preferred_element_type=jnp.float32) + b_ih_d  # (B, 3Hp)
        h = gru_cell(gi, h, w_hh_d, b_hh_d)
        dec_h_scr[pl.ds(t * B, B), :] = h

    # Logits hoisted out of the recurrence: one wide matmul + one fully dense store.
    out_ref[...] = jnp.dot(dec_h_scr[...], wl, preferred_element_type=jnp.float32) + bl


def seq2seq_forward(params, encoder_inputs, decoder_inputs, encoder_lengths,
                    decoder_lengths=None):
    """Matches Seq2Seq.forward (bpe=True). decoder_lengths is unused, as in the PyTorch code."""
    del decoder_lengths  # not used in the reference forward pass
    emb = params["emb"]
    E = emb.shape[1]
    H = params["wk"].shape[0]
    O = params["wl"].shape[1]
    Ep, Hp, Op = _round_up(E), _round_up(H), _round_up(O)

    # Embedding lookup (glue), time-major, lane-padded to 128.
    enc_emb = jnp.transpose(emb[encoder_inputs], (1, 0, 2)).astype(jnp.float32)
    dec_emb = jnp.transpose(emb[decoder_inputs], (1, 0, 2)).astype(jnp.float32)
    enc_emb = _pad_axis(enc_emb, Ep, axis=2)                      # (S_enc, B, Ep)
    dec_emb = _pad_axis(dec_emb, Ep, axis=2)                      # (S_dec, B, Ep)
    S_enc, B, _ = enc_emb.shape
    S_dec = dec_emb.shape[0]
    enc_len = encoder_lengths.astype(jnp.int32).reshape(B, 1)

    # --- fuse GRU gate weights [r|z|n] on the lane axis, zero-pad everything to 128 -------
    # Zero padding keeps padded hidden lanes exactly 0 through the recurrence
    # (pre-activations of padded lanes are 0, so h_new_pad = 0.5*h_pad stays 0).
    def fuse_w(w3, in_pad):
        return jnp.concatenate(
            [_pad_axis(_pad_axis(w3[g], Hp, axis=1), in_pad, axis=0) for g in range(3)],
            axis=1)

    def fuse_b(b3):
        return jnp.concatenate([_pad_axis(b3[g], Hp, axis=1) for g in range(3)], axis=1)

    w_ih_e = fuse_w(params["w_ih_e"], Ep)                         # (Ep, 3Hp)
    w_hh_e = fuse_w(params["w_hh_e"], Hp)                         # (Hp, 3Hp)
    b_ih_e = fuse_b(params["b_ih_e"])                             # (1, 3Hp)
    b_hh_e = fuse_b(params["b_hh_e"])

    # Decoder input weight acts on concat([x (Ep), ctx (Hp)]) -> (Ep+Hp, 3Hp)
    w_ih_d = jnp.concatenate(
        [jnp.concatenate(
            [_pad_axis(_pad_axis(params["w_ih_dx"][g], Hp, 1), Ep, 0),
             _pad_axis(_pad_axis(params["w_ih_dc"][g], Hp, 1), Hp, 0)], axis=0)
         for g in range(3)], axis=1)
    w_hh_d = fuse_w(params["w_hh_d"], Hp)
    b_ih_d = fuse_b(params["b_ih_d"])
    b_hh_d = fuse_b(params["b_hh_d"])

    wk = _pad_axis(_pad_axis(params["wk"], Hp, 1), Hp, 0)
    bk = _pad_axis(params["bk"], Hp, 1)
    wq = _pad_axis(_pad_axis(params["wq"], Hp, 1), Hp, 0)
    bq = _pad_axis(params["bq"], Hp, 1)
    wl = _pad_axis(_pad_axis(params["wl"], Op, 1), Hp, 0)
    bl = _pad_axis(params["bl"], Op, 1)

    inputs = [
        enc_emb, dec_emb, enc_len,
        w_ih_e, w_hh_e, b_ih_e, b_hh_e,
        w_ih_d, w_hh_d, b_ih_d, b_hh_d,
        wk, bk, wq, bq, wl, bl,
    ]

    # Whole-array in VMEM, no grid: the time recurrence cannot be gridded and the total
    # footprint (~1.3 MB) is tiny on v5e/v6e/v7x.
    out = pl.pallas_call(
        seq2seq_kernel,
        out_shape=jax.ShapeDtypeStruct((S_dec * B, Op), jnp.float32),
        in_specs=[pl.BlockSpec(memory_space=pltpu.MemorySpace.VMEM) for _ in inputs],
        out_specs=pl.BlockSpec(memory_space=pltpu.MemorySpace.VMEM),
        scratch_shapes=[
            pltpu.VMEM((B, S_enc, Hp), jnp.float32),   # encoder outputs (batch-major)
            pltpu.VMEM((S_dec * B, Hp), jnp.float32),  # stacked decoder hidden states
        ],
    )(*inputs)

    out = out.reshape(S_dec, B, Op)[:, :, :O]
    return jnp.transpose(out, (1, 0, 2))  # (B, S_dec, O) like PyTorch


# ----------------------------- pure-JAX reference (for checking) --------------------------
def reference_forward(params, encoder_inputs, decoder_inputs, encoder_lengths):
    emb = params["emb"]
    enc_emb = jnp.transpose(emb[encoder_inputs], (1, 0, 2)).astype(jnp.float32)
    dec_emb = jnp.transpose(emb[decoder_inputs], (1, 0, 2)).astype(jnp.float32)
    S_enc, B, E = enc_emb.shape
    S_dec = dec_emb.shape[0]
    H = params["wk"].shape[0]
    dot = lambda a, b: jnp.dot(a, b, precision="highest")

    def gru(gi, h, w_hh, b_hh):
        gh = [dot(h, w_hh[g]) + b_hh[g] for g in range(3)]
        r = jax.nn.sigmoid(gi[0] + gh[0])
        z = jax.nn.sigmoid(gi[1] + gh[1])
        n = jnp.tanh(gi[2] + r * gh[2])
        return (1.0 - z) * n + z * h

    h = jnp.zeros((B, H), jnp.float32)
    enc_out = []
    for t in range(S_enc):
        x = enc_emb[t]
        gi = [dot(x, params["w_ih_e"][g]) + params["b_ih_e"][g] for g in range(3)]
        h_new = gru(gi, h, params["w_hh_e"], params["b_hh_e"])
        mask = (encoder_lengths > t)[:, None]
        h = jnp.where(mask, h_new, h)
        enc_out.append(jnp.where(mask, h_new, 0.0))
    enc_out = jnp.stack(enc_out)  # (S_enc, B, H)

    outs = []
    for t in range(S_dec):
        k = jnp.stack([dot(enc_out[s], params["wk"]) + params["bk"] for s in range(S_enc)])
        q = dot(h, params["wq"]) + params["bq"]
        scores = jnp.einsum("sbh,bh->bs", k, q)
        attn = jax.nn.softmax(scores, axis=1)
        ctx = jnp.einsum("bs,sbh->bh", attn, enc_out)
        x = dec_emb[t]
        gi = [
            dot(x, params["w_ih_dx"][g]) + dot(ctx, params["w_ih_dc"][g]) + params["b_ih_d"][g]
            for g in range(3)
        ]
        h = gru(gi, h, params["w_hh_d"], params["b_hh_d"])
        outs.append(dot(h, params["wl"]) + params["bl"])
    return jnp.transpose(jnp.stack(outs), (1, 0, 2))


def init_params(key, vocab, E, H, O):
    ks = jax.random.split(key, 16)
    u = lambda k, shape, s=0.1: jax.random.uniform(k, shape, jnp.float32, -s, s)
    emb = u(ks[0], (vocab, E), 0.5).at[0].set(0.0)  # padding_idx=0 row is zero
    return dict(
        emb=emb,
        w_ih_e=u(ks[1], (3, E, H)), w_hh_e=u(ks[2], (3, H, H)),
        b_ih_e=u(ks[3], (3, 1, H)), b_hh_e=u(ks[4], (3, 1, H)),
        w_ih_dx=u(ks[5], (3, E, H)), w_ih_dc=u(ks[6], (3, H, H)),
        w_hh_d=u(ks[7], (3, H, H)),
        b_ih_d=u(ks[8], (3, 1, H)), b_hh_d=u(ks[9], (3, 1, H)),
        wk=u(ks[10], (H, H)), bk=u(ks[11], (1, H)),
        wq=u(ks[12], (H, H)), bq=u(ks[13], (1, H)),
        wl=u(ks[14], (H, O)), bl=u(ks[15], (1, O)),
    )


if __name__ == "__main__":
    # bpe=True -> shared embedding table (vocab_size == output_size here)
    vocab_size, embedding_size, rnn_size, output_size = 40, 32, 32, 40
    B, enc_seq_len, dec_seq_len = 2, 8, 8

    key = jax.random.PRNGKey(0)
    kp, ke, kd = jax.random.split(key, 3)
    params = init_params(kp, vocab_size, embedding_size, rnn_size, output_size)

    encoder_lengths = jnp.array([8, 5], dtype=jnp.int32)
    decoder_lengths = jnp.array([8, 6], dtype=jnp.int32)  # unused in forward (as in PyTorch)
    encoder_inputs = jax.random.randint(ke, (B, enc_seq_len), 1, vocab_size)
    decoder_inputs = jax.random.randint(kd, (B, dec_seq_len), 1, output_size)
    # pad positions past the real length with token id 0 (padding_idx)
    encoder_inputs = jnp.where(
        jnp.arange(enc_seq_len)[None, :] < encoder_lengths[:, None], encoder_inputs, 0)
    decoder_inputs = jnp.where(
        jnp.arange(dec_seq_len)[None, :] < decoder_lengths[:, None], decoder_inputs, 0)

    logits = seq2seq_forward(params, encoder_inputs, decoder_inputs,
                             encoder_lengths, decoder_lengths)
    logits = jax.block_until_ready(logits)

    ref = reference_forward(params, encoder_inputs, decoder_inputs, encoder_lengths)
    assert logits.shape == (B, dec_seq_len, output_size)
    assert float(jnp.max(jnp.abs(logits - ref))) < 5e-2

    print("KERNEL_OK")
</pallas_src>

<mosaic_0001>
module attributes {stable_mosaic.version = 11 : i64} {
  func.func @seq2seq_kernel(%arg0: memref<8x2x128xf32, #tpu.memory_space<vmem>>, %arg1: memref<8x2x128xf32, #tpu.memory_space<vmem>>, %arg2: memref<2x1xi32, #tpu.memory_space<vmem>>, %arg3: memref<128x384xf32, #tpu.memory_space<vmem>>, %arg4: memref<128x384xf32, #tpu.memory_space<vmem>>, %arg5: memref<1x384xf32, #tpu.memory_space<vmem>>, %arg6: memref<1x384xf32, #tpu.memory_space<vmem>>, %arg7: memref<256x384xf32, #tpu.memory_space<vmem>>, %arg8: memref<128x384xf32, #tpu.memory_space<vmem>>, %arg9: memref<1x384xf32, #tpu.memory_space<vmem>>, %arg10: memref<1x384xf32, #tpu.memory_space<vmem>>, %arg11: memref<128x128xf32, #tpu.memory_space<vmem>>, %arg12: memref<1x128xf32, #tpu.memory_space<vmem>>, %arg13: memref<128x128xf32, #tpu.memory_space<vmem>>, %arg14: memref<1x128xf32, #tpu.memory_space<vmem>>, %arg15: memref<128x128xf32, #tpu.memory_space<vmem>>, %arg16: memref<1x128xf32, #tpu.memory_space<vmem>>, %arg17: memref<16x128xf32, #tpu.memory_space<vmem>>, %arg18: memref<2x8x128xf32, #tpu.memory_space<vmem>>, %arg19: memref<16x128xf32, #tpu.memory_space<vmem>>) attributes {dimension_semantics = [], scalar_prefetch = 0 : i64, scratch_operands = 2 : i64, tpu.core_type = #tpu.core_type<tc>} {
    %c0 = arith.constant 0 : index
    %c0_0 = arith.constant 0 : index
    %0 = vector.load %arg3[%c0, %c0_0] : memref<128x384xf32, #tpu.memory_space<vmem>>, vector<128x384xf32>
    %c0_1 = arith.constant 0 : index
    %c0_2 = arith.constant 0 : index
    %1 = vector.load %arg4[%c0_1, %c0_2] : memref<128x384xf32, #tpu.memory_space<vmem>>, vector<128x384xf32>
    %c0_3 = arith.constant 0 : index
    %c0_4 = arith.constant 0 : index
    %2 = vector.load %arg5[%c0_3, %c0_4] : memref<1x384xf32, #tpu.memory_space<vmem>>, vector<1x384xf32>
    %c0_5 = arith.constant 0 : index
    %c0_6 = arith.constant 0 : index
    %3 = vector.load %arg6[%c0_5, %c0_6] : memref<1x384xf32, #tpu.memory_space<vmem>>, vector<1x384xf32>
    %c0_7 = arith.constant 0 : index
    %c0_8 = arith.constant 0 : index
    %4 = vector.load %arg7[%c0_7, %c0_8] : memref<256x384xf32, #tpu.memory_space<vmem>>, vector<256x384xf32>
    %c0_9 = arith.constant 0 : index
    %c0_10 = arith.constant 0 : index
    %5 = vector.load %arg8[%c0_9, %c0_10] : memref<128x384xf32, #tpu.memory_space<vmem>>, vector<128x384xf32>
    %c0_11 = arith.constant 0 : index
    %c0_12 = arith.constant 0 : index
    %6 = vector.load %arg9[%c0_11, %c0_12] : memref<1x384xf32, #tpu.memory_space<vmem>>, vector<1x384xf32>
    %c0_13 = arith.constant 0 : index
    %c0_14 = arith.constant 0 : index
    %7 = vector.load %arg10[%c0_13, %c0_14] : memref<1x384xf32, #tpu.memory_space<vmem>>, vector<1x384xf32>
    %c0_15 = arith.constant 0 : index
    %c0_16 = arith.constant 0 : index
    %8 = vector.load %arg11[%c0_15, %c0_16] : memref<128x128xf32, #tpu.memory_space<vmem>>, vector<128x128xf32>
    %c0_17 = arith.constant 0 : index
    %c0_18 = arith.constant 0 : index
    %9 = vector.load %arg12[%c0_17, %c0_18] : memref<1x128xf32, #tpu.memory_space<vmem>>, vector<1x128xf32>
    %c0_19 = arith.constant 0 : index
    %c0_20 = arith.constant 0 : index
    %10 = vector.load %arg13[%c0_19, %c0_20] : memref<128x128xf32, #tpu.memory_space<vmem>>, vector<128x128xf32>
    %c0_21 = arith.constant 0 : index
    %c0_22 = arith.constant 0 : index
    %11 = vector.load %arg14[%c0_21, %c0_22] : memref<1x128xf32, #tpu.memory_space<vmem>>, vector<1x128xf32>
    %c0_23 = arith.constant 0 : index
    %c0_24 = arith.constant 0 : index
    %12 = vector.load %arg15[%c0_23, %c0_24] : memref<128x128xf32, #tpu.memory_space<vmem>>, vector<128x128xf32>
    %c0_25 = arith.constant 0 : index
    %c0_26 = arith.constant 0 : index
    %13 = vector.load %arg16[%c0_25, %c0_26] : memref<1x128xf32, #tpu.memory_space<vmem>>, vector<1x128xf32>
    %c0_27 = arith.constant 0 : index
    %c0_28 = arith.constant 0 : index
    %14 = vector.load %arg2[%c0_27, %c0_28] : memref<2x1xi32, #tpu.memory_space<vmem>>, vector<2x1xi32>
    %cst = arith.constant 0.000000e+00 : f32
    %15 = vector.broadcast %cst : f32 to vector<2x128xf32>
    %c0_29 = arith.constant 0 : index
    %c0_30 = arith.constant 0 : index
    %c0_31 = arith.constant 0 : index
    %16 = vector.load %arg0[%c0_29, %c0_30, %c0_31] : memref<8x2x128xf32, #tpu.memory_space<vmem>>, vector<1x2x128xf32>
    %17 = vector.shape_cast %16 : vector<1x2x128xf32> to vector<2x128xf32>
    %cst_32 = arith.constant dense<0.000000e+00> : vector<2x384xf32>
    %18 = tpu.matmul %17, %0, %cst_32 {dimension_numbers = #tpu.dot_dimension_numbers<[1], [0], [0], [1], [0, 0, 1, 1], [], []>} : vector<2x128xf32>, vector<128x384xf32>, vector<2x384xf32> -> vector<2x384xf32>
    %19 = vector.broadcast %2 : vector<1x384xf32> to vector<2x384xf32>
    %20 = arith.addf %18, %19 : vector<2x384xf32>
    %cst_33 = arith.constant dense<0.000000e+00> : vector<2x384xf32>
    %21 = tpu.matmul %15, %1, %cst_33 {dimension_numbers = #tpu.dot_dimension_numbers<[1], [0], [0], [1], [0, 0, 1, 1], [], []>} : vector<2x128xf32>, vector<128x384xf32>, vector<2x384xf32> -> vector<2x384xf32>
    %22 = vector.broadcast %3 : vector<1x384xf32> to vector<2x384xf32>
    %23 = arith.addf %21, %22 : vector<2x384xf32>
    %24 = vector.extract_strided_slice %20 {offsets = [0, 0], sizes = [2, 128], strides = [1, 1]} : vector<2x384xf32> to vector<2x128xf32>
    %25 = vector.extract_strided_slice %23 {offsets = [0, 0], sizes = [2, 128], strides = [1, 1]} : vector<2x384xf32> to vector<2x128xf32>
    %26 = arith.addf %24, %25 : vector<2x128xf32>
    %27 = arith.negf %26 : vector<2x128xf32>
    %28 = math.exp %27 : vector<2x128xf32>
    %cst_34 = arith.constant 1.000000e+00 : f32
    %29 = vector.broadcast %cst_34 : f32 to vector<2x128xf32>
    %30 = arith.addf %29, %28 : vector<2x128xf32>
    %31 = arith.divf %29, %30 : vector<2x128xf32>
    %32 = vector.extract_strided_slice %20 {offsets = [0, 128], sizes = [2, 128], strides = [1, 1]} : vector<2x384xf32> to vector<2x128xf32>
    %33 = vector.extract_strided_slice %23 {offsets = [0, 128], sizes = [2, 128], strides = [1, 1]} : vector<2x384xf32> to vector<2x128xf32>
    %34 = arith.addf %32, %33 : vector<2x128xf32>
    %35 = arith.negf %34 : vector<2x128xf32>
    %36 = math.exp %35 : vector<2x128xf32>
    %cst_35 = arith.constant 1.000000e+00 : f32
    %37 = vector.broadcast %cst_35 : f32 to vector<2x128xf32>
    %38 = arith.addf %37, %36 : vector<2x128xf32>
    %39 = arith.divf %37, %38 : vector<2x128xf32>
    %40 = vector.extract_strided_slice %20 {offsets = [0, 256], sizes = [2, 128], strides = [1, 1]} : vector<2x384xf32> to vector<2x128xf32>
    %41 = vector.extract_strided_slice %23 {offsets = [0, 256], sizes = [2, 128], strides = [1, 1]} : vector<2x384xf32> to vector<2x128xf32>
    %42 = arith.mulf %31, %41 : vector<2x128xf32>
    %43 = arith.addf %40, %42 : vector<2x128xf32>
    %44 = math.tanh %43 : vector<2x128xf32>
    %cst_36 = arith.constant 1.000000e+00 : f32
    %45 = vector.broadcast %cst_36 : f32 to vector<2x128xf32>
    %46 = arith.subf %45, %39 : vector<2x128xf32>
    %47 = arith.mulf %46, %44 : vector<2x128xf32>
    %48 = arith.mulf %39, %15 : vector<2x128xf32>
    %49 = arith.addf %47, %48 : vector<2x128xf32>
    %c0_i32 = arith.constant 0 : i32
    %50 = vector.broadcast %c0_i32 : i32 to vector<2x1xi32>
    %51 = arith.cmpi sgt, %14, %50 : vector<2x1xi32>
    %52 = vector.shape_cast %51 : vector<2x1xi1> to vector<2x1xi1>
    %53 = vector.broadcast %52 : vector<2x1xi1> to vector<2x128xi1>
    %54 = arith.select %53, %49, %15 : vector<2x128xi1>, vector<2x128xf32>
    %cst_37 = arith.constant 0.000000e+00 : f32
    %55 = vector.shape_cast %51 : vector<2x1xi1> to vector<2x1xi1>
    %56 = vector.broadcast %55 : vector<2x1xi1> to vector<2x128xi1>
    %57 = vector.broadcast %cst_37 : f32 to vector<2x128xf32>
    %58 = arith.select %56, %49, %57 : vector<2x128xi1>, vector<2x128xf32>
    %59 = vector.shape_cast %58 : vector<2x128xf32> to vector<2x1x128xf32>
    %c0_38 = arith.constant 0 : index
    %c0_39 = arith.constant 0 : index
    %c0_40 = arith.constant 0 : index
    %60 = vector.load %arg18[%c0_38, %c0_39, %c0_40] : memref<2x8x128xf32, #tpu.memory_space<vmem>>, vector<2x1x128xf32>
    tpu.vector_store %arg18[%c0_38, %c0_39, %c0_40], %59 {strides = array<i32>} : memref<2x8x128xf32, #tpu.memory_space<vmem>>, vector<2x1x128xf32>,
    %c1 = arith.constant 1 : index
    %c0_41 = arith.constant 0 : index
    %c0_42 = arith.constant 0 : index
    %61 = vector.load %arg0[%c1, %c0_41, %c0_42] : memref<8x2x128xf32, #tpu.memory_space<vmem>>, vector<1x2x128xf32>
    %62 = vector.shape_cast %61 : vector<1x2x128xf32> to vector<2x128xf32>
    %cst_43 = arith.constant dense<0.000000e+00> : vector<2x384xf32>
    %63 = tpu.matmul %62, %0, %cst_43 {dimension_numbers = #tpu.dot_dimension_numbers<[1], [0], [0], [1], [0, 0, 1, 1], [], []>} : vector<2x128xf32>, vector<128x384xf32>, vector<2x384xf32> -> vector<2x384xf32>
    %64 = vector.broadcast %2 : vector<1x384xf32> to vector<2x384xf32>
    %65 = arith.addf %63, %64 : vector<2x384xf32>
    %cst_44 = arith.constant dense<0.000000e+00> : vector<2x384xf32>
    %66 = tpu.matmul %54, %1, %cst_44 {dimension_numbers = #tpu.dot_dimension_numbers<[1], [0], [0], [1], [0, 0, 1, 1], [], []>} : vector<2x128xf32>, vector<128x384xf32>, vector<2x384xf32> -> vector<2x384xf32>
    %67 = vector.broadcast %3 : vector<1x384xf32> to vector<2x384xf32>
    %68 = arith.addf %66, %67 : vector<2x384xf32>
    %69 = vector.extract_strided_slice %65 {offsets = [0, 0], sizes = [2, 128], strides = [1, 1]} : vector<2x384xf32> to vector<2x128xf32>
    %70 = vector.extract_strided_slice %68 {offsets = [0, 0], sizes = [2, 128], strides = [1, 1]} : vector<2x384xf32> to vector<2x128xf32>
    %71 = arith.addf %69, %70 : vector<2x128xf32>
    %72 = arith.negf %71 : vector<2x128xf32>
    %73 = math.exp %72 : vector<2x128xf32>
    %cst_45 = arith.constant 1.000000e+00 : f32
    %74 = vector.broadcast %cst_45 : f32 to vector<2x128xf32>
    %75 = arith.addf %74, %73 : vector<2x128xf32>
    %76 = arith.divf %74, %75 : vector<2x128xf32>
    %77 = vector.extract_strided_slice %65 {offsets = [0, 128], sizes = [2, 128], strides = [1, 1]} : vector<2x384xf32> to vector<2x128xf32>
    %78 = vector.extract_strided_slice %68 {offsets = [0, 128], sizes = [2, 128], strides = [1, 1]} : vector<2x384xf32> to vector<2x128xf32>
    %79 = arith.addf %77, %78 : vector<2x128xf32>
    %80 = arith.negf %79 : vector<2x128xf32>
    %81 = math.exp %80 : vector<2x128xf32>
    %cst_46 = arith.constant 1.000000e+00 : f32
    %82 = vector.broadcast %cst_46 : f32 to vector<2x128xf32>
    %83 = arith.addf %82, %81 : vector<2x128xf32>
    %84 = arith.divf %82, %83 : vector<2x128xf32>
    %85 = vector.extract_strided_slice %65 {offsets = [0, 256], sizes = [2, 128], strides = [1, 1]} : vector<2x384xf32> to vector<2x128xf32>
    %86 = vector.extract_strided_slice %68 {offsets = [0, 256], sizes = [2, 128], strides = [1, 1]} : vector<2x384xf32> to vector<2x128xf32>
    %87 = arith.mulf %76, %86 : vector<2x128xf32>
    %88 = arith.addf %85, %87 : vector<2x128xf32>
    %89 = math.tanh %88 : vector<2x128xf32>
    %cst_47 = arith.constant 1.000000e+00 : f32
    %90 = vector.broadcast %cst_47 : f32 to vector<2x128xf32>
    %91 = arith.subf %90, %84 : vector<2x128xf32>
    %92 = arith.mulf %91, %89 : vector<2x128xf32>
    %93 = arith.mulf %84, %54 : vector<2x128xf32>
    %94 = arith.addf %92, %93 : vector<2x128xf32>
    %c1_i32 = arith.constant 1 : i32
    %95 = vector.broadcast %c1_i32 : i32 to vector<2x1xi32>
    %96 = arith.cmpi sgt, %14, %95 : vector<2x1xi32>
    %97 = vector.shape_cast %96 : vector<2x1xi1> to vector<2x1xi1>
    %98 = vector.broadcast %97 : vector<2x1xi1> to vector<2x128xi1>
    %99 = arith.select %98, %94, %54 : vector<2x128xi1>, vector<2x128xf32>
    %cst_48 = arith.constant 0.000000e+00 : f32
    %100 = vector.shape_cast %96 : vector<2x1xi1> to vector<2x1xi1>
    %101 = vector.broadcast %100 : vector<2x1xi1> to vector<2x128xi1>
    %102 = vector.broadcast %cst_48 : f32 to vector<2x128xf32>
    %103 = arith.select %101, %94, %102 : vector<2x128xi1>, vector<2x128xf32>
    %104 = vector.shape_cast %103 : vector<2x128xf32> to vector<2x1x128xf32>
    %c0_49 = arith.constant 0 : index
    %c1_50 = arith.constant 1 : index
    %c0_51 = arith.constant 0 : index
    %105 = vector.load %arg18[%c0_49, %c1_50, %c0_51] : memref<2x8x128xf32, #tpu.memory_space<vmem>>, vector<2x1x128xf32>
    tpu.vector_store %arg18[%c0_49, %c1_50, %c0_51], %104 {strides = array<i32>} : memref<2x8x128xf32, #tpu.memory_space<vmem>>, vector<2x1x128xf32>,
    %c2 = arith.constant 2 : index
    %c0_52 = arith.constant 0 : index
    %c0_53 = arith.constant 0 : index
    %106 = vector.load %arg0[%c2, %c0_52, %c0_53] : memref<8x2x128xf32, #tpu.memory_space<vmem>>, vector<1x2x128xf32>
    %107 = vector.shape_cast %106 : vector<1x2x128xf32> to vector<2x128xf32>
    %cst_54 = arith.constant dense<0.000000e+00> : vector<2x384xf32>
    %108 = tpu.matmul %107, %0, %cst_54 {dimension_numbers = #tpu.dot_dimension_numbers<[1], [0], [0], [1], [0, 0, 1, 1], [], []>} : vector<2x128xf32>, vector<128x384xf32>, vector<2x384xf32> -> vector<2x384xf32>
    %109 = vector.broadcast %2 : vector<1x384xf32> to vector<2x384xf32>
    %110 = arith.addf %108, %109 : vector<2x384xf32>
    %cst_55 = arith.constant dense<0.000000e+00> : vector<2x384xf32>
    %111 = tpu.matmul %99, %1, %cst_55 {dimension_numbers = #tpu.dot_dimension_numbers<[1], [0], [0], [1], [0, 0, 1, 1], [], []>} : vector<2x128xf32>, vector<128x384xf32>, vector<2x384xf32> -> vector<2x384xf32>
    %112 = vector.broadcast %3 : vector<1x384xf32> to vector<2x384xf32>
    %113 = arith.addf %111, %112 : vector<2x384xf32>
    %114 = vector.extract_strided_slice %110 {offsets = [0, 0], sizes = [2, 128], strides = [1, 1]} : vector<2x384xf32> to vector<2x128xf32>
    %115 = vector.extract_strided_slice %113 {offsets = [0, 0], sizes = [2, 128], strides = [1, 1]} : vector<2x384xf32> to vector<2x128xf32>
    %116 = arith.addf %114, %115 : vector<2x128xf32>
    %117 = arith.negf %116 : vector<2x128xf32>
    %118 = math.exp %117 : vector<2x128xf32>
    %cst_56 = arith.constant 1.000000e+00 : f32
    %119 = vector.broadcast %cst_56 : f32 to vector<2x128xf32>
    %120 = arith.addf %119, %118 : vector<2x128xf32>
    %121 = arith.divf %119, %120 : vector<2x128xf32>
    %122 = vector.extract_strided_slice %110 {offsets = [0, 128], sizes = [2, 128], strides = [1, 1]} : vector<2x384xf32> to vector<2x128xf32>
    %123 = vector.extract_strided_slice %113 {offsets = [0, 128], sizes = [2, 128], strides = [1, 1]} : vector<2x384xf32> to vector<2x128xf32>
    %124 = arith.addf %122, %123 : vector<2x128xf32>
    %125 = arith.negf %124 : vector<2x128xf32>
    %126 = math.exp %125 : vector<2x128xf32>
    %cst_57 = arith.constant 1.000000e+00 : f32
    %127 = vector.broadcast %cst_57 : f32 to vector<2x128xf32>
    %128 = arith.addf %127, %126 : vector<2x128xf32>
    %129 = arith.divf %127, %128 : vector<2x128xf32>
    %130 = vector.extract_strided_slice %110 {offsets = [0, 256], sizes = [2, 128], strides = [1, 1]} : vector<2x384xf32> to vector<2x128xf32>
    %131 = vector.extract_strided_slice %113 {offsets = [0, 256], sizes = [2, 128], strides = [1, 1]} : vector<2x384xf32> to vector<2x128xf32>
    %132 = arith.mulf %121, %131 : vector<2x128xf32>
    %133 = arith.addf %130, %132 : vector<2x128xf32>
    %134 = math.tanh %133 : vector<2x128xf32>
    %cst_58 = arith.constant 1.000000e+00 : f32
    %135 = vector.broadcast %cst_58 : f32 to vector<2x128xf32>
    %136 = arith.subf %135, %129 : vector<2x128xf32>
    %137 = arith.mulf %136, %134 : vector<2x128xf32>
    %138 = arith.mulf %129, %99 : vector<2x128xf32>
    %139 = arith.addf %137, %138 : vector<2x128xf32>
    %c2_i32 = arith.constant 2 : i32
    %140 = vector.broadcast %c2_i32 : i32 to vector<2x1xi32>
    %141 = arith.cmpi sgt, %14, %140 : vector<2x1xi32>
    %142 = vector.shape_cast %141 : vector<2x1xi1> to vector<2x1xi1>
    %143 = vector.broadcast %142 : vector<2x1xi1> to vector<2x128xi1>
    %144 = arith.select %143, %139, %99 : vector<2x128xi1>, vector<2x128xf32>
    %cst_59 = arith.constant 0.000000e+00 : f32
    %145 = vector.shape_cast %141 : vector<2x1xi1> to vector<2x1xi1>
    %146 = vector.broadcast %145 : vector<2x1xi1> to vector<2x128xi1>
    %147 = vector.broadcast %cst_59 : f32 to vector<2x128xf32>
    %148 = arith.select %146, %139, %147 : vector<2x128xi1>, vector<2x128xf32>
    %149 = vector.shape_cast %148 : vector<2x128xf32> to vector<2x1x128xf32>
    %c0_60 = arith.constant 0 : index
    %c2_61 = arith.constant 2 : index
    %c0_62 = arith.constant 0 : index
    %150 = vector.load %arg18[%c0_60, %c2_61, %c0_62] : memref<2x8x128xf32, #tpu.memory_space<vmem>>, vector<2x1x128xf32>
    tpu.vector_store %arg18[%c0_60, %c2_61, %c0_62], %149 {strides = array<i32>} : memref<2x8x128xf32, #tpu.memory_space<vmem>>, vector<2x1x128xf32>,
    %c3 = arith.constant 3 : index
    %c0_63 = arith.constant 0 : index
    %c0_64 = arith.constant 0 : index
    %151 = vector.load %arg0[%c3, %c0_63, %c0_64] : memref<8x2x128xf32, #tpu.memory_space<vmem>>, vector<1x2x128xf32>
    %152 = vector.shape_cast %151 : vector<1x2x128xf32> to vector<2x128xf32>
    %cst_65 = arith.constant dense<0.000000e+00> : vector<2x384xf32>
    %153 = tpu.matmul %152, %0, %cst_65 {dimension_numbers = #tpu.dot_dimension_numbers<[1], [0], [0], [1], [0, 0, 1, 1], [], []>} : vector<2x128xf32>, vector<128x384xf32>, vector<2x384xf32> -> vector<2x384xf32>
    %154 = vector.broadcast %2 : vector<1x384xf32> to vector<2x384xf32>
    %155 = arith.addf %153, %154 : vector<2x384xf32>
    %cst_66 = arith.constant dense<0.000000e+00> : vector<2x384xf32>
    %156 = tpu.matmul %144, %1, %cst_66 {dimension_numbers = #tpu.dot_dimension_numbers<[1], [0], [0], [1], [0, 0, 1, 1], [], []>} : vector<2x128xf32>, vector<128x384xf32>, vector<2x384xf32> -> vector<2x384xf32>
    %157 = vector.broadcast %3 : vector<1x384xf32> to vector<2x384xf32>
    %158 = arith.addf %156, %157 : vector<2x384xf32>
    %159 = vector.extract_strided_slice %155 {offsets = [0, 0], sizes = [2, 128], strides = [1, 1]} : vector<2x384xf32> to vector<2x128xf32>
    %160 = vector.extract_strided_slice %158 {offsets = [0, 0], sizes = [2, 128], strides = [1, 1]} : vector<2x384xf32> to vector<2x128xf32>
    %161 = arith.addf %159, %160 : vector<2x128xf32>
    %162 = arith.negf %161 : vector<2x128xf32>
    %163 = math.exp %162 : vector<2x128xf32>
    %cst_67 = arith.constant 1.000000e+00 : f32
    %164 = vector.broadcast %cst_67 : f32 to vector<2x128xf32>
    %165 = arith.addf %164, %163 : vector<2x128xf32>
    %166 = arith.divf %164, %165 : vector<2x128xf32>
    %167 = vector.extract_strided_slice %155 {offsets = [0, 128], sizes = [2, 128], strides = [1, 1]} : vector<2x384xf32> to vector<2x128xf32>
    %168 = vector.extract_strided_slice %158 {offsets = [0, 128], sizes = [2, 128], strides = [1, 1]} : vector<2x384xf32> to vector<2x128xf32>
    %169 = arith.addf %167, %168 : vector<2x128xf32>
    %170 = arith.negf %169 : vector<2x128xf32>
    %171 = math.exp %170 : vector<2x128xf32>
    %cst_68 = arith.constant 1.000000e+00 : f32
    %172 = vector.broadcast %cst_68 : f32 to vector<2x128xf32>
    %173 = arith.addf %172, %171 : vector<2x128xf32>
    %174 = arith.divf %172, %173 : vector<2x128xf32>
    %175 = vector.extract_strided_slice %155 {offsets = [0, 256], sizes = [2, 128], strides = [1, 1]} : vector<2x384xf32> to vector<2x128xf32>
    %176 = vector.extract_strided_slice %158 {offsets = [0, 256], sizes = [2, 128], strides = [1, 1]} : vector<2x384xf32> to vector<2x128xf32>
    %177 = arith.mulf %166, %176 : vector<2x128xf32>
    %178 = arith.addf %175, %177 : vector<2x128xf32>
    %179 = math.tanh %178 : vector<2x128xf32>
    %cst_69 = arith.constant 1.000000e+00 : f32
    %180 = vector.broadcast %cst_69 : f32 to vector<2x128xf32>
    %181 = arith.subf %180, %174 : vector<2x128xf32>
    %182 = arith.mulf %181, %179 : vector<2x128xf32>
    %183 = arith.mulf %174, %144 : vector<2x128xf32>
    %184 = arith.addf %182, %183 : vector<2x128xf32>
    %c3_i32 = arith.constant 3 : i32
    %185 = vector.broadcast %c3_i32 : i32 to vector<2x1xi32>
    %186 = arith.cmpi sgt, %14, %185 : vector<2x1xi32>
    %187 = vector.shape_cast %186 : vector<2x1xi1> to vector<2x1xi1>
    %188 = vector.broadcast %187 : vector<2x1xi1> to vector<2x128xi1>
    %189 = arith.select %188, %184, %144 : vector<2x128xi1>, vector<2x128xf32>
    %cst_70 = arith.constant 0.000000e+00 : f32
    %190 = vector.shape_cast %186 : vector<2x1xi1> to vector<2x1xi1>
    %191 = vector.broadcast %190 : vector<2x1xi1> to vector<2x128xi1>
    %192 = vector.broadcast %cst_70 : f32 to vector<2x128xf32>
    %193 = arith.select %191, %184, %192 : vector<2x128xi1>, vector<2x128xf32>
    %194 = vector.shape_cast %193 : vector<2x128xf32> to vector<2x1x128xf32>
    %c0_71 = arith.constant 0 : index
    %c3_72 = arith.constant 3 : index
    %c0_73 = arith.constant 0 : index
    %195 = vector.load %arg18[%c0_71, %c3_72, %c0_73] : memref<2x8x128xf32, #tpu.memory_space<vmem>>, vector<2x1x128xf32>
    tpu.vector_store %arg18[%c0_71, %c3_72, %c0_73], %194 {strides = array<i32>} : memref<2x8x128xf32, #tpu.memory_space<vmem>>, vector<2x1x128xf32>,
    %c4 = arith.constant 4 : index
    %c0_74 = arith.constant 0 : index
    %c0_75 = arith.constant 0 : index
    %196 = vector.load %arg0[%c4, %c0_74, %c0_75] : memref<8x2x128xf32, #tpu.memory_space<vmem>>, vector<1x2x128xf32>
    %197 = vector.shape_cast %196 : vector<1x2x128xf32> to vector<2x128xf32>
    %cst_76 = arith.constant dense<0.000000e+00> : vector<2x384xf32>
    %198 = tpu.matmul %197, %0, %cst_76 {dimension_numbers = #tpu.dot_dimension_numbers<[1], [0], [0], [1], [0, 0, 1, 1], [], []>} : vector<2x128xf32>, vector<128x384xf32>, vector<2x384xf32> -> vector<2x384xf32>
    %199 = vector.broadcast %2 : vector<1x384xf32> to vector<2x384xf32>
    %200 = arith.addf %198, %199 : vector<2x384xf32>
    %cst_77 = arith.constant dense<0.000000e+00> : vector<2x384xf32>
    %201 = tpu.matmul %189, %1, %cst_77 {dimension_numbers = #tpu.dot_dimension_numbers<[1], [0], [0], [1], [0, 0, 1, 1], [], []>} : vector<2x128xf32>, vector<128x384xf32>, vector<2x384xf32> -> vector<2x384xf32>
    %202 = vector.broadcast %3 : vector<1x384xf32> to vector<2x384xf32>
    %203 = arith.addf %201, %202 : vector<2x384xf32>
    %204 = vector.extract_strided_slice %200 {offsets = [0, 0], sizes = [2, 128], strides = [1, 1]} : vector<2x384xf32> to vector<2x128xf32>
    %205 = vector.extract_strided_slice %203 {offsets = [0, 0], sizes = [2, 128], strides = [1, 1]} : vector<2x384xf32> to vector<2x128xf32>
    %206 = arith.addf %204, %205 : vector<2x128xf32>
    %207 = arith.negf %206 : vector<2x128xf32>
    %208 = math.exp %207 : vector<2x128xf32>
    %cst_78 = arith.constant 1.000000e+00 : f32
    %209 = vector.broadcast %cst_78 : f32 to vector<2x128xf32>
    %210 = arith.addf %209, %208 : vector<2x128xf32>
    %211 = arith.divf %209, %210 : vector<2x128xf32>
    %212 = vector.extract_strided_slice %200 {offsets = [0, 128], sizes = [2, 128], strides = [1, 1]} : vector<2x384xf32> to vector<2x128xf32>
    %213 = vector.extract_strided_slice %203 {offsets = [0, 128], sizes = [2, 128], strides = [1, 1]} : vector<2x384xf32> to vector<2x128xf32>
    %214 = arith.addf %212, %213 : vector<2x128xf32>
    %215 = arith.negf %214 : vector<2x128xf32>
    %216 = math.exp %215 : vector<2x128xf32>
    %cst_79 = arith.constant 1.000000e+00 : f32
    %217 = vector.broadcast %cst_79 : f32 to vector<2x128xf32>
    %218 = arith.addf %217, %216 : vector<2x128xf32>
    %219 = arith.divf %217, %218 : vector<2x128xf32>
    %220 = vector.extract_strided_slice %200 {offsets = [0, 256], sizes = [2, 128], strides = [1, 1]} : vector<2x384xf32> to vector<2x128xf32>
    %221 = vector.extract_strided_slice %203 {offsets = [0, 256], sizes = [2, 128], strides = [1, 1]} : vector<2x384xf32> to vector<2x128xf32>
    %222 = arith.mulf %211, %221 : vector<2x128xf32>
    %223 = arith.addf %220, %222 : vector<2x128xf32>
    %224 = math.tanh %223 : vector<2x128xf32>
    %cst_80 = arith.constant 1.000000e+00 : f32
    %225 = vector.broadcast %cst_80 : f32 to vector<2x128xf32>
    %226 = arith.subf %225, %219 : vector<2x128xf32>
    %227 = arith.mulf %226, %224 : vector<2x128xf32>
    %228 = arith.mulf %219, %189 : vector<2x128xf32>
    %229 = arith.addf %227, %228 : vector<2x128xf32>
    %c4_i32 = arith.constant 4 : i32
    %230 = vector.broadcast %c4_i32 : i32 to vector<2x1xi32>
    %231 = arith.cmpi sgt, %14, %230 : vector<2x1xi32>
    %232 = vector.shape_cast %231 : vector<2x1xi1> to vector<2x1xi1>
    %233 = vector.broadcast %232 : vector<2x1xi1> to vector<2x128xi1>
    %234 = arith.select %233, %229, %189 : vector<2x128xi1>, vector<2x128xf32>
    %cst_81 = arith.constant 0.000000e+00 : f32
    %235 = vector.shape_cast %231 : vector<2x1xi1> to vector<2x1xi1>
    %236 = vector.broadcast %235 : vector<2x1xi1> to vector<2x128xi1>
    %237 = vector.broadcast %cst_81 : f32 to vector<2x128xf32>
    %238 = arith.select %236, %229, %237 : vector<2x128xi1>, vector<2x128xf32>
    %239 = vector.shape_cast %238 : vector<2x128xf32> to vector<2x1x128xf32>
    %c0_82 = arith.constant 0 : index
    %c4_83 = arith.constant 4 : index
    %c0_84 = arith.constant 0 : index
    %240 = vector.load %arg18[%c0_82, %c4_83, %c0_84] : memref<2x8x128xf32, #tpu.memory_space<vmem>>, vector<2x1x128xf32>
    tpu.vector_store %arg18[%c0_82, %c4_83, %c0_84], %239 {strides = array<i32>} : memref<2x8x128xf32, #tpu.memory_space<vmem>>, vector<2x1x128xf32>,
    %c5 = arith.constant 5 : index
    %c0_85 = arith.constant 0 : index
    %c0_86 = arith.constant 0 : index
    %241 = vector.load %arg0[%c5, %c0_85, %c0_86] : memref<8x2x128xf32, #tpu.memory_space<vmem>>, vector<1x2x128xf32>
    %242 = vector.shape_cast %241 : vector<1x2x128xf32> to vector<2x128xf32>
    %cst_87 = arith.constant dense<0.000000e+00> : vector<2x384xf32>
    %243 = tpu.matmul %242, %0, %cst_87 {dimension_numbers = #tpu.dot_dimension_numbers<[1], [0], [0], [1], [0, 0, 1, 1], [], []>} : vector<2x128xf32>, vector<128x384xf32>, vector<2x384xf32> -> vector<2x384xf32>
    %244 = vector.broadcast %2 : vector<1x384xf32> to vector<2x384xf32>
    %245 = arith.addf %243, %244 : vector<2x384xf32>
    %cst_88 = arith.constant dense<0.000000e+00> : vector<2x384xf32>
    %246 = tpu.matmul %234, %1, %cst_88 {dimension_numbers = #tpu.dot_dimension_numbers<[1], [0], [0], [1], [0, 0, 1, 1], [], []>} : vector<2x128xf32>, vector<128x384xf32>, vector<2x384xf32> -> vector<2x384xf32>
    %247 = vector.broadcast %3 : vector<1x384xf32> to vector<2x384xf32>
    %248 = arith.addf %246, %247 : vector<2x384xf32>
    %249 = vector.extract_strided_slice %245 {offsets = [0, 0], sizes = [2, 128], strides = [1, 1]} : vector<2x384xf32> to vector<2x128xf32>
    %250 = vector.extract_strided_slice %248 {offsets = [0, 0], sizes = [2, 128], strides = [1, 1]} : vector<2x384xf32> to vector<2x128xf32>
    %251 = arith.addf %249, %250 : vector<2x128xf32>
    %252 = arith.negf %251 : vector<2x128xf32>
    %253 = math.exp %252 : vector<2x128xf32>
    %cst_89 = arith.constant 1.000000e+00 : f32
    %254 = vector.broadcast %cst_89 : f32 to vector<2x128xf32>
    %255 = arith.addf %254, %253 : vector<2x128xf32>
    %256 = arith.divf %254, %255 : vector<2x128xf32>
    %257 = vector.extract_strided_slice %245 {offsets = [0, 128], sizes = [2, 128], strides = [1, 1]} : vector<2x384xf32> to vector<2x128xf32>
    %258 = vector.extract_strided_slice %248 {offsets = [0, 128], sizes = [2, 128], strides = [1, 1]} : vector<2x384xf32> to vector<2x128xf32>
    %259 = arith.addf %257, %258 : vector<2x128xf32>
    %260 = arith.negf %259 : vector<2x128xf32>
    %261 = math.exp %260 : vector<2x128xf32>
    %cst_90 = arith.constant 1.000000e+00 : f32
    %262 = vector.broadcast %cst_90 : f32 to vector<2x128xf32>
    %263 = arith.addf %262, %261 : vector<2x128xf32>
    %264 = arith.divf %262, %263 : vector<2x128xf32>
    %265 = vector.extract_strided_slice %245 {offsets = [0, 256], sizes = [2, 128], strides = [1, 1]} : vector<2x384xf32> to vector<2x128xf32>
    %266 = vector.extract_strided_slice %248 {offsets = [0, 256], sizes = [2, 128], strides = [1, 1]} : vector<2x384xf32> to vector<2x128xf32>
    %267 = arith.mulf %256, %266 : vector<2x128xf32>
    %268 = arith.addf %265, %267 : vector<2x128xf32>
    %269 = math.tanh %268 : vector<2x128xf32>
    %cst_91 = arith.constant 1.000000e+00 : f32
    %270 = vector.broadcast %cst_91 : f32 to vector<2x128xf32>
    %271 = arith.subf %270, %264 : vector<2x128xf32>
    %272 = arith.mulf %271, %269 : vector<2x128xf32>
    %273 = arith.mulf %264, %234 : vector<2x128xf32>
    %274 = arith.addf %272, %273 : vector<2x128xf32>
    %c5_i32 = arith.constant 5 : i32
    %275 = vector.broadcast %c5_i32 : i32 to vector<2x1xi32>
    %276 = arith.cmpi sgt, %14, %275 : vector<2x1xi32>
    %277 = vector.shape_cast %276 : vector<2x1xi1> to vector<2x1xi1>
    %278 = vector.broadcast %277 : vector<2x1xi1> to vector<2x128xi1>
    %279 = arith.select %278, %274, %234 : vector<2x128xi1>, vector<2x128xf32>
    %cst_92 = arith.constant 0.000000e+00 : f32
    %280 = vector.shape_cast %276 : vector<2x1xi1> to vector<2x1xi1>
    %281 = vector.broadcast %280 : vector<2x1xi1> to vector<2x128xi1>
    %282 = vector.broadcast %cst_92 : f32 to vector<2x128xf32>
    %283 = arith.select %281, %274, %282 : vector<2x128xi1>, vector<2x128xf32>
    %284 = vector.shape_cast %283 : vector<2x128xf32> to vector<2x1x128xf32>
    %c0_93 = arith.constant 0 : index
    %c5_94 = arith.constant 5 : index
    %c0_95 = arith.constant 0 : index
    %285 = vector.load %arg18[%c0_93, %c5_94, %c0_95] : memref<2x8x128xf32, #tpu.memory_space<vmem>>, vector<2x1x128xf32>
    tpu.vector_store %arg18[%c0_93, %c5_94, %c0_95], %284 {strides = array<i32>} : memref<2x8x128xf32, #tpu.memory_space<vmem>>, vector<2x1x128xf32>,
    %c6 = arith.constant 6 : index
    %c0_96 = arith.constant 0 : index
    %c0_97 = arith.constant 0 : index
    %286 = vector.load %arg0[%c6, %c0_96, %c0_97] : memref<8x2x128xf32, #tpu.memory_space<vmem>>, vector<1x2x128xf32>
    %287 = vector.shape_cast %286 : vector<1x2x128xf32> to vector<2x128xf32>
    %cst_98 = arith.constant dense<0.000000e+00> : vector<2x384xf32>
    %288 = tpu.matmul %287, %0, %cst_98 {dimension_numbers = #tpu.dot_dimension_numbers<[1], [0], [0], [1], [0, 0, 1, 1], [], []>} : vector<2x128xf32>, vector<128x384xf32>, vector<2x384xf32> -> vector<2x384xf32>
    %289 = vector.broadcast %2 : vector<1x384xf32> to vector<2x384xf32>
    %290 = arith.addf %288, %289 : vector<2x384xf32>
    %cst_99 = arith.constant dense<0.000000e+00> : vector<2x384xf32>
    %291 = tpu.matmul %279, %1, %cst_99 {dimension_numbers = #tpu.dot_dimension_numbers<[1], [0], [0], [1], [0, 0, 1, 1], [], []>} : vector<2x128xf32>, vector<128x384xf32>, vector<2x384xf32> -> vector<2x384xf32>
    %292 = vector.broadcast %3 : vector<1x384xf32> to vector<2x384xf32>
    %293 = arith.addf %291, %292 : vector<2x384xf32>
    %294 = vector.extract_strided_slice %290 {offsets = [0, 0], sizes = [2, 128], strides = [1, 1]} : vector<2x384xf32> to vector<2x128xf32>
    %295 = vector.extract_strided_slice %293 {offsets = [0, 0], sizes = [2, 128], strides = [1, 1]} : vector<2x384xf32> to vector<2x128xf32>
    %296 = arith.addf %294, %295 : vector<2x128xf32>
    %297 = arith.negf %296 : vector<2x128xf32>
    %298 = math.exp %297 : vector<2x128xf32>
    %cst_100 = arith.constant 1.000000e+00 : f32
    %299 = vector.broadcast %cst_100 : f32 to vector<2x128xf32>
    %300 = arith.addf %299, %298 : vector<2x128xf32>
    %301 = arith.divf %299, %300 : vector<2x128xf32>
    %302 = vector.extract_strided_slice %290 {offsets = [0, 128], sizes = [2, 128], strides = [1, 1]} : vector<2x384xf32> to vector<2x128xf32>
    %303 = vector.extract_strided_slice %293 {offsets = [0, 128], sizes = [2, 128], strides = [1, 1]} : vector<2x384xf32> to vector<2x128xf32>
    %304 = arith.addf %302, %303 : vector<2x128xf32>
    %305 = arith.negf %304 : vector<2x128xf32>
    %306 = math.exp %305 : vector<2x128xf32>
    %cst_101 = arith.constant 1.000000e+00 : f32
    %307 = vector.broadcast %cst_101 : f32 to vector<2x128xf32>
    %308 = arith.addf %307, %306 : vector<2x128xf32>
    %309 = arith.divf %307, %308 : vector<2x128xf32>
    %310 = vector.extract_strided_slice %290 {offsets = [0, 256], sizes = [2, 128], strides = [1, 1]} : vector<2x384xf32> to vector<2x128xf32>
    %311 = vector.extract_strided_slice %293 {offsets = [0, 256], sizes = [2, 128], strides = [1, 1]} : vector<2x384xf32> to vector<2x128xf32>
    %312 = arith.mulf %301, %311 : vector<2x128xf32>
    %313 = arith.addf %310, %312 : vector<2x128xf32>
    %314 = math.tanh %313 : vector<2x128xf32>
    %cst_102 = arith.constant 1.000000e+00 : f32
    %315 = vector.broadcast %cst_102 : f32 to vector<2x128xf32>
    %316 = arith.subf %315, %309 : vector<2x128xf32>
    %317 = arith.mulf %316, %314 : vector<2x128xf32>
    %318 = arith.mulf %309, %279 : vector<2x128xf32>
    %319 = arith.addf %317, %318 : vector<2x128xf32>
    %c6_i32 = arith.constant 6 : i32
    %320 = vector.broadcast %c6_i32 : i32 to vector<2x1xi32>
    %321 = arith.cmpi sgt, %14, %320 : vector<2x1xi32>
    %322 = vector.shape_cast %321 : vector<2x1xi1> to vector<2x1xi1>
    %323 = vector.broadcast %322 : vector<2x1xi1> to vector<2x128xi1>
    %324 = arith.select %323, %319, %279 : vector<2x128xi1>, vector<2x128xf32>
    %cst_103 = arith.constant 0.000000e+00 : f32
    %325 = vector.shape_cast %321 : vector<2x1xi1> to vector<2x1xi1>
    %326 = vector.broadcast %325 : vector<2x1xi1> to vector<2x128xi1>
    %327 = vector.broadcast %cst_103 : f32 to vector<2x128xf32>
    %328 = arith.select %326, %319, %327 : vector<2x128xi1>, vector<2x128xf32>
    %329 = vector.shape_cast %328 : vector<2x128xf32> to vector<2x1x128xf32>
    %c0_104 = arith.constant 0 : index
    %c6_105 = arith.constant 6 : index
    %c0_106 = arith.constant 0 : index
    %330 = vector.load %arg18[%c0_104, %c6_105, %c0_106] : memref<2x8x128xf32, #tpu.memory_space<vmem>>, vector<2x1x128xf32>
    tpu.vector_store %arg18[%c0_104, %c6_105, %c0_106], %329 {strides = array<i32>} : memref<2x8x128xf32, #tpu.memory_space<vmem>>, vector<2x1x128xf32>,
    %c7 = arith.constant 7 : index
    %c0_107 = arith.constant 0 : index
    %c0_108 = arith.constant 0 : index
    %331 = vector.load %arg0[%c7, %c0_107, %c0_108] : memref<8x2x128xf32, #tpu.memory_space<vmem>>, vector<1x2x128xf32>
    %332 = vector.shape_cast %331 : vector<1x2x128xf32> to vector<2x128xf32>
    %cst_109 = arith.constant dense<0.000000e+00> : vector<2x384xf32>
    %333 = tpu.matmul %332, %0, %cst_109 {dimension_numbers = #tpu.dot_dimension_numbers<[1], [0], [0], [1], [0, 0, 1, 1], [], []>} : vector<2x128xf32>, vector<128x384xf32>, vector<2x384xf32> -> vector<2x384xf32>
    %334 = vector.broadcast %2 : vector<1x384xf32> to vector<2x384xf32>
    %335 = arith.addf %333, %334 : vector<2x384xf32>
    %cst_110 = arith.constant dense<0.000000e+00> : vector<2x384xf32>
    %336 = tpu.matmul %324, %1, %cst_110 {dimension_numbers = #tpu.dot_dimension_numbers<[1], [0], [0], [1], [0, 0, 1, 1], [], []>} : vector<2x128xf32>, vector<128x384xf32>, vector<2x384xf32> -> vector<2x384xf32>
    %337 = vector.broadcast %3 : vector<1x384xf32> to vector<2x384xf32>
    %338 = arith.addf %336, %337 : vector<2x384xf32>
    %339 = vector.extract_strided_slice %335 {offsets = [0, 0], sizes = [2, 128], strides = [1, 1]} : vector<2x384xf32> to vector<2x128xf32>
    %340 = vector.extract_strided_slice %338 {offsets = [0, 0], sizes = [2, 128], strides = [1, 1]} : vector<2x384xf32> to vector<2x128xf32>
    %341 = arith.addf %339, %340 : vector<2x128xf32>
    %342 = arith.negf %341 : vector<2x128xf32>
    %343 = math.exp %342 : vector<2x128xf32>
    %cst_111 = arith.constant 1.000000e+00 : f32
    %344 = vector.broadcast %cst_111 : f32 to vector<2x128xf32>
    %345 = arith.addf %344, %343 : vector<2x128xf32>
    %346 = arith.divf %344, %345 : vector<2x128xf32>
    %347 = vector.extract_strided_slice %335 {offsets = [0, 128], sizes = [2, 128], strides = [1, 1]} : vector<2x384xf32> to vector<2x128xf32>
    %348 = vector.extract_strided_slice %338 {offsets = [0, 128], sizes = [2, 128], strides = [1, 1]} : vector<2x384xf32> to vector<2x128xf32>
    %349 = arith.addf %347, %348 : vector<2x128xf32>
    %350 = arith.negf %349 : vector<2x128xf32>
    %351 = math.exp %350 : vector<2x128xf32>
    %cst_112 = arith.constant 1.000000e+00 : f32
    %352 = vector.broadcast %cst_112 : f32 to vector<2x128xf32>
    %353 = arith.addf %352, %351 : vector<2x128xf32>
    %354 = arith.divf %352, %353 : vector<2x128xf32>
    %355 = vector.extract_strided_slice %335 {offsets = [0, 256], sizes = [2, 128], strides = [1, 1]} : vector<2x384xf32> to vector<2x128xf32>
    %356 = vector.extract_strided_slice %338 {offsets = [0, 256], sizes = [2, 128], strides = [1, 1]} : vector<2x384xf32> to vector<2x128xf32>
    %357 = arith.mulf %346, %356 : vector<2x128xf32>
    %358 = arith.addf %355, %357 : vector<2x128xf32>
    %359 = math.tanh %358 : vector<2x128xf32>
    %cst_113 = arith.constant 1.000000e+00 : f32
    %360 = vector.broadcast %cst_113 : f32 to vector<2x128xf32>
    %361 = arith.subf %360, %354 : vector<2x128xf32>
    %362 = arith.mulf %361, %359 : vector<2x128xf32>
    %363 = arith.mulf %354, %324 : vector<2x128xf32>
    %364 = arith.addf %362, %363 : vector<2x128xf32>
    %c7_i32 = arith.constant 7 : i32
    %365 = vector.broadcast %c7_i32 : i32 to vector<2x1xi32>
    %366 = arith.cmpi sgt, %14, %365 : vector<2x1xi32>
    %367 = vector.shape_cast %366 : vector<2x1xi1> to vector<2x1xi1>
    %368 = vector.broadcast %367 : vector<2x1xi1> to vector<2x128xi1>
    %369 = arith.select %368, %364, %324 : vector<2x128xi1>, vector<2x128xf32>
    %cst_114 = arith.constant 0.000000e+00 : f32
    %370 = vector.shape_cast %366 : vector<2x1xi1> to vector<2x1xi1>
    %371 = vector.broadcast %370 : vector<2x1xi1> to vector<2x128xi1>
    %372 = vector.broadcast %cst_114 : f32 to vector<2x128xf32>
    %373 = arith.select %371, %364, %372 : vector<2x128xi1>, vector<2x128xf32>
    %374 = vector.shape_cast %373 : vector<2x128xf32> to vector<2x1x128xf32>
    %c0_115 = arith.constant 0 : index
    %c7_116 = arith.constant 7 : index
    %c0_117 = arith.constant 0 : index
    %375 = vector.load %arg18[%c0_115, %c7_116, %c0_117] : memref<2x8x128xf32, #tpu.memory_space<vmem>>, vector<2x1x128xf32>
    tpu.vector_store %arg18[%c0_115, %c7_116, %c0_117], %374 {strides = array<i32>} : memref<2x8x128xf32, #tpu.memory_space<vmem>>, vector<2x1x128xf32>,
    %c0_118 = arith.constant 0 : index
    %c0_119 = arith.constant 0 : index
    %c0_120 = arith.constant 0 : index
    %376 = vector.load %arg18[%c0_118, %c0_119, %c0_120] : memref<2x8x128xf32, #tpu.memory_space<vmem>>, vector<2x8x128xf32>
    %377 = vector.shape_cast %376 : vector<2x8x128xf32> to vector<16x128xf32>
    %cst_121 = arith.constant dense<0.000000e+00> : vector<16x128xf32>
    %378 = tpu.matmul %377, %8, %cst_121 {dimension_numbers = #tpu.dot_dimension_numbers<[1], [0], [0], [1], [0, 0, 1, 1], [], []>} : vector<16x128xf32>, vector<128x128xf32>, vector<16x128xf32> -> vector<16x128xf32>
    %379 = vector.broadcast %9 : vector<1x128xf32> to vector<16x128xf32>
    %380 = arith.addf %378, %379 : vector<16x128xf32>
    %381 = vector.shape_cast %380 : vector<16x128xf32> to vector<2x8x128xf32>
    %cst_122 = arith.constant dense<0.000000e+00> : vector<2x128xf32>
    %382 = tpu.matmul %369, %10, %cst_122 {dimension_numbers = #tpu.dot_dimension_numbers<[1], [0], [0], [1], [0, 0, 1, 1], [], []>} : vector<2x128xf32>, vector<128x128xf32>, vector<2x128xf32> -> vector<2x128xf32>
    %383 = vector.broadcast %11 : vector<1x128xf32> to vector<2x128xf32>
    %384 = arith.addf %382, %383 : vector<2x128xf32>
    %385 = vector.shape_cast %384 : vector<2x128xf32> to vector<2x1x128xf32>
    %386 = vector.broadcast %385 : vector<2x1x128xf32> to vector<2x8x128xf32>
    %387 = arith.mulf %381, %386 : vector<2x8x128xf32>
    %cst_123 = arith.constant dense<0.000000e+00> : vector<2x8xf32>
    %388 = vector.multi_reduction <add>, %387, %cst_123 [2] : vector<2x8x128xf32> to vector<2x8xf32>
    %cst_124 = arith.constant dense<0xFF800000> : vector<2xf32>
    %389 = vector.multi_reduction <maximumf>, %388, %cst_124 [1] : vector<2x8xf32> to vector<2xf32>
    %390 = vector.shape_cast %389 : vector<2xf32> to vector<2x1xf32>
    %391 = vector.broadcast %390 : vector<2x1xf32> to vector<2x8xf32>
    %392 = arith.subf %388, %391 : vector<2x8xf32>
    %393 = math.exp %392 : vector<2x8xf32>
    %cst_125 = arith.constant dense<0.000000e+00> : vector<2xf32>
    %394 = vector.multi_reduction <add>, %393, %cst_125 [1] : vector<2x8xf32> to vector<2xf32>
    %395 = vector.shape_cast %394 : vector<2xf32> to vector<2x1xf32>
    %396 = tpu.reciprocal %395 {approx = true} : vector<2x1xf32> -> vector<2x1xf32>
    %397 = vector.broadcast %396 : vector<2x1xf32> to vector<2x8xf32>
    %398 = arith.mulf %393, %397 : vector<2x8xf32>
    %399 = vector.shape_cast %398 : vector<2x8xf32> to vector<2x1x8xf32>
    "tpu.trace_start"() <{level = 10 : i32, message = "bqs,bsh->bqh"}> : () -> ()
    %cst_126 = arith.constant dense<0.000000e+00> : vector<2x1x128xf32>
    %400 = tpu.matmul %399, %376, %cst_126 {dimension_numbers = #tpu.dot_dimension_numbers<[2], [1], [1], [2], [0, 0, 0, 1, 1, 2], [0], [0]>} : vector<2x1x8xf32>, vector<2x8x128xf32>, vector<2x1x128xf32> -> vector<2x1x128xf32>
    "tpu.trace_stop"() : () -> ()
    %401 = vector.shape_cast %400 : vector<2x1x128xf32> to vector<2x128xf32>
    %c0_127 = arith.constant 0 : index
    %c0_128 = arith.constant 0 : index
    %c0_129 = arith.constant 0 : index
    %402 = vector.load %arg1[%c0_127, %c0_128, %c0_129] : memref<8x2x128xf32, #tpu.memory_space<vmem>>, vector<1x2x128xf32>
    %403 = vector.shape_cast %402 : vector<1x2x128xf32> to vector<2x128xf32>
    %404 = tpu.concatenate %403, %401 in 1 : vector<2x128xf32>, vector<2x128xf32> -> vector<2x256xf32>
    %cst_130 = arith.constant dense<0.000000e+00> : vector<2x384xf32>
    %405 = tpu.matmul %404, %4, %cst_130 {dimension_numbers = #tpu.dot_dimension_numbers<[1], [0], [0], [1], [0, 0, 1, 1], [], []>} : vector<2x256xf32>, vector<256x384xf32>, vector<2x384xf32> -> vector<2x384xf32>
    %406 = vector.broadcast %6 : vector<1x384xf32> to vector<2x384xf32>
    %407 = arith.addf %405, %406 : vector<2x384xf32>
    %cst_131 = arith.constant dense<0.000000e+00> : vector<2x384xf32>
    %408 = tpu.matmul %369, %5, %cst_131 {dimension_numbers = #tpu.dot_dimension_numbers<[1], [0], [0], [1], [0, 0, 1, 1], [], []>} : vector<2x128xf32>, vector<128x384xf32>, vector<2x384xf32> -> vector<2x384xf32>
    %409 = vector.broadcast %7 : vector<1x384xf32> to vector<2x384xf32>
    %410 = arith.addf %408, %409 : vector<2x384xf32>
    %411 = vector.extract_strided_slice %407 {offsets = [0, 0], sizes = [2, 128], strides = [1, 1]} : vector<2x384xf32> to vector<2x128xf32>
    %412 = vector.extract_strided_slice %410 {offsets = [0, 0], sizes = [2, 128], strides = [1, 1]} : vector<2x384xf32> to vector<2x128xf32>
    %413 = arith.addf %411, %412 : vector<2x128xf32>
    %414 = arith.negf %413 : vector<2x128xf32>
    %415 = math.exp %414 : vector<2x128xf32>
    %cst_132 = arith.constant 1.000000e+00 : f32
    %416 = vector.broadcast %cst_132 : f32 to vector<2x128xf32>
    %417 = arith.addf %416, %415 : vector<2x128xf32>
    %418 = arith.divf %416, %417 : vector<2x128xf32>
    %419 = vector.extract_strided_slice %407 {offsets = [0, 128], sizes = [2, 128], strides = [1, 1]} : vector<2x384xf32> to vector<2x128xf32>
    %420 = vector.extract_strided_slice %410 {offsets = [0, 128], sizes = [2, 128], strides = [1, 1]} : vector<2x384xf32> to vector<2x128xf32>
    %421 = arith.addf %419, %420 : vector<2x128xf32>
    %422 = arith.negf %421 : vector<2x128xf32>
    %423 = math.exp %422 : vector<2x128xf32>
    %cst_133 = arith.constant 1.000000e+00 : f32
    %424 = vector.broadcast %cst_133 : f32 to vector<2x128xf32>
    %425 = arith.addf %424, %423 : vector<2x128xf32>
    %426 = arith.divf %424, %425 : vector<2x128xf32>
    %427 = vector.extract_strided_slice %407 {offsets = [0, 256], sizes = [2, 128], strides = [1, 1]} : vector<2x384xf32> to vector<2x128xf32>
    %428 = vector.extract_strided_slice %410 {offsets = [0, 256], sizes = [2, 128], strides = [1, 1]} : vector<2x384xf32> to vector<2x128xf32>
    %429 = arith.mulf %418, %428 : vector<2x128xf32>
    %430 = arith.addf %427, %429 : vector<2x128xf32>
    %431 = math.tanh %430 : vector<2x128xf32>
    %cst_134 = arith.constant 1.000000e+00 : f32
    %432 = vector.broadcast %cst_134 : f32 to vector<2x128xf32>
    %433 = arith.subf %432, %426 : vector<2x128xf32>
    %434 = arith.mulf %433, %431 : vector<2x128xf32>
    %435 = arith.mulf %426, %369 : vector<2x128xf32>
    %436 = arith.addf %434, %435 : vector<2x128xf32>
    %c0_135 = arith.constant 0 : index
    %c0_136 = arith.constant 0 : index
    %437 = vector.load %arg19[%c0_135, %c0_136] : memref<16x128xf32, #tpu.memory_space<vmem>>, vector<2x128xf32>
    tpu.vector_store %arg19[%c0_135, %c0_136], %436 {strides = array<i32>} : memref<16x128xf32, #tpu.memory_space<vmem>>, vector<2x128xf32>,
    %cst_137 = arith.constant dense<0.000000e+00> : vector<2x128xf32>
    %438 = tpu.matmul %436, %10, %cst_137 {dimension_numbers = #tpu.dot_dimension_numbers<[1], [0], [0], [1], [0, 0, 1, 1], [], []>} : vector<2x128xf32>, vector<128x128xf32>, vector<2x128xf32> -> vector<2x128xf32>
    %439 = vector.broadcast %11 : vector<1x128xf32> to vector<2x128xf32>
    %440 = arith.addf %438, %439 : vector<2x128xf32>
    %441 = vector.shape_cast %440 : vector<2x128xf32> to vector<2x1x128xf32>
    %442 = vector.broadcast %441 : vector<2x1x128xf32> to vector<2x8x128xf32>
    %443 = arith.mulf %381, %442 : vector<2x8x128xf32>
    %cst_138 = arith.constant dense<0.000000e+00> : vector<2x8xf32>
    %444 = vector.multi_reduction <add>, %443, %cst_138 [2] : vector<2x8x128xf32> to vector<2x8xf32>
    %cst_139 = arith.constant dense<0xFF800000> : vector<2xf32>
    %445 = vector.multi_reduction <maximumf>, %444, %cst_139 [1] : vector<2x8xf32> to vector<2xf32>
    %446 = vector.shape_cast %445 : vector<2xf32> to vector<2x1xf32>
    %447 = vector.broadcast %446 : vector<2x1xf32> to vector<2x8xf32>
    %448 = arith.subf %444, %447 : vector<2x8xf32>
    %449 = math.exp %448 : vector<2x8xf32>
    %cst_140 = arith.constant dense<0.000000e+00> : vector<2xf32>
    %450 = vector.multi_reduction <add>, %449, %cst_140 [1] : vector<2x8xf32> to vector<2xf32>
    %451 = vector.shape_cast %450 : vector<2xf32> to vector<2x1xf32>
    %452 = tpu.reciprocal %451 {approx = true} : vector<2x1xf32> -> vector<2x1xf32>
    %453 = vector.broadcast %452 : vector<2x1xf32> to vector<2x8xf32>
    %454 = arith.mulf %449, %453 : vector<2x8xf32>
    %455 = vector.shape_cast %454 : vector<2x8xf32> to vector<2x1x8xf32>
    "tpu.trace_start"() <{level = 10 : i32, message = "bqs,bsh->bqh"}> : () -> ()
    %cst_141 = arith.constant dense<0.000000e+00> : vector<2x1x128xf32>
    %456 = tpu.matmul %455, %376, %cst_141 {dimension_numbers = #tpu.dot_dimension_numbers<[2], [1], [1], [2], [0, 0, 0, 1, 1, 2], [0], [0]>} : vector<2x1x8xf32>, vector<2x8x128xf32>, vector<2x1x128xf32> -> vector<2x1x128xf32>
    "tpu.trace_stop"() : () -> ()
    %457 = vector.shape_cast %456 : vector<2x1x128xf32> to vector<2x128xf32>
    %c1_142 = arith.constant 1 : index
    %c0_143 = arith.constant 0 : index
    %c0_144 = arith.constant 0 : index
    %458 = vector.load %arg1[%c1_142, %c0_143, %c0_144] : memref<8x2x128xf32, #tpu.memory_space<vmem>>, vector<1x2x128xf32>
    %459 = vector.shape_cast %458 : vector<1x2x128xf32> to vector<2x128xf32>
    %460 = tpu.concatenate %459, %457 in 1 : vector<2x128xf32>, vector<2x128xf32> -> vector<2x256xf32>
    %cst_145 = arith.constant dense<0.000000e+00> : vector<2x384xf32>
    %461 = tpu.matmul %460, %4, %cst_145 {dimension_numbers = #tpu.dot_dimension_numbers<[1], [0], [0], [1], [0, 0, 1, 1], [], []>} : vector<2x256xf32>, vector<256x384xf32>, vector<2x384xf32> -> vector<2x384xf32>
    %462 = vector.broadcast %6 : vector<1x384xf32> to vector<2x384xf32>
    %463 = arith.addf %461, %462 : vector<2x384xf32>
    %cst_146 = arith.constant dense<0.000000e+00> : vector<2x384xf32>
    %464 = tpu.matmul %436, %5, %cst_146 {dimension_numbers = #tpu.dot_dimension_numbers<[1], [0], [0], [1], [0, 0, 1, 1], [], []>} : vector<2x128xf32>, vector<128x384xf32>, vector<2x384xf32> -> vector<2x384xf32>
    %465 = vector.broadcast %7 : vector<1x384xf32> to vector<2x384xf32>
    %466 = arith.addf %464, %465 : vector<2x384xf32>
    %467 = vector.extract_strided_slice %463 {offsets = [0, 0], sizes = [2, 128], strides = [1, 1]} : vector<2x384xf32> to vector<2x128xf32>
    %468 = vector.extract_strided_slice %466 {offsets = [0, 0], sizes = [2, 128], strides = [1, 1]} : vector<2x384xf32> to vector<2x128xf32>
    %469 = arith.addf %467, %468 : vector<2x128xf32>
    %470 = arith.negf %469 : vector<2x128xf32>
    %471 = math.exp %470 : vector<2x128xf32>
    %cst_147 = arith.constant 1.000000e+00 : f32
    %472 = vector.broadcast %cst_147 : f32 to vector<2x128xf32>
    %473 = arith.addf %472, %471 : vector<2x128xf32>
    %474 = arith.divf %472, %473 : vector<2x128xf32>
    %475 = vector.extract_strided_slice %463 {offsets = [0, 128], sizes = [2, 128], strides = [1, 1]} : vector<2x384xf32> to vector<2x128xf32>
    %476 = vector.extract_strided_slice %466 {offsets = [0, 128], sizes = [2, 128], strides = [1, 1]} : vector<2x384xf32> to vector<2x128xf32>
    %477 = arith.addf %475, %476 : vector<2x128xf32>
    %478 = arith.negf %477 : vector<2x128xf32>
    %479 = math.exp %478 : vector<2x128xf32>
    %cst_148 = arith.constant 1.000000e+00 : f32
    %480 = vector.broadcast %cst_148 : f32 to vector<2x128xf32>
    %481 = arith.addf %480, %479 : vector<2x128xf32>
    %482 = arith.divf %480, %481 : vector<2x128xf32>
    %483 = vector.extract_strided_slice %463 {offsets = [0, 256], sizes = [2, 128], strides = [1, 1]} : vector<2x384xf32> to vector<2x128xf32>
    %484 = vector.extract_strided_slice %466 {offsets = [0, 256], sizes = [2, 128], strides = [1, 1]} : vector<2x384xf32> to vector<2x128xf32>
    %485 = arith.mulf %474, %484 : vector<2x128xf32>
    %486 = arith.addf %483, %485 : vector<2x128xf32>
    %487 = math.tanh %486 : vector<2x128xf32>
    %cst_149 = arith.constant 1.000000e+00 : f32
    %488 = vector.broadcast %cst_149 : f32 to vector<2x128xf32>
    %489 = arith.subf %488, %482 : vector<2x128xf32>
    %490 = arith.mulf %489, %487 : vector<2x128xf32>
    %491 = arith.mulf %482, %436 : vector<2x128xf32>
    %492 = arith.addf %490, %491 : vector<2x128xf32>
    %c2_150 = arith.constant 2 : index
    %c0_151 = arith.constant 0 : index
    %493 = vector.load %arg19[%c2_150, %c0_151] : memref<16x128xf32, #tpu.memory_space<vmem>>, vector<2x128xf32>
    tpu.vector_store %arg19[%c2_150, %c0_151], %492 {strides = array<i32>} : memref<16x128xf32, #tpu.memory_space<vmem>>, vector<2x128xf32>,
    %cst_152 = arith.constant dense<0.000000e+00> : vector<2x128xf32>
    %494 = tpu.matmul %492, %10, %cst_152 {dimension_numbers = #tpu.dot_dimension_numbers<[1], [0], [0], [1], [0, 0, 1, 1], [], []>} : vector<2x128xf32>, vector<128x128xf32>, vector<2x128xf32> -> vector<2x128xf32>
    %495 = vector.broadcast %11 : vector<1x128xf32> to vector<2x128xf32>
    %496 = arith.addf %494, %495 : vector<2x128xf32>
    %497 = vector.shape_cast %496 : vector<2x128xf32> to vector<2x1x128xf32>
    %498 = vector.broadcast %497 : vector<2x1x128xf32> to vector<2x8x128xf32>
    %499 = arith.mulf %381, %498 : vector<2x8x128xf32>
    %cst_153 = arith.constant dense<0.000000e+00> : vector<2x8xf32>
    %500 = vector.multi_reduction <add>, %499, %cst_153 [2] : vector<2x8x128xf32> to vector<2x8xf32>
    %cst_154 = arith.constant dense<0xFF800000> : vector<2xf32>
    %501 = vector.multi_reduction <maximumf>, %500, %cst_154 [1] : vector<2x8xf32> to vector<2xf32>
    %502 = vector.shape_cast %501 : vector<2xf32> to vector<2x1xf32>
    %503 = vector.broadcast %502 : vector<2x1xf32> to vector<2x8xf32>
    %504 = arith.subf %500, %503 : vector<2x8xf32>
    %505 = math.exp %504 : vector<2x8xf32>
    %cst_155 = arith.constant dense<0.000000e+00> : vector<2xf32>
    %506 = vector.multi_reduction <add>, %505, %cst_155 [1] : vector<2x8xf32> to vector<2xf32>
    %507 = vector.shape_cast %506 : vector<2xf32> to vector<2x1xf32>
    %508 = tpu.reciprocal %507 {approx = true} : vector<2x1xf32> -> vector<2x1xf32>
    %509 = vector.broadcast %508 : vector<2x1xf32> to vector<2x8xf32>
    %510 = arith.mulf %505, %509 : vector<2x8xf32>
    %511 = vector.shape_cast %510 : vector<2x8xf32> to vector<2x1x8xf32>
    "tpu.trace_start"() <{level = 10 : i32, message = "bqs,bsh->bqh"}> : () -> ()
    %cst_156 = arith.constant dense<0.000000e+00> : vector<2x1x128xf32>
    %512 = tpu.matmul %511, %376, %cst_156 {dimension_numbers = #tpu.dot_dimension_numbers<[2], [1], [1], [2], [0, 0, 0, 1, 1, 2], [0], [0]>} : vector<2x1x8xf32>, vector<2x8x128xf32>, vector<2x1x128xf32> -> vector<2x1x128xf32>
    "tpu.trace_stop"() : () -> ()
    %513 = vector.shape_cast %512 : vector<2x1x128xf32> to vector<2x128xf32>
    %c2_157 = arith.constant 2 : index
    %c0_158 = arith.constant 0 : index
    %c0_159 = arith.constant 0 : index
    %514 = vector.load %arg1[%c2_157, %c0_158, %c0_159] : memref<8x2x128xf32, #tpu.memory_space<vmem>>, vector<1x2x128xf32>
    %515 = vector.shape_cast %514 : vector<1x2x128xf32> to vector<2x128xf32>
    %516 = tpu.concatenate %515, %513 in 1 : vector<2x128xf32>, vector<2x128xf32> -> vector<2x256xf32>
    %cst_160 = arith.constant dense<0.000000e+00> : vector<2x384xf32>
    %517 = tpu.matmul %516, %4, %cst_160 {dimension_numbers = #tpu.dot_dimension_numbers<[1], [0], [0], [1], [0, 0, 1, 1], [], []>} : vector<2x256xf32>, vector<256x384xf32>, vector<2x384xf32> -> vector<2x384xf32>
    %518 = vector.broadcast %6 : vector<1x384xf32> to vector<2x384xf32>
    %519 = arith.addf %517, %518 : vector<2x384xf32>
    %cst_161 = arith.constant dense<0.000000e+00> : vector<2x384xf32>
    %520 = tpu.matmul %492, %5, %cst_161 {dimension_numbers = #tpu.dot_dimension_numbers<[1], [0], [0], [1], [0, 0, 1, 1], [], []>} : vector<2x128xf32>, vector<128x384xf32>, vector<2x384xf32> -> vector<2x384xf32>
    %521 = vector.broadcast %7 : vector<1x384xf32> to vector<2x384xf32>
    %522 = arith.addf %520, %521 : vector<2x384xf32>
    %523 = vector.extract_strided_slice %519 {offsets = [0, 0], sizes = [2, 128], strides = [1, 1]} : vector<2x384xf32> to vector<2x128xf32>
    %524 = vector.extract_strided_slice %522 {offsets = [0, 0], sizes = [2, 128], strides = [1, 1]} : vector<2x384xf32> to vector<2x128xf32>
    %525 = arith.addf %523, %524 : vector<2x128xf32>
    %526 = arith.negf %525 : vector<2x128xf32>
    %527 = math.exp %526 : vector<2x128xf32>
    %cst_162 = arith.constant 1.000000e+00 : f32
    %528 = vector.broadcast %cst_162 : f32 to vector<2x128xf32>
    %529 = arith.addf %528, %527 : vector<2x128xf32>
    %530 = arith.divf %528, %529 : vector<2x128xf32>
    %531 = vector.extract_strided_slice %519 {offsets = [0, 128], sizes = [2, 128], strides = [1, 1]} : vector<2x384xf32> to vector<2x128xf32>
    %532 = vector.extract_strided_slice %522 {offsets = [0, 128], sizes = [2, 128], strides = [1, 1]} : vector<2x384xf32> to vector<2x128xf32>
    %533 = arith.addf %531, %532 : vector<2x128xf32>
    %534 = arith.negf %533 : vector<2x128xf32>
    %535 = math.exp %534 : vector<2x128xf32>
    %cst_163 = arith.constant 1.000000e+00 : f32
    %536 = vector.broadcast %cst_163 : f32 to vector<2x128xf32>
    %537 = arith.addf %536, %535 : vector<2x128xf32>
    %538 = arith.divf %536, %537 : vector<2x128xf32>
    %539 = vector.extract_strided_slice %519 {offsets = [0, 256], sizes = [2, 128], strides = [1, 1]} : vector<2x384xf32> to vector<2x128xf32>
    %540 = vector.extract_strided_slice %522 {offsets = [0, 256], sizes = [2, 128], strides = [1, 1]} : vector<2x384xf32> to vector<2x128xf32>
    %541 = arith.mulf %530, %540 : vector<2x128xf32>
    %542 = arith.addf %539, %541 : vector<2x128xf32>
    %543 = math.tanh %542 : vector<2x128xf32>
    %cst_164 = arith.constant 1.000000e+00 : f32
    %544 = vector.broadcast %cst_164 : f32 to vector<2x128xf32>
    %545 = arith.subf %544, %538 : vector<2x128xf32>
    %546 = arith.mulf %545, %543 : vector<2x128xf32>
    %547 = arith.mulf %538, %492 : vector<2x128xf32>
    %548 = arith.addf %546, %547 : vector<2x128xf32>
    %c4_165 = arith.constant 4 : index
    %c0_166 = arith.constant 0 : index
    %549 = vector.load %arg19[%c4_165, %c0_166] : memref<16x128xf32, #tpu.memory_space<vmem>>, vector<2x128xf32>
    tpu.vector_store %arg19[%c4_165, %c0_166], %548 {strides = array<i32>} : memref<16x128xf32, #tpu.memory_space<vmem>>, vector<2x128xf32>,
    %cst_167 = arith.constant dense<0.000000e+00> : vector<2x128xf32>
    %550 = tpu.matmul %548, %10, %cst_167 {dimension_numbers = #tpu.dot_dimension_numbers<[1], [0], [0], [1], [0, 0, 1, 1], [], []>} : vector<2x128xf32>, vector<128x128xf32>, vector<2x128xf32> -> vector<2x128xf32>
    %551 = vector.broadcast %11 : vector<1x128xf32> to vector<2x128xf32>
    %552 = arith.addf %550, %551 : vector<2x128xf32>
    %553 = vector.shape_cast %552 : vector<2x128xf32> to vector<2x1x128xf32>
    %554 = vector.broadcast %553 : vector<2x1x128xf32> to vector<2x8x128xf32>
    %555 = arith.mulf %381, %554 : vector<2x8x128xf32>
    %cst_168 = arith.constant dense<0.000000e+00> : vector<2x8xf32>
    %556 = vector.multi_reduction <add>, %555, %cst_168 [2] : vector<2x8x128xf32> to vector<2x8xf32>
    %cst_169 = arith.constant dense<0xFF800000> : vector<2xf32>
    %557 = vector.multi_reduction <maximumf>, %556, %cst_169 [1] : vector<2x8xf32> to vector<2xf32>
    %558 = vector.shape_cast %557 : vector<2xf32> to vector<2x1xf32>
    %559 = vector.broadcast %558 : vector<2x1xf32> to vector<2x8xf32>
    %560 = arith.subf %556, %559 : vector<2x8xf32>
    %561 = math.exp %560 : vector<2x8xf32>
    %cst_170 = arith.constant dense<0.000000e+00> : vector<2xf32>
    %562 = vector.multi_reduction <add>, %561, %cst_170 [1] : vector<2x8xf32> to vector<2xf32>
    %563 = vector.shape_cast %562 : vector<2xf32> to vector<2x1xf32>
    %564 = tpu.reciprocal %563 {approx = true} : vector<2x1xf32> -> vector<2x1xf32>
    %565 = vector.broadcast %564 : vector<2x1xf32> to vector<2x8xf32>
    %566 = arith.mulf %561, %565 : vector<2x8xf32>
    %567 = vector.shape_cast %566 : vector<2x8xf32> to vector<2x1x8xf32>
    "tpu.trace_start"() <{level = 10 : i32, message = "bqs,bsh->bqh"}> : () -> ()
    %cst_171 = arith.constant dense<0.000000e+00> : vector<2x1x128xf32>
    %568 = tpu.matmul %567, %376, %cst_171 {dimension_numbers = #tpu.dot_dimension_numbers<[2], [1], [1], [2], [0, 0, 0, 1, 1, 2], [0], [0]>} : vector<2x1x8xf32>, vector<2x8x128xf32>, vector<2x1x128xf32> -> vector<2x1x128xf32>
    "tpu.trace_stop"() : () -> ()
    %569 = vector.shape_cast %568 : vector<2x1x128xf32> to vector<2x128xf32>
    %c3_172 = arith.constant 3 : index
    %c0_173 = arith.constant 0 : index
    %c0_174 = arith.constant 0 : index
    %570 = vector.load %arg1[%c3_172, %c0_173, %c0_174] : memref<8x2x128xf32, #tpu.memory_space<vmem>>, vector<1x2x128xf32>
    %571 = vector.shape_cast %570 : vector<1x2x128xf32> to vector<2x128xf32>
    %572 = tpu.concatenate %571, %569 in 1 : vector<2x128xf32>, vector<2x128xf32> -> vector<2x256xf32>
    %cst_175 = arith.constant dense<0.000000e+00> : vector<2x384xf32>
    %573 = tpu.matmul %572, %4, %cst_175 {dimension_numbers = #tpu.dot_dimension_numbers<[1], [0], [0], [1], [0, 0, 1, 1], [], []>} : vector<2x256xf32>, vector<256x384xf32>, vector<2x384xf32> -> vector<2x384xf32>
    %574 = vector.broadcast %6 : vector<1x384xf32> to vector<2x384xf32>
    %575 = arith.addf %573, %574 : vector<2x384xf32>
    %cst_176 = arith.constant dense<0.000000e+00> : vector<2x384xf32>
    %576 = tpu.matmul %548, %5, %cst_176 {dimension_numbers = #tpu.dot_dimension_numbers<[1], [0], [0], [1], [0, 0, 1, 1], [], []>} : vector<2x128xf32>, vector<128x384xf32>, vector<2x384xf32> -> vector<2x384xf32>
    %577 = vector.broadcast %7 : vector<1x384xf32> to vector<2x384xf32>
    %578 = arith.addf %576, %577 : vector<2x384xf32>
    %579 = vector.extract_strided_slice %575 {offsets = [0, 0], sizes = [2, 128], strides = [1, 1]} : vector<2x384xf32> to vector<2x128xf32>
    %580 = vector.extract_strided_slice %578 {offsets = [0, 0], sizes = [2, 128], strides = [1, 1]} : vector<2x384xf32> to vector<2x128xf32>
    %581 = arith.addf %579, %580 : vector<2x128xf32>
    %582 = arith.negf %581 : vector<2x128xf32>
    %583 = math.exp %582 : vector<2x128xf32>
    %cst_177 = arith.constant 1.000000e+00 : f32
    %584 = vector.broadcast %cst_177 : f32 to vector<2x128xf32>
    %585 = arith.addf %584, %583 : vector<2x128xf32>
    %586 = arith.divf %584, %585 : vector<2x128xf32>
    %587 = vector.extract_strided_slice %575 {offsets = [0, 128], sizes = [2, 128], strides = [1, 1]} : vector<2x384xf32> to vector<2x128xf32>
    %588 = vector.extract_strided_slice %578 {offsets = [0, 128], sizes = [2, 128], strides = [1, 1]} : vector<2x384xf32> to vector<2x128xf32>
    %589 = arith.addf %587, %588 : vector<2x128xf32>
    %590 = arith.negf %589 : vector<2x128xf32>
    %591 = math.exp %590 : vector<2x128xf32>
    %cst_178 = arith.constant 1.000000e+00 : f32
    %592 = vector.broadcast %cst_178 : f32 to vector<2x128xf32>
    %593 = arith.addf %592, %591 : vector<2x128xf32>
    %594 = arith.divf %592, %593 : vector<2x128xf32>
    %595 = vector.extract_strided_slice %575 {offsets = [0, 256], sizes = [2, 128], strides = [1, 1]} : vector<2x384xf32> to vector<2x128xf32>
    %596 = vector.extract_strided_slice %578 {offsets = [0, 256], sizes = [2, 128], strides = [1, 1]} : vector<2x384xf32> to vector<2x128xf32>
    %597 = arith.mulf %586, %596 : vector<2x128xf32>
    %598 = arith.addf %595, %597 : vector<2x128xf32>
    %599 = math.tanh %598 : vector<2x128xf32>
    %cst_179 = arith.constant 1.000000e+00 : f32
    %600 = vector.broadcast %cst_179 : f32 to vector<2x128xf32>
    %601 = arith.subf %600, %594 : vector<2x128xf32>
    %602 = arith.mulf %601, %599 : vector<2x128xf32>
    %603 = arith.mulf %594, %548 : vector<2x128xf32>
    %604 = arith.addf %602, %603 : vector<2x128xf32>
    %c6_180 = arith.constant 6 : index
    %c0_181 = arith.constant 0 : index
    %605 = vector.load %arg19[%c6_180, %c0_181] : memref<16x128xf32, #tpu.memory_space<vmem>>, vector<2x128xf32>
    tpu.vector_store %arg19[%c6_180, %c0_181], %604 {strides = array<i32>} : memref<16x128xf32, #tpu.memory_space<vmem>>, vector<2x128xf32>,
    %cst_182 = arith.constant dense<0.000000e+00> : vector<2x128xf32>
    %606 = tpu.matmul %604, %10, %cst_182 {dimension_numbers = #tpu.dot_dimension_numbers<[1], [0], [0], [1], [0, 0, 1, 1], [], []>} : vector<2x128xf32>, vector<128x128xf32>, vector<2x128xf32> -> vector<2x128xf32>
    %607 = vector.broadcast %11 : vector<1x128xf32> to vector<2x128xf32>
    %608 = arith.addf %606, %607 : vector<2x128xf32>
    %609 = vector.shape_cast %608 : vector<2x128xf32> to vector<2x1x128xf32>
    %610 = vector.broadcast %609 : vector<2x1x128xf32> to vector<2x8x128xf32>
    %611 = arith.mulf %381, %610 : vector<2x8x128xf32>
    %cst_183 = arith.constant dense<0.000000e+00> : vector<2x8xf32>
    %612 = vector.multi_reduction <add>, %611, %cst_183 [2] : vector<2x8x128xf32> to vector<2x8xf32>
    %cst_184 = arith.constant dense<0xFF800000> : vector<2xf32>
    %613 = vector.multi_reduction <maximumf>, %612, %cst_184 [1] : vector<2x8xf32> to vector<2xf32>
    %614 = vector.shape_cast %613 : vector<2xf32> to vector<2x1xf32>
    %615 = vector.broadcast %614 : vector<2x1xf32> to vector<2x8xf32>
    %616 = arith.subf %612, %615 : vector<2x8xf32>
    %617 = math.exp %616 : vector<2x8xf32>
    %cst_185 = arith.constant dense<0.000000e+00> : vector<2xf32>
    %618 = vector.multi_reduction <add>, %617, %cst_185 [1] : vector<2x8xf32> to vector<2xf32>
    %619 = vector.shape_cast %618 : vector<2xf32> to vector<2x1xf32>
    %620 = tpu.reciprocal %619 {approx = true} : vector<2x1xf32> -> vector<2x1xf32>
    %621 = vector.broadcast %620 : vector<2x1xf32> to vector<2x8xf32>
    %622 = arith.mulf %617, %621 : vector<2x8xf32>
    %623 = vector.shape_cast %622 : vector<2x8xf32> to vector<2x1x8xf32>
    "tpu.trace_start"() <{level = 10 : i32, message = "bqs,bsh->bqh"}> : () -> ()
    %cst_186 = arith.constant dense<0.000000e+00> : vector<2x1x128xf32>
    %624 = tpu.matmul %623, %376, %cst_186 {dimension_numbers = #tpu.dot_dimension_numbers<[2], [1], [1], [2], [0, 0, 0, 1, 1, 2], [0], [0]>} : vector<2x1x8xf32>, vector<2x8x128xf32>, vector<2x1x128xf32> -> vector<2x1x128xf32>
    "tpu.trace_stop"() : () -> ()
    %625 = vector.shape_cast %624 : vector<2x1x128xf32> to vector<2x128xf32>
    %c4_187 = arith.constant 4 : index
    %c0_188 = arith.constant 0 : index
    %c0_189 = arith.constant 0 : index
    %626 = vector.load %arg1[%c4_187, %c0_188, %c0_189] : memref<8x2x128xf32, #tpu.memory_space<vmem>>, vector<1x2x128xf32>
    %627 = vector.shape_cast %626 : vector<1x2x128xf32> to vector<2x128xf32>
    %628 = tpu.concatenate %627, %625 in 1 : vector<2x128xf32>, vector<2x128xf32> -> vector<2x256xf32>
    %cst_190 = arith.constant dense<0.000000e+00> : vector<2x384xf32>
    %629 = tpu.matmul %628, %4, %cst_190 {dimension_numbers = #tpu.dot_dimension_numbers<[1], [0], [0], [1], [0, 0, 1, 1], [], []>} : vector<2x256xf32>, vector<256x384xf32>, vector<2x384xf32> -> vector<2x384xf32>
    %630 = vector.broadcast %6 : vector<1x384xf32> to vector<2x384xf32>
    %631 = arith.addf %629, %630 : vector<2x384xf32>
    %cst_191 = arith.constant dense<0.000000e+00> : vector<2x384xf32>
    %632 = tpu.matmul %604, %5, %cst_191 {dimension_numbers = #tpu.dot_dimension_numbers<[1], [0], [0], [1], [0, 0, 1, 1], [], []>} : vector<2x128xf32>, vector<128x384xf32>, vector<2x384xf32> -> vector<2x384xf32>
    %633 = vector.broadcast %7 : vector<1x384xf32> to vector<2x384xf32>
    %634 = arith.addf %632, %633 : vector<2x384xf32>
    %635 = vector.extract_strided_slice %631 {offsets = [0, 0], sizes = [2, 128], strides = [1, 1]} : vector<2x384xf32> to vector<2x128xf32>
    %636 = vector.extract_strided_slice %634 {offsets = [0, 0], sizes = [2, 128], strides = [1, 1]} : vector<2x384xf32> to vector<2x128xf32>
    %637 = arith.addf %635, %636 : vector<2x128xf32>
    %638 = arith.negf %637 : vector<2x128xf32>
    %639 = math.exp %638 : vector<2x128xf32>
    %cst_192 = arith.constant 1.000000e+00 : f32
    %640 = vector.broadcast %cst_192 : f32 to vector<2x128xf32>
    %641 = arith.addf %640, %639 : vector<2x128xf32>
    %642 = arith.divf %640, %641 : vector<2x128xf32>
    %643 = vector.extract_strided_slice %631 {offsets = [0, 128], sizes = [2, 128], strides = [1, 1]} : vector<2x384xf32> to vector<2x128xf32>
    %644 = vector.extract_strided_slice %634 {offsets = [0, 128], sizes = [2, 128], strides = [1, 1]} : vector<2x384xf32> to vector<2x128xf32>
    %645 = arith.addf %643, %644 : vector<2x128xf32>
    %646 = arith.negf %645 : vector<2x128xf32>
    %647 = math.exp %646 : vector<2x128xf32>
    %cst_193 = arith.constant 1.000000e+00 : f32
    %648 = vector.broadcast %cst_193 : f32 to vector<2x128xf32>
    %649 = arith.addf %648, %647 : vector<2x128xf32>
    %650 = arith.divf %648, %649 : vector<2x128xf32>
    %651 = vector.extract_strided_slice %631 {offsets = [0, 256], sizes = [2, 128], strides = [1, 1]} : vector<2x384xf32> to vector<2x128xf32>
    %652 = vector.extract_strided_slice %634 {offsets = [0, 256], sizes = [2, 128], strides = [1, 1]} : vector<2x384xf32> to vector<2x128xf32>
    %653 = arith.mulf %642, %652 : vector<2x128xf32>
    %654 = arith.addf %651, %653 : vector<2x128xf32>
    %655 = math.tanh %654 : vector<2x128xf32>
    %cst_194 = arith.constant 1.000000e+00 : f32
    %656 = vector.broadcast %cst_194 : f32 to vector<2x128xf32>
    %657 = arith.subf %656, %650 : vector<2x128xf32>
    %658 = arith.mulf %657, %655 : vector<2x128xf32>
    %659 = arith.mulf %650, %604 : vector<2x128xf32>
    %660 = arith.addf %658, %659 : vector<2x128xf32>
    %c8 = arith.constant 8 : index
    %c0_195 = arith.constant 0 : index
    %661 = vector.load %arg19[%c8, %c0_195] : memref<16x128xf32, #tpu.memory_space<vmem>>, vector<2x128xf32>
    tpu.vector_store %arg19[%c8, %c0_195], %660 {strides = array<i32>} : memref<16x128xf32, #tpu.memory_space<vmem>>, vector<2x128xf32>,
    %cst_196 = arith.constant dense<0.000000e+00> : vector<2x128xf32>
    %662 = tpu.matmul %660, %10, %cst_196 {dimension_numbers = #tpu.dot_dimension_numbers<[1], [0], [0], [1], [0, 0, 1, 1], [], []>} : vector<2x128xf32>, vector<128x128xf32>, vector<2x128xf32> -> vector<2x128xf32>
    %663 = vector.broadcast %11 : vector<1x128xf32> to vector<2x128xf32>
    %664 = arith.addf %662, %663 : vector<2x128xf32>
    %665 = vector.shape_cast %664 : vector<2x128xf32> to vector<2x1x128xf32>
    %666 = vector.broadcast %665 : vector<2x1x128xf32> to vector<2x8x128xf32>
    %667 = arith.mulf %381, %666 : vector<2x8x128xf32>
    %cst_197 = arith.constant dense<0.000000e+00> : vector<2x8xf32>
    %668 = vector.multi_reduction <add>, %667, %cst_197 [2] : vector<2x8x128xf32> to vector<2x8xf32>
    %cst_198 = arith.constant dense<0xFF800000> : vector<2xf32>
    %669 = vector.multi_reduction <maximumf>, %668, %cst_198 [1] : vector<2x8xf32> to vector<2xf32>
    %670 = vector.shape_cast %669 : vector<2xf32> to vector<2x1xf32>
    %671 = vector.broadcast %670 : vector<2x1xf32> to vector<2x8xf32>
    %672 = arith.subf %668, %671 : vector<2x8xf32>
    %673 = math.exp %672 : vector<2x8xf32>
    %cst_199 = arith.constant dense<0.000000e+00> : vector<2xf32>
    %674 = vector.multi_reduction <add>, %673, %cst_199 [1] : vector<2x8xf32> to vector<2xf32>
    %675 = vector.shape_cast %674 : vector<2xf32> to vector<2x1xf32>
    %676 = tpu.reciprocal %675 {approx = true} : vector<2x1xf32> -> vector<2x1xf32>
    %677 = vector.broadcast %676 : vector<2x1xf32> to vector<2x8xf32>
    %678 = arith.mulf %673, %677 : vector<2x8xf32>
    %679 = vector.shape_cast %678 : vector<2x8xf32> to vector<2x1x8xf32>
    "tpu.trace_start"() <{level = 10 : i32, message = "bqs,bsh->bqh"}> : () -> ()
    %cst_200 = arith.constant dense<0.000000e+00> : vector<2x1x128xf32>
    %680 = tpu.matmul %679, %376, %cst_200 {dimension_numbers = #tpu.dot_dimension_numbers<[2], [1], [1], [2], [0, 0, 0, 1, 1, 2], [0], [0]>} : vector<2x1x8xf32>, vector<2x8x128xf32>, vector<2x1x128xf32> -> vector<2x1x128xf32>
    "tpu.trace_stop"() : () -> ()
    %681 = vector.shape_cast %680 : vector<2x1x128xf32> to vector<2x128xf32>
    %c5_201 = arith.constant 5 : index
    %c0_202 = arith.constant 0 : index
    %c0_203 = arith.constant 0 : index
    %682 = vector.load %arg1[%c5_201, %c0_202, %c0_203] : memref<8x2x128xf32, #tpu.memory_space<vmem>>, vector<1x2x128xf32>
    %683 = vector.shape_cast %682 : vector<1x2x128xf32> to vector<2x128xf32>
    %684 = tpu.concatenate %683, %681 in 1 : vector<2x128xf32>, vector<2x128xf32> -> vector<2x256xf32>
    %cst_204 = arith.constant dense<0.000000e+00> : vector<2x384xf32>
    %685 = tpu.matmul %684, %4, %cst_204 {dimension_numbers = #tpu.dot_dimension_numbers<[1], [0], [0], [1], [0, 0, 1, 1], [], []>} : vector<2x256xf32>, vector<256x384xf32>, vector<2x384xf32> -> vector<2x384xf32>
    %686 = vector.broadcast %6 : vector<1x384xf32> to vector<2x384xf32>
    %687 = arith.addf %685, %686 : vector<2x384xf32>
    %cst_205 = arith.constant dense<0.000000e+00> : vector<2x384xf32>
    %688 = tpu.matmul %660, %5, %cst_205 {dimension_numbers = #tpu.dot_dimension_numbers<[1], [0], [0], [1], [0, 0, 1, 1], [], []>} : vector<2x128xf32>, vector<128x384xf32>, vector<2x384xf32> -> vector<2x384xf32>
    %689 = vector.broadcast %7 : vector<1x384xf32> to vector<2x384xf32>
    %690 = arith.addf %688, %689 : vector<2x384xf32>
    %691 = vector.extract_strided_slice %687 {offsets = [0, 0], sizes = [2, 128], strides = [1, 1]} : vector<2x384xf32> to vector<2x128xf32>
    %692 = vector.extract_strided_slice %690 {offsets = [0, 0], sizes = [2, 128], strides = [1, 1]} : vector<2x384xf32> to vector<2x128xf32>
    %693 = arith.addf %691, %692 : vector<2x128xf32>
    %694 = arith.negf %693 : vector<2x128xf32>
    %695 = math.exp %694 : vector<2x128xf32>
    %cst_206 = arith.constant 1.000000e+00 : f32
    %696 = vector.broadcast %cst_206 : f32 to vector<2x128xf32>
    %697 = arith.addf %696, %695 : vector<2x128xf32>
    %698 = arith.divf %696, %697 : vector<2x128xf32>
    %699 = vector.extract_strided_slice %687 {offsets = [0, 128], sizes = [2, 128], strides = [1, 1]} : vector<2x384xf32> to vector<2x128xf32>
    %700 = vector.extract_strided_slice %690 {offsets = [0, 128], sizes = [2, 128], strides = [1, 1]} : vector<2x384xf32> to vector<2x128xf32>
    %701 = arith.addf %699, %700 : vector<2x128xf32>
    %702 = arith.negf %701 : vector<2x128xf32>
    %703 = math.exp %702 : vector<2x128xf32>
    %cst_207 = arith.constant 1.000000e+00 : f32
    %704 = vector.broadcast %cst_207 : f32 to vector<2x128xf32>
    %705 = arith.addf %704, %703 : vector<2x128xf32>
    %706 = arith.divf %704, %705 : vector<2x128xf32>
    %707 = vector.extract_strided_slice %687 {offsets = [0, 256], sizes = [2, 128], strides = [1, 1]} : vector<2x384xf32> to vector<2x128xf32>
    %708 = vector.extract_strided_slice %690 {offsets = [0, 256], sizes = [2, 128], strides = [1, 1]} : vector<2x384xf32> to vector<2x128xf32>
    %709 = arith.mulf %698, %708 : vector<2x128xf32>
    %710 = arith.addf %707, %709 : vector<2x128xf32>
    %711 = math.tanh %710 : vector<2x128xf32>
    %cst_208 = arith.constant 1.000000e+00 : f32
    %712 = vector.broadcast %cst_208 : f32 to vector<2x128xf32>
    %713 = arith.subf %712, %706 : vector<2x128xf32>
    %714 = arith.mulf %713, %711 : vector<2x128xf32>
    %715 = arith.mulf %706, %660 : vector<2x128xf32>
    %716 = arith.addf %714, %715 : vector<2x128xf32>
    %c10 = arith.constant 10 : index
    %c0_209 = arith.constant 0 : index
    %717 = vector.load %arg19[%c10, %c0_209] : memref<16x128xf32, #tpu.memory_space<vmem>>, vector<2x128xf32>
    tpu.vector_store %arg19[%c10, %c0_209], %716 {strides = array<i32>} : memref<16x128xf32, #tpu.memory_space<vmem>>, vector<2x128xf32>,
    %cst_210 = arith.constant dense<0.000000e+00> : vector<2x128xf32>
    %718 = tpu.matmul %716, %10, %cst_210 {dimension_numbers = #tpu.dot_dimension_numbers<[1], [0], [0], [1], [0, 0, 1, 1], [], []>} : vector<2x128xf32>, vector<128x128xf32>, vector<2x128xf32> -> vector<2x128xf32>
    %719 = vector.broadcast %11 : vector<1x128xf32> to vector<2x128xf32>
    %720 = arith.addf %718, %719 : vector<2x128xf32>
    %721 = vector.shape_cast %720 : vector<2x128xf32> to vector<2x1x128xf32>
    %722 = vector.broadcast %721 : vector<2x1x128xf32> to vector<2x8x128xf32>
    %723 = arith.mulf %381, %722 : vector<2x8x128xf32>
    %cst_211 = arith.constant dense<0.000000e+00> : vector<2x8xf32>
    %724 = vector.multi_reduction <add>, %723, %cst_211 [2] : vector<2x8x128xf32> to vector<2x8xf32>
    %cst_212 = arith.constant dense<0xFF800000> : vector<2xf32>
    %725 = vector.multi_reduction <maximumf>, %724, %cst_212 [1] : vector<2x8xf32> to vector<2xf32>
    %726 = vector.shape_cast %725 : vector<2xf32> to vector<2x1xf32>
    %727 = vector.broadcast %726 : vector<2x1xf32> to vector<2x8xf32>
    %728 = arith.subf %724, %727 : vector<2x8xf32>
    %729 = math.exp %728 : vector<2x8xf32>
    %cst_213 = arith.constant dense<0.000000e+00> : vector<2xf32>
    %730 = vector.multi_reduction <add>, %729, %cst_213 [1] : vector<2x8xf32> to vector<2xf32>
    %731 = vector.shape_cast %730 : vector<2xf32> to vector<2x1xf32>
    %732 = tpu.reciprocal %731 {approx = true} : vector<2x1xf32> -> vector<2x1xf32>
    %733 = vector.broadcast %732 : vector<2x1xf32> to vector<2x8xf32>
    %734 = arith.mulf %729, %733 : vector<2x8xf32>
    %735 = vector.shape_cast %734 : vector<2x8xf32> to vector<2x1x8xf32>
    "tpu.trace_start"() <{level = 10 : i32, message = "bqs,bsh->bqh"}> : () -> ()
    %cst_214 = arith.constant dense<0.000000e+00> : vector<2x1x128xf32>
    %736 = tpu.matmul %735, %376, %cst_214 {dimension_numbers = #tpu.dot_dimension_numbers<[2], [1], [1], [2], [0, 0, 0, 1, 1, 2], [0], [0]>} : vector<2x1x8xf32>, vector<2x8x128xf32>, vector<2x1x128xf32> -> vector<2x1x128xf32>
    "tpu.trace_stop"() : () -> ()
    %737 = vector.shape_cast %736 : vector<2x1x128xf32> to vector<2x128xf32>
    %c6_215 = arith.constant 6 : index
    %c0_216 = arith.constant 0 : index
    %c0_217 = arith.constant 0 : index
    %738 = vector.load %arg1[%c6_215, %c0_216, %c0_217] : memref<8x2x128xf32, #tpu.memory_space<vmem>>, vector<1x2x128xf32>
    %739 = vector.shape_cast %738 : vector<1x2x128xf32> to vector<2x128xf32>
    %740 = tpu.concatenate %739, %737 in 1 : vector<2x128xf32>, vector<2x128xf32> -> vector<2x256xf32>
    %cst_218 = arith.constant dense<0.000000e+00> : vector<2x384xf32>
    %741 = tpu.matmul %740, %4, %cst_218 {dimension_numbers = #tpu.dot_dimension_numbers<[1], [0], [0], [1], [0, 0, 1, 1], [], []>} : vector<2x256xf32>, vector<256x384xf32>, vector<2x384xf32> -> vector<2x384xf32>
    %742 = vector.broadcast %6 : vector<1x384xf32> to vector<2x384xf32>
    %743 = arith.addf %741, %742 : vector<2x384xf32>
    %cst_219 = arith.constant dense<0.000000e+00> : vector<2x384xf32>
    %744 = tpu.matmul %716, %5, %cst_219 {dimension_numbers = #tpu.dot_dimension_numbers<[1], [0], [0], [1], [0, 0, 1, 1], [], []>} : vector<2x128xf32>, vector<128x384xf32>, vector<2x384xf32> -> vector<2x384xf32>
    %745 = vector.broadcast %7 : vector<1x384xf32> to vector<2x384xf32>
    %746 = arith.addf %744, %745 : vector<2x384xf32>
    %747 = vector.extract_strided_slice %743 {offsets = [0, 0], sizes = [2, 128], strides = [1, 1]} : vector<2x384xf32> to vector<2x128xf32>
    %748 = vector.extract_strided_slice %746 {offsets = [0, 0], sizes = [2, 128], strides = [1, 1]} : vector<2x384xf32> to vector<2x128xf32>
    %749 = arith.addf %747, %748 : vector<2x128xf32>
    %750 = arith.negf %749 : vector<2x128xf32>
    %751 = math.exp %750 : vector<2x128xf32>
    %cst_220 = arith.constant 1.000000e+00 : f32
    %752 = vector.broadcast %cst_220 : f32 to vector<2x128xf32>
    %753 = arith.addf %752, %751 : vector<2x128xf32>
    %754 = arith.divf %752, %753 : vector<2x128xf32>
    %755 = vector.extract_strided_slice %743 {offsets = [0, 128], sizes = [2, 128], strides = [1, 1]} : vector<2x384xf32> to vector<2x128xf32>
    %756 = vector.extract_strided_slice %746 {offsets = [0, 128], sizes = [2, 128], strides = [1, 1]} : vector<2x384xf32> to vector<2x128xf32>
    %757 = arith.addf %755, %756 : vector<2x128xf32>
    %758 = arith.negf %757 : vector<2x128xf32>
    %759 = math.exp %758 : vector<2x128xf32>
    %cst_221 = arith.constant 1.000000e+00 : f32
    %760 = vector.broadcast %cst_221 : f32 to vector<2x128xf32>
    %761 = arith.addf %760, %759 : vector<2x128xf32>
    %762 = arith.divf %760, %761 : vector<2x128xf32>
    %763 = vector.extract_strided_slice %743 {offsets = [0, 256], sizes = [2, 128], strides = [1, 1]} : vector<2x384xf32> to vector<2x128xf32>
    %764 = vector.extract_strided_slice %746 {offsets = [0, 256], sizes = [2, 128], strides = [1, 1]} : vector<2x384xf32> to vector<2x128xf32>
    %765 = arith.mulf %754, %764 : vector<2x128xf32>
    %766 = arith.addf %763, %765 : vector<2x128xf32>
    %767 = math.tanh %766 : vector<2x128xf32>
    %cst_222 = arith.constant 1.000000e+00 : f32
    %768 = vector.broadcast %cst_222 : f32 to vector<2x128xf32>
    %769 = arith.subf %768, %762 : vector<2x128xf32>
    %770 = arith.mulf %769, %767 : vector<2x128xf32>
    %771 = arith.mulf %762, %716 : vector<2x128xf32>
    %772 = arith.addf %770, %771 : vector<2x128xf32>
    %c12 = arith.constant 12 : index
    %c0_223 = arith.constant 0 : index
    %773 = vector.load %arg19[%c12, %c0_223] : memref<16x128xf32, #tpu.memory_space<vmem>>, vector<2x128xf32>
    tpu.vector_store %arg19[%c12, %c0_223], %772 {strides = array<i32>} : memref<16x128xf32, #tpu.memory_space<vmem>>, vector<2x128xf32>,
    %cst_224 = arith.constant dense<0.000000e+00> : vector<2x128xf32>
    %774 = tpu.matmul %772, %10, %cst_224 {dimension_numbers = #tpu.dot_dimension_numbers<[1], [0], [0], [1], [0, 0, 1, 1], [], []>} : vector<2x128xf32>, vector<128x128xf32>, vector<2x128xf32> -> vector<2x128xf32>
    %775 = vector.broadcast %11 : vector<1x128xf32> to vector<2x128xf32>
    %776 = arith.addf %774, %775 : vector<2x128xf32>
    %777 = vector.shape_cast %776 : vector<2x128xf32> to vector<2x1x128xf32>
    %778 = vector.broadcast %777 : vector<2x1x128xf32> to vector<2x8x128xf32>
    %779 = arith.mulf %381, %778 : vector<2x8x128xf32>
    %cst_225 = arith.constant dense<0.000000e+00> : vector<2x8xf32>
    %780 = vector.multi_reduction <add>, %779, %cst_225 [2] : vector<2x8x128xf32> to vector<2x8xf32>
    %cst_226 = arith.constant dense<0xFF800000> : vector<2xf32>
    %781 = vector.multi_reduction <maximumf>, %780, %cst_226 [1] : vector<2x8xf32> to vector<2xf32>
    %782 = vector.shape_cast %781 : vector<2xf32> to vector<2x1xf32>
    %783 = vector.broadcast %782 : vector<2x1xf32> to vector<2x8xf32>
    %784 = arith.subf %780, %783 : vector<2x8xf32>
    %785 = math.exp %784 : vector<2x8xf32>
    %cst_227 = arith.constant dense<0.000000e+00> : vector<2xf32>
    %786 = vector.multi_reduction <add>, %785, %cst_227 [1] : vector<2x8xf32> to vector<2xf32>
    %787 = vector.shape_cast %786 : vector<2xf32> to vector<2x1xf32>
    %788 = tpu.reciprocal %787 {approx = true} : vector<2x1xf32> -> vector<2x1xf32>
    %789 = vector.broadcast %788 : vector<2x1xf32> to vector<2x8xf32>
    %790 = arith.mulf %785, %789 : vector<2x8xf32>
    %791 = vector.shape_cast %790 : vector<2x8xf32> to vector<2x1x8xf32>
    "tpu.trace_start"() <{level = 10 : i32, message = "bqs,bsh->bqh"}> : () -> ()
    %cst_228 = arith.constant dense<0.000000e+00> : vector<2x1x128xf32>
    %792 = tpu.matmul %791, %376, %cst_228 {dimension_numbers = #tpu.dot_dimension_numbers<[2], [1], [1], [2], [0, 0, 0, 1, 1, 2], [0], [0]>} : vector<2x1x8xf32>, vector<2x8x128xf32>, vector<2x1x128xf32> -> vector<2x1x128xf32>
    "tpu.trace_stop"() : () -> ()
    %793 = vector.shape_cast %792 : vector<2x1x128xf32> to vector<2x128xf32>
    %c7_229 = arith.constant 7 : index
    %c0_230 = arith.constant 0 : index
    %c0_231 = arith.constant 0 : index
    %794 = vector.load %arg1[%c7_229, %c0_230, %c0_231] : memref<8x2x128xf32, #tpu.memory_space<vmem>>, vector<1x2x128xf32>
    %795 = vector.shape_cast %794 : vector<1x2x128xf32> to vector<2x128xf32>
    %796 = tpu.concatenate %795, %793 in 1 : vector<2x128xf32>, vector<2x128xf32> -> vector<2x256xf32>
    %cst_232 = arith.constant dense<0.000000e+00> : vector<2x384xf32>
    %797 = tpu.matmul %796, %4, %cst_232 {dimension_numbers = #tpu.dot_dimension_numbers<[1], [0], [0], [1], [0, 0, 1, 1], [], []>} : vector<2x256xf32>, vector<256x384xf32>, vector<2x384xf32> -> vector<2x384xf32>
    %798 = vector.broadcast %6 : vector<1x384xf32> to vector<2x384xf32>
    %799 = arith.addf %797, %798 : vector<2x384xf32>
    %cst_233 = arith.constant dense<0.000000e+00> : vector<2x384xf32>
    %800 = tpu.matmul %772, %5, %cst_233 {dimension_numbers = #tpu.dot_dimension_numbers<[1], [0], [0], [1], [0, 0, 1, 1], [], []>} : vector<2x128xf32>, vector<128x384xf32>, vector<2x384xf32> -> vector<2x384xf32>
    %801 = vector.broadcast %7 : vector<1x384xf32> to vector<2x384xf32>
    %802 = arith.addf %800, %801 : vector<2x384xf32>
    %803 = vector.extract_strided_slice %799 {offsets = [0, 0], sizes = [2, 128], strides = [1, 1]} : vector<2x384xf32> to vector<2x128xf32>
    %804 = vector.extract_strided_slice %802 {offsets = [0, 0], sizes = [2, 128], strides = [1, 1]} : vector<2x384xf32> to vector<2x128xf32>
    %805 = arith.addf %803, %804 : vector<2x128xf32>
    %806 = arith.negf %805 : vector<2x128xf32>
    %807 = math.exp %806 : vector<2x128xf32>
    %cst_234 = arith.constant 1.000000e+00 : f32
    %808 = vector.broadcast %cst_234 : f32 to vector<2x128xf32>
    %809 = arith.addf %808, %807 : vector<2x128xf32>
    %810 = arith.divf %808, %809 : vector<2x128xf32>
    %811 = vector.extract_strided_slice %799 {offsets = [0, 128], sizes = [2, 128], strides = [1, 1]} : vector<2x384xf32> to vector<2x128xf32>
    %812 = vector.extract_strided_slice %802 {offsets = [0, 128], sizes = [2, 128], strides = [1, 1]} : vector<2x384xf32> to vector<2x128xf32>
    %813 = arith.addf %811, %812 : vector<2x128xf32>
    %814 = arith.negf %813 : vector<2x128xf32>
    %815 = math.exp %814 : vector<2x128xf32>
    %cst_235 = arith.constant 1.000000e+00 : f32
    %816 = vector.broadcast %cst_235 : f32 to vector<2x128xf32>
    %817 = arith.addf %816, %815 : vector<2x128xf32>
    %818 = arith.divf %816, %817 : vector<2x128xf32>
    %819 = vector.extract_strided_slice %799 {offsets = [0, 256], sizes = [2, 128], strides = [1, 1]} : vector<2x384xf32> to vector<2x128xf32>
    %820 = vector.extract_strided_slice %802 {offsets = [0, 256], sizes = [2, 128], strides = [1, 1]} : vector<2x384xf32> to vector<2x128xf32>
    %821 = arith.mulf %810, %820 : vector<2x128xf32>
    %822 = arith.addf %819, %821 : vector<2x128xf32>
    %823 = math.tanh %822 : vector<2x128xf32>
    %cst_236 = arith.constant 1.000000e+00 : f32
    %824 = vector.broadcast %cst_236 : f32 to vector<2x128xf32>
    %825 = arith.subf %824, %818 : vector<2x128xf32>
    %826 = arith.mulf %825, %823 : vector<2x128xf32>
    %827 = arith.mulf %818, %772 : vector<2x128xf32>
    %828 = arith.addf %826, %827 : vector<2x128xf32>
    %c14 = arith.constant 14 : index
    %c0_237 = arith.constant 0 : index
    %829 = vector.load %arg19[%c14, %c0_237] : memref<16x128xf32, #tpu.memory_space<vmem>>, vector<2x128xf32>
    tpu.vector_store %arg19[%c14, %c0_237], %828 {strides = array<i32>} : memref<16x128xf32, #tpu.memory_space<vmem>>, vector<2x128xf32>,
    %c0_238 = arith.constant 0 : index
    %c0_239 = arith.constant 0 : index
    %830 = vector.load %arg19[%c0_238, %c0_239] : memref<16x128xf32, #tpu.memory_space<vmem>>, vector<16x128xf32>
    %cst_240 = arith.constant dense<0.000000e+00> : vector<16x128xf32>
    %831 = tpu.matmul %830, %12, %cst_240 {dimension_numbers = #tpu.dot_dimension_numbers<[1], [0], [0], [1], [0, 0, 1, 1], [], []>} : vector<16x128xf32>, vector<128x128xf32>, vector<16x128xf32> -> vector<16x128xf32>
    %832 = vector.broadcast %13 : vector<1x128xf32> to vector<16x128xf32>
    %833 = arith.addf %831, %832 : vector<16x128xf32>
    %c0_241 = arith.constant 0 : index
    %c0_242 = arith.constant 0 : index
    %834 = vector.load %arg17[%c0_241, %c0_242] : memref<16x128xf32, #tpu.memory_space<vmem>>, vector<16x128xf32>
    tpu.vector_store %arg17[%c0_241, %c0_242], %833 {strides = array<i32>} : memref<16x128xf32, #tpu.memory_space<vmem>>, vector<16x128xf32>,
    return
  }
}

</mosaic_0001>

<llo_original>
// kernel: tpu_custom_call.1
$region0: #{tpu_custom_call.1}
  #allocation0 [shape = 'u32[]', space=smem, size = 0x4, offset = 0x4, fixed_abs, tag = 'smem constant byte address 0x4 - core index']
  #allocation1 [shape = 'u32[144,128]{1,0:T(1,128)}', space=vmem, size = 0x12000, scoped, tag = 'internal scratch']
  #allocation2 [shape = 'f32[2,8,128]{2,1,0:T(8,128)}', space=vmem, size = 0x2000, scoped, tag = 'scratch operand']
  #allocation3 [shape = 'f32[16,128]{1,0:T(8,128)}', space=vmem, size = 0x2000, scoped, tag = 'scratch operand']
  %s0 = inlined_call_operand.hbm [shape: f32[8,2,128], index: 0, kind: input, shape index: {}]
  %s1 = inlined_call_operand.hbm [shape: f32[8,2,128], index: 1, kind: input, shape index: {}]
  %s2 = inlined_call_operand.vmem [shape: s32[2,1], index: 2, kind: input, shape index: {}]
  %s3 = inlined_call_operand.hbm [shape: f32[128,384], index: 3, kind: input, shape index: {}]
  %s4 = inlined_call_operand.hbm [shape: f32[128,384], index: 4, kind: input, shape index: {}]
  %s5 = inlined_call_operand.vmem [shape: f32[1,384], index: 5, kind: input, shape index: {}]
  %s6 = inlined_call_operand.vmem [shape: f32[1,384], index: 6, kind: input, shape index: {}]
  %s7 = inlined_call_operand.hbm [shape: f32[256,384], index: 7, kind: input, shape index: {}]
  %s8 = inlined_call_operand.hbm [shape: f32[128,384], index: 8, kind: input, shape index: {}]
  %s9 = inlined_call_operand.vmem [shape: f32[1,384], index: 9, kind: input, shape index: {}]
  %s10 = inlined_call_operand.vmem [shape: f32[1,384], index: 10, kind: input, shape index: {}]
  %s11 = inlined_call_operand.hbm [shape: f32[128,128], index: 11, kind: input, shape index: {}]
  %s12 = inlined_call_operand.vmem [shape: f32[1,128], index: 12, kind: input, shape index: {}]
  %s13 = inlined_call_operand.hbm [shape: f32[128,128], index: 13, kind: input, shape index: {}]
  %s14 = inlined_call_operand.vmem [shape: f32[1,128], index: 14, kind: input, shape index: {}]
  %s15 = inlined_call_operand.hbm [shape: f32[128,128], index: 15, kind: input, shape index: {}]
  %s16 = inlined_call_operand.vmem [shape: f32[1,128], index: 16, kind: input, shape index: {}]
  %s17 = inlined_call_operand.hbm [shape: f32[16,128], index: 17, kind: output, shape index: {}]
  %s18 = sld [smem:[#allocation0]]
  $region114: #{tpu_custom_call.1} parent=0
    _
  %s20 = ssub.s32 1, %s18
  %s21 = scalar_select 0, %s20, %s18
  $region1: #{tpu_custom_call.1} parent=0
    #allocation4 [shape = 'u8[8192]{0}', space=vmem, size = 0x2000, scoped, tag = 'input window, operand 0, single buffered']
    #allocation5 [shape = 's32[1]{0}', space=sflag, size = 0x4, scoped, tag = 'scoped memory for tpu_custom_call.1']
    #allocation6 [shape = 's32[1]{0}', space=sflag, size = 0x4, scoped, tag = 'scoped memory for tpu_custom_call.1']
    #allocation7 [shape = 'u8[8192]{0}', space=vmem, size = 0x2000, scoped, tag = 'input window, operand 1, single buffered']
    #allocation8 [shape = 's32[1]{0}', space=sflag, size = 0x4, scoped, tag = 'scoped memory for tpu_custom_call.1']
    #allocation9 [shape = 'u8[196608]{0}', space=vmem, size = 0x30000, scoped, tag = 'input window, operand 3, single buffered']
    #allocation10 [shape = 'u8[196608]{0}', space=vmem, size = 0x30000, scoped, tag = 'input window, operand 4, single buffered']
    #allocation11 [shape = 's32[1]{0}', space=sflag, size = 0x4, scoped, tag = 'scoped memory for tpu_custom_call.1']
    #allocation12 [shape = 'u8[393216]{0}', space=vmem, size = 0x60000, scoped, tag = 'input window, operand 7, single buffered']
    #allocation13 [shape = 'u8[196608]{0}', space=vmem, size = 0x30000, scoped, tag = 'input window, operand 8, single buffered']
    #allocation14 [shape = 's32[1]{0}', space=sflag, size = 0x4, scoped, tag = 'scoped memory for tpu_custom_call.1']
    #allocation15 [shape = 'u8[65536]{0}', space=vmem, size = 0x10000, scoped, tag = 'input window, operand 11, single buffered']
    #allocation16 [shape = 'u8[65536]{0}', space=vmem, size = 0x10000, scoped, tag = 'input window, operand 13, single buffered']
    #allocation17 [shape = 's32[1]{0}', space=sflag, size = 0x4, scoped, tag = 'scoped memory for tpu_custom_call.1']
    #allocation18 [shape = 'u8[65536]{0}', space=vmem, size = 0x10000, scoped, tag = 'input window, operand 15, single buffered']
    #allocation19 [shape = 'u8[8192]{0}', space=vmem, size = 0x2000, scoped, tag = 'output window, operand 0, single buffered']
    %22 = vsyncpa [#allocation5], 0
    %23 = vsyncpa [#allocation8], 0
    %24 = vsyncpa [#allocation11], 0
    %25 = vsyncpa [#allocation14], 0
    %26 = vsyncpa [#allocation17], 0
    %27 = vsyncpa [#allocation6], 0
    // Predicated region
    $region2: #{tpu_custom_call.1} parent=1 // pred_check
      _
    $region3: #{tpu_custom_call.1} parent=1 // pred_check_branch
      %29 = sbr.rel (0) target = $region5
    $region4: #{tpu_custom_call.1} parent=1 // pred_region
      %s31 = ssub.s32 256, 256
      %32 = vsyncadd [#allocation5], %s31
      %s33 = sshll.u32 [#allocation4], 4
      %s34 = int_to_ptr.vmem [resolvable:$true] %s33
      %39 = dma.hbm_to_vmem [thread:$0]  %s0, 256, %s34, [#allocation5], 32, 32, 2
    $region5: #{tpu_custom_call.1} parent=1 // pred_fallthru
      _
    // Predicated region
    $region6: #{tpu_custom_call.1} parent=1 // pred_check
      _
    $region7: #{tpu_custom_call.1} parent=1 // pred_check_branch
      %41 = sbr.rel (0) target = $region9
    $region8: #{tpu_custom_call.1} parent=1 // pred_region
      %s43 = ssub.s32 256, 256
      %44 = vsyncadd [#allocation8], %s43
      %s45 = sshll.u32 [#allocation7], 4
      %s46 = int_to_ptr.vmem [resolvable:$true] %s45
      %51 = dma.hbm_to_vmem [thread:$0]  %s1, 256, %s46, [#allocation8], 32, 32, 2
    $region9: #{tpu_custom_call.1} parent=1 // pred_fallthru
      _
    // Predicated region
    $region10: #{tpu_custom_call.1} parent=1 // pred_check
      _
    $region11: #{tpu_custom_call.1} parent=1 // pred_check_branch
      %53 = sbr.rel (0) target = $region13
    $region12: #{tpu_custom_call.1} parent=1 // pred_region
      _
    $region13: #{tpu_custom_call.1} parent=1 // pred_fallthru
      _
    // Predicated region
    $region14: #{tpu_custom_call.1} parent=1 // pred_check
      _
    $region15: #{tpu_custom_call.1} parent=1 // pred_check_branch
      %55 = sbr.rel (0) target = $region17
    $region16: #{tpu_custom_call.1} parent=1 // pred_region
      %s57 = ssub.s32 6144, 6144
      %58 = vsyncadd [#allocation8], %s57
      %s59 = sshll.u32 [#allocation9], 4
      %s60 = int_to_ptr.vmem [resolvable:$true] %s59
      %65 = dma.hbm_to_vmem [thread:$0]  %s3, 6144, %s60, [#allocation8], 384, 384, 24
    $region17: #{tpu_custom_call.1} parent=1 // pred_fallthru
      _
    // Predicated region
    $region18: #{tpu_custom_call.1} parent=1 // pred_check
      _
    $region19: #{tpu_custom_call.1} parent=1 // pred_check_branch
      %67 = sbr.rel (0) target = $region21
    $region20: #{tpu_custom_call.1} parent=1 // pred_region
      %s69 = ssub.s32 6144, 6144
      %70 = vsyncadd [#allocation11], %s69
      %s71 = sshll.u32 [#allocation10], 4
      %s72 = int_to_ptr.vmem [resolvable:$true] %s71
      %77 = dma.hbm_to_vmem [thread:$0]  %s4, 6144, %s72, [#allocation11], 384, 384, 24
    $region21: #{tpu_custom_call.1} parent=1 // pred_fallthru
      _
    // Predicated region
    $region22: #{tpu_custom_call.1} parent=1 // pred_check
      _
    $region23: #{tpu_custom_call.1} parent=1 // pred_check_branch
      %79 = sbr.rel (0) target = $region25
    $region24: #{tpu_custom_call.1} parent=1 // pred_region
      _
    $region25: #{tpu_custom_call.1} parent=1 // pred_fallthru
      _
    // Predicated region
    $region26: #{tpu_custom_call.1} parent=1 // pred_check
      _
    $region27: #{tpu_custom_call.1} parent=1 // pred_check_branch
      %81 = sbr.rel (0) target = $region29
    $region28: #{tpu_custom_call.1} parent=1 // pred_region
      _
    $region29: #{tpu_custom_call.1} parent=1 // pred_fallthru
      _
    // Predicated region
    $region30: #{tpu_custom_call.1} parent=1 // pred_check
      _
    $region31: #{tpu_custom_call.1} parent=1 // pred_check_branch
      %83 = sbr.rel (0) target = $region33
    $region32: #{tpu_custom_call.1} parent=1 // pred_region
      %s85 = ssub.s32 12288, 12288
      %86 = vsyncadd [#allocation11], %s85
      %s87 = sshll.u32 [#allocation12], 4
      %s88 = int_to_ptr.vmem [resolvable:$true] %s87
      %93 = dma.hbm_to_vmem [thread:$0]  %s7, 12288, %s88, [#allocation11], 384, 384, 24
    $region33: #{tpu_custom_call.1} parent=1 // pred_fallthru
      _
    // Predicated region
    $region34: #{tpu_custom_call.1} parent=1 // pred_check
      _
    $region35: #{tpu_custom_call.1} parent=1 // pred_check_branch
      %95 = sbr.rel (0) target = $region37
    $region36: #{tpu_custom_call.1} parent=1 // pred_region
      %s97 = ssub.s32 6144, 6144
      %98 = vsyncadd [#allocation14], %s97
      %s99 = sshll.u32 [#allocation13], 4
      %s100 = int_to_ptr.vmem [resolvable:$true] %s99
      %105 = dma.hbm_to_vmem [thread:$0]  %s8, 6144, %s100, [#allocation14], 384, 384, 24
    $region37: #{tpu_custom_call.1} parent=1 // pred_fallthru
      _
    // Predicated region
    $region38: #{tpu_custom_call.1} parent=1 // pred_check
      _
    $region39: #{tpu_custom_call.1} parent=1 // pred_check_branch
      %107 = sbr.rel (0) target = $region41
    $region40: #{tpu_custom_call.1} parent=1 // pred_region
      _
    $region41: #{tpu_custom_call.1} parent=1 // pred_fallthru
      _
    // Predicated region
    $region42: #{tpu_custom_call.1} parent=1 // pred_check
      _
    $region43: #{tpu_custom_call.1} parent=1 // pred_check_branch
      %109 = sbr.rel (0) target = $region45
    $region44: #{tpu_custom_call.1} parent=1 // pred_region
      _
    $region45: #{tpu_custom_call.1} parent=1 // pred_fallthru
      _
    // Predicated region
    $region46: #{tpu_custom_call.1} parent=1 // pred_check
      _
    $region47: #{tpu_custom_call.1} parent=1 // pred_check_branch
      %111 = sbr.rel (0) target = $region49
    $region48: #{tpu_custom_call.1} parent=1 // pred_region
      %s113 = ssub.s32 2048, 2048
      %114 = vsyncadd [#allocation14], %s113
      %s115 = sshll.u32 [#allocation15], 4
      %s116 = int_to_ptr.vmem [resolvable:$true] %s115
      %121 = dma.hbm_to_vmem [thread:$0]  %s11, 2048, %s116, [#allocation14], 128, 128, 8
    $region49: #{tpu_custom_call.1} parent=1 // pred_fallthru
      _
    // Predicated region
    $region50: #{tpu_custom_call.1} parent=1 // pred_check
      _
    $region51: #{tpu_custom_call.1} parent=1 // pred_check_branch
      %123 = sbr.rel (0) target = $region53
    $region52: #{tpu_custom_call.1} parent=1 // pred_region
      _
    $region53: #{tpu_custom_call.1} parent=1 // pred_fallthru
      _
    // Predicated region
    $region54: #{tpu_custom_call.1} parent=1 // pred_check
      _
    $region55: #{tpu_custom_call.1} parent=1 // pred_check_branch
      %125 = sbr.rel (0) target = $region57
    $region56: #{tpu_custom_call.1} parent=1 // pred_region
      %s127 = ssub.s32 2048, 2048
      %128 = vsyncadd [#allocation17], %s127
      %s129 = sshll.u32 [#allocation16], 4
      %s130 = int_to_ptr.vmem [resolvable:$true] %s129
      %135 = dma.hbm_to_vmem [thread:$0]  %s13, 2048, %s130, [#allocation17], 128, 128, 8
    $region57: #{tpu_custom_call.1} parent=1 // pred_fallthru
      _
    // Predicated region
    $region58: #{tpu_custom_call.1} parent=1 // pred_check
      _
    $region59: #{tpu_custom_call.1} parent=1 // pred_check_branch
      %137 = sbr.rel (0) target = $region61
    $region60: #{tpu_custom_call.1} parent=1 // pred_region
      _
    $region61: #{tpu_custom_call.1} parent=1 // pred_fallthru
      _
    // Predicated region
    $region62: #{tpu_custom_call.1} parent=1 // pred_check
      _
    $region63: #{tpu_custom_call.1} parent=1 // pred_check_branch
      %139 = sbr.rel (0) target = $region65
    $region64: #{tpu_custom_call.1} parent=1 // pred_region
      %s141 = ssub.s32 2048, 2048
      %142 = vsyncadd [#allocation17], %s141
      %s143 = sshll.u32 [#allocation18], 4
      %s144 = int_to_ptr.vmem [resolvable:$true] %s143
      %149 = dma.hbm_to_vmem [thread:$0]  %s15, 2048, %s144, [#allocation17], 128, 128, 8
    $region65: #{tpu_custom_call.1} parent=1 // pred_fallthru
      _
    // Predicated region
    $region66: #{tpu_custom_call.1} parent=1 // pred_check
      _
    $region67: #{tpu_custom_call.1} parent=1 // pred_check_branch
      %151 = sbr.rel (0) target = $region69
    $region68: #{tpu_custom_call.1} parent=1 // pred_region
      _
    $region69: #{tpu_custom_call.1} parent=1 // pred_fallthru
      _
    // Predicated region
    $region70: #{tpu_custom_call.1} parent=1 // pred_check
      _
    $region71: #{tpu_custom_call.1} parent=1 // pred_check_branch
      %153 = sbr.rel (0) target = $region73
    $region72: #{tpu_custom_call.1} parent=1 // pred_region
      %154 = dma.done [#allocation5], 256
    $region73: #{tpu_custom_call.1} parent=1 // pred_fallthru
      _
    // Predicated region
    $region74: #{tpu_custom_call.1} parent=1 // pred_check
      _
    $region75: #{tpu_custom_call.1} parent=1 // pred_check_branch
      %156 = sbr.rel (0) target = $region77
    $region76: #{tpu_custom_call.1} parent=1 // pred_region
      %157 = dma.done [#allocation8], 256
    $region77: #{tpu_custom_call.1} parent=1 // pred_fallthru
      _
    // Predicated region
    $region78: #{tpu_custom_call.1} parent=1 // pred_check
      _
    $region79: #{tpu_custom_call.1} parent=1 // pred_check_branch
      %159 = sbr.rel (0) target = $region81
    $region80: #{tpu_custom_call.1} parent=1 // pred_region
      %160 = dma.done [#allocation8], 6144
    $region81: #{tpu_custom_call.1} parent=1 // pred_fallthru
      _
    // Predicated region
    $region82: #{tpu_custom_call.1} parent=1 // pred_check
      _
    $region83: #{tpu_custom_call.1} parent=1 // pred_check_branch
      %162 = sbr.rel (0) target = $region85
    $region84: #{tpu_custom_call.1} parent=1 // pred_region
      %163 = dma.done [#allocation11], 6144
    $region85: #{tpu_custom_call.1} parent=1 // pred_fallthru
      _
    // Predicated region
    $region86: #{tpu_custom_call.1} parent=1 // pred_check
      _
    $region87: #{tpu_custom_call.1} parent=1 // pred_check_branch
      %165 = sbr.rel (0) target = $region89
    $region88: #{tpu_custom_call.1} parent=1 // pred_region
      %166 = dma.done [#allocation11], 12288
    $region89: #{tpu_custom_call.1} parent=1 // pred_fallthru
      _
    // Predicated region
    $region90: #{tpu_custom_call.1} parent=1 // pred_check
      _
    $region91: #{tpu_custom_call.1} parent=1 // pred_check_branch
      %168 = sbr.rel (0) target = $region93
    $region92: #{tpu_custom_call.1} parent=1 // pred_region
      %169 = dma.done [#allocation14], 6144
    $region93: #{tpu_custom_call.1} parent=1 // pred_fallthru
      _
    // Predicated region
    $region94: #{tpu_custom_call.1} parent=1 // pred_check
      _
    $region95: #{tpu_custom_call.1} parent=1 // pred_check_branch
      %171 = sbr.rel (0) target = $region97
    $region96: #{tpu_custom_call.1} parent=1 // pred_region
      %172 = dma.done [#allocation14], 2048
    $region97: #{tpu_custom_call.1} parent=1 // pred_fallthru
      _
    // Predicated region
    $region98: #{tpu_custom_call.1} parent=1 // pred_check
      _
    $region99: #{tpu_custom_call.1} parent=1 // pred_check_branch
      %174 = sbr.rel (0) target = $region101
    $region100: #{tpu_custom_call.1} parent=1 // pred_region
      %175 = dma.done [#allocation17], 2048
    $region101: #{tpu_custom_call.1} parent=1 // pred_fallthru
      _
    // Predicated region
    $region102: #{tpu_custom_call.1} parent=1 // pred_check
      _
    $region103: #{tpu_custom_call.1} parent=1 // pred_check_branch
      %177 = sbr.rel (0) target = $region105
    $region104: #{tpu_custom_call.1} parent=1 // pred_region
      %178 = dma.done [#allocation17], 2048
    $region105: #{tpu_custom_call.1} parent=1 // pred_fallthru
      _
    %v179 = vld [vmem:[#allocation9] sm:$0xff]
    %v180 = vld [vmem:[#allocation9 + $0x8] sm:$0xff]
    %v181 = vld [vmem:[#allocation9 + $0x10] sm:$0xff]
    %v182 = vld [vmem:[#allocation9 + $0x18] sm:$0xff]
    %v183 = vld [vmem:[#allocation9 + $0x20] sm:$0xff]
    %v184 = vld [vmem:[#allocation9 + $0x28] sm:$0xff]
    %v185 = vld [vmem:[#allocation9 + $0x30] sm:$0xff]
    %v186 = vld [vmem:[#allocation9 + $0x38] sm:$0xff]
    %v187 = vld [vmem:[#allocation9 + $0x40] sm:$0xff]
    %v188 = vld [vmem:[#allocation9 + $0x48] sm:$0xff]
    %v189 = vld [vmem:[#allocation9 + $0x50] sm:$0xff]
    %v190 = vld [vmem:[#allocation9 + $0x58] sm:$0xff]
    %v191 = vld [vmem:[#allocation9 + $0x60] sm:$0xff]
    %v192 = vld [vmem:[#allocation9 + $0x68] sm:$0xff]
    %v193 = vld [vmem:[#allocation9 + $0x70] sm:$0xff]
    %v194 = vld [vmem:[#allocation9 + $0x78] sm:$0xff]
    %v195 = vld [vmem:[#allocation9 + $0x80] sm:$0xff]
    %v196 = vld [vmem:[#allocation9 + $0x88] sm:$0xff]
    %v197 = vld [vmem:[#allocation9 + $0x90] sm:$0xff]
    %v198 = vld [vmem:[#allocation9 + $0x98] sm:$0xff]
    %v199 = vld [vmem:[#allocation9 + $0xa0] sm:$0xff]
    %v200 = vld [vmem:[#allocation9 + $0xa8] sm:$0xff]
    %v201 = vld [vmem:[#allocation9 + $0xb0] sm:$0xff]
    %v202 = vld [vmem:[#allocation9 + $0xb8] sm:$0xff]
    %v203 = vld [vmem:[#allocation9 + $0xc0] sm:$0xff]
    %v204 = vld [vmem:[#allocation9 + $0xc8] sm:$0xff]
    %v205 = vld [vmem:[#allocation9 + $0xd0] sm:$0xff]
    %v206 = vld [vmem:[#allocation9 + $0xd8] sm:$0xff]
    %v207 = vld [vmem:[#allocation9 + $0xe0] sm:$0xff]
    %v208 = vld [vmem:[#allocation9 + $0xe8] sm:$0xff]
    %v209 = vld [vmem:[#allocation9 + $0xf0] sm:$0xff]
    %v210 = vld [vmem:[#allocation9 + $0xf8] sm:$0xff]
    %v211 = vld [vmem:[#allocation9 + $0x100] sm:$0xff]
    %v212 = vld [vmem:[#allocation9 + $0x108] sm:$0xff]
    %v213 = vld [vmem:[#allocation9 + $0x110] sm:$0xff]
    %v214 = vld [vmem:[#allocation9 + $0x118] sm:$0xff]
    %v215 = vld [vmem:[#allocation9 + $0x120] sm:$0xff]
    %v216 = vld [vmem:[#allocation9 + $0x128] sm:$0xff]
    %v217 = vld [vmem:[#allocation9 + $0x130] sm:$0xff]
    %v218 = vld [vmem:[#allocation9 + $0x138] sm:$0xff]
    %v219 = vld [vmem:[#allocation9 + $0x140] sm:$0xff]
    %v220 = vld [vmem:[#allocation9 + $0x148] sm:$0xff]
    %v221 = vld [vmem:[#allocation9 + $0x150] sm:$0xff]
    %v222 = vld [vmem:[#allocation9 + $0x158] sm:$0xff]
    %v223 = vld [vmem:[#allocation9 + $0x160] sm:$0xff]
    %v224 = vld [vmem:[#allocation9 + $0x168] sm:$0xff]
    %v225 = vld [vmem:[#allocation9 + $0x170] sm:$0xff]
    %v226 = vld [vmem:[#allocation9 + $0x178] sm:$0xff]
    %v227 = vld [vmem:[#allocation10] sm:$0xff]
    %v228 = vld [vmem:[#allocation10 + $0x8] sm:$0xff]
    %v229 = vld [vmem:[#allocation10 + $0x10] sm:$0xff]
    %v230 = vld [vmem:[#allocation10 + $0x18] sm:$0xff]
    %v231 = vld [vmem:[#allocation10 + $0x20] sm:$0xff]
    %v232 = vld [vmem:[#allocation10 + $0x28] sm:$0xff]
    %v233 = vld [vmem:[#allocation10 + $0x30] sm:$0xff]
    %v234 = vld [vmem:[#allocation10 + $0x38] sm:$0xff]
    %v235 = vld [vmem:[#allocation10 + $0x40] sm:$0xff]
    %v236 = vld [vmem:[#allocation10 + $0x48] sm:$0xff]
    %v237 = vld [vmem:[#allocation10 + $0x50] sm:$0xff]
    %v238 = vld [vmem:[#allocation10 + $0x58] sm:$0xff]
    %v239 = vld [vmem:[#allocation10 + $0x60] sm:$0xff]
    %v240 = vld [vmem:[#allocation10 + $0x68] sm:$0xff]
    %v241 = vld [vmem:[#allocation10 + $0x70] sm:$0xff]
    %v242 = vld [vmem:[#allocation10 + $0x78] sm:$0xff]
    %v243 = vld [vmem:[#allocation10 + $0x80] sm:$0xff]
    %v244 = vld [vmem:[#allocation10 + $0x88] sm:$0xff]
    %v245 = vld [vmem:[#allocation10 + $0x90] sm:$0xff]
    %v246 = vld [vmem:[#allocation10 + $0x98] sm:$0xff]
    %v247 = vld [vmem:[#allocation10 + $0xa0] sm:$0xff]
    %v248 = vld [vmem:[#allocation10 + $0xa8] sm:$0xff]
    %v249 = vld [vmem:[#allocation10 + $0xb0] sm:$0xff]
    %v250 = vld [vmem:[#allocation10 + $0xb8] sm:$0xff]
    %v251 = vld [vmem:[#allocation10 + $0xc0] sm:$0xff]
    %v252 = vld [vmem:[#allocation10 + $0xc8] sm:$0xff]
    %v253 = vld [vmem:[#allocation10 + $0xd0] sm:$0xff]
    %v254 = vld [vmem:[#allocation10 + $0xd8] sm:$0xff]
    %v255 = vld [vmem:[#allocation10 + $0xe0] sm:$0xff]
    %v256 = vld [vmem:[#allocation10 + $0xe8] sm:$0xff]
    %v257 = vld [vmem:[#allocation10 + $0xf0] sm:$0xff]
    %v258 = vld [vmem:[#allocation10 + $0xf8] sm:$0xff]
    %v259 = vld [vmem:[#allocation10 + $0x100] sm:$0xff]
    %v260 = vld [vmem:[#allocation10 + $0x108] sm:$0xff]
    %v261 = vld [vmem:[#allocation10 + $0x110] sm:$0xff]
    %v262 = vld [vmem:[#allocation10 + $0x118] sm:$0xff]
    %v263 = vld [vmem:[#allocation10 + $0x120] sm:$0xff]
    %v264 = vld [vmem:[#allocation10 + $0x128] sm:$0xff]
    %v265 = vld [vmem:[#allocation10 + $0x130] sm:$0xff]
    %v266 = vld [vmem:[#allocation10 + $0x138] sm:$0xff]
    %v267 = vld [vmem:[#allocation10 + $0x140] sm:$0xff]
    %v268 = vld [vmem:[#allocation10 + $0x148] sm:$0xff]
    %v269 = vld [vmem:[#allocation10 + $0x150] sm:$0xff]
    %v270 = vld [vmem:[#allocation10 + $0x158] sm:$0xff]
    %v271 = vld [vmem:[#allocation10 + $0x160] sm:$0xff]
    %v272 = vld [vmem:[#allocation10 + $0x168] sm:$0xff]
    %v273 = vld [vmem:[#allocation10 + $0x170] sm:$0xff]
    %v274 = vld [vmem:[#allocation10 + $0x178] sm:$0xff]
    %v275 = vld [vmem:[%s5] sm:$0x7]
    %v276 = vld [vmem:[%s6] sm:$0x7]
    %v277 = vld [vmem:[#allocation12] sm:$0xff]
    %v278 = vld [vmem:[#allocation12 + $0x8] sm:$0xff]
    %v279 = vld [vmem:[#allocation12 + $0x10] sm:$0xff]
    %v280 = vld [vmem:[#allocation12 + $0x18] sm:$0xff]
    %v281 = vld [vmem:[#allocation12 + $0x20] sm:$0xff]
    %v282 = vld [vmem:[#allocation12 + $0x28] sm:$0xff]
    %v283 = vld [vmem:[#allocation12 + $0x30] sm:$0xff]
    %v284 = vld [vmem:[#allocation12 + $0x38] sm:$0xff]
    %v285 = vld [vmem:[#allocation12 + $0x40] sm:$0xff]
    %v286 = vld [vmem:[#allocation12 + $0x48] sm:$0xff]
    %v287 = vld [vmem:[#allocation12 + $0x50] sm:$0xff]
    %v288 = vld [vmem:[#allocation12 + $0x58] sm:$0xff]
    %v289 = vld [vmem:[#allocation12 + $0x60] sm:$0xff]
    %v290 = vld [vmem:[#allocation12 + $0x68] sm:$0xff]
    %v291 = vld [vmem:[#allocation12 + $0x70] sm:$0xff]
    %v292 = vld [vmem:[#allocation12 + $0x78] sm:$0xff]
    %v293 = vld [vmem:[#allocation12 + $0x80] sm:$0xff]
    %v294 = vld [vmem:[#allocation12 + $0x88] sm:$0xff]
    %v295 = vld [vmem:[#allocation12 + $0x90] sm:$0xff]
    %v296 = vld [vmem:[#allocation12 + $0x98] sm:$0xff]
    %v297 = vld [vmem:[#allocation12 + $0xa0] sm:$0xff]
    %v298 = vld [vmem:[#allocation12 + $0xa8] sm:$0xff]
    %v299 = vld [vmem:[#allocation12 + $0xb0] sm:$0xff]
    %v300 = vld [vmem:[#allocation12 + $0xb8] sm:$0xff]
    %v301 = vld [vmem:[#allocation12 + $0xc0] sm:$0xff]
    %v302 = vld [vmem:[#allocation12 + $0xc8] sm:$0xff]
    %v303 = vld [vmem:[#allocation12 + $0xd0] sm:$0xff]
    %v304 = vld [vmem:[#allocation12 + $0xd8] sm:$0xff]
    %v305 = vld [vmem:[#allocation12 + $0xe0] sm:$0xff]
    %v306 = vld [vmem:[#allocation12 + $0xe8] sm:$0xff]
    %v307 = vld [vmem:[#allocation12 + $0xf0] sm:$0xff]
    %v308 = vld [vmem:[#allocation12 + $0xf8] sm:$0xff]
    %v309 = vld [vmem:[#allocation12 + $0x100] sm:$0xff]
    %v310 = vld [vmem:[#allocation12 + $0x108] sm:$0xff]
    %v311 = vld [vmem:[#allocation12 + $0x110] sm:$0xff]
    %v312 = vld [vmem:[#allocation12 + $0x118] sm:$0xff]
    %v313 = vld [vmem:[#allocation12 + $0x120] sm:$0xff]
    %v314 = vld [vmem:[#allocation12 + $0x128] sm:$0xff]
    %v315 = vld [vmem:[#allocation12 + $0x130] sm:$0xff]
    %v316 = vld [vmem:[#allocation12 + $0x138] sm:$0xff]
    %v317 = vld [vmem:[#allocation12 + $0x140] sm:$0xff]
    %v318 = vld [vmem:[#allocation12 + $0x148] sm:$0xff]
    %v319 = vld [vmem:[#allocation12 + $0x150] sm:$0xff]
    %v320 = vld [vmem:[#allocation12 + $0x158] sm:$0xff]
    %v321 = vld [vmem:[#allocation12 + $0x160] sm:$0xff]
    %v322 = vld [vmem:[#allocation12 + $0x168] sm:$0xff]
    %v323 = vld [vmem:[#allocation12 + $0x170] sm:$0xff]
    %v324 = vld [vmem:[#allocation12 + $0x178] sm:$0xff]
    %v325 = vld [vmem:[#allocation12 + $0x180] sm:$0xff]
    %v326 = vld [vmem:[#allocation12 + $0x188] sm:$0xff]
    %v327 = vld [vmem:[#allocation12 + $0x190] sm:$0xff]
    %v328 = vld [vmem:[#allocation12 + $0x198] sm:$0xff]
    %v329 = vld [vmem:[#allocation12 + $0x1a0] sm:$0xff]
    %v330 = vld [vmem:[#allocation12 + $0x1a8] sm:$0xff]
    %v331 = vld [vmem:[#allocation12 + $0x1b0] sm:$0xff]
    %v332 = vld [vmem:[#allocation12 + $0x1b8] sm:$0xff]
    %v333 = vld [vmem:[#allocation12 + $0x1c0] sm:$0xff]
    %v334 = vld [vmem:[#allocation12 + $0x1c8] sm:$0xff]
    %v335 = vld [vmem:[#allocation12 + $0x1d0] sm:$0xff]
    %v336 = vld [vmem:[#allocation12 + $0x1d8] sm:$0xff]
    %v337 = vld [vmem:[#allocation12 + $0x1e0] sm:$0xff]
    %v338 = vld [vmem:[#allocation12 + $0x1e8] sm:$0xff]
    %v339 = vld [vmem:[#allocation12 + $0x1f0] sm:$0xff]
    %v340 = vld [vmem:[#allocation12 + $0x1f8] sm:$0xff]
    %v341 = vld [vmem:[#allocation12 + $0x200] sm:$0xff]
    %v342 = vld [vmem:[#allocation12 + $0x208] sm:$0xff]
    %v343 = vld [vmem:[#allocation12 + $0x210] sm:$0xff]
    %v344 = vld [vmem:[#allocation12 + $0x218] sm:$0xff]
    %v345 = vld [vmem:[#allocation12 + $0x220] sm:$0xff]
    %v346 = vld [vmem:[#allocation12 + $0x228] sm:$0xff]
    %v347 = vld [vmem:[#allocation12 + $0x230] sm:$0xff]
    %v348 = vld [vmem:[#allocation12 + $0x238] sm:$0xff]
    %v349 = vld [vmem:[#allocation12 + $0x240] sm:$0xff]
    %v350 = vld [vmem:[#allocation12 + $0x248] sm:$0xff]
    %v351 = vld [vmem:[#allocation12 + $0x250] sm:$0xff]
    %v352 = vld [vmem:[#allocation12 + $0x258] sm:$0xff]
    %v353 = vld [vmem:[#allocation12 + $0x260] sm:$0xff]
    %v354 = vld [vmem:[#allocation12 + $0x268] sm:$0xff]
    %v355 = vld [vmem:[#allocation12 + $0x270] sm:$0xff]
    %v356 = vld [vmem:[#allocation12 + $0x278] sm:$0xff]
    %v357 = vld [vmem:[#allocation12 + $0x280] sm:$0xff]
    %v358 = vld [vmem:[#allocation12 + $0x288] sm:$0xff]
    %v359 = vld [vmem:[#allocation12 + $0x290] sm:$0xff]
    %v360 = vld [vmem:[#allocation12 + $0x298] sm:$0xff]
    %v361 = vld [vmem:[#allocation12 + $0x2a0] sm:$0xff]
    %v362 = vld [vmem:[#allocation12 + $0x2a8] sm:$0xff]
    %v363 = vld [vmem:[#allocation12 + $0x2b0] sm:$0xff]
    %v364 = vld [vmem:[#allocation12 + $0x2b8] sm:$0xff]
    %v365 = vld [vmem:[#allocation12 + $0x2c0] sm:$0xff]
    %v366 = vld [vmem:[#allocation12 + $0x2c8] sm:$0xff]
    %v367 = vld [vmem:[#allocation12 + $0x2d0] sm:$0xff]
    %v368 = vld [vmem:[#allocation12 + $0x2d8] sm:$0xff]
    %v369 = vld [vmem:[#allocation12 + $0x2e0] sm:$0xff]
    %v370 = vld [vmem:[#allocation12 + $0x2e8] sm:$0xff]
    %v371 = vld [vmem:[#allocation12 + $0x2f0] sm:$0xff]
    %v372 = vld [vmem:[#allocation12 + $0x2f8] sm:$0xff]
    %v373 = vld [vmem:[#allocation13] sm:$0xff]
    %v374 = vld [vmem:[#allocation13 + $0x8] sm:$0xff]
    %v375 = vld [vmem:[#allocation13 + $0x10] sm:$0xff]
    %v376 = vld [vmem:[#allocation13 + $0x18] sm:$0xff]
    %v377 = vld [vmem:[#allocation13 + $0x20] sm:$0xff]
    %v378 = vld [vmem:[#allocation13 + $0x28] sm:$0xff]
    %v379 = vld [vmem:[#allocation13 + $0x30] sm:$0xff]
    %v380 = vld [vmem:[#allocation13 + $0x38] sm:$0xff]
    %v381 = vld [vmem:[#allocation13 + $0x40] sm:$0xff]
    %v382 = vld [vmem:[#allocation13 + $0x48] sm:$0xff]
    %v383 = vld [vmem:[#allocation13 + $0x50] sm:$0xff]
    %v384 = vld [vmem:[#allocation13 + $0x58] sm:$0xff]
    %v385 = vld [vmem:[#allocation13 + $0x60] sm:$0xff]
    %v386 = vld [vmem:[#allocation13 + $0x68] sm:$0xff]
    %v387 = vld [vmem:[#allocation13 + $0x70] sm:$0xff]
    %v388 = vld [vmem:[#allocation13 + $0x78] sm:$0xff]
    %v389 = vld [vmem:[#allocation13 + $0x80] sm:$0xff]
    %v390 = vld [vmem:[#allocation13 + $0x88] sm:$0xff]
    %v391 = vld [vmem:[#allocation13 + $0x90] sm:$0xff]
    %v392 = vld [vmem:[#allocation13 + $0x98] sm:$0xff]
    %v393 = vld [vmem:[#allocation13 + $0xa0] sm:$0xff]
    %v394 = vld [vmem:[#allocation13 + $0xa8] sm:$0xff]
    %v395 = vld [vmem:[#allocation13 + $0xb0] sm:$0xff]
    %v396 = vld [vmem:[#allocation13 + $0xb8] sm:$0xff]
    %v397 = vld [vmem:[#allocation13 + $0xc0] sm:$0xff]
    %v398 = vld [vmem:[#allocation13 + $0xc8] sm:$0xff]
    %v399 = vld [vmem:[#allocation13 + $0xd0] sm:$0xff]
    %v400 = vld [vmem:[#allocation13 + $0xd8] sm:$0xff]
    %v401 = vld [vmem:[#allocation13 + $0xe0] sm:$0xff]
    %v402 = vld [vmem:[#allocation13 + $0xe8] sm:$0xff]
    %v403 = vld [vmem:[#allocation13 + $0xf0] sm:$0xff]
    %v404 = vld [vmem:[#allocation13 + $0xf8] sm:$0xff]
    %v405 = vld [vmem:[#allocation13 + $0x100] sm:$0xff]
    %v406 = vld [vmem:[#allocation13 + $0x108] sm:$0xff]
    %v407 = vld [vmem:[#allocation13 + $0x110] sm:$0xff]
    %v408 = vld [vmem:[#allocation13 + $0x118] sm:$0xff]
    %v409 = vld [vmem:[#allocation13 + $0x120] sm:$0xff]
    %v410 = vld [vmem:[#allocation13 + $0x128] sm:$0xff]
    %v411 = vld [vmem:[#allocation13 + $0x130] sm:$0xff]
    %v412 = vld [vmem:[#allocation13 + $0x138] sm:$0xff]
    %v413 = vld [vmem:[#allocation13 + $0x140] sm:$0xff]
    %v414 = vld [vmem:[#allocation13 + $0x148] sm:$0xff]
    %v415 = vld [vmem:[#allocation13 + $0x150] sm:$0xff]
    %v416 = vld [vmem:[#allocation13 + $0x158] sm:$0xff]
    %v417 = vld [vmem:[#allocation13 + $0x160] sm:$0xff]
    %v418 = vld [vmem:[#allocation13 + $0x168] sm:$0xff]
    %v419 = vld [vmem:[#allocation13 + $0x170] sm:$0xff]
    %v420 = vld [vmem:[#allocation13 + $0x178] sm:$0xff]
    %v421 = vld [vmem:[%s9] sm:$0x7]
    %v422 = vld [vmem:[%s10] sm:$0x7]
    %v423 = vld [vmem:[#allocation15] sm:$0xff]
    %v424 = vld [vmem:[#allocation15 + $0x8] sm:$0xff]
    %v425 = vld [vmem:[#allocation15 + $0x10] sm:$0xff]
    %v426 = vld [vmem:[#allocation15 + $0x18] sm:$0xff]
    %v427 = vld [vmem:[#allocation15 + $0x20] sm:$0xff]
    %v428 = vld [vmem:[#allocation15 + $0x28] sm:$0xff]
    %v429 = vld [vmem:[#allocation15 + $0x30] sm:$0xff]
    %v430 = vld [vmem:[#allocation15 + $0x38] sm:$0xff]
    %v431 = vld [vmem:[#allocation15 + $0x40] sm:$0xff]
    %v432 = vld [vmem:[#allocation15 + $0x48] sm:$0xff]
    %v433 = vld [vmem:[#allocation15 + $0x50] sm:$0xff]
    %v434 = vld [vmem:[#allocation15 + $0x58] sm:$0xff]
    %v435 = vld [vmem:[#allocation15 + $0x60] sm:$0xff]
    %v436 = vld [vmem:[#allocation15 + $0x68] sm:$0xff]
    %v437 = vld [vmem:[#allocation15 + $0x70] sm:$0xff]
    %v438 = vld [vmem:[#allocation15 + $0x78] sm:$0xff]
    %v439 = vld [vmem:[%s12] sm:$0x1]
    %v440 = vld [vmem:[#allocation16] sm:$0xff]
    %v441 = vld [vmem:[#allocation16 + $0x8] sm:$0xff]
    %v442 = vld [vmem:[#allocation16 + $0x10] sm:$0xff]
    %v443 = vld [vmem:[#allocation16 + $0x18] sm:$0xff]
    %v444 = vld [vmem:[#allocation16 + $0x20] sm:$0xff]
    %v445 = vld [vmem:[#allocation16 + $0x28] sm:$0xff]
    %v446 = vld [vmem:[#allocation16 + $0x30] sm:$0xff]
    %v447 = vld [vmem:[#allocation16 + $0x38] sm:$0xff]
    %v448 = vld [vmem:[#allocation16 + $0x40] sm:$0xff]
    %v449 = vld [vmem:[#allocation16 + $0x48] sm:$0xff]
    %v450 = vld [vmem:[#allocation16 + $0x50] sm:$0xff]
    %v451 = vld [vmem:[#allocation16 + $0x58] sm:$0xff]
    %v452 = vld [vmem:[#allocation16 + $0x60] sm:$0xff]
    %v453 = vld [vmem:[#allocation16 + $0x68] sm:$0xff]
    %v454 = vld [vmem:[#allocation16 + $0x70] sm:$0xff]
    %v455 = vld [vmem:[#allocation16 + $0x78] sm:$0xff]
    %v456 = vld [vmem:[%s14] sm:$0x1]
    %v457 = vld [vmem:[#allocation18] sm:$0xff]
    %v458 = vld [vmem:[#allocation18 + $0x8] sm:$0xff]
    %v459 = vld [vmem:[#allocation18 + $0x10] sm:$0xff]
    %v460 = vld [vmem:[#allocation18 + $0x18] sm:$0xff]
    %v461 = vld [vmem:[#allocation18 + $0x20] sm:$0xff]
    %v462 = vld [vmem:[#allocation18 + $0x28] sm:$0xff]
    %v463 = vld [vmem:[#allocation18 + $0x30] sm:$0xff]
    %v464 = vld [vmem:[#allocation18 + $0x38] sm:$0xff]
    %v465 = vld [vmem:[#allocation18 + $0x40] sm:$0xff]
    %v466 = vld [vmem:[#allocation18 + $0x48] sm:$0xff]
    %v467 = vld [vmem:[#allocation18 + $0x50] sm:$0xff]
    %v468 = vld [vmem:[#allocation18 + $0x58] sm:$0xff]
    %v469 = vld [vmem:[#allocation18 + $0x60] sm:$0xff]
    %v470 = vld [vmem:[#allocation18 + $0x68] sm:$0xff]
    %v471 = vld [vmem:[#allocation18 + $0x70] sm:$0xff]
    %v472 = vld [vmem:[#allocation18 + $0x78] sm:$0xff]
    %v473 = vld [vmem:[%s16] sm:$0x1]
    %v474 = vld [vmem:[%s2] sm:$0x3]
    %v475 = vld [vmem:[#allocation4] sm:$0x3]
    %v477 = vlaneseq
    %v478 = vshrl.u32 %v477, 7
    %v479 = vsub.s32 0, %v478
    %v480 = vrot.slane %v275, %v479
    %v481 = vlaneseq
    %v482 = vshrl.u32 %v481, 7
    %v483 = vsub.s32 1, %v482
    %v484 = vrot.slane %v275, %v483
    %v485 = vlaneseq
    %v486 = vshrl.u32 %v485, 7
    %v487 = vsub.s32 2, %v486
    %v488 = vrot.slane %v275, %v487
    %492 = vmatprep.subr.mxu0 %v180
    %493 = vmatpush1.msra.mxu0 %v179
    %494 = vmatprep.subr.mxu0 %v183
    %495 = vmatpush1.msra.mxu0 %v182
    %496 = vmatprep.subr.mxu0 %v186
    %497 = vmatpush1.msra.mxu0 %v185
    %498 = vmatprep.subr.mxu0 %v189
    %499 = vmatpush1.msra.mxu0 %v188
    %500 = vmatprep.subr.mxu0 %v192
    %501 = vmatpush1.msra.mxu0 %v191
    %502 = vmatprep.subr.mxu0 %v195
    %503 = vmatpush1.msra.mxu0 %v194
    %504 = vmatprep.subr.mxu0 %v198
    %505 = vmatpush1.msra.mxu0 %v197
    %506 = vmatprep.subr.mxu0 %v201
    %507 = vmatpush1.msra.mxu0 %v200
    %508 = vmatprep.subr.mxu0 %v204
    %509 = vmatpush1.msra.mxu0 %v203
    %510 = vmatprep.subr.mxu0 %v207
    %511 = vmatpush1.msra.mxu0 %v206
    %512 = vmatprep.subr.mxu0 %v210
    %513 = vmatpush1.msra.mxu0 %v209
    %514 = vmatprep.subr.mxu0 %v213
    %515 = vmatpush1.msra.mxu0 %v212
    %516 = vmatprep.subr.mxu0 %v216
    %517 = vmatpush1.msra.mxu0 %v215
    %518 = vmatprep.subr.mxu0 %v219
    %519 = vmatpush1.msra.mxu0 %v218
    %520 = vmatprep.subr.mxu0 %v222
    %521 = vmatpush1.msra.mxu0 %v221
    %522 = vmatprep.subr.mxu0 %v225
    %523 = vmatpush1.msra.mxu0 %v224
    %524 = vmatprep.subr.mxu0 0.0
    %525 = vmatpush1.msra.mxu0 0.0
    %526 = vmatprep.subr.mxu0 0.0
    %527 = vmatpush1.msra.mxu0 0.0
    %528 = vmatprep.subr.mxu0 0.0
    %529 = vmatpush1.msra.mxu0 0.0
    %530 = vmatprep.subr.mxu0 0.0
    %531 = vmatpush1.msra.mxu0 0.0
    %532 = vmatprep.subr.mxu0 0.0
    %533 = vmatpush1.msra.mxu0 0.0
    %534 = vmatprep.subr.mxu0 0.0
    %535 = vmatpush1.msra.mxu0 0.0
    %536 = vmatprep.subr.mxu0 0.0
    %537 = vmatpush1.msra.mxu0 0.0
    %538 = vmatprep.subr.mxu0 0.0
    %539 = vmatpush1.msra.mxu0 0.0
    %540 = vmatprep.subr.mxu0 0.0
    %541 = vmatpush1.msra.mxu0 0.0
    %542 = vmatprep.subr.mxu0 0.0
    %543 = vmatpush1.msra.mxu0 0.0
    %544 = vmatprep.subr.mxu0 0.0
    %545 = vmatpush1.msra.mxu0 0.0
    %546 = vmatprep.subr.mxu0 0.0
    %547 = vmatpush1.msra.mxu0 0.0
    %548 = vmatprep.subr.mxu0 0.0
    %549 = vmatpush1.msra.mxu0 0.0
    %550 = vmatprep.subr.mxu0 0.0
    %551 = vmatpush1.msra.mxu0 0.0
    %552 = vmatprep.subr.mxu0 0.0
    %553 = vmatpush1.msra.mxu0 0.0
    %554 = vmatprep.subr.mxu0 0.0
    %555 = vmatpush1.msra.mxu0 0.0
    %556 = vmatprep.mubr.f32.mxu0 0.0
    %557 = vmatmul.mubr.f32.gmra.mrb[0].mxu0 %v475
    %v558 = vpop.f32.mrb[0].mxu0
    %v559 = vadd.f32 %v480, %v558
    %v560 = vpop.f32.mrb[0].mxu0
    %v561 = vadd.f32 %v484, %v560
    %562 = vdwg.mxu0
    %563 = vmatprep.subr.mxu0 0.0
    %564 = vmatpush1.msra.mxu0 %v181
    %565 = vmatprep.subr.mxu0 0.0
    %566 = vmatpush1.msra.mxu0 %v184
    %567 = vmatprep.subr.mxu0 0.0
    %568 = vmatpush1.msra.mxu0 %v187
    %569 = vmatprep.subr.mxu0 0.0
    %570 = vmatpush1.msra.mxu0 %v190
    %571 = vmatprep.subr.mxu0 0.0
    %572 = vmatpush1.msra.mxu0 %v193
    %573 = vmatprep.subr.mxu0 0.0
    %574 = vmatpush1.msra.mxu0 %v196
    %575 = vmatprep.subr.mxu0 0.0
    %576 = vmatpush1.msra.mxu0 %v199
    %577 = vmatprep.subr.mxu0 0.0
    %578 = vmatpush1.msra.mxu0 %v202
    %579 = vmatprep.subr.mxu0 0.0
    %580 = vmatpush1.msra.mxu0 %v205
    %581 = vmatprep.subr.mxu0 0.0
    %582 = vmatpush1.msra.mxu0 %v208
    %583 = vmatprep.subr.mxu0 0.0
    %584 = vmatpush1.msra.mxu0 %v211
    %585 = vmatprep.subr.mxu0 0.0
    %586 = vmatpush1.msra.mxu0 %v214
    %587 = vmatprep.subr.mxu0 0.0
    %588 = vmatpush1.msra.mxu0 %v217
    %589 = vmatprep.subr.mxu0 0.0
    %590 = vmatpush1.msra.mxu0 %v220
    %591 = vmatprep.subr.mxu0 0.0
    %592 = vmatpush1.msra.mxu0 %v223
    %593 = vmatprep.subr.mxu0 0.0
    %594 = vmatpush1.msra.mxu0 %v226
    %595 = vmatprep.subr.mxu0 0.0
    %596 = vmatpush1.msra.mxu0 0.0
    %597 = vmatprep.subr.mxu0 0.0
    %598 = vmatpush1.msra.mxu0 0.0
    %599 = vmatprep.subr.mxu0 0.0
    %600 = vmatpush1.msra.mxu0 0.0
    %601 = vmatprep.subr.mxu0 0.0
    %602 = vmatpush1.msra.mxu0 0.0
    %603 = vmatprep.subr.mxu0 0.0
    %604 = vmatpush1.msra.mxu0 0.0
    %605 = vmatprep.subr.mxu0 0.0
    %606 = vmatpush1.msra.mxu0 0.0
    %607 = vmatprep.subr.mxu0 0.0
    %608 = vmatpush1.msra.mxu0 0.0
    %609 = vmatprep.subr.mxu0 0.0
    %610 = vmatpush1.msra.mxu0 0.0
    %611 = vmatprep.subr.mxu0 0.0
    %612 = vmatpush1.msra.mxu0 0.0
    %613 = vmatprep.subr.mxu0 0.0
    %614 = vmatpush1.msra.mxu0 0.0
    %615 = vmatprep.subr.mxu0 0.0
    %616 = vmatpush1.msra.mxu0 0.0
    %617 = vmatprep.subr.mxu0 0.0
    %618 = vmatpush1.msra.mxu0 0.0
    %619 = vmatprep.subr.mxu0 0.0
    %620 = vmatpush1.msra.mxu0 0.0
    %621 = vmatprep.subr.mxu0 0.0
    %622 = vmatpush1.msra.mxu0 0.0
    %623 = vmatprep.subr.mxu0 0.0
    %624 = vmatpush1.msra.mxu0 0.0
    %625 = vmatprep.subr.mxu0 0.0
    %626 = vmatpush1.msra.mxu0 0.0
    %627 = vmatprep.mubr.f32.mxu0 0.0
    %628 = vmatmul.mubr.f32.gmra.mrb[0].mxu0 %v475
    %v629 = vpop.f32.mrb[0].mxu0
    %v630 = vadd.f32 %v488, %v629
    %v631 = vpop.f32.mrb[0].mxu0
    %632 = vdwg.mxu0
    %v634 = vlaneseq
    %v635 = vshrl.u32 %v634, 7
    %v636 = vsub.s32 0, %v635
    %v637 = vrot.slane %v276, %v636
    %v638 = vlaneseq
    %v639 = vshrl.u32 %v638, 7
    %v640 = vsub.s32 1, %v639
    %v641 = vrot.slane %v276, %v640
    %v642 = vlaneseq
    %v643 = vshrl.u32 %v642, 7
    %v644 = vsub.s32 2, %v643
    %v645 = vrot.slane %v276, %v644
    %649 = vmatprep.subr.mxu0 %v228
    %650 = vmatpush1.msra.mxu0 %v227
    %651 = vmatprep.subr.mxu0 %v231
    %652 = vmatpush1.msra.mxu0 %v230
    %653 = vmatprep.subr.mxu0 %v234
    %654 = vmatpush1.msra.mxu0 %v233
    %655 = vmatprep.subr.mxu0 %v237
    %656 = vmatpush1.msra.mxu0 %v236
    %657 = vmatprep.subr.mxu0 %v240
    %658 = vmatpush1.msra.mxu0 %v239
    %659 = vmatprep.subr.mxu0 %v243
    %660 = vmatpush1.msra.mxu0 %v242
    %661 = vmatprep.subr.mxu0 %v246
    %662 = vmatpush1.msra.mxu0 %v245
    %663 = vmatprep.subr.mxu0 %v249
    %664 = vmatpush1.msra.mxu0 %v248
    %665 = vmatprep.subr.mxu0 %v252
    %666 = vmatpush1.msra.mxu0 %v251
    %667 = vmatprep.subr.mxu0 %v255
    %668 = vmatpush1.msra.mxu0 %v254
    %669 = vmatprep.subr.mxu0 %v258
    %670 = vmatpush1.msra.mxu0 %v257
    %671 = vmatprep.subr.mxu0 %v261
    %672 = vmatpush1.msra.mxu0 %v260
    %673 = vmatprep.subr.mxu0 %v264
    %674 = vmatpush1.msra.mxu0 %v263
    %675 = vmatprep.subr.mxu0 %v267
    %676 = vmatpush1.msra.mxu0 %v266
    %677 = vmatprep.subr.mxu0 %v270
    %678 = vmatpush1.msra.mxu0 %v269
    %679 = vmatprep.subr.mxu0 %v273
    %680 = vmatpush1.msra.mxu0 %v272
    %681 = vmatprep.subr.mxu0 0.0
    %682 = vmatpush1.msra.mxu0 0.0
    %683 = vmatprep.subr.mxu0 0.0
    %684 = vmatpush1.msra.mxu0 0.0
    %685 = vmatprep.subr.mxu0 0.0
    %686 = vmatpush1.msra.mxu0 0.0
    %687 = vmatprep.subr.mxu0 0.0
    %688 = vmatpush1.msra.mxu0 0.0
    %689 = vmatprep.subr.mxu0 0.0
    %690 = vmatpush1.msra.mxu0 0.0
    %691 = vmatprep.subr.mxu0 0.0
    %692 = vmatpush1.msra.mxu0 0.0
    %693 = vmatprep.subr.mxu0 0.0
    %694 = vmatpush1.msra.mxu0 0.0
    %695 = vmatprep.subr.mxu0 0.0
    %696 = vmatpush1.msra.mxu0 0.0
    %697 = vmatprep.subr.mxu0 0.0
    %698 = vmatpush1.msra.mxu0 0.0
    %699 = vmatprep.subr.mxu0 0.0
    %700 = vmatpush1.msra.mxu0 0.0
    %701 = vmatprep.subr.mxu0 0.0
    %702 = vmatpush1.msra.mxu0 0.0
    %703 = vmatprep.subr.mxu0 0.0
    %704 = vmatpush1.msra.mxu0 0.0
    %705 = vmatprep.subr.mxu0 0.0
    %706 = vmatpush1.msra.mxu0 0.0
    %707 = vmatprep.subr.mxu0 0.0
    %708 = vmatpush1.msra.mxu0 0.0
    %709 = vmatprep.subr.mxu0 0.0
    %710 = vmatpush1.msra.mxu0 0.0
    %711 = vmatprep.subr.mxu0 0.0
    %712 = vmatpush1.msra.mxu0 0.0
    %713 = vmatprep.mubr.f32.mxu0 0.0
    %714 = vmatmul.mubr.f32.gmra.mrb[0].mxu0 0.0
    %v715 = vpop.f32.mrb[0].mxu0
    %v716 = vadd.f32 %v637, %v715
    %v717 = vpop.f32.mrb[0].mxu0
    %v718 = vadd.f32 %v641, %v717
    %719 = vdwg.mxu0
    %720 = vmatprep.subr.mxu0 0.0
    %721 = vmatpush1.msra.mxu0 %v229
    %722 = vmatprep.subr.mxu0 0.0
    %723 = vmatpush1.msra.mxu0 %v232
    %724 = vmatprep.subr.mxu0 0.0
    %725 = vmatpush1.msra.mxu0 %v235
    %726 = vmatprep.subr.mxu0 0.0
    %727 = vmatpush1.msra.mxu0 %v238
    %728 = vmatprep.subr.mxu0 0.0
    %729 = vmatpush1.msra.mxu0 %v241
    %730 = vmatprep.subr.mxu0 0.0
    %731 = vmatpush1.msra.mxu0 %v244
    %732 = vmatprep.subr.mxu0 0.0
    %733 = vmatpush1.msra.mxu0 %v247
    %734 = vmatprep.subr.mxu0 0.0
    %735 = vmatpush1.msra.mxu0 %v250
    %736 = vmatprep.subr.mxu0 0.0
    %737 = vmatpush1.msra.mxu0 %v253
    %738 = vmatprep.subr.mxu0 0.0
    %739 = vmatpush1.msra.mxu0 %v256
    %740 = vmatprep.subr.mxu0 0.0
    %741 = vmatpush1.msra.mxu0 %v259
    %742 = vmatprep.subr.mxu0 0.0
    %743 = vmatpush1.msra.mxu0 %v262
    %744 = vmatprep.subr.mxu0 0.0
    %745 = vmatpush1.msra.mxu0 %v265
    %746 = vmatprep.subr.mxu0 0.0
    %747 = vmatpush1.msra.mxu0 %v268
    %748 = vmatprep.subr.mxu0 0.0
    %749 = vmatpush1.msra.mxu0 %v271
    %750 = vmatprep.subr.mxu0 0.0
    %751 = vmatpush1.msra.mxu0 %v274
    %752 = vmatprep.subr.mxu0 0.0
    %753 = vmatpush1.msra.mxu0 0.0
    %754 = vmatprep.subr.mxu0 0.0
    %755 = vmatpush1.msra.mxu0 0.0
    %756 = vmatprep.subr.mxu0 0.0
    %757 = vmatpush1.msra.mxu0 0.0
    %758 = vmatprep.subr.mxu0 0.0
    %759 = vmatpush1.msra.mxu0 0.0
    %760 = vmatprep.subr.mxu0 0.0
    %761 = vmatpush1.msra.mxu0 0.0
    %762 = vmatprep.subr.mxu0 0.0
    %763 = vmatpush1.msra.mxu0 0.0
    %764 = vmatprep.subr.mxu0 0.0
    %765 = vmatpush1.msra.mxu0 0.0
    %766 = vmatprep.subr.mxu0 0.0
    %767 = vmatpush1.msra.mxu0 0.0
    %768 = vmatprep.subr.mxu0 0.0
    %769 = vmatpush1.msra.mxu0 0.0
    %770 = vmatprep.subr.mxu0 0.0
    %771 = vmatpush1.msra.mxu0 0.0
    %772 = vmatprep.subr.mxu0 0.0
    %773 = vmatpush1.msra.mxu0 0.0
    %774 = vmatprep.subr.mxu0 0.0
    %775 = vmatpush1.msra.mxu0 0.0
    %776 = vmatprep.subr.mxu0 0.0
    %777 = vmatpush1.msra.mxu0 0.0
    %778 = vmatprep.subr.mxu0 0.0
    %779 = vmatpush1.msra.mxu0 0.0
    %780 = vmatprep.subr.mxu0 0.0
    %781 = vmatpush1.msra.mxu0 0.0
    %782 = vmatprep.subr.mxu0 0.0
    %783 = vmatpush1.msra.mxu0 0.0
    %784 = vmatprep.mubr.f32.mxu0 0.0
    %785 = vmatmul.mubr.f32.gmra.mrb[0].mxu0 0.0
    %v786 = vpop.f32.mrb[0].mxu0
    %v787 = vadd.f32 %v645, %v786
    %v788 = vpop.f32.mrb[0].mxu0
    %789 = vdwg.mxu0
    %v790 = vadd.f32 %v559, %v716
    %v791 = vxor.u32 %v790, 2147483648
    %v792 = vmul.f32 %v791, 1.442695
    %v793 = vpow.pop %v792
    %v794 = vadd.f32 %v793, 1.0
    %v795 = vrcp.pop %v794
    %v796 = vmul.f32 1.0, %v795
    %v797 = vadd.f32 %v561, %v718
    %v798 = vxor.u32 %v797, 2147483648
    %v799 = vmul.f32 %v798, 1.442695
    %v800 = vpow.pop %v799
    %v801 = vadd.f32 %v800, 1.0
    %v802 = vrcp.pop %v801
    %v803 = vmul.f32 1.0, %v802
    %v804 = vmul.f32 %v796, %v787
    %v805 = vadd.f32 %v630, %v804
    %v806 = vtanh.pop %v805
    %v807 = vsub.f32 1.0, %v803
    %v808 = vmul.f32 %v807, %v806
    %v809 = vmul.f32 %v803, 0.0
    %v810 = vadd.f32 %v808, %v809
    %vm811 = vcmp.gt.s32.totalorder %v474, 0
    %v812 = vsel %vm811, 1, 0
    %813 = vset.pattern.permute.xlu0 0
    %814 = vperm.xlu0 %813, %v812
    %v815 = vpop.permute.xlu0 %814
    %vm816 = vcmp.eq.s32.totalorder %v815, 1
    %v817 = vsel %vm816, %v810, 0.0
    %v820 = vunpack.c.l.s4 1966171168
    %v821 = vunpack.c.0.s8 %v820
    %v822 = vlaneseq
    %v823 = vshrl.u32 %v822, 7
    %v824 = vsub.s32 %v821, %v823
    %v825 = vrot.slane %v817, %v824
    %v826 = vcombine.high %v825, %v825
    %v828 = vunpack.c.l.s4 1966171168
    %v829 = vunpack.c.0.s8 %v828
    %v830 = vlaneseq
    %v831 = vshrl.u32 %v830, 7
    %v832 = vsub.s32 %v829, %v831
    %v833 = vrot.slane %v825, %v832
    %v835 = vunpack.c.l.s4 1966171168
    %v836 = vunpack.c.0.s8 %v835
    %v837 = vlaneseq
    %v838 = vshrl.u32 %v837, 7
    %v839 = vsub.s32 %v836, %v838
    %v840 = vrot.slane %v826, %v839
    %843 = vst [vmem:[#allocation2] sm:$0x1] %v833
    %844 = vst [vmem:[#allocation2 + $0x8] sm:$0x1] %v840
    %s845 = scalar_lea.vmem [#allocation4], 2
    %v846 = vld [vmem:[%s845] sm:$0x3]
    %847 = vmatprep.subr.mxu0 %v180
    %848 = vmatpush1.msra.mxu0 %v179
    %849 = vmatprep.subr.mxu0 %v183
    %850 = vmatpush1.msra.mxu0 %v182
    %851 = vmatprep.subr.mxu0 %v186
    %852 = vmatpush1.msra.mxu0 %v185
    %853 = vmatprep.subr.mxu0 %v189
    %854 = vmatpush1.msra.mxu0 %v188
    %855 = vmatprep.subr.mxu0 %v192
    %856 = vmatpush1.msra.mxu0 %v191
    %857 = vmatprep.subr.mxu0 %v195
    %858 = vmatpush1.msra.mxu0 %v194
    %859 = vmatprep.subr.mxu0 %v198
    %860 = vmatpush1.msra.mxu0 %v197
    %861 = vmatprep.subr.mxu0 %v201
    %862 = vmatpush1.msra.mxu0 %v200
    %863 = vmatprep.subr.mxu0 %v204
    %864 = vmatpush1.msra.mxu0 %v203
    %865 = vmatprep.subr.mxu0 %v207
    %866 = vmatpush1.msra.mxu0 %v206
    %867 = vmatprep.subr.mxu0 %v210
    %868 = vmatpush1.msra.mxu0 %v209
    %869 = vmatprep.subr.mxu0 %v213
    %870 = vmatpush1.msra.mxu0 %v212
    %871 = vmatprep.subr.mxu0 %v216
    %872 = vmatpush1.msra.mxu0 %v215
    %873 = vmatprep.subr.mxu0 %v219
    %874 = vmatpush1.msra.mxu0 %v218
    %875 = vmatprep.subr.mxu0 %v222
    %876 = vmatpush1.msra.mxu0 %v221
    %877 = vmatprep.subr.mxu0 %v225
    %878 = vmatpush1.msra.mxu0 %v224
    %879 = vmatprep.subr.mxu0 0.0
    %880 = vmatpush1.msra.mxu0 0.0
    %881 = vmatprep.subr.mxu0 0.0
    %882 = vmatpush1.msra.mxu0 0.0
    %883 = vmatprep.subr.mxu0 0.0
    %884 = vmatpush1.msra.mxu0 0.0
    %885 = vmatprep.subr.mxu0 0.0
    %886 = vmatpush1.msra.mxu0 0.0
    %887 = vmatprep.subr.mxu0 0.0
    %888 = vmatpush1.msra.mxu0 0.0
    %889 = vmatprep.subr.mxu0 0.0
    %890 = vmatpush1.msra.mxu0 0.0
    %891 = vmatprep.subr.mxu0 0.0
    %892 = vmatpush1.msra.mxu0 0.0
    %893 = vmatprep.subr.mxu0 0.0
    %894 = vmatpush1.msra.mxu0 0.0
    %895 = vmatprep.subr.mxu0 0.0
    %896 = vmatpush1.msra.mxu0 0.0
    %897 = vmatprep.subr.mxu0 0.0
    %898 = vmatpush1.msra.mxu0 0.0
    %899 = vmatprep.subr.mxu0 0.0
    %900 = vmatpush1.msra.mxu0 0.0
    %901 = vmatprep.subr.mxu0 0.0
    %902 = vmatpush1.msra.mxu0 0.0
    %903 = vmatprep.subr.mxu0 0.0
    %904 = vmatpush1.msra.mxu0 0.0
    %905 = vmatprep.subr.mxu0 0.0
    %906 = vmatpush1.msra.mxu0 0.0
    %907 = vmatprep.subr.mxu0 0.0
    %908 = vmatpush1.msra.mxu0 0.0
    %909 = vmatprep.subr.mxu0 0.0
    %910 = vmatpush1.msra.mxu0 0.0
    %911 = vmatprep.mubr.f32.mxu0 0.0
    %912 = vmatmul.mubr.f32.gmra.mrb[0].mxu0 %v846
    %v913 = vpop.f32.mrb[0].mxu0
    %v914 = vadd.f32 %v480, %v913
    %v915 = vpop.f32.mrb[0].mxu0
    %v916 = vadd.f32 %v484, %v915
    %917 = vdwg.mxu0
    %918 = vmatprep.subr.mxu0 0.0
    %919 = vmatpush1.msra.mxu0 %v181
    %920 = vmatprep.subr.mxu0 0.0
    %921 = vmatpush1.msra.mxu0 %v184
    %922 = vmatprep.subr.mxu0 0.0
    %923 = vmatpush1.msra.mxu0 %v187
    %924 = vmatprep.subr.mxu0 0.0
    %925 = vmatpush1.msra.mxu0 %v190
    %926 = vmatprep.subr.mxu0 0.0
    %927 = vmatpush1.msra.mxu0 %v193
    %928 = vmatprep.subr.mxu0 0.0
    %929 = vmatpush1.msra.mxu0 %v196
    %930 = vmatprep.subr.mxu0 0.0
    %931 = vmatpush1.msra.mxu0 %v199
    %932 = vmatprep.subr.mxu0 0.0
    %933 = vmatpush1.msra.mxu0 %v202
    %934 = vmatprep.subr.mxu0 0.0
    %935 = vmatpush1.msra.mxu0 %v205
    %936 = vmatprep.subr.mxu0 0.0
    %937 = vmatpush1.msra.mxu0 %v208
    %938 = vmatprep.subr.mxu0 0.0
    %939 = vmatpush1.msra.mxu0 %v211
    %940 = vmatprep.subr.mxu0 0.0
    %941 = vmatpush1.msra.mxu0 %v214
    %942 = vmatprep.subr.mxu0 0.0
    %943 = vmatpush1.msra.mxu0 %v217
    %944 = vmatprep.subr.mxu0 0.0
    %945 = vmatpush1.msra.mxu0 %v220
    %946 = vmatprep.subr.mxu0 0.0
    %947 = vmatpush1.msra.mxu0 %v223
    %948 = vmatprep.subr.mxu0 0.0
    %949 = vmatpush1.msra.mxu0 %v226
    %950 = vmatprep.subr.mxu0 0.0
    %951 = vmatpush1.msra.mxu0 0.0
    %952 = vmatprep.subr.mxu0 0.0
    %953 = vmatpush1.msra.mxu0 0.0
    %954 = vmatprep.subr.mxu0 0.0
    %955 = vmatpush1.msra.mxu0 0.0
    %956 = vmatprep.subr.mxu0 0.0
    %957 = vmatpush1.msra.mxu0 0.0
    %958 = vmatprep.subr.mxu0 0.0
    %959 = vmatpush1.msra.mxu0 0.0
    %960 = vmatprep.subr.mxu0 0.0
    %961 = vmatpush1.msra.mxu0 0.0
    %962 = vmatprep.subr.mxu0 0.0
    %963 = vmatpush1.msra.mxu0 0.0
    %964 = vmatprep.subr.mxu0 0.0
    %965 = vmatpush1.msra.mxu0 0.0
    %966 = vmatprep.subr.mxu0 0.0
    %967 = vmatpush1.msra.mxu0 0.0
    %968 = vmatprep.subr.mxu0 0.0
    %969 = vmatpush1.msra.mxu0 0.0
    %970 = vmatprep.subr.mxu0 0.0
    %971 = vmatpush1.msra.mxu0 0.0
    %972 = vmatprep.subr.mxu0 0.0
    %973 = vmatpush1.msra.mxu0 0.0
    %974 = vmatprep.subr.mxu0 0.0
    %975 = vmatpush1.msra.mxu0 0.0
    %976 = vmatprep.subr.mxu0 0.0
    %977 = vmatpush1.msra.mxu0 0.0
    %978 = vmatprep.subr.mxu0 0.0
    %979 = vmatpush1.msra.mxu0 0.0
    %980 = vmatprep.subr.mxu0 0.0
    %981 = vmatpush1.msra.mxu0 0.0
    %982 = vmatprep.mubr.f32.mxu0 0.0
    %983 = vmatmul.mubr.f32.gmra.mrb[0].mxu0 %v846
    %v984 = vpop.f32.mrb[0].mxu0
    %v985 = vadd.f32 %v488, %v984
    %v986 = vpop.f32.mrb[0].mxu0
    %987 = vdwg.mxu0
    %988 = vmatprep.subr.mxu0 %v228
    %989 = vmatpush1.msra.mxu0 %v227
    %990 = vmatprep.subr.mxu0 %v231
    %991 = vmatpush1.msra.mxu0 %v230
    %992 = vmatprep.subr.mxu0 %v234
    %993 = vmatpush1.msra.mxu0 %v233
    %994 = vmatprep.subr.mxu0 %v237
    %995 = vmatpush1.msra.mxu0 %v236
    %996 = vmatprep.subr.mxu0 %v240
    %997 = vmatpush1.msra.mxu0 %v239
    %998 = vmatprep.subr.mxu0 %v243
    %999 = vmatpush1.msra.mxu0 %v242
    %1000 = vmatprep.subr.mxu0 %v246
    %1001 = vmatpush1.msra.mxu0 %v245
    %1002 = vmatprep.subr.mxu0 %v249
    %1003 = vmatpush1.msra.mxu0 %v248
    %1004 = vmatprep.subr.mxu0 %v252
    %1005 = vmatpush1.msra.mxu0 %v251
    %1006 = vmatprep.subr.mxu0 %v255
    %1007 = vmatpush1.msra.mxu0 %v254
    %1008 = vmatprep.subr.mxu0 %v258
    %1009 = vmatpush1.msra.mxu0 %v257
    %1010 = vmatprep.subr.mxu0 %v261
    %1011 = vmatpush1.msra.mxu0 %v260
    %1012 = vmatprep.subr.mxu0 %v264
    %1013 = vmatpush1.msra.mxu0 %v263
    %1014 = vmatprep.subr.mxu0 %v267
    %1015 = vmatpush1.msra.mxu0 %v266
    %1016 = vmatprep.subr.mxu0 %v270
    %1017 = vmatpush1.msra.mxu0 %v269
    %1018 = vmatprep.subr.mxu0 %v273
    %1019 = vmatpush1.msra.mxu0 %v272
    %1020 = vmatprep.subr.mxu0 0.0
    %1021 = vmatpush1.msra.mxu0 0.0
    %1022 = vmatprep.subr.mxu0 0.0
    %1023 = vmatpush1.msra.mxu0 0.0
    %1024 = vmatprep.subr.mxu0 0.0
    %1025 = vmatpush1.msra.mxu0 0.0
    %1026 = vmatprep.subr.mxu0 0.0
    %1027 = vmatpush1.msra.mxu0 0.0
    %1028 = vmatprep.subr.mxu0 0.0
    %1029 = vmatpush1.msra.mxu0 0.0
    %1030 = vmatprep.subr.mxu0 0.0
    %1031 = vmatpush1.msra.mxu0 0.0
    %1032 = vmatprep.subr.mxu0 0.0
    %1033 = vmatpush1.msra.mxu0 0.0
    %1034 = vmatprep.subr.mxu0 0.0
    %1035 = vmatpush1.msra.mxu0 0.0
    %1036 = vmatprep.subr.mxu0 0.0
    %1037 = vmatpush1.msra.mxu0 0.0
    %1038 = vmatprep.subr.mxu0 0.0
    %1039 = vmatpush1.msra.mxu0 0.0
    %1040 = vmatprep.subr.mxu0 0.0
    %1041 = vmatpush1.msra.mxu0 0.0
    %1042 = vmatprep.subr.mxu0 0.0
    %1043 = vmatpush1.msra.mxu0 0.0
    %1044 = vmatprep.subr.mxu0 0.0
    %1045 = vmatpush1.msra.mxu0 0.0
    %1046 = vmatprep.subr.mxu0 0.0
    %1047 = vmatpush1.msra.mxu0 0.0
    %1048 = vmatprep.subr.mxu0 0.0
    %1049 = vmatpush1.msra.mxu0 0.0
    %1050 = vmatprep.subr.mxu0 0.0
    %1051 = vmatpush1.msra.mxu0 0.0
    %1052 = vmatprep.mubr.f32.mxu0 0.0
    %1053 = vmatmul.mubr.f32.gmra.mrb[0].mxu0 %v817
    %v1054 = vpop.f32.mrb[0].mxu0
    %v1055 = vadd.f32 %v637, %v1054
    %v1056 = vpop.f32.mrb[0].mxu0
    %v1057 = vadd.f32 %v641, %v1056
    %1058 = vdwg.mxu0
    %1059 = vmatprep.subr.mxu0 0.0
    %1060 = vmatpush1.msra.mxu0 %v229
    %1061 = vmatprep.subr.mxu0 0.0
    %1062 = vmatpush1.msra.mxu0 %v232
    %1063 = vmatprep.subr.mxu0 0.0
    %1064 = vmatpush1.msra.mxu0 %v235
    %1065 = vmatprep.subr.mxu0 0.0
    %1066 = vmatpush1.msra.mxu0 %v238
    %1067 = vmatprep.subr.mxu0 0.0
    %1068 = vmatpush1.msra.mxu0 %v241
    %1069 = vmatprep.subr.mxu0 0.0
    %1070 = vmatpush1.msra.mxu0 %v244
    %1071 = vmatprep.subr.mxu0 0.0
    %1072 = vmatpush1.msra.mxu0 %v247
    %1073 = vmatprep.subr.mxu0 0.0
    %1074 = vmatpush1.msra.mxu0 %v250
    %1075 = vmatprep.subr.mxu0 0.0
    %1076 = vmatpush1.msra.mxu0 %v253
    %1077 = vmatprep.subr.mxu0 0.0
    %1078 = vmatpush1.msra.mxu0 %v256
    %1079 = vmatprep.subr.mxu0 0.0
    %1080 = vmatpush1.msra.mxu0 %v259
    %1081 = vmatprep.subr.mxu0 0.0
    %1082 = vmatpush1.msra.mxu0 %v262
    %1083 = vmatprep.subr.mxu0 0.0
    %1084 = vmatpush1.msra.mxu0 %v265
    %1085 = vmatprep.subr.mxu0 0.0
    %1086 = vmatpush1.msra.mxu0 %v268
    %1087 = vmatprep.subr.mxu0 0.0
    %1088 = vmatpush1.msra.mxu0 %v271
    %1089 = vmatprep.subr.mxu0 0.0
    %1090 = vmatpush1.msra.mxu0 %v274
    %1091 = vmatprep.subr.mxu0 0.0
    %1092 = vmatpush1.msra.mxu0 0.0
    %1093 = vmatprep.subr.mxu0 0.0
    %1094 = vmatpush1.msra.mxu0 0.0
    %1095 = vmatprep.subr.mxu0 0.0
    %1096 = vmatpush1.msra.mxu0 0.0
    %1097 = vmatprep.subr.mxu0 0.0
    %1098 = vmatpush1.msra.mxu0 0.0
    %1099 = vmatprep.subr.mxu0 0.0
    %1100 = vmatpush1.msra.mxu0 0.0
    %1101 = vmatprep.subr.mxu0 0.0
    %1102 = vmatpush1.msra.mxu0 0.0
    %1103 = vmatprep.subr.mxu0 0.0
    %1104 = vmatpush1.msra.mxu0 0.0
    %1105 = vmatprep.subr.mxu0 0.0
    %1106 = vmatpush1.msra.mxu0 0.0
    %1107 = vmatprep.subr.mxu0 0.0
    %1108 = vmatpush1.msra.mxu0 0.0
    %1109 = vmatprep.subr.mxu0 0.0
    %1110 = vmatpush1.msra.mxu0 0.0
    %1111 = vmatprep.subr.mxu0 0.0
    %1112 = vmatpush1.msra.mxu0 0.0
    %1113 = vmatprep.subr.mxu0 0.0
    %1114 = vmatpush1.msra.mxu0 0.0
    %1115 = vmatprep.subr.mxu0 0.0
    %1116 = vmatpush1.msra.mxu0 0.0
    %1117 = vmatprep.subr.mxu0 0.0
    %1118 = vmatpush1.msra.mxu0 0.0
    %1119 = vmatprep.subr.mxu0 0.0
    %1120 = vmatpush1.msra.mxu0 0.0
    %1121 = vmatprep.subr.mxu0 0.0
    %1122 = vmatpush1.msra.mxu0 0.0
    %1123 = vmatprep.mubr.f32.mxu0 0.0
    %1124 = vmatmul.mubr.f32.gmra.mrb[0].mxu0 %v817
    %v1125 = vpop.f32.mrb[0].mxu0
    %v1126 = vadd.f32 %v645, %v1125
    %v1127 = vpop.f32.mrb[0].mxu0
    %1128 = vdwg.mxu0
    %v1129 = vadd.f32 %v914, %v1055
    %v1130 = vxor.u32 %v1129, 2147483648
    %v1131 = vmul.f32 %v1130, 1.442695
    %v1132 = vpow.pop %v1131
    %v1133 = vadd.f32 %v1132, 1.0
    %v1134 = vrcp.pop %v1133
    %v1135 = vmul.f32 1.0, %v1134
    %v1136 = vadd.f32 %v916, %v1057
    %v1137 = vxor.u32 %v1136, 2147483648
    %v1138 = vmul.f32 %v1137, 1.442695
    %v1139 = vpow.pop %v1138
    %v1140 = vadd.f32 %v1139, 1.0
    %v1141 = vrcp.pop %v1140
    %v1142 = vmul.f32 1.0, %v1141
    %v1143 = vmul.f32 %v1135, %v1126
    %v1144 = vadd.f32 %v985, %v1143
    %v1145 = vtanh.pop %v1144
    %v1146 = vsub.f32 1.0, %v1142
    %v1147 = vmul.f32 %v1146, %v1145
    %v1148 = vmul.f32 %v1142, %v817
    %v1149 = vadd.f32 %v1147, %v1148
    %vm1150 = vcmp.gt.s32.totalorder %v474, 1
    %v1151 = vsel %vm1150, 1, 0
    %1152 = vset.pattern.permute.xlu0 0
    %1153 = vperm.xlu0 %1152, %v1151
    %v1154 = vpop.permute.xlu0 %1153
    %vm1155 = vcmp.eq.s32.totalorder %v1154, 1
    %v1156 = vsel %vm1155, %v1149, %v817
    %v1157 = vsel %vm1155, %v1149, 0.0
    %v1160 = vunpack.c.l.s4 1966171168
    %v1161 = vunpack.c.0.s8 %v1160
    %v1162 = vlaneseq
    %v1163 = vshrl.u32 %v1162, 7
    %v1164 = vsub.s32 %v1161, %v1163
    %v1165 = vrot.slane %v1157, %v1164
    %v1166 = vcombine.high %v1165, %v1165
    %v1168 = vunpack.c.l.s4 1966171168
    %v1169 = vunpack.c.0.s8 %v1168
    %v1170 = vlaneseq
    %v1171 = vshrl.u32 %v1170, 7
    %v1172 = vsub.s32 %v1169, %v1171
    %v1173 = vrot.slane %v1165, %v1172
    %v1175 = vunpack.c.l.s4 1966171168
    %v1176 = vunpack.c.0.s8 %v1175
    %v1177 = vlaneseq
    %v1178 = vshrl.u32 %v1177, 7
    %v1179 = vsub.s32 %v1176, %v1178
    %v1180 = vrot.slane %v1166, %v1179
    %1183 = vst [vmem:[#allocation2 + $0x1] sm:$0x1] %v1173
    %1184 = vst [vmem:[#allocation2 + $0x9] sm:$0x1] %v1180
    %s1185 = scalar_lea.vmem [#allocation4], 4
    %v1186 = vld [vmem:[%s1185] sm:$0x3]
    %1187 = vmatprep.subr.mxu0 %v180
    %1188 = vmatpush1.msra.mxu0 %v179
    %1189 = vmatprep.subr.mxu0 %v183
    %1190 = vmatpush1.msra.mxu0 %v182
    %1191 = vmatprep.subr.mxu0 %v186
    %1192 = vmatpush1.msra.mxu0 %v185
    %1193 = vmatprep.subr.mxu0 %v189
    %1194 = vmatpush1.msra.mxu0 %v188
    %1195 = vmatprep.subr.mxu0 %v192
    %1196 = vmatpush1.msra.mxu0 %v191
    %1197 = vmatprep.subr.mxu0 %v195
    %1198 = vmatpush1.msra.mxu0 %v194
    %1199 = vmatprep.subr.mxu0 %v198
    %1200 = vmatpush1.msra.mxu0 %v197
    %1201 = vmatprep.subr.mxu0 %v201
    %1202 = vmatpush1.msra.mxu0 %v200
    %1203 = vmatprep.subr.mxu0 %v204
    %1204 = vmatpush1.msra.mxu0 %v203
    %1205 = vmatprep.subr.mxu0 %v207
    %1206 = vmatpush1.msra.mxu0 %v206
    %1207 = vmatprep.subr.mxu0 %v210
    %1208 = vmatpush1.msra.mxu0 %v209
    %1209 = vmatprep.subr.mxu0 %v213
    %1210 = vmatpush1.msra.mxu0 %v212
    %1211 = vmatprep.subr.mxu0 %v216
    %1212 = vmatpush1.msra.mxu0 %v215
    %1213 = vmatprep.subr.mxu0 %v219
    %1214 = vmatpush1.msra.mxu0 %v218
    %1215 = vmatprep.subr.mxu0 %v222
    %1216 = vmatpush1.msra.mxu0 %v221
    %1217 = vmatprep.subr.mxu0 %v225
    %1218 = vmatpush1.msra.mxu0 %v224
    %1219 = vmatprep.subr.mxu0 0.0
    %1220 = vmatpush1.msra.mxu0 0.0
    %1221 = vmatprep.subr.mxu0 0.0
    %1222 = vmatpush1.msra.mxu0 0.0
    %1223 = vmatprep.subr.mxu0 0.0
    %1224 = vmatpush1.msra.mxu0 0.0
    %1225 = vmatprep.subr.mxu0 0.0
    %1226 = vmatpush1.msra.mxu0 0.0
    %1227 = vmatprep.subr.mxu0 0.0
    %1228 = vmatpush1.msra.mxu0 0.0
    %1229 = vmatprep.subr.mxu0 0.0
    %1230 = vmatpush1.msra.mxu0 0.0
    %1231 = vmatprep.subr.mxu0 0.0
    %1232 = vmatpush1.msra.mxu0 0.0
    %1233 = vmatprep.subr.mxu0 0.0
    %1234 = vmatpush1.msra.mxu0 0.0
    %1235 = vmatprep.subr.mxu0 0.0
    %1236 = vmatpush1.msra.mxu0 0.0
    %1237 = vmatprep.subr.mxu0 0.0
    %1238 = vmatpush1.msra.mxu0 0.0
    %1239 = vmatprep.subr.mxu0 0.0
    %1240 = vmatpush1.msra.mxu0 0.0
    %1241 = vmatprep.subr.mxu0 0.0
    %1242 = vmatpush1.msra.mxu0 0.0
    %1243 = vmatprep.subr.mxu0 0.0
    %1244 = vmatpush1.msra.mxu0 0.0
    %1245 = vmatprep.subr.mxu0 0.0
    %1246 = vmatpush1.msra.mxu0 0.0
    %1247 = vmatprep.subr.mxu0 0.0
    %1248 = vmatpush1.msra.mxu0 0.0
    %1249 = vmatprep.subr.mxu0 0.0
    %1250 = vmatpush1.msra.mxu0 0.0
    %1251 = vmatprep.mubr.f32.mxu0 0.0
    %1252 = vmatmul.mubr.f32.gmra.mrb[0].mxu0 %v1186
    %v1253 = vpop.f32.mrb[0].mxu0
    %v1254 = vadd.f32 %v480, %v1253
    %v1255 = vpop.f32.mrb[0].mxu0
    %v1256 = vadd.f32 %v484, %v1255
    %1257 = vdwg.mxu0
    %1258 = vmatprep.subr.mxu0 0.0
    %1259 = vmatpush1.msra.mxu0 %v181
    %1260 = vmatprep.subr.mxu0 0.0
    %1261 = vmatpush1.msra.mxu0 %v184
    %1262 = vmatprep.subr.mxu0 0.0
    %1263 = vmatpush1.msra.mxu0 %v187
    %1264 = vmatprep.subr.mxu0 0.0
    %1265 = vmatpush1.msra.mxu0 %v190
    %1266 = vmatprep.subr.mxu0 0.0
    %1267 = vmatpush1.msra.mxu0 %v193
    %1268 = vmatprep.subr.mxu0 0.0
    %1269 = vmatpush1.msra.mxu0 %v196
    %1270 = vmatprep.subr.mxu0 0.0
    %1271 = vmatpush1.msra.mxu0 %v199
    %1272 = vmatprep.subr.mxu0 0.0
    %1273 = vmatpush1.msra.mxu0 %v202
    %1274 = vmatprep.subr.mxu0 0.0
    %1275 = vmatpush1.msra.mxu0 %v205
    %1276 = vmatprep.subr.mxu0 0.0
    %1277 = vmatpush1.msra.mxu0 %v208
    %1278 = vmatprep.subr.mxu0 0.0
    %1279 = vmatpush1.msra.mxu0 %v211
    %1280 = vmatprep.subr.mxu0 0.0
    %1281 = vmatpush1.msra.mxu0 %v214
    %1282 = vmatprep.subr.mxu0 0.0
    %1283 = vmatpush1.msra.mxu0 %v217
    %1284 = vmatprep.subr.mxu0 0.0
    %1285 = vmatpush1.msra.mxu0 %v220
    %1286 = vmatprep.subr.mxu0 0.0
    %1287 = vmatpush1.msra.mxu0 %v223
    %1288 = vmatprep.subr.mxu0 0.0
    %1289 = vmatpush1.msra.mxu0 %v226
    %1290 = vmatprep.subr.mxu0 0.0
    %1291 = vmatpush1.msra.mxu0 0.0
    %1292 = vmatprep.subr.mxu0 0.0
    %1293 = vmatpush1.msra.mxu0 0.0
    %1294 = vmatprep.subr.mxu0 0.0
    %1295 = vmatpush1.msra.mxu0 0.0
    %1296 = vmatprep.subr.mxu0 0.0
    %1297 = vmatpush1.msra.mxu0 0.0
    %1298 = vmatprep.subr.mxu0 0.0
    %1299 = vmatpush1.msra.mxu0 0.0
    %1300 = vmatprep.subr.mxu0 0.0
    %1301 = vmatpush1.msra.mxu0 0.0
    %1302 = vmatprep.subr.mxu0 0.0
    %1303 = vmatpush1.msra.mxu0 0.0
    %1304 = vmatprep.subr.mxu0 0.0
    %1305 = vmatpush1.msra.mxu0 0.0
    %1306 = vmatprep.subr.mxu0 0.0
    %1307 = vmatpush1.msra.mxu0 0.0
    %1308 = vmatprep.subr.mxu0 0.0
    %1309 = vmatpush1.msra.mxu0 0.0
    %1310 = vmatprep.subr.mxu0 0.0
    %1311 = vmatpush1.msra.mxu0 0.0
    %1312 = vmatprep.subr.mxu0 0.0
    %1313 = vmatpush1.msra.mxu0 0.0
    %1314 = vmatprep.subr.mxu0 0.0
    %1315 = vmatpush1.msra.mxu0 0.0
    %1316 = vmatprep.subr.mxu0 0.0
    %1317 = vmatpush1.msra.mxu0 0.0
    %1318 = vmatprep.subr.mxu0 0.0
    %1319 = vmatpush1.msra.mxu0 0.0
    %1320 = vmatprep.subr.mxu0 0.0
    %1321 = vmatpush1.msra.mxu0 0.0
    %1322 = vmatprep.mubr.f32.mxu0 0.0
    %1323 = vmatmul.mubr.f32.gmra.mrb[0].mxu0 %v1186
    %v1324 = vpop.f32.mrb[0].mxu0
    %v1325 = vadd.f32 %v488, %v1324
    %v1326 = vpop.f32.mrb[0].mxu0
    %1327 = vdwg.mxu0
    %1328 = vmatprep.subr.mxu0 %v228
    %1329 = vmatpush1.msra.mxu0 %v227
    %1330 = vmatprep.subr.mxu0 %v231
    %1331 = vmatpush1.msra.mxu0 %v230
    %1332 = vmatprep.subr.mxu0 %v234
    %1333 = vmatpush1.msra.mxu0 %v233
    %1334 = vmatprep.subr.mxu0 %v237
    %1335 = vmatpush1.msra.mxu0 %v236
    %1336 = vmatprep.subr.mxu0 %v240
    %1337 = vmatpush1.msra.mxu0 %v239
    %1338 = vmatprep.subr.mxu0 %v243
    %1339 = vmatpush1.msra.mxu0 %v242
    %1340 = vmatprep.subr.mxu0 %v246
    %1341 = vmatpush1.msra.mxu0 %v245
    %1342 = vmatprep.subr.mxu0 %v249
    %1343 = vmatpush1.msra.mxu0 %v248
    %1344 = vmatprep.subr.mxu0 %v252
    %1345 = vmatpush1.msra.mxu0 %v251
    %1346 = vmatprep.subr.mxu0 %v255
    %1347 = vmatpush1.msra.mxu0 %v254
    %1348 = vmatprep.subr.mxu0 %v258
    %1349 = vmatpush1.msra.mxu0 %v257
    %1350 = vmatprep.subr.mxu0 %v261
    %1351 = vmatpush1.msra.mxu0 %v260
    %1352 = vmatprep.subr.mxu0 %v264
    %1353 = vmatpush1.msra.mxu0 %v263
    %1354 = vmatprep.subr.mxu0 %v267
    %1355 = vmatpush1.msra.mxu0 %v266
    %1356 = vmatprep.subr.mxu0 %v270
    %1357 = vmatpush1.msra.mxu0 %v269
    %1358 = vmatprep.subr.mxu0 %v273
    %1359 = vmatpush1.msra.mxu0 %v272
    %1360 = vmatprep.subr.mxu0 0.0
    %1361 = vmatpush1.msra.mxu0 0.0
    %1362 = vmatprep.subr.mxu0 0.0
    %1363 = vmatpush1.msra.mxu0 0.0
    %1364 = vmatprep.subr.mxu0 0.0
    %1365 = vmatpush1.msra.mxu0 0.0
    %1366 = vmatprep.subr.mxu0 0.0
    %1367 = vmatpush1.msra.mxu0 0.0
    %1368 = vmatprep.subr.mxu0 0.0
    %1369 = vmatpush1.msra.mxu0 0.0
    %1370 = vmatprep.subr.mxu0 0.0
    %1371 = vmatpush1.msra.mxu0 0.0
    %1372 = vmatprep.subr.mxu0 0.0
    %1373 = vmatpush1.msra.mxu0 0.0
    %1374 = vmatprep.subr.mxu0 0.0
    %1375 = vmatpush1.msra.mxu0 0.0
    %1376 = vmatprep.subr.mxu0 0.0
    %1377 = vmatpush1.msra.mxu0 0.0
    %1378 = vmatprep.subr.mxu0 0.0
    %1379 = vmatpush1.msra.mxu0 0.0
    %1380 = vmatprep.subr.mxu0 0.0
    %1381 = vmatpush1.msra.mxu0 0.0
    %1382 = vmatprep.subr.mxu0 0.0
    %1383 = vmatpush1.msra.mxu0 0.0
    %1384 = vmatprep.subr.mxu0 0.0
    %1385 = vmatpush1.msra.mxu0 0.0
    %1386 = vmatprep.subr.mxu0 0.0
    %1387 = vmatpush1.msra.mxu0 0.0
    %1388 = vmatprep.subr.mxu0 0.0
    %1389 = vmatpush1.msra.mxu0 0.0
    %1390 = vmatprep.subr.mxu0 0.0
    %1391 = vmatpush1.msra.mxu0 0.0
    %1392 = vmatprep.mubr.f32.mxu0 0.0
    %1393 = vmatmul.mubr.f32.gmra.mrb[0].mxu0 %v1156
    %v1394 = vpop.f32.mrb[0].mxu0
    %v1395 = vadd.f32 %v637, %v1394
    %v1396 = vpop.f32.mrb[0].mxu0
    %v1397 = vadd.f32 %v641, %v1396
    %1398 = vdwg.mxu0
    %1399 = vmatprep.subr.mxu0 0.0
    %1400 = vmatpush1.msra.mxu0 %v229
    %1401 = vmatprep.subr.mxu0 0.0
    %1402 = vmatpush1.msra.mxu0 %v232
    %1403 = vmatprep.subr.mxu0 0.0
    %1404 = vmatpush1.msra.mxu0 %v235
    %1405 = vmatprep.subr.mxu0 0.0
    %1406 = vmatpush1.msra.mxu0 %v238
    %1407 = vmatprep.subr.mxu0 0.0
    %1408 = vmatpush1.msra.mxu0 %v241
    %1409 = vmatprep.subr.mxu0 0.0
    %1410 = vmatpush1.msra.mxu0 %v244
    %1411 = vmatprep.subr.mxu0 0.0
    %1412 = vmatpush1.msra.mxu0 %v247
    %1413 = vmatprep.subr.mxu0 0.0
    %1414 = vmatpush1.msra.mxu0 %v250
    %1415 = vmatprep.subr.mxu0 0.0
    %1416 = vmatpush1.msra.mxu0 %v253
    %1417 = vmatprep.subr.mxu0 0.0
    %1418 = vmatpush1.msra.mxu0 %v256
    %1419 = vmatprep.subr.mxu0 0.0
    %1420 = vmatpush1.msra.mxu0 %v259
    %1421 = vmatprep.subr.mxu0 0.0
    %1422 = vmatpush1.msra.mxu0 %v262
    %1423 = vmatprep.subr.mxu0 0.0
    %1424 = vmatpush1.msra.mxu0 %v265
    %1425 = vmatprep.subr.mxu0 0.0
    %1426 = vmatpush1.msra.mxu0 %v268
    %1427 = vmatprep.subr.mxu0 0.0
    %1428 = vmatpush1.msra.mxu0 %v271
    %1429 = vmatprep.subr.mxu0 0.0
    %1430 = vmatpush1.msra.mxu0 %v274
    %1431 = vmatprep.subr.mxu0 0.0
    %1432 = vmatpush1.msra.mxu0 0.0
    %1433 = vmatprep.subr.mxu0 0.0
    %1434 = vmatpush1.msra.mxu0 0.0
    %1435 = vmatprep.subr.mxu0 0.0
    %1436 = vmatpush1.msra.mxu0 0.0
    %1437 = vmatprep.subr.mxu0 0.0
    %1438 = vmatpush1.msra.mxu0 0.0
    %1439 = vmatprep.subr.mxu0 0.0
    %1440 = vmatpush1.msra.mxu0 0.0
    %1441 = vmatprep.subr.mxu0 0.0
    %1442 = vmatpush1.msra.mxu0 0.0
    %1443 = vmatprep.subr.mxu0 0.0
    %1444 = vmatpush1.msra.mxu0 0.0
    %1445 = vmatprep.subr.mxu0 0.0
    %1446 = vmatpush1.msra.mxu0 0.0
    %1447 = vmatprep.subr.mxu0 0.0
    %1448 = vmatpush1.msra.mxu0 0.0
    %1449 = vmatprep.subr.mxu0 0.0
    %1450 = vmatpush1.msra.mxu0 0.0
    %1451 = vmatprep.subr.mxu0 0.0
    %1452 = vmatpush1.msra.mxu0 0.0
    %1453 = vmatprep.subr.mxu0 0.0
    %1454 = vmatpush1.msra.mxu0 0.0
    %1455 = vmatprep.subr.mxu0 0.0
    %1456 = vmatpush1.msra.mxu0 0.0
    %1457 = vmatprep.subr.mxu0 0.0
    %1458 = vmatpush1.msra.mxu0 0.0
    %1459 = vmatprep.subr.mxu0 0.0
    %1460 = vmatpush1.msra.mxu0 0.0
    %1461 = vmatprep.subr.mxu0 0.0
    %1462 = vmatpush1.msra.mxu0 0.0
    %1463 = vmatprep.mubr.f32.mxu0 0.0
    %1464 = vmatmul.mubr.f32.gmra.mrb[0].mxu0 %v1156
    %v1465 = vpop.f32.mrb[0].mxu0
    %v1466 = vadd.f32 %v645, %v1465
    %v1467 = vpop.f32.mrb[0].mxu0
    %1468 = vdwg.mxu0
    %v1469 = vadd.f32 %v1254, %v1395
    %v1470 = vxor.u32 %v1469, 2147483648
    %v1471 = vmul.f32 %v1470, 1.442695
    %v1472 = vpow.pop %v1471
    %v1473 = vadd.f32 %v1472, 1.0
    %v1474 = vrcp.pop %v1473
    %v1475 = vmul.f32 1.0, %v1474
    %v1476 = vadd.f32 %v1256, %v1397
    %v1477 = vxor.u32 %v1476, 2147483648
    %v1478 = vmul.f32 %v1477, 1.442695
    %v1479 = vpow.pop %v1478
    %v1480 = vadd.f32 %v1479, 1.0
    %v1481 = vrcp.pop %v1480
    %v1482 = vmul.f32 1.0, %v1481
    %v1483 = vmul.f32 %v1475, %v1466
    %v1484 = vadd.f32 %v1325, %v1483
    %v1485 = vtanh.pop %v1484
    %v1486 = vsub.f32 1.0, %v1482
    %v1487 = vmul.f32 %v1486, %v1485
    %v1488 = vmul.f32 %v1482, %v1156
    %v1489 = vadd.f32 %v1487, %v1488
    %vm1490 = vcmp.gt.s32.totalorder %v474, 2
    %v1491 = vsel %vm1490, 1, 0
    %1492 = vset.pattern.permute.xlu0 0
    %1493 = vperm.xlu0 %1492, %v1491
    %v1494 = vpop.permute.xlu0 %1493
    %vm1495 = vcmp.eq.s32.totalorder %v1494, 1
    %v1496 = vsel %vm1495, %v1489, %v1156
    %v1497 = vsel %vm1495, %v1489, 0.0
    %v1500 = vunpack.c.l.s4 1966171168
    %v1501 = vunpack.c.0.s8 %v1500
    %v1502 = vlaneseq
    %v1503 = vshrl.u32 %v1502, 7
    %v1504 = vsub.s32 %v1501, %v1503
    %v1505 = vrot.slane %v1497, %v1504
    %v1506 = vcombine.high %v1505, %v1505
    %v1508 = vunpack.c.l.s4 1966171168
    %v1509 = vunpack.c.0.s8 %v1508
    %v1510 = vlaneseq
    %v1511 = vshrl.u32 %v1510, 7
    %v1512 = vsub.s32 %v1509, %v1511
    %v1513 = vrot.slane %v1505, %v1512
    %v1515 = vunpack.c.l.s4 1966171168
    %v1516 = vunpack.c.0.s8 %v1515
    %v1517 = vlaneseq
    %v1518 = vshrl.u32 %v1517, 7
    %v1519 = vsub.s32 %v1516, %v1518
    %v1520 = vrot.slane %v1506, %v1519
    %1523 = vst [vmem:[#allocation2 + $0x2] sm:$0x1] %v1513
    %1524 = vst [vmem:[#allocation2 + $0xa] sm:$0x1] %v1520
    %s1525 = scalar_lea.vmem [#allocation4], 6
    %v1526 = vld [vmem:[%s1525] sm:$0x3]
    %1527 = vmatprep.subr.mxu0 %v180
    %1528 = vmatpush1.msra.mxu0 %v179
    %1529 = vmatprep.subr.mxu0 %v183
    %1530 = vmatpush1.msra.mxu0 %v182
    %1531 = vmatprep.subr.mxu0 %v186
    %1532 = vmatpush1.msra.mxu0 %v185
    %1533 = vmatprep.subr.mxu0 %v189
    %1534 = vmatpush1.msra.mxu0 %v188
    %1535 = vmatprep.subr.mxu0 %v192
    %1536 = vmatpush1.msra.mxu0 %v191
    %1537 = vmatprep.subr.mxu0 %v195
    %1538 = vmatpush1.msra.mxu0 %v194
    %1539 = vmatprep.subr.mxu0 %v198
    %1540 = vmatpush1.msra.mxu0 %v197
    %1541 = vmatprep.subr.mxu0 %v201
    %1542 = vmatpush1.msra.mxu0 %v200
    %1543 = vmatprep.subr.mxu0 %v204
    %1544 = vmatpush1.msra.mxu0 %v203
    %1545 = vmatprep.subr.mxu0 %v207
    %1546 = vmatpush1.msra.mxu0 %v206
    %1547 = vmatprep.subr.mxu0 %v210
    %1548 = vmatpush1.msra.mxu0 %v209
    %1549 = vmatprep.subr.mxu0 %v213
    %1550 = vmatpush1.msra.mxu0 %v212
    %1551 = vmatprep.subr.mxu0 %v216
    %1552 = vmatpush1.msra.mxu0 %v215
    %1553 = vmatprep.subr.mxu0 %v219
    %1554 = vmatpush1.msra.mxu0 %v218
    %1555 = vmatprep.subr.mxu0 %v222
    %1556 = vmatpush1.msra.mxu0 %v221
    %1557 = vmatprep.subr.mxu0 %v225
    %1558 = vmatpush1.msra.mxu0 %v224
    %1559 = vmatprep.subr.mxu0 0.0
    %1560 = vmatpush1.msra.mxu0 0.0
    %1561 = vmatprep.subr.mxu0 0.0
    %1562 = vmatpush1.msra.mxu0 0.0
    %1563 = vmatprep.subr.mxu0 0.0
    %1564 = vmatpush1.msra.mxu0 0.0
    %1565 = vmatprep.subr.mxu0 0.0
    %1566 = vmatpush1.msra.mxu0 0.0
    %1567 = vmatprep.subr.mxu0 0.0
    %1568 = vmatpush1.msra.mxu0 0.0
    %1569 = vmatprep.subr.mxu0 0.0
    %1570 = vmatpush1.msra.mxu0 0.0
    %1571 = vmatprep.subr.mxu0 0.0
    %1572 = vmatpush1.msra.mxu0 0.0
    %1573 = vmatprep.subr.mxu0 0.0
    %1574 = vmatpush1.msra.mxu0 0.0
    %1575 = vmatprep.subr.mxu0 0.0
    %1576 = vmatpush1.msra.mxu0 0.0
    %1577 = vmatprep.subr.mxu0 0.0
    %1578 = vmatpush1.msra.mxu0 0.0
    %1579 = vmatprep.subr.mxu0 0.0
    %1580 = vmatpush1.msra.mxu0 0.0
    %1581 = vmatprep.subr.mxu0 0.0
    %1582 = vmatpush1.msra.mxu0 0.0
    %1583 = vmatprep.subr.mxu0 0.0
    %1584 = vmatpush1.msra.mxu0 0.0
    %1585 = vmatprep.subr.mxu0 0.0
    %1586 = vmatpush1.msra.mxu0 0.0
    %1587 = vmatprep.subr.mxu0 0.0
    %1588 = vmatpush1.msra.mxu0 0.0
    %1589 = vmatprep.subr.mxu0 0.0
    %1590 = vmatpush1.msra.mxu0 0.0
    %1591 = vmatprep.mubr.f32.mxu0 0.0
    %1592 = vmatmul.mubr.f32.gmra.mrb[0].mxu0 %v1526
    %v1593 = vpop.f32.mrb[0].mxu0
    %v1594 = vadd.f32 %v480, %v1593
    %v1595 = vpop.f32.mrb[0].mxu0
    %v1596 = vadd.f32 %v484, %v1595
    %1597 = vdwg.mxu0
    %1598 = vmatprep.subr.mxu0 0.0
    %1599 = vmatpush1.msra.mxu0 %v181
    %1600 = vmatprep.subr.mxu0 0.0
    %1601 = vmatpush1.msra.mxu0 %v184
    %1602 = vmatprep.subr.mxu0 0.0
    %1603 = vmatpush1.msra.mxu0 %v187
    %1604 = vmatprep.subr.mxu0 0.0
    %1605 = vmatpush1.msra.mxu0 %v190
    %1606 = vmatprep.subr.mxu0 0.0
    %1607 = vmatpush1.msra.mxu0 %v193
    %1608 = vmatprep.subr.mxu0 0.0
    %1609 = vmatpush1.msra.mxu0 %v196
    %1610 = vmatprep.subr.mxu0 0.0
    %1611 = vmatpush1.msra.mxu0 %v199
    %1612 = vmatprep.subr.mxu0 0.0
    %1613 = vmatpush1.msra.mxu0 %v202
    %1614 = vmatprep.subr.mxu0 0.0
    %1615 = vmatpush1.msra.mxu0 %v205
    %1616 = vmatprep.subr.mxu0 0.0
    %1617 = vmatpush1.msra.mxu0 %v208
    %1618 = vmatprep.subr.mxu0 0.0
    %1619 = vmatpush1.msra.mxu0 %v211
    %1620 = vmatprep.subr.mxu0 0.0
    %1621 = vmatpush1.msra.mxu0 %v214
    %1622 = vmatprep.subr.mxu0 0.0
    %1623 = vmatpush1.msra.mxu0 %v217
    %1624 = vmatprep.subr.mxu0 0.0
    %1625 = vmatpush1.msra.mxu0 %v220
    %1626 = vmatprep.subr.mxu0 0.0
    %1627 = vmatpush1.msra.mxu0 %v223
    %1628 = vmatprep.subr.mxu0 0.0
    %1629 = vmatpush1.msra.mxu0 %v226
    %1630 = vmatprep.subr.mxu0 0.0
    %1631 = vmatpush1.msra.mxu0 0.0
    %1632 = vmatprep.subr.mxu0 0.0
    %1633 = vmatpush1.msra.mxu0 0.0
    %1634 = vmatprep.subr.mxu0 0.0
    %1635 = vmatpush1.msra.mxu0 0.0
    %1636 = vmatprep.subr.mxu0 0.0
    %1637 = vmatpush1.msra.mxu0 0.0
    %1638 = vmatprep.subr.mxu0 0.0
    %1639 = vmatpush1.msra.mxu0 0.0
    %1640 = vmatprep.subr.mxu0 0.0
    %1641 = vmatpush1.msra.mxu0 0.0
    %1642 = vmatprep.subr.mxu0 0.0
    %1643 = vmatpush1.msra.mxu0 0.0
    %1644 = vmatprep.subr.mxu0 0.0
    %1645 = vmatpush1.msra.mxu0 0.0
    %1646 = vmatprep.subr.mxu0 0.0
    %1647 = vmatpush1.msra.mxu0 0.0
    %1648 = vmatprep.subr.mxu0 0.0
    %1649 = vmatpush1.msra.mxu0 0.0
    %1650 = vmatprep.subr.mxu0 0.0
    %1651 = vmatpush1.msra.mxu0 0.0
    %1652 = vmatprep.subr.mxu0 0.0
    %1653 = vmatpush1.msra.mxu0 0.0
    %1654 = vmatprep.subr.mxu0 0.0
    %1655 = vmatpush1.msra.mxu0 0.0
    %1656 = vmatprep.subr.mxu0 0.0
    %1657 = vmatpush1.msra.mxu0 0.0
    %1658 = vmatprep.subr.mxu0 0.0
    %1659 = vmatpush1.msra.mxu0 0.0
    %1660 = vmatprep.subr.mxu0 0.0
    %1661 = vmatpush1.msra.mxu0 0.0
    %1662 = vmatprep.mubr.f32.mxu0 0.0
    %1663 = vmatmul.mubr.f32.gmra.mrb[0].mxu0 %v1526
    %v1664 = vpop.f32.mrb[0].mxu0
    %v1665 = vadd.f32 %v488, %v1664
    %v1666 = vpop.f32.mrb[0].mxu0
    %1667 = vdwg.mxu0
    %1668 = vmatprep.subr.mxu0 %v228
    %1669 = vmatpush1.msra.mxu0 %v227
    %1670 = vmatprep.subr.mxu0 %v231
    %1671 = vmatpush1.msra.mxu0 %v230
    %1672 = vmatprep.subr.mxu0 %v234
    %1673 = vmatpush1.msra.mxu0 %v233
    %1674 = vmatprep.subr.mxu0 %v237
    %1675 = vmatpush1.msra.mxu0 %v236
    %1676 = vmatprep.subr.mxu0 %v240
    %1677 = vmatpush1.msra.mxu0 %v239
    %1678 = vmatprep.subr.mxu0 %v243
    %1679 = vmatpush1.msra.mxu0 %v242
    %1680 = vmatprep.subr.mxu0 %v246
    %1681 = vmatpush1.msra.mxu0 %v245
    %1682 = vmatprep.subr.mxu0 %v249
    %1683 = vmatpush1.msra.mxu0 %v248
    %1684 = vmatprep.subr.mxu0 %v252
    %1685 = vmatpush1.msra.mxu0 %v251
    %1686 = vmatprep.subr.mxu0 %v255
    %1687 = vmatpush1.msra.mxu0 %v254
    %1688 = vmatprep.subr.mxu0 %v258
    %1689 = vmatpush1.msra.mxu0 %v257
    %1690 = vmatprep.subr.mxu0 %v261
    %1691 = vmatpush1.msra.mxu0 %v260
    %1692 = vmatprep.subr.mxu0 %v264
    %1693 = vmatpush1.msra.mxu0 %v263
    %1694 = vmatprep.subr.mxu0 %v267
    %1695 = vmatpush1.msra.mxu0 %v266
    %1696 = vmatprep.subr.mxu0 %v270
    %1697 = vmatpush1.msra.mxu0 %v269
    %1698 = vmatprep.subr.mxu0 %v273
    %1699 = vmatpush1.msra.mxu0 %v272
    %1700 = vmatprep.subr.mxu0 0.0
    %1701 = vmatpush1.msra.mxu0 0.0
    %1702 = vmatprep.subr.mxu0 0.0
    %1703 = vmatpush1.msra.mxu0 0.0
    %1704 = vmatprep.subr.mxu0 0.0
    %1705 = vmatpush1.msra.mxu0 0.0
    %1706 = vmatprep.subr.mxu0 0.0
    %1707 = vmatpush1.msra.mxu0 0.0
    %1708 = vmatprep.subr.mxu0 0.0
    %1709 = vmatpush1.msra.mxu0 0.0
    %1710 = vmatprep.subr.mxu0 0.0
    %1711 = vmatpush1.msra.mxu0 0.0
    %1712 = vmatprep.subr.mxu0 0.0
    %1713 = vmatpush1.msra.mxu0 0.0
    %1714 = vmatprep.subr.mxu0 0.0
    %1715 = vmatpush1.msra.mxu0 0.0
    %1716 = vmatprep.subr.mxu0 0.0
    %1717 = vmatpush1.msra.mxu0 0.0
    %1718 = vmatprep.subr.mxu0 0.0
    %1719 = vmatpush1.msra.mxu0 0.0
    %1720 = vmatprep.subr.mxu0 0.0
    %1721 = vmatpush1.msra.mxu0 0.0
    %1722 = vmatprep.subr.mxu0 0.0
    %1723 = vmatpush1.msra.mxu0 0.0
    %1724 = vmatprep.subr.mxu0 0.0
    %1725 = vmatpush1.msra.mxu0 0.0
    %1726 = vmatprep.subr.mxu0 0.0
    %1727 = vmatpush1.msra.mxu0 0.0
    %1728 = vmatprep.subr.mxu0 0.0
    %1729 = vmatpush1.msra.mxu0 0.0
    %1730 = vmatprep.subr.mxu0 0.0
    %1731 = vmatpush1.msra.mxu0 0.0
    %1732 = vmatprep.mubr.f32.mxu0 0.0
    %1733 = vmatmul.mubr.f32.gmra.mrb[0].mxu0 %v1496
    %v1734 = vpop.f32.mrb[0].mxu0
    %v1735 = vadd.f32 %v637, %v1734
    %v1736 = vpop.f32.mrb[0].mxu0
    %v1737 = vadd.f32 %v641, %v1736
    %1738 = vdwg.mxu0
    %1739 = vmatprep.subr.mxu0 0.0
    %1740 = vmatpush1.msra.mxu0 %v229
    %1741 = vmatprep.subr.mxu0 0.0
    %1742 = vmatpush1.msra.mxu0 %v232
    %1743 = vmatprep.subr.mxu0 0.0
    %1744 = vmatpush1.msra.mxu0 %v235
    %1745 = vmatprep.subr.mxu0 0.0
    %1746 = vmatpush1.msra.mxu0 %v238
    %1747 = vmatprep.subr.mxu0 0.0
    %1748 = vmatpush1.msra.mxu0 %v241
    %1749 = vmatprep.subr.mxu0 0.0
    %1750 = vmatpush1.msra.mxu0 %v244
    %1751 = vmatprep.subr.mxu0 0.0
    %1752 = vmatpush1.msra.mxu0 %v247
    %1753 = vmatprep.subr.mxu0 0.0
    %1754 = vmatpush1.msra.mxu0 %v250
    %1755 = vmatprep.subr.mxu0 0.0
    %1756 = vmatpush1.msra.mxu0 %v253
    %1757 = vmatprep.subr.mxu0 0.0
    %1758 = vmatpush1.msra.mxu0 %v256
    %1759 = vmatprep.subr.mxu0 0.0
    %1760 = vmatpush1.msra.mxu0 %v259
    %1761 = vmatprep.subr.mxu0 0.0
    %1762 = vmatpush1.msra.mxu0 %v262
    %1763 = vmatprep.subr.mxu0 0.0
    %1764 = vmatpush1.msra.mxu0 %v265
    %1765 = vmatprep.subr.mxu0 0.0
    %1766 = vmatpush1.msra.mxu0 %v268
    %1767 = vmatprep.subr.mxu0 0.0
    %1768 = vmatpush1.msra.mxu0 %v271
    %1769 = vmatprep.subr.mxu0 0.0
    %1770 = vmatpush1.msra.mxu0 %v274
    %1771 = vmatprep.subr.mxu0 0.0
    %1772 = vmatpush1.msra.mxu0 0.0
    %1773 = vmatprep.subr.mxu0 0.0
    %1774 = vmatpush1.msra.mxu0 0.0
    %1775 = vmatprep.subr.mxu0 0.0
    %1776 = vmatpush1.msra.mxu0 0.0
    %1777 = vmatprep.subr.mxu0 0.0
    %1778 = vmatpush1.msra.mxu0 0.0
    %1779 = vmatprep.subr.mxu0 0.0
    %1780 = vmatpush1.msra.mxu0 0.0
    %1781 = vmatprep.subr.mxu0 0.0
    %1782 = vmatpush1.msra.mxu0 0.0
    %1783 = vmatprep.subr.mxu0 0.0
    %1784 = vmatpush1.msra.mxu0 0.0
    %1785 = vmatprep.subr.mxu0 0.0
    %1786 = vmatpush1.msra.mxu0 0.0
    %1787 = vmatprep.subr.mxu0 0.0
    %1788 = vmatpush1.msra.mxu0 0.0
    %1789 = vmatprep.subr.mxu0 0.0
    %1790 = vmatpush1.msra.mxu0 0.0
    %1791 = vmatprep.subr.mxu0 0.0
    %1792 = vmatpush1.msra.mxu0 0.0
    %1793 = vmatprep.subr.mxu0 0.0
    %1794 = vmatpush1.msra.mxu0 0.0
    %1795 = vmatprep.subr.mxu0 0.0
    %1796 = vmatpush1.msra.mxu0 0.0
    %1797 = vmatprep.subr.mxu0 0.0
    %1798 = vmatpush1.msra.mxu0 0.0
    %1799 = vmatprep.subr.mxu0 0.0
    %1800 = vmatpush1.msra.mxu0 0.0
    %1801 = vmatprep.subr.mxu0 0.0
    %1802 = vmatpush1.msra.mxu0 0.0
    %1803 = vmatprep.mubr.f32.mxu0 0.0
    %1804 = vmatmul.mubr.f32.gmra.mrb[0].mxu0 %v1496
    %v1805 = vpop.f32.mrb[0].mxu0
    %v1806 = vadd.f32 %v645, %v1805
    %v1807 = vpop.f32.mrb[0].mxu0
    %1808 = vdwg.mxu0
    %v1809 = vadd.f32 %v1594, %v1735
    %v1810 = vxor.u32 %v1809, 2147483648
    %v1811 = vmul.f32 %v1810, 1.442695
    %v1812 = vpow.pop %v1811
    %v1813 = vadd.f32 %v1812, 1.0
    %v1814 = vrcp.pop %v1813
    %v1815 = vmul.f32 1.0, %v1814
    %v1816 = vadd.f32 %v1596, %v1737
    %v1817 = vxor.u32 %v1816, 2147483648
    %v1818 = vmul.f32 %v1817, 1.442695
    %v1819 = vpow.pop %v1818
    %v1820 = vadd.f32 %v1819, 1.0
    %v1821 = vrcp.pop %v1820
    %v1822 = vmul.f32 1.0, %v1821
    %v1823 = vmul.f32 %v1815, %v1806
    %v1824 = vadd.f32 %v1665, %v1823
    %v1825 = vtanh.pop %v1824
    %v1826 = vsub.f32 1.0, %v1822
    %v1827 = vmul.f32 %v1826, %v1825
    %v1828 = vmul.f32 %v1822, %v1496
    %v1829 = vadd.f32 %v1827, %v1828
    %vm1830 = vcmp.gt.s32.totalorder %v474, 3
    %v1831 = vsel %vm1830, 1, 0
    %1832 = vset.pattern.permute.xlu0 0
    %1833 = vperm.xlu0 %1832, %v1831
    %v1834 = vpop.permute.xlu0 %1833
    %vm1835 = vcmp.eq.s32.totalorder %v1834, 1
    %v1836 = vsel %vm1835, %v1829, %v1496
    %v1837 = vsel %vm1835, %v1829, 0.0
    %v1840 = vunpack.c.l.s4 1966171168
    %v1841 = vunpack.c.0.s8 %v1840
    %v1842 = vlaneseq
    %v1843 = vshrl.u32 %v1842, 7
    %v1844 = vsub.s32 %v1841, %v1843
    %v1845 = vrot.slane %v1837, %v1844
    %v1846 = vcombine.high %v1845, %v1845
    %v1848 = vunpack.c.l.s4 1966171168
    %v1849 = vunpack.c.0.s8 %v1848
    %v1850 = vlaneseq
    %v1851 = vshrl.u32 %v1850, 7
    %v1852 = vsub.s32 %v1849, %v1851
    %v1853 = vrot.slane %v1845, %v1852
    %v1855 = vunpack.c.l.s4 1966171168
    %v1856 = vunpack.c.0.s8 %v1855
    %v1857 = vlaneseq
    %v1858 = vshrl.u32 %v1857, 7
    %v1859 = vsub.s32 %v1856, %v1858
    %v1860 = vrot.slane %v1846, %v1859
    %1863 = vst [vmem:[#allocation2 + $0x3] sm:$0x1] %v1853
    %1864 = vst [vmem:[#allocation2 + $0xb] sm:$0x1] %v1860
    %s1865 = scalar_lea.vmem [#allocation4], 8
    %v1866 = vld [vmem:[%s1865] sm:$0x3]
    %1867 = vmatprep.subr.mxu0 %v180
    %1868 = vmatpush1.msra.mxu0 %v179
    %1869 = vmatprep.subr.mxu0 %v183
    %1870 = vmatpush1.msra.mxu0 %v182
    %1871 = vmatprep.subr.mxu0 %v186
    %1872 = vmatpush1.msra.mxu0 %v185
    %1873 = vmatprep.subr.mxu0 %v189
    %1874 = vmatpush1.msra.mxu0 %v188
    %1875 = vmatprep.subr.mxu0 %v192
    %1876 = vmatpush1.msra.mxu0 %v191
    %1877 = vmatprep.subr.mxu0 %v195
    %1878 = vmatpush1.msra.mxu0 %v194
    %1879 = vmatprep.subr.mxu0 %v198
    %1880 = vmatpush1.msra.mxu0 %v197
    %1881 = vmatprep.subr.mxu0 %v201
    %1882 = vmatpush1.msra.mxu0 %v200
    %1883 = vmatprep.subr.mxu0 %v204
    %1884 = vmatpush1.msra.mxu0 %v203
    %1885 = vmatprep.subr.mxu0 %v207
    %1886 = vmatpush1.msra.mxu0 %v206
    %1887 = vmatprep.subr.mxu0 %v210
    %1888 = vmatpush1.msra.mxu0 %v209
    %1889 = vmatprep.subr.mxu0 %v213
    %1890 = vmatpush1.msra.mxu0 %v212
    %1891 = vmatprep.subr.mxu0 %v216
    %1892 = vmatpush1.msra.mxu0 %v215
    %1893 = vmatprep.subr.mxu0 %v219
    %1894 = vmatpush1.msra.mxu0 %v218
    %1895 = vmatprep.subr.mxu0 %v222
    %1896 = vmatpush1.msra.mxu0 %v221
    %1897 = vmatprep.subr.mxu0 %v225
    %1898 = vmatpush1.msra.mxu0 %v224
    %1899 = vmatprep.subr.mxu0 0.0
    %1900 = vmatpush1.msra.mxu0 0.0
    %1901 = vmatprep.subr.mxu0 0.0
    %1902 = vmatpush1.msra.mxu0 0.0
    %1903 = vmatprep.subr.mxu0 0.0
    %1904 = vmatpush1.msra.mxu0 0.0
    %1905 = vmatprep.subr.mxu0 0.0
    %1906 = vmatpush1.msra.mxu0 0.0
    %1907 = vmatprep.subr.mxu0 0.0
    %1908 = vmatpush1.msra.mxu0 0.0
    %1909 = vmatprep.subr.mxu0 0.0
    %1910 = vmatpush1.msra.mxu0 0.0
    %1911 = vmatprep.subr.mxu0 0.0
    %1912 = vmatpush1.msra.mxu0 0.0
    %1913 = vmatprep.subr.mxu0 0.0
    %1914 = vmatpush1.msra.mxu0 0.0
    %1915 = vmatprep.subr.mxu0 0.0
    %1916 = vmatpush1.msra.mxu0 0.0
    %1917 = vmatprep.subr.mxu0 0.0
    %1918 = vmatpush1.msra.mxu0 0.0
    %1919 = vmatprep.subr.mxu0 0.0
    %1920 = vmatpush1.msra.mxu0 0.0
    %1921 = vmatprep.subr.mxu0 0.0
    %1922 = vmatpush1.msra.mxu0 0.0
    %1923 = vmatprep.subr.mxu0 0.0
    %1924 = vmatpush1.msra.mxu0 0.0
    %1925 = vmatprep.subr.mxu0 0.0
    %1926 = vmatpush1.msra.mxu0 0.0
    %1927 = vmatprep.subr.mxu0 0.0
    %1928 = vmatpush1.msra.mxu0 0.0
    %1929 = vmatprep.subr.mxu0 0.0
    %1930 = vmatpush1.msra.mxu0 0.0
    %1931 = vmatprep.mubr.f32.mxu0 0.0
    %1932 = vmatmul.mubr.f32.gmra.mrb[0].mxu0 %v1866
    %v1933 = vpop.f32.mrb[0].mxu0
    %v1934 = vadd.f32 %v480, %v1933
    %v1935 = vpop.f32.mrb[0].mxu0
    %v1936 = vadd.f32 %v484, %v1935
    %1937 = vdwg.mxu0
    %1938 = vmatprep.subr.mxu0 0.0
    %1939 = vmatpush1.msra.mxu0 %v181
    %1940 = vmatprep.subr.mxu0 0.0
    %1941 = vmatpush1.msra.mxu0 %v184
    %1942 = vmatprep.subr.mxu0 0.0
    %1943 = vmatpush1.msra.mxu0 %v187
    %1944 = vmatprep.subr.mxu0 0.0
    %1945 = vmatpush1.msra.mxu0 %v190
    %1946 = vmatprep.subr.mxu0 0.0
    %1947 = vmatpush1.msra.mxu0 %v193
    %1948 = vmatprep.subr.mxu0 0.0
    %1949 = vmatpush1.msra.mxu0 %v196
    %1950 = vmatprep.subr.mxu0 0.0
    %1951 = vmatpush1.msra.mxu0 %v199
    %1952 = vmatprep.subr.mxu0 0.0
    %1953 = vmatpush1.msra.mxu0 %v202
    %1954 = vmatprep.subr.mxu0 0.0
    %1955 = vmatpush1.msra.mxu0 %v205
    %1956 = vmatprep.subr.mxu0 0.0
    %1957 = vmatpush1.msra.mxu0 %v208
    %1958 = vmatprep.subr.mxu0 0.0
    %1959 = vmatpush1.msra.mxu0 %v211
    %1960 = vmatprep.subr.mxu0 0.0
    %1961 = vmatpush1.msra.mxu0 %v214
    %1962 = vmatprep.subr.mxu0 0.0
    %1963 = vmatpush1.msra.mxu0 %v217
    %1964 = vmatprep.subr.mxu0 0.0
    %1965 = vmatpush1.msra.mxu0 %v220
    %1966 = vmatprep.subr.mxu0 0.0
    %1967 = vmatpush1.msra.mxu0 %v223
    %1968 = vmatprep.subr.mxu0 0.0
    %1969 = vmatpush1.msra.mxu0 %v226
    %1970 = vmatprep.subr.mxu0 0.0
    %1971 = vmatpush1.msra.mxu0 0.0
    %1972 = vmatprep.subr.mxu0 0.0
    %1973 = vmatpush1.msra.mxu0 0.0
    %1974 = vmatprep.subr.mxu0 0.0
    %1975 = vmatpush1.msra.mxu0 0.0
    %1976 = vmatprep.subr.mxu0 0.0
    %1977 = vmatpush1.msra.mxu0 0.0
    %1978 = vmatprep.subr.mxu0 0.0
    %1979 = vmatpush1.msra.mxu0 0.0
    %1980 = vmatprep.subr.mxu0 0.0
    %1981 = vmatpush1.msra.mxu0 0.0
    %1982 = vmatprep.subr.mxu0 0.0
    %1983 = vmatpush1.msra.mxu0 0.0
    %1984 = vmatprep.subr.mxu0 0.0
    %1985 = vmatpush1.msra.mxu0 0.0
    %1986 = vmatprep.subr.mxu0 0.0
    %1987 = vmatpush1.msra.mxu0 0.0
    %1988 = vmatprep.subr.mxu0 0.0
    %1989 = vmatpush1.msra.mxu0 0.0
    %1990 = vmatprep.subr.mxu0 0.0
    %1991 = vmatpush1.msra.mxu0 0.0
    %1992 = vmatprep.subr.mxu0 0.0
    %1993 = vmatpush1.msra.mxu0 0.0
    %1994 = vmatprep.subr.mxu0 0.0
    %1995 = vmatpush1.msra.mxu0 0.0
    %1996 = vmatprep.subr.mxu0 0.0
    %1997 = vmatpush1.msra.mxu0 0.0
    %1998 = vmatprep.subr.mxu0 0.0
    %1999 = vmatpush1.msra.mxu0 0.0
    %2000 = vmatprep.subr.mxu0 0.0
    %2001 = vmatpush1.msra.mxu0 0.0
    %2002 = vmatprep.mubr.f32.mxu0 0.0
    %2003 = vmatmul.mubr.f32.gmra.mrb[0].mxu0 %v1866
    %v2004 = vpop.f32.mrb[0].mxu0
    %v2005 = vadd.f32 %v488, %v2004
    %v2006 = vpop.f32.mrb[0].mxu0
    %2007 = vdwg.mxu0
    %2008 = vmatprep.subr.mxu0 %v228
    %2009 = vmatpush1.msra.mxu0 %v227
    %2010 = vmatprep.subr.mxu0 %v231
    %2011 = vmatpush1.msra.mxu0 %v230
    %2012 = vmatprep.subr.mxu0 %v234
    %2013 = vmatpush1.msra.mxu0 %v233
    %2014 = vmatprep.subr.mxu0 %v237
    %2015 = vmatpush1.msra.mxu0 %v236
    %2016 = vmatprep.subr.mxu0 %v240
    %2017 = vmatpush1.msra.mxu0 %v239
    %2018 = vmatprep.subr.mxu0 %v243
    %2019 = vmatpush1.msra.mxu0 %v242
    %2020 = vmatprep.subr.mxu0 %v246
    %2021 = vmatpush1.msra.mxu0 %v245
    %2022 = vmatprep.subr.mxu0 %v249
    %2023 = vmatpush1.msra.mxu0 %v248
    %2024 = vmatprep.subr.mxu0 %v252
    %2025 = vmatpush1.msra.mxu0 %v251
    %2026 = vmatprep.subr.mxu0 %v255
    %2027 = vmatpush1.msra.mxu0 %v254
    %2028 = vmatprep.subr.mxu0 %v258
    %2029 = vmatpush1.msra.mxu0 %v257
    %2030 = vmatprep.subr.mxu0 %v261
    %2031 = vmatpush1.msra.mxu0 %v260
    %2032 = vmatprep.subr.mxu0 %v264
    %2033 = vmatpush1.msra.mxu0 %v263
    %2034 = vmatprep.subr.mxu0 %v267
    %2035 = vmatpush1.msra.mxu0 %v266
    %2036 = vmatprep.subr.mxu0 %v270
    %2037 = vmatpush1.msra.mxu0 %v269
    %2038 = vmatprep.subr.mxu0 %v273
    %2039 = vmatpush1.msra.mxu0 %v272
    %2040 = vmatprep.subr.mxu0 0.0
    %2041 = vmatpush1.msra.mxu0 0.0
    %2042 = vmatprep.subr.mxu0 0.0
    %2043 = vmatpush1.msra.mxu0 0.0
    %2044 = vmatprep.subr.mxu0 0.0
    %2045 = vmatpush1.msra.mxu0 0.0
    %2046 = vmatprep.subr.mxu0 0.0
    %2047 = vmatpush1.msra.mxu0 0.0
    %2048 = vmatprep.subr.mxu0 0.0
    %2049 = vmatpush1.msra.mxu0 0.0
    %2050 = vmatprep.subr.mxu0 0.0
    %2051 = vmatpush1.msra.mxu0 0.0
    %2052 = vmatprep.subr.mxu0 0.0
    %2053 = vmatpush1.msra.mxu0 0.0
    %2054 = vmatprep.subr.mxu0 0.0
    %2055 = vmatpush1.msra.mxu0 0.0
    %2056 = vmatprep.subr.mxu0 0.0
    %2057 = vmatpush1.msra.mxu0 0.0
    %2058 = vmatprep.subr.mxu0 0.0
    %2059 = vmatpush1.msra.mxu0 0.0
    %2060 = vmatprep.subr.mxu0 0.0
    %2061 = vmatpush1.msra.mxu0 0.0
    %2062 = vmatprep.subr.mxu0 0.0
    %2063 = vmatpush1.msra.mxu0 0.0
    %2064 = vmatprep.subr.mxu0 0.0
    %2065 = vmatpush1.msra.mxu0 0.0
    %2066 = vmatprep.subr.mxu0 0.0
    %2067 = vmatpush1.msra.mxu0 0.0
    %2068 = vmatprep.subr.mxu0 0.0
    %2069 = vmatpush1.msra.mxu0 0.0
    %2070 = vmatprep.subr.mxu0 0.0
    %2071 = vmatpush1.msra.mxu0 0.0
    %2072 = vmatprep.mubr.f32.mxu0 0.0
    %2073 = vmatmul.mubr.f32.gmra.mrb[0].mxu0 %v1836
    %v2074 = vpop.f32.mrb[0].mxu0
    %v2075 = vadd.f32 %v637, %v2074
    %v2076 = vpop.f32.mrb[0].mxu0
    %v2077 = vadd.f32 %v641, %v2076
    %2078 = vdwg.mxu0
    %2079 = vmatprep.subr.mxu0 0.0
    %2080 = vmatpush1.msra.mxu0 %v229
    %2081 = vmatprep.subr.mxu0 0.0
    %2082 = vmatpush1.msra.mxu0 %v232
    %2083 = vmatprep.subr.mxu0 0.0
    %2084 = vmatpush1.msra.mxu0 %v235
    %2085 = vmatprep.subr.mxu0 0.0
    %2086 = vmatpush1.msra.mxu0 %v238
    %2087 = vmatprep.subr.mxu0 0.0
    %2088 = vmatpush1.msra.mxu0 %v241
    %2089 = vmatprep.subr.mxu0 0.0
    %2090 = vmatpush1.msra.mxu0 %v244
    %2091 = vmatprep.subr.mxu0 0.0
    %2092 = vmatpush1.msra.mxu0 %v247
    %2093 = vmatprep.subr.mxu0 0.0
    %2094 = vmatpush1.msra.mxu0 %v250
    %2095 = vmatprep.subr.mxu0 0.0
    %2096 = vmatpush1.msra.mxu0 %v253
    %2097 = vmatprep.subr.mxu0 0.0
    %2098 = vmatpush1.msra.mxu0 %v256
    %2099 = vmatprep.subr.mxu0 0.0
    %2100 = vmatpush1.msra.mxu0 %v259
    %2101 = vmatprep.subr.mxu0 0.0
    %2102 = vmatpush1.msra.mxu0 %v262
    %2103 = vmatprep.subr.mxu0 0.0
    %2104 = vmatpush1.msra.mxu0 %v265
    %2105 = vmatprep.subr.mxu0 0.0
    %2106 = vmatpush1.msra.mxu0 %v268
    %2107 = vmatprep.subr.mxu0 0.0
    %2108 = vmatpush1.msra.mxu0 %v271
    %2109 = vmatprep.subr.mxu0 0.0
    %2110 = vmatpush1.msra.mxu0 %v274
    %2111 = vmatprep.subr.mxu0 0.0
    %2112 = vmatpush1.msra.mxu0 0.0
    %2113 = vmatprep.subr.mxu0 0.0
    %2114 = vmatpush1.msra.mxu0 0.0
    %2115 = vmatprep.subr.mxu0 0.0
    %2116 = vmatpush1.msra.mxu0 0.0
    %2117 = vmatprep.subr.mxu0 0.0
    %2118 = vmatpush1.msra.mxu0 0.0
    %2119 = vmatprep.subr.mxu0 0.0
    %2120 = vmatpush1.msra.mxu0 0.0
    %2121 = vmatprep.subr.mxu0 0.0
    %2122 = vmatpush1.msra.mxu0 0.0
    %2123 = vmatprep.subr.mxu0 0.0
    %2124 = vmatpush1.msra.mxu0 0.0
    %2125 = vmatprep.subr.mxu0 0.0
    %2126 = vmatpush1.msra.mxu0 0.0
    %2127 = vmatprep.subr.mxu0 0.0
    %2128 = vmatpush1.msra.mxu0 0.0
    %2129 = vmatprep.subr.mxu0 0.0
    %2130 = vmatpush1.msra.mxu0 0.0
    %2131 = vmatprep.subr.mxu0 0.0
    %2132 = vmatpush1.msra.mxu0 0.0
    %2133 = vmatprep.subr.mxu0 0.0
    %2134 = vmatpush1.msra.mxu0 0.0
    %2135 = vmatprep.subr.mxu0 0.0
    %2136 = vmatpush1.msra.mxu0 0.0
    %2137 = vmatprep.subr.mxu0 0.0
    %2138 = vmatpush1.msra.mxu0 0.0
    %2139 = vmatprep.subr.mxu0 0.0
    %2140 = vmatpush1.msra.mxu0 0.0
    %2141 = vmatprep.subr.mxu0 0.0
    %2142 = vmatpush1.msra.mxu0 0.0
    %2143 = vmatprep.mubr.f32.mxu0 0.0
    %2144 = vmatmul.mubr.f32.gmra.mrb[0].mxu0 %v1836
    %v2145 = vpop.f32.mrb[0].mxu0
    %v2146 = vadd.f32 %v645, %v2145
    %v2147 = vpop.f32.mrb[0].mxu0
    %2148 = vdwg.mxu0
    %v2149 = vadd.f32 %v1934, %v2075
    %v2150 = vxor.u32 %v2149, 2147483648
    %v2151 = vmul.f32 %v2150, 1.442695
    %v2152 = vpow.pop %v2151
    %v2153 = vadd.f32 %v2152, 1.0
    %v2154 = vrcp.pop %v2153
    %v2155 = vmul.f32 1.0, %v2154
    %v2156 = vadd.f32 %v1936, %v2077
    %v2157 = vxor.u32 %v2156, 2147483648
    %v2158 = vmul.f32 %v2157, 1.442695
    %v2159 = vpow.pop %v2158
    %v2160 = vadd.f32 %v2159, 1.0
    %v2161 = vrcp.pop %v2160
    %v2162 = vmul.f32 1.0, %v2161
    %v2163 = vmul.f32 %v2155, %v2146
    %v2164 = vadd.f32 %v2005, %v2163
    %v2165 = vtanh.pop %v2164
    %v2166 = vsub.f32 1.0, %v2162
    %v2167 = vmul.f32 %v2166, %v2165
    %v2168 = vmul.f32 %v2162, %v1836
    %v2169 = vadd.f32 %v2167, %v2168
    %vm2170 = vcmp.gt.s32.totalorder %v474, 4
    %v2171 = vsel %vm2170, 1, 0
    %2172 = vset.pattern.permute.xlu0 0
    %2173 = vperm.xlu0 %2172, %v2171
    %v2174 = vpop.permute.xlu0 %2173
    %vm2175 = vcmp.eq.s32.totalorder %v2174, 1
    %v2176 = vsel %vm2175, %v2169, %v1836
    %v2177 = vsel %vm2175, %v2169, 0.0
    %v2180 = vunpack.c.l.s4 1966171168
    %v2181 = vunpack.c.0.s8 %v2180
    %v2182 = vlaneseq
    %v2183 = vshrl.u32 %v2182, 7
    %v2184 = vsub.s32 %v2181, %v2183
    %v2185 = vrot.slane %v2177, %v2184
    %v2186 = vcombine.high %v2185, %v2185
    %v2188 = vunpack.c.l.s4 1966171168
    %v2189 = vunpack.c.0.s8 %v2188
    %v2190 = vlaneseq
    %v2191 = vshrl.u32 %v2190, 7
    %v2192 = vsub.s32 %v2189, %v2191
    %v2193 = vrot.slane %v2185, %v2192
    %v2195 = vunpack.c.l.s4 1966171168
    %v2196 = vunpack.c.0.s8 %v2195
    %v2197 = vlaneseq
    %v2198 = vshrl.u32 %v2197, 7
    %v2199 = vsub.s32 %v2196, %v2198
    %v2200 = vrot.slane %v2186, %v2199
    %2203 = vst [vmem:[#allocation2 + $0x4] sm:$0x1] %v2193
    %2204 = vst [vmem:[#allocation2 + $0xc] sm:$0x1] %v2200
    %s2205 = scalar_lea.vmem [#allocation4], 10
    %v2206 = vld [vmem:[%s2205] sm:$0x3]
    %2207 = vmatprep.subr.mxu0 %v180
    %2208 = vmatpush1.msra.mxu0 %v179
    %2209 = vmatprep.subr.mxu0 %v183
    %2210 = vmatpush1.msra.mxu0 %v182
    %2211 = vmatprep.subr.mxu0 %v186
    %2212 = vmatpush1.msra.mxu0 %v185
    %2213 = vmatprep.subr.mxu0 %v189
    %2214 = vmatpush1.msra.mxu0 %v188
    %2215 = vmatprep.subr.mxu0 %v192
    %2216 = vmatpush1.msra.mxu0 %v191
    %2217 = vmatprep.subr.mxu0 %v195
    %2218 = vmatpush1.msra.mxu0 %v194
    %2219 = vmatprep.subr.mxu0 %v198
    %2220 = vmatpush1.msra.mxu0 %v197
    %2221 = vmatprep.subr.mxu0 %v201
    %2222 = vmatpush1.msra.mxu0 %v200
    %2223 = vmatprep.subr.mxu0 %v204
    %2224 = vmatpush1.msra.mxu0 %v203
    %2225 = vmatprep.subr.mxu0 %v207
    %2226 = vmatpush1.msra.mxu0 %v206
    %2227 = vmatprep.subr.mxu0 %v210
    %2228 = vmatpush1.msra.mxu0 %v209
    %2229 = vmatprep.subr.mxu0 %v213
    %2230 = vmatpush1.msra.mxu0 %v212
    %2231 = vmatprep.subr.mxu0 %v216
    %2232 = vmatpush1.msra.mxu0 %v215
    %2233 = vmatprep.subr.mxu0 %v219
    %2234 = vmatpush1.msra.mxu0 %v218
    %2235 = vmatprep.subr.mxu0 %v222
    %2236 = vmatpush1.msra.mxu0 %v221
    %2237 = vmatprep.subr.mxu0 %v225
    %2238 = vmatpush1.msra.mxu0 %v224
    %2239 = vmatprep.subr.mxu0 0.0
    %2240 = vmatpush1.msra.mxu0 0.0
    %2241 = vmatprep.subr.mxu0 0.0
    %2242 = vmatpush1.msra.mxu0 0.0
    %2243 = vmatprep.subr.mxu0 0.0
    %2244 = vmatpush1.msra.mxu0 0.0
    %2245 = vmatprep.subr.mxu0 0.0
    %2246 = vmatpush1.msra.mxu0 0.0
    %2247 = vmatprep.subr.mxu0 0.0
    %2248 = vmatpush1.msra.mxu0 0.0
    %2249 = vmatprep.subr.mxu0 0.0
    %2250 = vmatpush1.msra.mxu0 0.0
    %2251 = vmatprep.subr.mxu0 0.0
    %2252 = vmatpush1.msra.mxu0 0.0
    %2253 = vmatprep.subr.mxu0 0.0
    %2254 = vmatpush1.msra.mxu0 0.0
    %2255 = vmatprep.subr.mxu0 0.0
    %2256 = vmatpush1.msra.mxu0 0.0
    %2257 = vmatprep.subr.mxu0 0.0
    %2258 = vmatpush1.msra.mxu0 0.0
    %2259 = vmatprep.subr.mxu0 0.0
    %2260 = vmatpush1.msra.mxu0 0.0
    %2261 = vmatprep.subr.mxu0 0.0
    %2262 = vmatpush1.msra.mxu0 0.0
    %2263 = vmatprep.subr.mxu0 0.0
    %2264 = vmatpush1.msra.mxu0 0.0
    %2265 = vmatprep.subr.mxu0 0.0
    %2266 = vmatpush1.msra.mxu0 0.0
    %2267 = vmatprep.subr.mxu0 0.0
    %2268 = vmatpush1.msra.mxu0 0.0
    %2269 = vmatprep.subr.mxu0 0.0
    %2270 = vmatpush1.msra.mxu0 0.0
    %2271 = vmatprep.mubr.f32.mxu0 0.0
    %2272 = vmatmul.mubr.f32.gmra.mrb[0].mxu0 %v2206
    %v2273 = vpop.f32.mrb[0].mxu0
    %v2274 = vadd.f32 %v480, %v2273
    %v2275 = vpop.f32.mrb[0].mxu0
    %v2276 = vadd.f32 %v484, %v2275
    %2277 = vdwg.mxu0
    %2278 = vmatprep.subr.mxu0 0.0
    %2279 = vmatpush1.msra.mxu0 %v181
    %2280 = vmatprep.subr.mxu0 0.0
    %2281 = vmatpush1.msra.mxu0 %v184
    %2282 = vmatprep.subr.mxu0 0.0
    %2283 = vmatpush1.msra.mxu0 %v187
    %2284 = vmatprep.subr.mxu0 0.0
    %2285 = vmatpush1.msra.mxu0 %v190
    %2286 = vmatprep.subr.mxu0 0.0
    %2287 = vmatpush1.msra.mxu0 %v193
    %2288 = vmatprep.subr.mxu0 0.0
    %2289 = vmatpush1.msra.mxu0 %v196
    %2290 = vmatprep.subr.mxu0 0.0
    %2291 = vmatpush1.msra.mxu0 %v199
    %2292 = vmatprep.subr.mxu0 0.0
    %2293 = vmatpush1.msra.mxu0 %v202
    %2294 = vmatprep.subr.mxu0 0.0
    %2295 = vmatpush1.msra.mxu0 %v205
    %2296 = vmatprep.subr.mxu0 0.0
    %2297 = vmatpush1.msra.mxu0 %v208
    %2298 = vmatprep.subr.mxu0 0.0
    %2299 = vmatpush1.msra.mxu0 %v211
    %2300 = vmatprep.subr.mxu0 0.0
    %2301 = vmatpush1.msra.mxu0 %v214
    %2302 = vmatprep.subr.mxu0 0.0
    %2303 = vmatpush1.msra.mxu0 %v217
    %2304 = vmatprep.subr.mxu0 0.0
    %2305 = vmatpush1.msra.mxu0 %v220
    %2306 = vmatprep.subr.mxu0 0.0
    %2307 = vmatpush1.msra.mxu0 %v223
    %2308 = vmatprep.subr.mxu0 0.0
    %2309 = vmatpush1.msra.mxu0 %v226
    %2310 = vmatprep.subr.mxu0 0.0
    %2311 = vmatpush1.msra.mxu0 0.0
    %2312 = vmatprep.subr.mxu0 0.0
    %2313 = vmatpush1.msra.mxu0 0.0
    %2314 = vmatprep.subr.mxu0 0.0
    %2315 = vmatpush1.msra.mxu0 0.0
    %2316 = vmatprep.subr.mxu0 0.0
    %2317 = vmatpush1.msra.mxu0 0.0
    %2318 = vmatprep.subr.mxu0 0.0
    %2319 = vmatpush1.msra.mxu0 0.0
    %2320 = vmatprep.subr.mxu0 0.0
    %2321 = vmatpush1.msra.mxu0 0.0
    %2322 = vmatprep.subr.mxu0 0.0
    %2323 = vmatpush1.msra.mxu0 0.0
    %2324 = vmatprep.subr.mxu0 0.0
    %2325 = vmatpush1.msra.mxu0 0.0
    %2326 = vmatprep.subr.mxu0 0.0
    %2327 = vmatpush1.msra.mxu0 0.0
    %2328 = vmatprep.subr.mxu0 0.0
    %2329 = vmatpush1.msra.mxu0 0.0
    %2330 = vmatprep.subr.mxu0 0.0
    %2331 = vmatpush1.msra.mxu0 0.0
    %2332 = vmatprep.subr.mxu0 0.0
    %2333 = vmatpush1.msra.mxu0 0.0
    %2334 = vmatprep.subr.mxu0 0.0
    %2335 = vmatpush1.msra.mxu0 0.0
    %2336 = vmatprep.subr.mxu0 0.0
    %2337 = vmatpush1.msra.mxu0 0.0
    %2338 = vmatprep.subr.mxu0 0.0
    %2339 = vmatpush1.msra.mxu0 0.0
    %2340 = vmatprep.subr.mxu0 0.0
    %2341 = vmatpush1.msra.mxu0 0.0
    %2342 = vmatprep.mubr.f32.mxu0 0.0
    %2343 = vmatmul.mubr.f32.gmra.mrb[0].mxu0 %v2206
    %v2344 = vpop.f32.mrb[0].mxu0
    %v2345 = vadd.f32 %v488, %v2344
    %v2346 = vpop.f32.mrb[0].mxu0
    %2347 = vdwg.mxu0
    %2348 = vmatprep.subr.mxu0 %v228
    %2349 = vmatpush1.msra.mxu0 %v227
    %2350 = vmatprep.subr.mxu0 %v231
    %2351 = vmatpush1.msra.mxu0 %v230
    %2352 = vmatprep.subr.mxu0 %v234
    %2353 = vmatpush1.msra.mxu0 %v233
    %2354 = vmatprep.subr.mxu0 %v237
    %2355 = vmatpush1.msra.mxu0 %v236
    %2356 = vmatprep.subr.mxu0 %v240
    %2357 = vmatpush1.msra.mxu0 %v239
    %2358 = vmatprep.subr.mxu0 %v243
    %2359 = vmatpush1.msra.mxu0 %v242
    %2360 = vmatprep.subr.mxu0 %v246
    %2361 = vmatpush1.msra.mxu0 %v245
    %2362 = vmatprep.subr.mxu0 %v249
    %2363 = vmatpush1.msra.mxu0 %v248
    %2364 = vmatprep.subr.mxu0 %v252
    %2365 = vmatpush1.msra.mxu0 %v251
    %2366 = vmatprep.subr.mxu0 %v255
    %2367 = vmatpush1.msra.mxu0 %v254
    %2368 = vmatprep.subr.mxu0 %v258
    %2369 = vmatpush1.msra.mxu0 %v257
    %2370 = vmatprep.subr.mxu0 %v261
    %2371 = vmatpush1.msra.mxu0 %v260
    %2372 = vmatprep.subr.mxu0 %v264
    %2373 = vmatpush1.msra.mxu0 %v263
    %2374 = vmatprep.subr.mxu0 %v267
    %2375 = vmatpush1.msra.mxu0 %v266
    %2376 = vmatprep.subr.mxu0 %v270
    %2377 = vmatpush1.msra.mxu0 %v269
    %2378 = vmatprep.subr.mxu0 %v273
    %2379 = vmatpush1.msra.mxu0 %v272
    %2380 = vmatprep.subr.mxu0 0.0
    %2381 = vmatpush1.msra.mxu0 0.0
    %2382 = vmatprep.subr.mxu0 0.0
    %2383 = vmatpush1.msra.mxu0 0.0
    %2384 = vmatprep.subr.mxu0 0.0
    %2385 = vmatpush1.msra.mxu0 0.0
    %2386 = vmatprep.subr.mxu0 0.0
    %2387 = vmatpush1.msra.mxu0 0.0
    %2388 = vmatprep.subr.mxu0 0.0
    %2389 = vmatpush1.msra.mxu0 0.0
    %2390 = vmatprep.subr.mxu0 0.0
    %2391 = vmatpush1.msra.mxu0 0.0
    %2392 = vmatprep.subr.mxu0 0.0
    %2393 = vmatpush1.msra.mxu0 0.0
    %2394 = vmatprep.subr.mxu0 0.0
    %2395 = vmatpush1.msra.mxu0 0.0
    %2396 = vmatprep.subr.mxu0 0.0
    %2397 = vmatpush1.msra.mxu0 0.0
    %2398 = vmatprep.subr.mxu0 0.0
    %2399 = vmatpush1.msra.mxu0 0.0
    %2400 = vmatprep.subr.mxu0 0.0
    %2401 = vmatpush1.msra.mxu0 0.0
    %2402 = vmatprep.subr.mxu0 0.0
    %2403 = vmatpush1.msra.mxu0 0.0
    %2404 = vmatprep.subr.mxu0 0.0
    %2405 = vmatpush1.msra.mxu0 0.0
    %2406 = vmatprep.subr.mxu0 0.0
    %2407 = vmatpush1.msra.mxu0 0.0
    %2408 = vmatprep.subr.mxu0 0.0
    %2409 = vmatpush1.msra.mxu0 0.0
    %2410 = vmatprep.subr.mxu0 0.0
    %2411 = vmatpush1.msra.mxu0 0.0
    %2412 = vmatprep.mubr.f32.mxu0 0.0
    %2413 = vmatmul.mubr.f32.gmra.mrb[0].mxu0 %v2176
    %v2414 = vpop.f32.mrb[0].mxu0
    %v2415 = vadd.f32 %v637, %v2414
    %v2416 = vpop.f32.mrb[0].mxu0
    %v2417 = vadd.f32 %v641, %v2416
    %2418 = vdwg.mxu0
    %2419 = vmatprep.subr.mxu0 0.0
    %2420 = vmatpush1.msra.mxu0 %v229
    %2421 = vmatprep.subr.mxu0 0.0
    %2422 = vmatpush1.msra.mxu0 %v232
    %2423 = vmatprep.subr.mxu0 0.0
    %2424 = vmatpush1.msra.mxu0 %v235
    %2425 = vmatprep.subr.mxu0 0.0
    %2426 = vmatpush1.msra.mxu0 %v238
    %2427 = vmatprep.subr.mxu0 0.0
    %2428 = vmatpush1.msra.mxu0 %v241
    %2429 = vmatprep.subr.mxu0 0.0
    %2430 = vmatpush1.msra.mxu0 %v244
    %2431 = vmatprep.subr.mxu0 0.0
    %2432 = vmatpush1.msra.mxu0 %v247
    %2433 = vmatprep.subr.mxu0 0.0
    %2434 = vmatpush1.msra.mxu0 %v250
    %2435 = vmatprep.subr.mxu0 0.0
    %2436 = vmatpush1.msra.mxu0 %v253
    %2437 = vmatprep.subr.mxu0 0.0
    %2438 = vmatpush1.msra.mxu0 %v256
    %2439 = vmatprep.subr.mxu0 0.0
    %2440 = vmatpush1.msra.mxu0 %v259
    %2441 = vmatprep.subr.mxu0 0.0
    %2442 = vmatpush1.msra.mxu0 %v262
    %2443 = vmatprep.subr.mxu0 0.0
    %2444 = vmatpush1.msra.mxu0 %v265
    %2445 = vmatprep.subr.mxu0 0.0
    %2446 = vmatpush1.msra.mxu0 %v268
    %2447 = vmatprep.subr.mxu0 0.0
    %2448 = vmatpush1.msra.mxu0 %v271
    %2449 = vmatprep.subr.mxu0 0.0
    %2450 = vmatpush1.msra.mxu0 %v274
    %2451 = vmatprep.subr.mxu0 0.0
    %2452 = vmatpush1.msra.mxu0 0.0
    %2453 = vmatprep.subr.mxu0 0.0
    %2454 = vmatpush1.msra.mxu0 0.0
    %2455 = vmatprep.subr.mxu0 0.0
    %2456 = vmatpush1.msra.mxu0 0.0
    %2457 = vmatprep.subr.mxu0 0.0
    %2458 = vmatpush1.msra.mxu0 0.0
    %2459 = vmatprep.subr.mxu0 0.0
    %2460 = vmatpush1.msra.mxu0 0.0
    %2461 = vmatprep.subr.mxu0 0.0
    %2462 = vmatpush1.msra.mxu0 0.0
    %2463 = vmatprep.subr.mxu0 0.0
    %2464 = vmatpush1.msra.mxu0 0.0
    %2465 = vmatprep.subr.mxu0 0.0
    %2466 = vmatpush1.msra.mxu0 0.0
    %2467 = vmatprep.subr.mxu0 0.0
    %2468 = vmatpush1.msra.mxu0 0.0
    %2469 = vmatprep.subr.mxu0 0.0
    %2470 = vmatpush1.msra.mxu0 0.0
    %2471 = vmatprep.subr.mxu0 0.0
    %2472 = vmatpush1.msra.mxu0 0.0
    %2473 = vmatprep.subr.mxu0 0.0
    %2474 = vmatpush1.msra.mxu0 0.0
    %2475 = vmatprep.subr.mxu0 0.0
    %2476 = vmatpush1.msra.mxu0 0.0
    %2477 = vmatprep.subr.mxu0 0.0
    %2478 = vmatpush1.msra.mxu0 0.0
    %2479 = vmatprep.subr.mxu0 0.0
    %2480 = vmatpush1.msra.mxu0 0.0
    %2481 = vmatprep.subr.mxu0 0.0
    %2482 = vmatpush1.msra.mxu0 0.0
    %2483 = vmatprep.mubr.f32.mxu0 0.0
    %2484 = vmatmul.mubr.f32.gmra.mrb[0].mxu0 %v2176
    %v2485 = vpop.f32.mrb[0].mxu0
    %v2486 = vadd.f32 %v645, %v2485
    %v2487 = vpop.f32.mrb[0].mxu0
    %2488 = vdwg.mxu0
    %v2489 = vadd.f32 %v2274, %v2415
    %v2490 = vxor.u32 %v2489, 2147483648
    %v2491 = vmul.f32 %v2490, 1.442695
    %v2492 = vpow.pop %v2491
    %v2493 = vadd.f32 %v2492, 1.0
    %v2494 = vrcp.pop %v2493
    %v2495 = vmul.f32 1.0, %v2494
    %v2496 = vadd.f32 %v2276, %v2417
    %v2497 = vxor.u32 %v2496, 2147483648
    %v2498 = vmul.f32 %v2497, 1.442695
    %v2499 = vpow.pop %v2498
    %v2500 = vadd.f32 %v2499, 1.0
    %v2501 = vrcp.pop %v2500
    %v2502 = vmul.f32 1.0, %v2501
    %v2503 = vmul.f32 %v2495, %v2486
    %v2504 = vadd.f32 %v2345, %v2503
    %v2505 = vtanh.pop %v2504
    %v2506 = vsub.f32 1.0, %v2502
    %v2507 = vmul.f32 %v2506, %v2505
    %v2508 = vmul.f32 %v2502, %v2176
    %v2509 = vadd.f32 %v2507, %v2508
    %vm2510 = vcmp.gt.s32.totalorder %v474, 5
    %v2511 = vsel %vm2510, 1, 0
    %2512 = vset.pattern.permute.xlu0 0
    %2513 = vperm.xlu0 %2512, %v2511
    %v2514 = vpop.permute.xlu0 %2513
    %vm2515 = vcmp.eq.s32.totalorder %v2514, 1
    %v2516 = vsel %vm2515, %v2509, %v2176
    %v2517 = vsel %vm2515, %v2509, 0.0
    %v2520 = vunpack.c.l.s4 1966171168
    %v2521 = vunpack.c.0.s8 %v2520
    %v2522 = vlaneseq
    %v2523 = vshrl.u32 %v2522, 7
    %v2524 = vsub.s32 %v2521, %v2523
    %v2525 = vrot.slane %v2517, %v2524
    %v2526 = vcombine.high %v2525, %v2525
    %v2528 = vunpack.c.l.s4 1966171168
    %v2529 = vunpack.c.0.s8 %v2528
    %v2530 = vlaneseq
    %v2531 = vshrl.u32 %v2530, 7
    %v2532 = vsub.s32 %v2529, %v2531
    %v2533 = vrot.slane %v2525, %v2532
    %v2535 = vunpack.c.l.s4 1966171168
    %v2536 = vunpack.c.0.s8 %v2535
    %v2537 = vlaneseq
    %v2538 = vshrl.u32 %v2537, 7
    %v2539 = vsub.s32 %v2536, %v2538
    %v2540 = vrot.slane %v2526, %v2539
    %2543 = vst [vmem:[#allocation2 + $0x5] sm:$0x1] %v2533
    %2544 = vst [vmem:[#allocation2 + $0xd] sm:$0x1] %v2540
    %s2545 = scalar_lea.vmem [#allocation4], 12
    %v2546 = vld [vmem:[%s2545] sm:$0x3]
    %2547 = vmatprep.subr.mxu0 %v180
    %2548 = vmatpush1.msra.mxu0 %v179
    %2549 = vmatprep.subr.mxu0 %v183
    %2550 = vmatpush1.msra.mxu0 %v182
    %2551 = vmatprep.subr.mxu0 %v186
    %2552 = vmatpush1.msra.mxu0 %v185
    %2553 = vmatprep.subr.mxu0 %v189
    %2554 = vmatpush1.msra.mxu0 %v188
    %2555 = vmatprep.subr.mxu0 %v192
    %2556 = vmatpush1.msra.mxu0 %v191
    %2557 = vmatprep.subr.mxu0 %v195
    %2558 = vmatpush1.msra.mxu0 %v194
    %2559 = vmatprep.subr.mxu0 %v198
    %2560 = vmatpush1.msra.mxu0 %v197
    %2561 = vmatprep.subr.mxu0 %v201
    %2562 = vmatpush1.msra.mxu0 %v200
    %2563 = vmatprep.subr.mxu0 %v204
    %2564 = vmatpush1.msra.mxu0 %v203
    %2565 = vmatprep.subr.mxu0 %v207
    %2566 = vmatpush1.msra.mxu0 %v206
    %2567 = vmatprep.subr.mxu0 %v210
    %2568 = vmatpush1.msra.mxu0 %v209
    %2569 = vmatprep.subr.mxu0 %v213
    %2570 = vmatpush1.msra.mxu0 %v212
    %2571 = vmatprep.subr.mxu0 %v216
    %2572 = vmatpush1.msra.mxu0 %v215
    %2573 = vmatprep.subr.mxu0 %v219
    %2574 = vmatpush1.msra.mxu0 %v218
    %2575 = vmatprep.subr.mxu0 %v222
    %2576 = vmatpush1.msra.mxu0 %v221
    %2577 = vmatprep.subr.mxu0 %v225
    %2578 = vmatpush1.msra.mxu0 %v224
    %2579 = vmatprep.subr.mxu0 0.0
    %2580 = vmatpush1.msra.mxu0 0.0
    %2581 = vmatprep.subr.mxu0 0.0
    %2582 = vmatpush1.msra.mxu0 0.0
    %2583 = vmatprep.subr.mxu0 0.0
    %2584 = vmatpush1.msra.mxu0 0.0
    %2585 = vmatprep.subr.mxu0 0.0
    %2586 = vmatpush1.msra.mxu0 0.0
    %2587 = vmatprep.subr.mxu0 0.0
    %2588 = vmatpush1.msra.mxu0 0.0
    %2589 = vmatprep.subr.mxu0 0.0
    %2590 = vmatpush1.msra.mxu0 0.0
    %2591 = vmatprep.subr.mxu0 0.0
    %2592 = vmatpush1.msra.mxu0 0.0
    %2593 = vmatprep.subr.mxu0 0.0
    %2594 = vmatpush1.msra.mxu0 0.0
    %2595 = vmatprep.subr.mxu0 0.0
    %2596 = vmatpush1.msra.mxu0 0.0
    %2597 = vmatprep.subr.mxu0 0.0
    %2598 = vmatpush1.msra.mxu0 0.0
    %2599 = vmatprep.subr.mxu0 0.0
    %2600 = vmatpush1.msra.mxu0 0.0
    %2601 = vmatprep.subr.mxu0 0.0
    %2602 = vmatpush1.msra.mxu0 0.0
    %2603 = vmatprep.subr.mxu0 0.0
    %2604 = vmatpush1.msra.mxu0 0.0
    %2605 = vmatprep.subr.mxu0 0.0
    %2606 = vmatpush1.msra.mxu0 0.0
    %2607 = vmatprep.subr.mxu0 0.0
    %2608 = vmatpush1.msra.mxu0 0.0
    %2609 = vmatprep.subr.mxu0 0.0
    %2610 = vmatpush1.msra.mxu0 0.0
    %2611 = vmatprep.mubr.f32.mxu0 0.0
    %2612 = vmatmul.mubr.f32.gmra.mrb[0].mxu0 %v2546
    %v2613 = vpop.f32.mrb[0].mxu0
    %v2614 = vadd.f32 %v480, %v2613
    %v2615 = vpop.f32.mrb[0].mxu0
    %v2616 = vadd.f32 %v484, %v2615
    %2617 = vdwg.mxu0
    %2618 = vmatprep.subr.mxu0 0.0
    %2619 = vmatpush1.msra.mxu0 %v181
    %2620 = vmatprep.subr.mxu0 0.0
    %2621 = vmatpush1.msra.mxu0 %v184
    %2622 = vmatprep.subr.mxu0 0.0
    %2623 = vmatpush1.msra.mxu0 %v187
    %2624 = vmatprep.subr.mxu0 0.0
    %2625 = vmatpush1.msra.mxu0 %v190
    %2626 = vmatprep.subr.mxu0 0.0
    %2627 = vmatpush1.msra.mxu0 %v193
    %2628 = vmatprep.subr.mxu0 0.0
    %2629 = vmatpush1.msra.mxu0 %v196
    %2630 = vmatprep.subr.mxu0 0.0
    %2631 = vmatpush1.msra.mxu0 %v199
    %2632 = vmatprep.subr.mxu0 0.0
    %2633 = vmatpush1.msra.mxu0 %v202
    %2634 = vmatprep.subr.mxu0 0.0
    %2635 = vmatpush1.msra.mxu0 %v205
    %2636 = vmatprep.subr.mxu0 0.0
    %2637 = vmatpush1.msra.mxu0 %v208
    %2638 = vmatprep.subr.mxu0 0.0
    %2639 = vmatpush1.msra.mxu0 %v211
    %2640 = vmatprep.subr.mxu0 0.0
    %2641 = vmatpush1.msra.mxu0 %v214
    %2642 = vmatprep.subr.mxu0 0.0
    %2643 = vmatpush1.msra.mxu0 %v217
    %2644 = vmatprep.subr.mxu0 0.0
    %2645 = vmatpush1.msra.mxu0 %v220
    %2646 = vmatprep.subr.mxu0 0.0
    %2647 = vmatpush1.msra.mxu0 %v223
    %2648 = vmatprep.subr.mxu0 0.0
    %2649 = vmatpush1.msra.mxu0 %v226
    %2650 = vmatprep.subr.mxu0 0.0
    %2651 = vmatpush1.msra.mxu0 0.0
    %2652 = vmatprep.subr.mxu0 0.0
    %2653 = vmatpush1.msra.mxu0 0.0
    %2654 = vmatprep.subr.mxu0 0.0
    %2655 = vmatpush1.msra.mxu0 0.0
    %2656 = vmatprep.subr.mxu0 0.0
    %2657 = vmatpush1.msra.mxu0 0.0
    %2658 = vmatprep.subr.mxu0 0.0
    %2659 = vmatpush1.msra.mxu0 0.0
    %2660 = vmatprep.subr.mxu0 0.0
    %2661 = vmatpush1.msra.mxu0 0.0
    %2662 = vmatprep.subr.mxu0 0.0
    %2663 = vmatpush1.msra.mxu0 0.0
    %2664 = vmatprep.subr.mxu0 0.0
    %2665 = vmatpush1.msra.mxu0 0.0
    %2666 = vmatprep.subr.mxu0 0.0
    %2667 = vmatpush1.msra.mxu0 0.0
    %2668 = vmatprep.subr.mxu0 0.0
    %2669 = vmatpush1.msra.mxu0 0.0
    %2670 = vmatprep.subr.mxu0 0.0
    %2671 = vmatpush1.msra.mxu0 0.0
    %2672 = vmatprep.subr.mxu0 0.0
    %2673 = vmatpush1.msra.mxu0 0.0
    %2674 = vmatprep.subr.mxu0 0.0
    %2675 = vmatpush1.msra.mxu0 0.0
    %2676 = vmatprep.subr.mxu0 0.0
    %2677 = vmatpush1.msra.mxu0 0.0
    %2678 = vmatprep.subr.mxu0 0.0
    %2679 = vmatpush1.msra.mxu0 0.0
    %2680 = vmatprep.subr.mxu0 0.0
    %2681 = vmatpush1.msra.mxu0 0.0
    %2682 = vmatprep.mubr.f32.mxu0 0.0
    %2683 = vmatmul.mubr.f32.gmra.mrb[0].mxu0 %v2546
    %v2684 = vpop.f32.mrb[0].mxu0
    %v2685 = vadd.f32 %v488, %v2684
    %v2686 = vpop.f32.mrb[0].mxu0
    %2687 = vdwg.mxu0
    %2688 = vmatprep.subr.mxu0 %v228
    %2689 = vmatpush1.msra.mxu0 %v227
    %2690 = vmatprep.subr.mxu0 %v231
    %2691 = vmatpush1.msra.mxu0 %v230
    %2692 = vmatprep.subr.mxu0 %v234
    %2693 = vmatpush1.msra.mxu0 %v233
    %2694 = vmatprep.subr.mxu0 %v237
    %2695 = vmatpush1.msra.mxu0 %v236
    %2696 = vmatprep.subr.mxu0 %v240
    %2697 = vmatpush1.msra.mxu0 %v239
    %2698 = vmatprep.subr.mxu0 %v243
    %2699 = vmatpush1.msra.mxu0 %v242
    %2700 = vmatprep.subr.mxu0 %v246
    %2701 = vmatpush1.msra.mxu0 %v245
    %2702 = vmatprep.subr.mxu0 %v249
    %2703 = vmatpush1.msra.mxu0 %v248
    %2704 = vmatprep.subr.mxu0 %v252
    %2705 = vmatpush1.msra.mxu0 %v251
    %2706 = vmatprep.subr.mxu0 %v255
    %2707 = vmatpush1.msra.mxu0 %v254
    %2708 = vmatprep.subr.mxu0 %v258
    %2709 = vmatpush1.msra.mxu0 %v257
    %2710 = vmatprep.subr.mxu0 %v261
    %2711 = vmatpush1.msra.mxu0 %v260
    %2712 = vmatprep.subr.mxu0 %v264
    %2713 = vmatpush1.msra.mxu0 %v263
    %2714 = vmatprep.subr.mxu0 %v267
    %2715 = vmatpush1.msra.mxu0 %v266
    %2716 = vmatprep.subr.mxu0 %v270
    %2717 = vmatpush1.msra.mxu0 %v269
    %2718 = vmatprep.subr.mxu0 %v273
    %2719 = vmatpush1.msra.mxu0 %v272
    %2720 = vmatprep.subr.mxu0 0.0
    %2721 = vmatpush1.msra.mxu0 0.0
    %2722 = vmatprep.subr.mxu0 0.0
    %2723 = vmatpush1.msra.mxu0 0.0
    %2724 = vmatprep.subr.mxu0 0.0
    %2725 = vmatpush1.msra.mxu0 0.0
    %2726 = vmatprep.subr.mxu0 0.0
    %2727 = vmatpush1.msra.mxu0 0.0
    %2728 = vmatprep.subr.mxu0 0.0
    %2729 = vmatpush1.msra.mxu0 0.0
    %2730 = vmatprep.subr.mxu0 0.0
    %2731 = vmatpush1.msra.mxu0 0.0
    %2732 = vmatprep.subr.mxu0 0.0
    %2733 = vmatpush1.msra.mxu0 0.0
    %2734 = vmatprep.subr.mxu0 0.0
    %2735 = vmatpush1.msra.mxu0 0.0
    %2736 = vmatprep.subr.mxu0 0.0
    %2737 = vmatpush1.msra.mxu0 0.0
    %2738 = vmatprep.subr.mxu0 0.0
    %2739 = vmatpush1.msra.mxu0 0.0
    %2740 = vmatprep.subr.mxu0 0.0
    %2741 = vmatpush1.msra.mxu0 0.0
    %2742 = vmatprep.subr.mxu0 0.0
    %2743 = vmatpush1.msra.mxu0 0.0
    %2744 = vmatprep.subr.mxu0 0.0
    %2745 = vmatpush1.msra.mxu0 0.0
    %2746 = vmatprep.subr.mxu0 0.0
    %2747 = vmatpush1.msra.mxu0 0.0
    %2748 = vmatprep.subr.mxu0 0.0
    %2749 = vmatpush1.msra.mxu0 0.0
    %2750 = vmatprep.subr.mxu0 0.0
    %2751 = vmatpush1.msra.mxu0 0.0
    %2752 = vmatprep.mubr.f32.mxu0 0.0
    %2753 = vmatmul.mubr.f32.gmra.mrb[0].mxu0 %v2516
    %v2754 = vpop.f32.mrb[0].mxu0
    %v2755 = vadd.f32 %v637, %v2754
    %v2756 = vpop.f32.mrb[0].mxu0
    %v2757 = vadd.f32 %v641, %v2756
    %2758 = vdwg.mxu0
    %2759 = vmatprep.subr.mxu0 0.0
    %2760 = vmatpush1.msra.mxu0 %v229
    %2761 = vmatprep.subr.mxu0 0.0
    %2762 = vmatpush1.msra.mxu0 %v232
    %2763 = vmatprep.subr.mxu0 0.0
    %2764 = vmatpush1.msra.mxu0 %v235
    %2765 = vmatprep.subr.mxu0 0.0
    %2766 = vmatpush1.msra.mxu0 %v238
    %2767 = vmatprep.subr.mxu0 0.0
    %2768 = vmatpush1.msra.mxu0 %v241
    %2769 = vmatprep.subr.mxu0 0.0
    %2770 = vmatpush1.msra.mxu0 %v244
    %2771 = vmatprep.subr.mxu0 0.0
    %2772 = vmatpush1.msra.mxu0 %v247
    %2773 = vmatprep.subr.mxu0 0.0
    %2774 = vmatpush1.msra.mxu0 %v250
    %2775 = vmatprep.subr.mxu0 0.0
    %2776 = vmatpush1.msra.mxu0 %v253
    %2777 = vmatprep.subr.mxu0 0.0
    %2778 = vmatpush1.msra.mxu0 %v256
    %2779 = vmatprep.subr.mxu0 0.0
    %2780 = vmatpush1.msra.mxu0 %v259
    %2781 = vmatprep.subr.mxu0 0.0
    %2782 = vmatpush1.msra.mxu0 %v262
    %2783 = vmatprep.subr.mxu0 0.0
    %2784 = vmatpush1.msra.mxu0 %v265
    %2785 = vmatprep.subr.mxu0 0.0
    %2786 = vmatpush1.msra.mxu0 %v268
    %2787 = vmatprep.subr.mxu0 0.0
    %2788 = vmatpush1.msra.mxu0 %v271
    %2789 = vmatprep.subr.mxu0 0.0
    %2790 = vmatpush1.msra.mxu0 %v274
    %2791 = vmatprep.subr.mxu0 0.0
    %2792 = vmatpush1.msra.mxu0 0.0
    %2793 = vmatprep.subr.mxu0 0.0
    %2794 = vmatpush1.msra.mxu0 0.0
    %2795 = vmatprep.subr.mxu0 0.0
    %2796 = vmatpush1.msra.mxu0 0.0
    %2797 = vmatprep.subr.mxu0 0.0
    %2798 = vmatpush1.msra.mxu0 0.0
    %2799 = vmatprep.subr.mxu0 0.0
    %2800 = vmatpush1.msra.mxu0 0.0
    %2801 = vmatprep.subr.mxu0 0.0
    %2802 = vmatpush1.msra.mxu0 0.0
    %2803 = vmatprep.subr.mxu0 0.0
    %2804 = vmatpush1.msra.mxu0 0.0
    %2805 = vmatprep.subr.mxu0 0.0
    %2806 = vmatpush1.msra.mxu0 0.0
    %2807 = vmatprep.subr.mxu0 0.0
    %2808 = vmatpush1.msra.mxu0 0.0
    %2809 = vmatprep.subr.mxu0 0.0
    %2810 = vmatpush1.msra.mxu0 0.0
    %2811 = vmatprep.subr.mxu0 0.0
    %2812 = vmatpush1.msra.mxu0 0.0
    %2813 = vmatprep.subr.mxu0 0.0
    %2814 = vmatpush1.msra.mxu0 0.0
    %2815 = vmatprep.subr.mxu0 0.0
    %2816 = vmatpush1.msra.mxu0 0.0
    %2817 = vmatprep.subr.mxu0 0.0
    %2818 = vmatpush1.msra.mxu0 0.0
    %2819 = vmatprep.subr.mxu0 0.0
    %2820 = vmatpush1.msra.mxu0 0.0
    %2821 = vmatprep.subr.mxu0 0.0
    %2822 = vmatpush1.msra.mxu0 0.0
    %2823 = vmatprep.mubr.f32.mxu0 0.0
    %2824 = vmatmul.mubr.f32.gmra.mrb[0].mxu0 %v2516
    %v2825 = vpop.f32.mrb[0].mxu0
    %v2826 = vadd.f32 %v645, %v2825
    %v2827 = vpop.f32.mrb[0].mxu0
    %2828 = vdwg.mxu0
    %v2829 = vadd.f32 %v2614, %v2755
    %v2830 = vxor.u32 %v2829, 2147483648
    %v2831 = vmul.f32 %v2830, 1.442695
    %v2832 = vpow.pop %v2831
    %v2833 = vadd.f32 %v2832, 1.0
    %v2834 = vrcp.pop %v2833
    %v2835 = vmul.f32 1.0, %v2834
    %v2836 = vadd.f32 %v2616, %v2757
    %v2837 = vxor.u32 %v2836, 2147483648
    %v2838 = vmul.f32 %v2837, 1.442695
    %v2839 = vpow.pop %v2838
    %v2840 = vadd.f32 %v2839, 1.0
    %v2841 = vrcp.pop %v2840
    %v2842 = vmul.f32 1.0, %v2841
    %v2843 = vmul.f32 %v2835, %v2826
    %v2844 = vadd.f32 %v2685, %v2843
    %v2845 = vtanh.pop %v2844
    %v2846 = vsub.f32 1.0, %v2842
    %v2847 = vmul.f32 %v2846, %v2845
    %v2848 = vmul.f32 %v2842, %v2516
    %v2849 = vadd.f32 %v2847, %v2848
    %vm2850 = vcmp.gt.s32.totalorder %v474, 6
    %v2851 = vsel %vm2850, 1, 0
    %2852 = vset.pattern.permute.xlu0 0
    %2853 = vperm.xlu0 %2852, %v2851
    %v2854 = vpop.permute.xlu0 %2853
    %vm2855 = vcmp.eq.s32.totalorder %v2854, 1
    %v2856 = vsel %vm2855, %v2849, %v2516
    %v2857 = vsel %vm2855, %v2849, 0.0
    %v2860 = vunpack.c.l.s4 1966171168
    %v2861 = vunpack.c.0.s8 %v2860
    %v2862 = vlaneseq
    %v2863 = vshrl.u32 %v2862, 7
    %v2864 = vsub.s32 %v2861, %v2863
    %v2865 = vrot.slane %v2857, %v2864
    %v2866 = vcombine.high %v2865, %v2865
    %v2868 = vunpack.c.l.s4 1966171168
    %v2869 = vunpack.c.0.s8 %v2868
    %v2870 = vlaneseq
    %v2871 = vshrl.u32 %v2870, 7
    %v2872 = vsub.s32 %v2869, %v2871
    %v2873 = vrot.slane %v2865, %v2872
    %v2875 = vunpack.c.l.s4 1966171168
    %v2876 = vunpack.c.0.s8 %v2875
    %v2877 = vlaneseq
    %v2878 = vshrl.u32 %v2877, 7
    %v2879 = vsub.s32 %v2876, %v2878
    %v2880 = vrot.slane %v2866, %v2879
    %2883 = vst [vmem:[#allocation2 + $0x6] sm:$0x1] %v2873
    %2884 = vst [vmem:[#allocation2 + $0xe] sm:$0x1] %v2880
    %s2885 = scalar_lea.vmem [#allocation4], 14
    %v2886 = vld [vmem:[%s2885] sm:$0x3]
    %2887 = vmatprep.subr.mxu0 %v180
    %2888 = vmatpush1.msra.mxu0 %v179
    %2889 = vmatprep.subr.mxu0 %v183
    %2890 = vmatpush1.msra.mxu0 %v182
    %2891 = vmatprep.subr.mxu0 %v186
    %2892 = vmatpush1.msra.mxu0 %v185
    %2893 = vmatprep.subr.mxu0 %v189
    %2894 = vmatpush1.msra.mxu0 %v188
    %2895 = vmatprep.subr.mxu0 %v192
    %2896 = vmatpush1.msra.mxu0 %v191
    %2897 = vmatprep.subr.mxu0 %v195
    %2898 = vmatpush1.msra.mxu0 %v194
    %2899 = vmatprep.subr.mxu0 %v198
    %2900 = vmatpush1.msra.mxu0 %v197
    %2901 = vmatprep.subr.mxu0 %v201
    %2902 = vmatpush1.msra.mxu0 %v200
    %2903 = vmatprep.subr.mxu0 %v204
    %2904 = vmatpush1.msra.mxu0 %v203
    %2905 = vmatprep.subr.mxu0 %v207
    %2906 = vmatpush1.msra.mxu0 %v206
    %2907 = vmatprep.subr.mxu0 %v210
    %2908 = vmatpush1.msra.mxu0 %v209
    %2909 = vmatprep.subr.mxu0 %v213
    %2910 = vmatpush1.msra.mxu0 %v212
    %2911 = vmatprep.subr.mxu0 %v216
    %2912 = vmatpush1.msra.mxu0 %v215
    %2913 = vmatprep.subr.mxu0 %v219
    %2914 = vmatpush1.msra.mxu0 %v218
    %2915 = vmatprep.subr.mxu0 %v222
    %2916 = vmatpush1.msra.mxu0 %v221
    %2917 = vmatprep.subr.mxu0 %v225
    %2918 = vmatpush1.msra.mxu0 %v224
    %2919 = vmatprep.subr.mxu0 0.0
    %2920 = vmatpush1.msra.mxu0 0.0
    %2921 = vmatprep.subr.mxu0 0.0
    %2922 = vmatpush1.msra.mxu0 0.0
    %2923 = vmatprep.subr.mxu0 0.0
    %2924 = vmatpush1.msra.mxu0 0.0
    %2925 = vmatprep.subr.mxu0 0.0
    %2926 = vmatpush1.msra.mxu0 0.0
    %2927 = vmatprep.subr.mxu0 0.0
    %2928 = vmatpush1.msra.mxu0 0.0
    %2929 = vmatprep.subr.mxu0 0.0
    %2930 = vmatpush1.msra.mxu0 0.0
    %2931 = vmatprep.subr.mxu0 0.0
    %2932 = vmatpush1.msra.mxu0 0.0
    %2933 = vmatprep.subr.mxu0 0.0
    %2934 = vmatpush1.msra.mxu0 0.0
    %2935 = vmatprep.subr.mxu0 0.0
    %2936 = vmatpush1.msra.mxu0 0.0
    %2937 = vmatprep.subr.mxu0 0.0
    %2938 = vmatpush1.msra.mxu0 0.0
    %2939 = vmatprep.subr.mxu0 0.0
    %2940 = vmatpush1.msra.mxu0 0.0
    %2941 = vmatprep.subr.mxu0 0.0
    %2942 = vmatpush1.msra.mxu0 0.0
    %2943 = vmatprep.subr.mxu0 0.0
    %2944 = vmatpush1.msra.mxu0 0.0
    %2945 = vmatprep.subr.mxu0 0.0
    %2946 = vmatpush1.msra.mxu0 0.0
    %2947 = vmatprep.subr.mxu0 0.0
    %2948 = vmatpush1.msra.mxu0 0.0
    %2949 = vmatprep.subr.mxu0 0.0
    %2950 = vmatpush1.msra.mxu0 0.0
    %2951 = vmatprep.mubr.f32.mxu0 0.0
    %2952 = vmatmul.mubr.f32.gmra.mrb[0].mxu0 %v2886
    %v2953 = vpop.f32.mrb[0].mxu0
    %v2954 = vadd.f32 %v480, %v2953
    %v2955 = vpop.f32.mrb[0].mxu0
    %v2956 = vadd.f32 %v484, %v2955
    %2957 = vdwg.mxu0
    %2958 = vmatprep.subr.mxu0 0.0
    %2959 = vmatpush1.msra.mxu0 %v181
    %2960 = vmatprep.subr.mxu0 0.0
    %2961 = vmatpush1.msra.mxu0 %v184
    %2962 = vmatprep.subr.mxu0 0.0
    %2963 = vmatpush1.msra.mxu0 %v187
    %2964 = vmatprep.subr.mxu0 0.0
    %2965 = vmatpush1.msra.mxu0 %v190
    %2966 = vmatprep.subr.mxu0 0.0
    %2967 = vmatpush1.msra.mxu0 %v193
    %2968 = vmatprep.subr.mxu0 0.0
    %2969 = vmatpush1.msra.mxu0 %v196
    %2970 = vmatprep.subr.mxu0 0.0
    %2971 = vmatpush1.msra.mxu0 %v199
    %2972 = vmatprep.subr.mxu0 0.0
    %2973 = vmatpush1.msra.mxu0 %v202
    %2974 = vmatprep.subr.mxu0 0.0
    %2975 = vmatpush1.msra.mxu0 %v205
    %2976 = vmatprep.subr.mxu0 0.0
    %2977 = vmatpush1.msra.mxu0 %v208
    %2978 = vmatprep.subr.mxu0 0.0
    %2979 = vmatpush1.msra.mxu0 %v211
    %2980 = vmatprep.subr.mxu0 0.0
    %2981 = vmatpush1.msra.mxu0 %v214
    %2982 = vmatprep.subr.mxu0 0.0
    %2983 = vmatpush1.msra.mxu0 %v217
    %2984 = vmatprep.subr.mxu0 0.0
    %2985 = vmatpush1.msra.mxu0 %v220
    %2986 = vmatprep.subr.mxu0 0.0
    %2987 = vmatpush1.msra.mxu0 %v223
    %2988 = vmatprep.subr.mxu0 0.0
    %2989 = vmatpush1.msra.mxu0 %v226
    %2990 = vmatprep.subr.mxu0 0.0
    %2991 = vmatpush1.msra.mxu0 0.0
    %2992 = vmatprep.subr.mxu0 0.0
    %2993 = vmatpush1.msra.mxu0 0.0
    %2994 = vmatprep.subr.mxu0 0.0
    %2995 = vmatpush1.msra.mxu0 0.0
    %2996 = vmatprep.subr.mxu0 0.0
    %2997 = vmatpush1.msra.mxu0 0.0
    %2998 = vmatprep.subr.mxu0 0.0
    %2999 = vmatpush1.msra.mxu0 0.0
    %3000 = vmatprep.subr.mxu0 0.0
    %3001 = vmatpush1.msra.mxu0 0.0
    %3002 = vmatprep.subr.mxu0 0.0
    %3003 = vmatpush1.msra.mxu0 0.0
    %3004 = vmatprep.subr.mxu0 0.0
    %3005 = vmatpush1.msra.mxu0 0.0
    %3006 = vmatprep.subr.mxu0 0.0
    %3007 = vmatpush1.msra.mxu0 0.0
    %3008 = vmatprep.subr.mxu0 0.0
    %3009 = vmatpush1.msra.mxu0 0.0
    %3010 = vmatprep.subr.mxu0 0.0
    %3011 = vmatpush1.msra.mxu0 0.0
    %3012 = vmatprep.subr.mxu0 0.0
    %3013 = vmatpush1.msra.mxu0 0.0
    %3014 = vmatprep.subr.mxu0 0.0
    %3015 = vmatpush1.msra.mxu0 0.0
    %3016 = vmatprep.subr.mxu0 0.0
    %3017 = vmatpush1.msra.mxu0 0.0
    %3018 = vmatprep.subr.mxu0 0.0
    %3019 = vmatpush1.msra.mxu0 0.0
    %3020 = vmatprep.subr.mxu0 0.0
    %3021 = vmatpush1.msra.mxu0 0.0
    %3022 = vmatprep.mubr.f32.mxu0 0.0
    %3023 = vmatmul.mubr.f32.gmra.mrb[0].mxu0 %v2886
    %v3024 = vpop.f32.mrb[0].mxu0
    %v3025 = vadd.f32 %v488, %v3024
    %v3026 = vpop.f32.mrb[0].mxu0
    %3027 = vdwg.mxu0
    %3028 = vmatprep.subr.mxu0 %v228
    %3029 = vmatpush1.msra.mxu0 %v227
    %3030 = vmatprep.subr.mxu0 %v231
    %3031 = vmatpush1.msra.mxu0 %v230
    %3032 = vmatprep.subr.mxu0 %v234
    %3033 = vmatpush1.msra.mxu0 %v233
    %3034 = vmatprep.subr.mxu0 %v237
    %3035 = vmatpush1.msra.mxu0 %v236
    %3036 = vmatprep.subr.mxu0 %v240
    %3037 = vmatpush1.msra.mxu0 %v239
    %3038 = vmatprep.subr.mxu0 %v243
    %3039 = vmatpush1.msra.mxu0 %v242
    %3040 = vmatprep.subr.mxu0 %v246
    %3041 = vmatpush1.msra.mxu0 %v245
    %3042 = vmatprep.subr.mxu0 %v249
    %3043 = vmatpush1.msra.mxu0 %v248
    %3044 = vmatprep.subr.mxu0 %v252
    %3045 = vmatpush1.msra.mxu0 %v251
    %3046 = vmatprep.subr.mxu0 %v255
    %3047 = vmatpush1.msra.mxu0 %v254
    %3048 = vmatprep.subr.mxu0 %v258
    %3049 = vmatpush1.msra.mxu0 %v257
    %3050 = vmatprep.subr.mxu0 %v261
    %3051 = vmatpush1.msra.mxu0 %v260
    %3052 = vmatprep.subr.mxu0 %v264
    %3053 = vmatpush1.msra.mxu0 %v263
    %3054 = vmatprep.subr.mxu0 %v267
    %3055 = vmatpush1.msra.mxu0 %v266
    %3056 = vmatprep.subr.mxu0 %v270
    %3057 = vmatpush1.msra.mxu0 %v269
    %3058 = vmatprep.subr.mxu0 %v273
    %3059 = vmatpush1.msra.mxu0 %v272
    %3060 = vmatprep.subr.mxu0 0.0
    %3061 = vmatpush1.msra.mxu0 0.0
    %3062 = vmatprep.subr.mxu0 0.0
    %3063 = vmatpush1.msra.mxu0 0.0
    %3064 = vmatprep.subr.mxu0 0.0
    %3065 = vmatpush1.msra.mxu0 0.0
    %3066 = vmatprep.subr.mxu0 0.0
    %3067 = vmatpush1.msra.mxu0 0.0
    %3068 = vmatprep.subr.mxu0 0.0
    %3069 = vmatpush1.msra.mxu0 0.0
    %3070 = vmatprep.subr.mxu0 0.0
    %3071 = vmatpush1.msra.mxu0 0.0
    %3072 = vmatprep.subr.mxu0 0.0
    %3073 = vmatpush1.msra.mxu0 0.0
    %3074 = vmatprep.subr.mxu0 0.0
    %3075 = vmatpush1.msra.mxu0 0.0
    %3076 = vmatprep.subr.mxu0 0.0
    %3077 = vmatpush1.msra.mxu0 0.0
    %3078 = vmatprep.subr.mxu0 0.0
    %3079 = vmatpush1.msra.mxu0 0.0
    %3080 = vmatprep.subr.mxu0 0.0
    %3081 = vmatpush1.msra.mxu0 0.0
    %3082 = vmatprep.subr.mxu0 0.0
    %3083 = vmatpush1.msra.mxu0 0.0
    %3084 = vmatprep.subr.mxu0 0.0
    %3085 = vmatpush1.msra.mxu0 0.0
    %3086 = vmatprep.subr.mxu0 0.0
    %3087 = vmatpush1.msra.mxu0 0.0
    %3088 = vmatprep.subr.mxu0 0.0
    %3089 = vmatpush1.msra.mxu0 0.0
    %3090 = vmatprep.subr.mxu0 0.0
    %3091 = vmatpush1.msra.mxu0 0.0
    %3092 = vmatprep.mubr.f32.mxu0 0.0
    %3093 = vmatmul.mubr.f32.gmra.mrb[0].mxu0 %v2856
    %v3094 = vpop.f32.mrb[0].mxu0
    %v3095 = vadd.f32 %v637, %v3094
    %v3096 = vpop.f32.mrb[0].mxu0
    %v3097 = vadd.f32 %v641, %v3096
    %3098 = vdwg.mxu0
    %3099 = vmatprep.subr.mxu0 0.0
    %3100 = vmatpush1.msra.mxu0 %v229
    %3101 = vmatprep.subr.mxu0 0.0
    %3102 = vmatpush1.msra.mxu0 %v232
    %3103 = vmatprep.subr.mxu0 0.0
    %3104 = vmatpush1.msra.mxu0 %v235
    %3105 = vmatprep.subr.mxu0 0.0
    %3106 = vmatpush1.msra.mxu0 %v238
    %3107 = vmatprep.subr.mxu0 0.0
    %3108 = vmatpush1.msra.mxu0 %v241
    %3109 = vmatprep.subr.mxu0 0.0
    %3110 = vmatpush1.msra.mxu0 %v244
    %3111 = vmatprep.subr.mxu0 0.0
    %3112 = vmatpush1.msra.mxu0 %v247
    %3113 = vmatprep.subr.mxu0 0.0
    %3114 = vmatpush1.msra.mxu0 %v250
    %3115 = vmatprep.subr.mxu0 0.0
    %3116 = vmatpush1.msra.mxu0 %v253
    %3117 = vmatprep.subr.mxu0 0.0
    %3118 = vmatpush1.msra.mxu0 %v256
    %3119 = vmatprep.subr.mxu0 0.0
    %3120 = vmatpush1.msra.mxu0 %v259
    %3121 = vmatprep.subr.mxu0 0.0
    %3122 = vmatpush1.msra.mxu0 %v262
    %3123 = vmatprep.subr.mxu0 0.0
    %3124 = vmatpush1.msra.mxu0 %v265
    %3125 = vmatprep.subr.mxu0 0.0
    %3126 = vmatpush1.msra.mxu0 %v268
    %3127 = vmatprep.subr.mxu0 0.0
    %3128 = vmatpush1.msra.mxu0 %v271
    %3129 = vmatprep.subr.mxu0 0.0
    %3130 = vmatpush1.msra.mxu0 %v274
    %3131 = vmatprep.subr.mxu0 0.0
    %3132 = vmatpush1.msra.mxu0 0.0
    %3133 = vmatprep.subr.mxu0 0.0
    %3134 = vmatpush1.msra.mxu0 0.0
    %3135 = vmatprep.subr.mxu0 0.0
    %3136 = vmatpush1.msra.mxu0 0.0
    %3137 = vmatprep.subr.mxu0 0.0
    %3138 = vmatpush1.msra.mxu0 0.0
    %3139 = vmatprep.subr.mxu0 0.0
    %3140 = vmatpush1.msra.mxu0 0.0
    %3141 = vmatprep.subr.mxu0 0.0
    %3142 = vmatpush1.msra.mxu0 0.0
    %3143 = vmatprep.subr.mxu0 0.0
    %3144 = vmatpush1.msra.mxu0 0.0
    %3145 = vmatprep.subr.mxu0 0.0
    %3146 = vmatpush1.msra.mxu0 0.0
    %3147 = vmatprep.subr.mxu0 0.0
    %3148 = vmatpush1.msra.mxu0 0.0
    %3149 = vmatprep.subr.mxu0 0.0
    %3150 = vmatpush1.msra.mxu0 0.0
    %3151 = vmatprep.subr.mxu0 0.0
    %3152 = vmatpush1.msra.mxu0 0.0
    %3153 = vmatprep.subr.mxu0 0.0
    %3154 = vmatpush1.msra.mxu0 0.0
    %3155 = vmatprep.subr.mxu0 0.0
    %3156 = vmatpush1.msra.mxu0 0.0
    %3157 = vmatprep.subr.mxu0 0.0
    %3158 = vmatpush1.msra.mxu0 0.0
    %3159 = vmatprep.subr.mxu0 0.0
    %3160 = vmatpush1.msra.mxu0 0.0
    %3161 = vmatprep.subr.mxu0 0.0
    %3162 = vmatpush1.msra.mxu0 0.0
    %3163 = vmatprep.mubr.f32.mxu0 0.0
    %3164 = vmatmul.mubr.f32.gmra.mrb[0].mxu0 %v2856
    %v3165 = vpop.f32.mrb[0].mxu0
    %v3166 = vadd.f32 %v645, %v3165
    %v3167 = vpop.f32.mrb[0].mxu0
    %3168 = vdwg.mxu0
    %v3169 = vadd.f32 %v2954, %v3095
    %v3170 = vxor.u32 %v3169, 2147483648
    %v3171 = vmul.f32 %v3170, 1.442695
    %v3172 = vpow.pop %v3171
    %v3173 = vadd.f32 %v3172, 1.0
    %v3174 = vrcp.pop %v3173
    %v3175 = vmul.f32 1.0, %v3174
    %v3176 = vadd.f32 %v2956, %v3097
    %v3177 = vxor.u32 %v3176, 2147483648
    %v3178 = vmul.f32 %v3177, 1.442695
    %v3179 = vpow.pop %v3178
    %v3180 = vadd.f32 %v3179, 1.0
    %v3181 = vrcp.pop %v3180
    %v3182 = vmul.f32 1.0, %v3181
    %v3183 = vmul.f32 %v3175, %v3166
    %v3184 = vadd.f32 %v3025, %v3183
    %v3185 = vtanh.pop %v3184
    %v3186 = vsub.f32 1.0, %v3182
    %v3187 = vmul.f32 %v3186, %v3185
    %v3188 = vmul.f32 %v3182, %v2856
    %v3189 = vadd.f32 %v3187, %v3188
    %vm3190 = vcmp.gt.s32.totalorder %v474, 7
    %v3191 = vsel %vm3190, 1, 0
    %3192 = vset.pattern.permute.xlu0 0
    %3193 = vperm.xlu0 %3192, %v3191
    %v3194 = vpop.permute.xlu0 %3193
    %vm3195 = vcmp.eq.s32.totalorder %v3194, 1
    %v3196 = vsel %vm3195, %v3189, %v2856
    %v3197 = vsel %vm3195, %v3189, 0.0
    %v3200 = vunpack.c.l.s4 1966171168
    %v3201 = vunpack.c.0.s8 %v3200
    %v3202 = vlaneseq
    %v3203 = vshrl.u32 %v3202, 7
    %v3204 = vsub.s32 %v3201, %v3203
    %v3205 = vrot.slane %v3197, %v3204
    %v3206 = vcombine.high %v3205, %v3205
    %v3208 = vunpack.c.l.s4 1966171168
    %v3209 = vunpack.c.0.s8 %v3208
    %v3210 = vlaneseq
    %v3211 = vshrl.u32 %v3210, 7
    %v3212 = vsub.s32 %v3209, %v3211
    %v3213 = vrot.slane %v3205, %v3212
    %v3215 = vunpack.c.l.s4 1966171168
    %v3216 = vunpack.c.0.s8 %v3215
    %v3217 = vlaneseq
    %v3218 = vshrl.u32 %v3217, 7
    %v3219 = vsub.s32 %v3216, %v3218
    %v3220 = vrot.slane %v3206, %v3219
    %3223 = vst [vmem:[#allocation2 + $0x7] sm:$0x1] %v3213
    %3224 = vst [vmem:[#allocation2 + $0xf] sm:$0x1] %v3220
    %v3225 = vld [vmem:[#allocation2] sm:$0xff]
    %v3226 = vld [vmem:[#allocation2 + $0x8] sm:$0xff]
    %v3228 = vlaneseq
    %v3229 = vshrl.u32 %v3228, 7
    %v3230 = vsub.s32 0, %v3229
    %v3231 = vrot.slane %v439, %v3230
    %3233 = vmatprep.subr.mxu0 0.0
    %3234 = vmatpush1.msra.mxu0 %v423
    %3235 = vmatprep.subr.mxu0 0.0
    %3236 = vmatpush1.msra.mxu0 %v424
    %3237 = vmatprep.subr.mxu0 0.0
    %3238 = vmatpush1.msra.mxu0 %v425
    %3239 = vmatprep.subr.mxu0 0.0
    %3240 = vmatpush1.msra.mxu0 %v426
    %3241 = vmatprep.subr.mxu0 0.0
    %3242 = vmatpush1.msra.mxu0 %v427
    %3243 = vmatprep.subr.mxu0 0.0
    %3244 = vmatpush1.msra.mxu0 %v428
    %3245 = vmatprep.subr.mxu0 0.0
    %3246 = vmatpush1.msra.mxu0 %v429
    %3247 = vmatprep.subr.mxu0 0.0
    %3248 = vmatpush1.msra.mxu0 %v430
    %3249 = vmatprep.subr.mxu0 0.0
    %3250 = vmatpush1.msra.mxu0 %v431
    %3251 = vmatprep.subr.mxu0 0.0
    %3252 = vmatpush1.msra.mxu0 %v432
    %3253 = vmatprep.subr.mxu0 0.0
    %3254 = vmatpush1.msra.mxu0 %v433
    %3255 = vmatprep.subr.mxu0 0.0
    %3256 = vmatpush1.msra.mxu0 %v434
    %3257 = vmatprep.subr.mxu0 0.0
    %3258 = vmatpush1.msra.mxu0 %v435
    %3259 = vmatprep.subr.mxu0 0.0
    %3260 = vmatpush1.msra.mxu0 %v436
    %3261 = vmatprep.subr.mxu0 0.0
    %3262 = vmatpush1.msra.mxu0 %v437
    %3263 = vmatprep.subr.mxu0 0.0
    %3264 = vmatpush1.msra.mxu0 %v438
    %3265 = vmatprep.subr.mxu0 0.0
    %3266 = vmatpush1.msra.mxu0 0.0
    %3267 = vmatprep.subr.mxu0 0.0
    %3268 = vmatpush1.msra.mxu0 0.0
    %3269 = vmatprep.subr.mxu0 0.0
    %3270 = vmatpush1.msra.mxu0 0.0
    %3271 = vmatprep.subr.mxu0 0.0
    %3272 = vmatpush1.msra.mxu0 0.0
    %3273 = vmatprep.subr.mxu0 0.0
    %3274 = vmatpush1.msra.mxu0 0.0
    %3275 = vmatprep.subr.mxu0 0.0
    %3276 = vmatpush1.msra.mxu0 0.0
    %3277 = vmatprep.subr.mxu0 0.0
    %3278 = vmatpush1.msra.mxu0 0.0
    %3279 = vmatprep.subr.mxu0 0.0
    %3280 = vmatpush1.msra.mxu0 0.0
    %3281 = vmatprep.subr.mxu0 0.0
    %3282 = vmatpush1.msra.mxu0 0.0
    %3283 = vmatprep.subr.mxu0 0.0
    %3284 = vmatpush1.msra.mxu0 0.0
    %3285 = vmatprep.subr.mxu0 0.0
    %3286 = vmatpush1.msra.mxu0 0.0
    %3287 = vmatprep.subr.mxu0 0.0
    %3288 = vmatpush1.msra.mxu0 0.0
    %3289 = vmatprep.subr.mxu0 0.0
    %3290 = vmatpush1.msra.mxu0 0.0
    %3291 = vmatprep.subr.mxu0 0.0
    %3292 = vmatpush1.msra.mxu0 0.0
    %3293 = vmatprep.subr.mxu0 0.0
    %3294 = vmatpush1.msra.mxu0 0.0
    %3295 = vmatprep.subr.mxu0 0.0
    %3296 = vmatpush1.msra.mxu0 0.0
    %3297 = vmatprep.mubr.f32.mxu0 0.0
    %3298 = vmatmul.mubr.f32.gmra.mrb[0].mxu0 %v3225
    %v3299 = vpop.f32.mrb[0].mxu0
    %v3300 = vadd.f32 %v3231, %v3299
    %v3301 = vpop.f32.mrb[0].mxu0
    %3302 = vmatprep.mubr.f32.mxu0 0.0
    %3303 = vmatmul.mubr.f32.gmra.mrb[0].mxu0 %v3226
    %v3304 = vpop.f32.mrb[0].mxu0
    %v3305 = vadd.f32 %v3231, %v3304
    %v3306 = vpop.f32.mrb[0].mxu0
    %3307 = vdwg.mxu0
    %v3309 = vlaneseq
    %v3310 = vshrl.u32 %v3309, 7
    %v3311 = vsub.s32 0, %v3310
    %v3312 = vrot.slane %v456, %v3311
    %3314 = vmatprep.subr.mxu0 0.0
    %3315 = vmatpush1.msra.mxu0 %v440
    %3316 = vmatprep.subr.mxu0 0.0
    %3317 = vmatpush1.msra.mxu0 %v441
    %3318 = vmatprep.subr.mxu0 0.0
    %3319 = vmatpush1.msra.mxu0 %v442
    %3320 = vmatprep.subr.mxu0 0.0
    %3321 = vmatpush1.msra.mxu0 %v443
    %3322 = vmatprep.subr.mxu0 0.0
    %3323 = vmatpush1.msra.mxu0 %v444
    %3324 = vmatprep.subr.mxu0 0.0
    %3325 = vmatpush1.msra.mxu0 %v445
    %3326 = vmatprep.subr.mxu0 0.0
    %3327 = vmatpush1.msra.mxu0 %v446
    %3328 = vmatprep.subr.mxu0 0.0
    %3329 = vmatpush1.msra.mxu0 %v447
    %3330 = vmatprep.subr.mxu0 0.0
    %3331 = vmatpush1.msra.mxu0 %v448
    %3332 = vmatprep.subr.mxu0 0.0
    %3333 = vmatpush1.msra.mxu0 %v449
    %3334 = vmatprep.subr.mxu0 0.0
    %3335 = vmatpush1.msra.mxu0 %v450
    %3336 = vmatprep.subr.mxu0 0.0
    %3337 = vmatpush1.msra.mxu0 %v451
    %3338 = vmatprep.subr.mxu0 0.0
    %3339 = vmatpush1.msra.mxu0 %v452
    %3340 = vmatprep.subr.mxu0 0.0
    %3341 = vmatpush1.msra.mxu0 %v453
    %3342 = vmatprep.subr.mxu0 0.0
    %3343 = vmatpush1.msra.mxu0 %v454
    %3344 = vmatprep.subr.mxu0 0.0
    %3345 = vmatpush1.msra.mxu0 %v455
    %3346 = vmatprep.subr.mxu0 0.0
    %3347 = vmatpush1.msra.mxu0 0.0
    %3348 = vmatprep.subr.mxu0 0.0
    %3349 = vmatpush1.msra.mxu0 0.0
    %3350 = vmatprep.subr.mxu0 0.0
    %3351 = vmatpush1.msra.mxu0 0.0
    %3352 = vmatprep.subr.mxu0 0.0
    %3353 = vmatpush1.msra.mxu0 0.0
    %3354 = vmatprep.subr.mxu0 0.0
    %3355 = vmatpush1.msra.mxu0 0.0
    %3356 = vmatprep.subr.mxu0 0.0
    %3357 = vmatpush1.msra.mxu0 0.0
    %3358 = vmatprep.subr.mxu0 0.0
    %3359 = vmatpush1.msra.mxu0 0.0
    %3360 = vmatprep.subr.mxu0 0.0
    %3361 = vmatpush1.msra.mxu0 0.0
    %3362 = vmatprep.subr.mxu0 0.0
    %3363 = vmatpush1.msra.mxu0 0.0
    %3364 = vmatprep.subr.mxu0 0.0
    %3365 = vmatpush1.msra.mxu0 0.0
    %3366 = vmatprep.subr.mxu0 0.0
    %3367 = vmatpush1.msra.mxu0 0.0
    %3368 = vmatprep.subr.mxu0 0.0
    %3369 = vmatpush1.msra.mxu0 0.0
    %3370 = vmatprep.subr.mxu0 0.0
    %3371 = vmatpush1.msra.mxu0 0.0
    %3372 = vmatprep.subr.mxu0 0.0
    %3373 = vmatpush1.msra.mxu0 0.0
    %3374 = vmatprep.subr.mxu0 0.0
    %3375 = vmatpush1.msra.mxu0 0.0
    %3376 = vmatprep.subr.mxu0 0.0
    %3377 = vmatpush1.msra.mxu0 0.0
    %3378 = vmatprep.mubr.f32.mxu0 0.0
    %3379 = vmatmul.mubr.f32.gmra.mrb[0].mxu0 %v3196
    %v3380 = vpop.f32.mrb[0].mxu0
    %v3381 = vadd.f32 %v3312, %v3380
    %v3382 = vpop.f32.mrb[0].mxu0
    %3383 = vdwg.mxu0
    %v3386 = vunpack.c.l.s4 1966171168
    %v3387 = vunpack.c.0.s8 %v3386
    %v3388 = vlaneseq
    %v3389 = vshrl.u32 %v3388, 7
    %v3390 = vsub.s32 %v3387, %v3389
    %v3391 = vrot.slane %v3381, %v3390
    %v3392 = vcombine.high %v3391, %v3391
    %v3394 = vunpack.c.l.s4 1966171168
    %v3395 = vunpack.c.0.s8 %v3394
    %v3396 = vlaneseq
    %v3397 = vshrl.u32 %v3396, 7
    %v3398 = vsub.s32 %v3395, %v3397
    %v3399 = vrot.slane %v3391, %v3398
    %v3401 = vunpack.c.l.s4 1966171168
    %v3402 = vunpack.c.0.s8 %v3401
    %v3403 = vlaneseq
    %v3404 = vshrl.u32 %v3403, 7
    %v3405 = vsub.s32 %v3402, %v3404
    %v3406 = vrot.slane %v3392, %v3405
    %v3407 = vlaneseq
    %v3408 = vshrl.u32 %v3407, 7
    %v3409 = vsub.s32 0, %v3408
    %v3410 = vrot.slane %v3399, %v3409
    %v3411 = vlaneseq
    %v3412 = vshrl.u32 %v3411, 7
    %v3413 = vsub.s32 0, %v3412
    %v3414 = vrot.slane %v3406, %v3413
    %v3417 = vmul.f32 %v3300, %v3410
    %v3418 = vmul.f32 %v3305, %v3414
    %3419 = vadd.xlane.f32.xlu0 %v3417
    %v3420 = vpop.xlane.xlu0 %3419
    %3421 = vadd.xlane.f32.xlu0 %v3418
    %v3422 = vpop.xlane.xlu0 %3421
    %v3425 = vlaneseq
    %v3426 = vand.u32 %v3425, 127
    %v3427 = vlaneseq
    %v3428 = vshrl.u32 %v3427, 7
    %v3429 = vsub.s32 %v3426, %v3428
    %v3430 = vrot.slane %v3420, %v3429
    %v3431 = vlaneseq
    %v3432 = vshrl.u32 %v3431, 7
    %v3433 = vsub.s32 %v3426, %v3432
    %v3434 = vrot.slane %v3422, %v3433
    %vm3435 = vcmask 1041409
    %v3436 = vsel %vm3435, %v3434, %v3430
    %vm3438 = vcmask 58368
    %v3439 = vsel %vm3438, %v3436, -inf
    %3440 = vmax.xlane.f32.xlu0 %v3439
    %v3441 = vpop.xlane.xlu0 %3440
    %v3443 = vlaneseq
    %v3444 = vshrl.u32 %v3443, 7
    %v3445 = vsub.s32 0, %v3444
    %v3446 = vrot.slane %v3441, %v3445
    %v3447 = vlaneseq
    %v3448 = vshrl.u32 %v3447, 7
    %v3449 = vsub.s32 1, %v3448
    %v3450 = vrot.slane %v3441, %v3449
    %v3453 = vsub.f32 %v3420, %v3446
    %v3454 = vsub.f32 %v3422, %v3450
    %v3455 = vmul.f32 %v3453, 1.442695
    %v3456 = vpow.pop %v3455
    %v3457 = vmul.f32 %v3454, 1.442695
    %v3458 = vpow.pop %v3457
    %3461 = vset.pattern.permute.xlu0 0
    %3462 = vperm.xlu0 %3461, %v3456
    %v3463 = vpop.permute.xlu0 %3462
    %3464 = vset.pattern.permute.xlu0 0
    %3465 = vperm.xlu0 %3464, %v3458
    %v3466 = vpop.permute.xlu0 %3465
    %v3467 = vlaneseq
    %v3468 = vshrl.u32 %v3467, 7
    %v3469 = vsub.s32 %v3426, %v3468
    %v3470 = vrot.slane %v3463, %v3469
    %v3471 = vlaneseq
    %v3472 = vshrl.u32 %v3471, 7
    %v3473 = vsub.s32 %v3426, %v3472
    %v3474 = vrot.slane %v3466, %v3473
    %v3475 = vsel %vm3435, %v3474, %v3470
    %v3477 = vsel %vm3438, %v3475, 0.0
    %3478 = vadd.xlane.f32.xlu0 %v3477
    %v3479 = vpop.xlane.xlu0 %3478
    %v3480 = vrcp.pop %v3479
    %v3482 = vlaneseq
    %v3483 = vshrl.u32 %v3482, 7
    %v3484 = vsub.s32 0, %v3483
    %v3485 = vrot.slane %v3480, %v3484
    %v3486 = vlaneseq
    %v3487 = vshrl.u32 %v3486, 7
    %v3488 = vsub.s32 1, %v3487
    %v3489 = vrot.slane %v3480, %v3488
    %v3492 = vmul.f32 %v3456, %v3485
    %v3493 = vmul.f32 %v3458, %v3489
    %3495 = vset.pattern.permute.xlu0 0
    %3496 = vperm.xlu0 %3495, %v3492
    %v3497 = vpop.permute.xlu0 %3496
    %v3498 = vlaneseq
    %v3499 = vshrl.u32 %v3498, 7
    %v3500 = vsub.s32 %v3426, %v3499
    %v3501 = vrot.slane %v3497, %v3500
    %vm3502 = vcmask 64512
    %v3503 = vsel %vm3502, %v3501, 0
    %3505 = vmatprep.subr.mxu0 0.0
    %3506 = vmatpush1.msra.mxu0 %v3225
    %3507 = vmatprep.subr.mxu0 0.0
    %3508 = vmatpush1.msra.mxu0 0.0
    %3509 = vmatprep.subr.mxu0 0.0
    %3510 = vmatpush1.msra.mxu0 0.0
    %3511 = vmatprep.subr.mxu0 0.0
    %3512 = vmatpush1.msra.mxu0 0.0
    %3513 = vmatprep.subr.mxu0 0.0
    %3514 = vmatpush1.msra.mxu0 0.0
    %3515 = vmatprep.subr.mxu0 0.0
    %3516 = vmatpush1.msra.mxu0 0.0
    %3517 = vmatprep.subr.mxu0 0.0
    %3518 = vmatpush1.msra.mxu0 0.0
    %3519 = vmatprep.subr.mxu0 0.0
    %3520 = vmatpush1.msra.mxu0 0.0
    %3521 = vmatprep.subr.mxu0 0.0
    %3522 = vmatpush1.msra.mxu0 0.0
    %3523 = vmatprep.subr.mxu0 0.0
    %3524 = vmatpush1.msra.mxu0 0.0
    %3525 = vmatprep.subr.mxu0 0.0
    %3526 = vmatpush1.msra.mxu0 0.0
    %3527 = vmatprep.subr.mxu0 0.0
    %3528 = vmatpush1.msra.mxu0 0.0
    %3529 = vmatprep.subr.mxu0 0.0
    %3530 = vmatpush1.msra.mxu0 0.0
    %3531 = vmatprep.subr.mxu0 0.0
    %3532 = vmatpush1.msra.mxu0 0.0
    %3533 = vmatprep.subr.mxu0 0.0
    %3534 = vmatpush1.msra.mxu0 0.0
    %3535 = vmatprep.subr.mxu0 0.0
    %3536 = vmatpush1.msra.mxu0 0.0
    %3537 = vmatprep.subr.mxu0 0.0
    %3538 = vmatpush1.msra.mxu0 0.0
    %3539 = vmatprep.subr.mxu0 0.0
    %3540 = vmatpush1.msra.mxu0 0.0
    %3541 = vmatprep.subr.mxu0 0.0
    %3542 = vmatpush1.msra.mxu0 0.0
    %3543 = vmatprep.subr.mxu0 0.0
    %3544 = vmatpush1.msra.mxu0 0.0
    %3545 = vmatprep.subr.mxu0 0.0
    %3546 = vmatpush1.msra.mxu0 0.0
    %3547 = vmatprep.subr.mxu0 0.0
    %3548 = vmatpush1.msra.mxu0 0.0
    %3549 = vmatprep.subr.mxu0 0.0
    %3550 = vmatpush1.msra.mxu0 0.0
    %3551 = vmatprep.subr.mxu0 0.0
    %3552 = vmatpush1.msra.mxu0 0.0
    %3553 = vmatprep.subr.mxu0 0.0
    %3554 = vmatpush1.msra.mxu0 0.0
    %3555 = vmatprep.subr.mxu0 0.0
    %3556 = vmatpush1.msra.mxu0 0.0
    %3557 = vmatprep.subr.mxu0 0.0
    %3558 = vmatpush1.msra.mxu0 0.0
    %3559 = vmatprep.subr.mxu0 0.0
    %3560 = vmatpush1.msra.mxu0 0.0
    %3561 = vmatprep.subr.mxu0 0.0
    %3562 = vmatpush1.msra.mxu0 0.0
    %3563 = vmatprep.subr.mxu0 0.0
    %3564 = vmatpush1.msra.mxu0 0.0
    %3565 = vmatprep.subr.mxu0 0.0
    %3566 = vmatpush1.msra.mxu0 0.0
    %3567 = vmatprep.subr.mxu0 0.0
    %3568 = vmatpush1.msra.mxu0 0.0
    %3569 = vmatprep.mubr.f32.mxu0 0.0
    %3570 = vmatmul.mubr.f32.gmra.mrb[0].mxu0 %v3503
    %v3571 = vpop.f32.mrb[0].mxu0
    %v3572 = vadd.f32 0.0, %v3571
    %v3573 = vpop.f32.mrb[0].mxu0
    %3574 = vdwg.mxu0
    %3576 = vset.pattern.permute.xlu0 0
    %3577 = vperm.xlu0 %3576, %v3493
    %v3578 = vpop.permute.xlu0 %3577
    %v3579 = vlaneseq
    %v3580 = vshrl.u32 %v3579, 7
    %v3581 = vsub.s32 %v3426, %v3580
    %v3582 = vrot.slane %v3578, %v3581
    %v3583 = vsel %vm3502, %v3582, 0
    %3585 = vmatprep.subr.mxu0 0.0
    %3586 = vmatpush1.msra.mxu0 %v3226
    %3587 = vmatprep.subr.mxu0 0.0
    %3588 = vmatpush1.msra.mxu0 0.0
    %3589 = vmatprep.subr.mxu0 0.0
    %3590 = vmatpush1.msra.mxu0 0.0
    %3591 = vmatprep.subr.mxu0 0.0
    %3592 = vmatpush1.msra.mxu0 0.0
    %3593 = vmatprep.subr.mxu0 0.0
    %3594 = vmatpush1.msra.mxu0 0.0
    %3595 = vmatprep.subr.mxu0 0.0
    %3596 = vmatpush1.msra.mxu0 0.0
    %3597 = vmatprep.subr.mxu0 0.0
    %3598 = vmatpush1.msra.mxu0 0.0
    %3599 = vmatprep.subr.mxu0 0.0
    %3600 = vmatpush1.msra.mxu0 0.0
    %3601 = vmatprep.subr.mxu0 0.0
    %3602 = vmatpush1.msra.mxu0 0.0
    %3603 = vmatprep.subr.mxu0 0.0
    %3604 = vmatpush1.msra.mxu0 0.0
    %3605 = vmatprep.subr.mxu0 0.0
    %3606 = vmatpush1.msra.mxu0 0.0
    %3607 = vmatprep.subr.mxu0 0.0
    %3608 = vmatpush1.msra.mxu0 0.0
    %3609 = vmatprep.subr.mxu0 0.0
    %3610 = vmatpush1.msra.mxu0 0.0
    %3611 = vmatprep.subr.mxu0 0.0
    %3612 = vmatpush1.msra.mxu0 0.0
    %3613 = vmatprep.subr.mxu0 0.0
    %3614 = vmatpush1.msra.mxu0 0.0
    %3615 = vmatprep.subr.mxu0 0.0
    %3616 = vmatpush1.msra.mxu0 0.0
    %3617 = vmatprep.subr.mxu0 0.0
    %3618 = vmatpush1.msra.mxu0 0.0
    %3619 = vmatprep.subr.mxu0 0.0
    %3620 = vmatpush1.msra.mxu0 0.0
    %3621 = vmatprep.subr.mxu0 0.0
    %3622 = vmatpush1.msra.mxu0 0.0
    %3623 = vmatprep.subr.mxu0 0.0
    %3624 = vmatpush1.msra.mxu0 0.0
    %3625 = vmatprep.subr.mxu0 0.0
    %3626 = vmatpush1.msra.mxu0 0.0
    %3627 = vmatprep.subr.mxu0 0.0
    %3628 = vmatpush1.msra.mxu0 0.0
    %3629 = vmatprep.subr.mxu0 0.0
    %3630 = vmatpush1.msra.mxu0 0.0
    %3631 = vmatprep.subr.mxu0 0.0
    %3632 = vmatpush1.msra.mxu0 0.0
    %3633 = vmatprep.subr.mxu0 0.0
    %3634 = vmatpush1.msra.mxu0 0.0
    %3635 = vmatprep.subr.mxu0 0.0
    %3636 = vmatpush1.msra.mxu0 0.0
    %3637 = vmatprep.subr.mxu0 0.0
    %3638 = vmatpush1.msra.mxu0 0.0
    %3639 = vmatprep.subr.mxu0 0.0
    %3640 = vmatpush1.msra.mxu0 0.0
    %3641 = vmatprep.subr.mxu0 0.0
    %3642 = vmatpush1.msra.mxu0 0.0
    %3643 = vmatprep.subr.mxu0 0.0
    %3644 = vmatpush1.msra.mxu0 0.0
    %3645 = vmatprep.subr.mxu0 0.0
    %3646 = vmatpush1.msra.mxu0 0.0
    %3647 = vmatprep.subr.mxu0 0.0
    %3648 = vmatpush1.msra.mxu0 0.0
    %3649 = vmatprep.mubr.f32.mxu0 0.0
    %3650 = vmatmul.mubr.f32.gmra.mrb[0].mxu0 %v3583
    %v3651 = vpop.f32.mrb[0].mxu0
    %v3652 = vadd.f32 0.0, %v3651
    %v3653 = vpop.f32.mrb[0].mxu0
    %3654 = vdwg.mxu0
    %v3655 = vld [vmem:[#allocation7] sm:$0x3]
    %v3658 = vrot.slane %v3652, 7
    %v3659 = vsel %vm3435, %v3658, %v3572
    %v3662 = vlaneseq
    %v3663 = vshrl.u32 %v3662, 7
    %v3664 = vsub.s32 0, %v3663
    %v3665 = vrot.slane %v421, %v3664
    %v3666 = vlaneseq
    %v3667 = vshrl.u32 %v3666, 7
    %v3668 = vsub.s32 1, %v3667
    %v3669 = vrot.slane %v421, %v3668
    %v3670 = vlaneseq
    %v3671 = vshrl.u32 %v3670, 7
    %v3672 = vsub.s32 2, %v3671
    %v3673 = vrot.slane %v421, %v3672
    %3677 = vmatprep.subr.mxu0 %v278
    %3678 = vmatpush1.msra.mxu0 %v277
    %3679 = vmatprep.subr.mxu0 %v281
    %3680 = vmatpush1.msra.mxu0 %v280
    %3681 = vmatprep.subr.mxu0 %v284
    %3682 = vmatpush1.msra.mxu0 %v283
    %3683 = vmatprep.subr.mxu0 %v287
    %3684 = vmatpush1.msra.mxu0 %v286
    %3685 = vmatprep.subr.mxu0 %v290
    %3686 = vmatpush1.msra.mxu0 %v289
    %3687 = vmatprep.subr.mxu0 %v293
    %3688 = vmatpush1.msra.mxu0 %v292
    %3689 = vmatprep.subr.mxu0 %v296
    %3690 = vmatpush1.msra.mxu0 %v295
    %3691 = vmatprep.subr.mxu0 %v299
    %3692 = vmatpush1.msra.mxu0 %v298
    %3693 = vmatprep.subr.mxu0 %v302
    %3694 = vmatpush1.msra.mxu0 %v301
    %3695 = vmatprep.subr.mxu0 %v305
    %3696 = vmatpush1.msra.mxu0 %v304
    %3697 = vmatprep.subr.mxu0 %v308
    %3698 = vmatpush1.msra.mxu0 %v307
    %3699 = vmatprep.subr.mxu0 %v311
    %3700 = vmatpush1.msra.mxu0 %v310
    %3701 = vmatprep.subr.mxu0 %v314
    %3702 = vmatpush1.msra.mxu0 %v313
    %3703 = vmatprep.subr.mxu0 %v317
    %3704 = vmatpush1.msra.mxu0 %v316
    %3705 = vmatprep.subr.mxu0 %v320
    %3706 = vmatpush1.msra.mxu0 %v319
    %3707 = vmatprep.subr.mxu0 %v323
    %3708 = vmatpush1.msra.mxu0 %v322
    %3709 = vmatprep.subr.mxu0 %v326
    %3710 = vmatpush1.msra.mxu0 %v325
    %3711 = vmatprep.subr.mxu0 %v329
    %3712 = vmatpush1.msra.mxu0 %v328
    %3713 = vmatprep.subr.mxu0 %v332
    %3714 = vmatpush1.msra.mxu0 %v331
    %3715 = vmatprep.subr.mxu0 %v335
    %3716 = vmatpush1.msra.mxu0 %v334
    %3717 = vmatprep.subr.mxu0 %v338
    %3718 = vmatpush1.msra.mxu0 %v337
    %3719 = vmatprep.subr.mxu0 %v341
    %3720 = vmatpush1.msra.mxu0 %v340
    %3721 = vmatprep.subr.mxu0 %v344
    %3722 = vmatpush1.msra.mxu0 %v343
    %3723 = vmatprep.subr.mxu0 %v347
    %3724 = vmatpush1.msra.mxu0 %v346
    %3725 = vmatprep.subr.mxu0 %v350
    %3726 = vmatpush1.msra.mxu0 %v349
    %3727 = vmatprep.subr.mxu0 %v353
    %3728 = vmatpush1.msra.mxu0 %v352
    %3729 = vmatprep.subr.mxu0 %v356
    %3730 = vmatpush1.msra.mxu0 %v355
    %3731 = vmatprep.subr.mxu0 %v359
    %3732 = vmatpush1.msra.mxu0 %v358
    %3733 = vmatprep.subr.mxu0 %v362
    %3734 = vmatpush1.msra.mxu0 %v361
    %3735 = vmatprep.subr.mxu0 %v365
    %3736 = vmatpush1.msra.mxu0 %v364
    %3737 = vmatprep.subr.mxu0 %v368
    %3738 = vmatpush1.msra.mxu0 %v367
    %3739 = vmatprep.subr.mxu0 %v371
    %3740 = vmatpush1.msra.mxu0 %v370
    %3741 = vmatprep.mubr.f32.mxu0 %v3659
    %3742 = vmatmul.mubr.f32.gmra.mrb[0].mxu0 %v3655
    %v3743 = vpop.f32.mrb[0].mxu0
    %v3744 = vadd.f32 %v3665, %v3743
    %v3745 = vpop.f32.mrb[0].mxu0
    %v3746 = vadd.f32 %v3669, %v3745
    %3747 = vdwg.mxu0
    %3748 = vmatprep.subr.mxu0 0.0
    %3749 = vmatpush1.msra.mxu0 %v279
    %3750 = vmatprep.subr.mxu0 0.0
    %3751 = vmatpush1.msra.mxu0 %v282
    %3752 = vmatprep.subr.mxu0 0.0
    %3753 = vmatpush1.msra.mxu0 %v285
    %3754 = vmatprep.subr.mxu0 0.0
    %3755 = vmatpush1.msra.mxu0 %v288
    %3756 = vmatprep.subr.mxu0 0.0
    %3757 = vmatpush1.msra.mxu0 %v291
    %3758 = vmatprep.subr.mxu0 0.0
    %3759 = vmatpush1.msra.mxu0 %v294
    %3760 = vmatprep.subr.mxu0 0.0
    %3761 = vmatpush1.msra.mxu0 %v297
    %3762 = vmatprep.subr.mxu0 0.0
    %3763 = vmatpush1.msra.mxu0 %v300
    %3764 = vmatprep.subr.mxu0 0.0
    %3765 = vmatpush1.msra.mxu0 %v303
    %3766 = vmatprep.subr.mxu0 0.0
    %3767 = vmatpush1.msra.mxu0 %v306
    %3768 = vmatprep.subr.mxu0 0.0
    %3769 = vmatpush1.msra.mxu0 %v309
    %3770 = vmatprep.subr.mxu0 0.0
    %3771 = vmatpush1.msra.mxu0 %v312
    %3772 = vmatprep.subr.mxu0 0.0
    %3773 = vmatpush1.msra.mxu0 %v315
    %3774 = vmatprep.subr.mxu0 0.0
    %3775 = vmatpush1.msra.mxu0 %v318
    %3776 = vmatprep.subr.mxu0 0.0
    %3777 = vmatpush1.msra.mxu0 %v321
    %3778 = vmatprep.subr.mxu0 0.0
    %3779 = vmatpush1.msra.mxu0 %v324
    %3780 = vmatprep.subr.mxu0 0.0
    %3781 = vmatpush1.msra.mxu0 %v327
    %3782 = vmatprep.subr.mxu0 0.0
    %3783 = vmatpush1.msra.mxu0 %v330
    %3784 = vmatprep.subr.mxu0 0.0
    %3785 = vmatpush1.msra.mxu0 %v333
    %3786 = vmatprep.subr.mxu0 0.0
    %3787 = vmatpush1.msra.mxu0 %v336
    %3788 = vmatprep.subr.mxu0 0.0
    %3789 = vmatpush1.msra.mxu0 %v339
    %3790 = vmatprep.subr.mxu0 0.0
    %3791 = vmatpush1.msra.mxu0 %v342
    %3792 = vmatprep.subr.mxu0 0.0
    %3793 = vmatpush1.msra.mxu0 %v345
    %3794 = vmatprep.subr.mxu0 0.0
    %3795 = vmatpush1.msra.mxu0 %v348
    %3796 = vmatprep.subr.mxu0 0.0
    %3797 = vmatpush1.msra.mxu0 %v351
    %3798 = vmatprep.subr.mxu0 0.0
    %3799 = vmatpush1.msra.mxu0 %v354
    %3800 = vmatprep.subr.mxu0 0.0
    %3801 = vmatpush1.msra.mxu0 %v357
    %3802 = vmatprep.subr.mxu0 0.0
    %3803 = vmatpush1.msra.mxu0 %v360
    %3804 = vmatprep.subr.mxu0 0.0
    %3805 = vmatpush1.msra.mxu0 %v363
    %3806 = vmatprep.subr.mxu0 0.0
    %3807 = vmatpush1.msra.mxu0 %v366
    %3808 = vmatprep.subr.mxu0 0.0
    %3809 = vmatpush1.msra.mxu0 %v369
    %3810 = vmatprep.subr.mxu0 0.0
    %3811 = vmatpush1.msra.mxu0 %v372
    %3812 = vmatprep.mubr.f32.mxu0 %v3659
    %3813 = vmatmul.mubr.f32.gmra.mrb[0].mxu0 %v3655
    %v3814 = vpop.f32.mrb[0].mxu0
    %v3815 = vadd.f32 %v3673, %v3814
    %v3816 = vpop.f32.mrb[0].mxu0
    %3817 = vdwg.mxu0
    %v3819 = vlaneseq
    %v3820 = vshrl.u32 %v3819, 7
    %v3821 = vsub.s32 0, %v3820
    %v3822 = vrot.slane %v422, %v3821
    %v3823 = vlaneseq
    %v3824 = vshrl.u32 %v3823, 7
    %v3825 = vsub.s32 1, %v3824
    %v3826 = vrot.slane %v422, %v3825
    %v3827 = vlaneseq
    %v3828 = vshrl.u32 %v3827, 7
    %v3829 = vsub.s32 2, %v3828
    %v3830 = vrot.slane %v422, %v3829
    %3834 = vmatprep.subr.mxu0 %v374
    %3835 = vmatpush1.msra.mxu0 %v373
    %3836 = vmatprep.subr.mxu0 %v377
    %3837 = vmatpush1.msra.mxu0 %v376
    %3838 = vmatprep.subr.mxu0 %v380
    %3839 = vmatpush1.msra.mxu0 %v379
    %3840 = vmatprep.subr.mxu0 %v383
    %3841 = vmatpush1.msra.mxu0 %v382
    %3842 = vmatprep.subr.mxu0 %v386
    %3843 = vmatpush1.msra.mxu0 %v385
    %3844 = vmatprep.subr.mxu0 %v389
    %3845 = vmatpush1.msra.mxu0 %v388
    %3846 = vmatprep.subr.mxu0 %v392
    %3847 = vmatpush1.msra.mxu0 %v391
    %3848 = vmatprep.subr.mxu0 %v395
    %3849 = vmatpush1.msra.mxu0 %v394
    %3850 = vmatprep.subr.mxu0 %v398
    %3851 = vmatpush1.msra.mxu0 %v397
    %3852 = vmatprep.subr.mxu0 %v401
    %3853 = vmatpush1.msra.mxu0 %v400
    %3854 = vmatprep.subr.mxu0 %v404
    %3855 = vmatpush1.msra.mxu0 %v403
    %3856 = vmatprep.subr.mxu0 %v407
    %3857 = vmatpush1.msra.mxu0 %v406
    %3858 = vmatprep.subr.mxu0 %v410
    %3859 = vmatpush1.msra.mxu0 %v409
    %3860 = vmatprep.subr.mxu0 %v413
    %3861 = vmatpush1.msra.mxu0 %v412
    %3862 = vmatprep.subr.mxu0 %v416
    %3863 = vmatpush1.msra.mxu0 %v415
    %3864 = vmatprep.subr.mxu0 %v419
    %3865 = vmatpush1.msra.mxu0 %v418
    %3866 = vmatprep.subr.mxu0 0.0
    %3867 = vmatpush1.msra.mxu0 0.0
    %3868 = vmatprep.subr.mxu0 0.0
    %3869 = vmatpush1.msra.mxu0 0.0
    %3870 = vmatprep.subr.mxu0 0.0
    %3871 = vmatpush1.msra.mxu0 0.0
    %3872 = vmatprep.subr.mxu0 0.0
    %3873 = vmatpush1.msra.mxu0 0.0
    %3874 = vmatprep.subr.mxu0 0.0
    %3875 = vmatpush1.msra.mxu0 0.0
    %3876 = vmatprep.subr.mxu0 0.0
    %3877 = vmatpush1.msra.mxu0 0.0
    %3878 = vmatprep.subr.mxu0 0.0
    %3879 = vmatpush1.msra.mxu0 0.0
    %3880 = vmatprep.subr.mxu0 0.0
    %3881 = vmatpush1.msra.mxu0 0.0
    %3882 = vmatprep.subr.mxu0 0.0
    %3883 = vmatpush1.msra.mxu0 0.0
    %3884 = vmatprep.subr.mxu0 0.0
    %3885 = vmatpush1.msra.mxu0 0.0
    %3886 = vmatprep.subr.mxu0 0.0
    %3887 = vmatpush1.msra.mxu0 0.0
    %3888 = vmatprep.subr.mxu0 0.0
    %3889 = vmatpush1.msra.mxu0 0.0
    %3890 = vmatprep.subr.mxu0 0.0
    %3891 = vmatpush1.msra.mxu0 0.0
    %3892 = vmatprep.subr.mxu0 0.0
    %3893 = vmatpush1.msra.mxu0 0.0
    %3894 = vmatprep.subr.mxu0 0.0
    %3895 = vmatpush1.msra.mxu0 0.0
    %3896 = vmatprep.subr.mxu0 0.0
    %3897 = vmatpush1.msra.mxu0 0.0
    %3898 = vmatprep.mubr.f32.mxu0 0.0
    %3899 = vmatmul.mubr.f32.gmra.mrb[0].mxu0 %v3196
    %v3900 = vpop.f32.mrb[0].mxu0
    %v3901 = vadd.f32 %v3822, %v3900
    %v3902 = vpop.f32.mrb[0].mxu0
    %v3903 = vadd.f32 %v3826, %v3902
    %3904 = vdwg.mxu0
    %3905 = vmatprep.subr.mxu0 0.0
    %3906 = vmatpush1.msra.mxu0 %v375
    %3907 = vmatprep.subr.mxu0 0.0
    %3908 = vmatpush1.msra.mxu0 %v378
    %3909 = vmatprep.subr.mxu0 0.0
    %3910 = vmatpush1.msra.mxu0 %v381
    %3911 = vmatprep.subr.mxu0 0.0
    %3912 = vmatpush1.msra.mxu0 %v384
    %3913 = vmatprep.subr.mxu0 0.0
    %3914 = vmatpush1.msra.mxu0 %v387
    %3915 = vmatprep.subr.mxu0 0.0
    %3916 = vmatpush1.msra.mxu0 %v390
    %3917 = vmatprep.subr.mxu0 0.0
    %3918 = vmatpush1.msra.mxu0 %v393
    %3919 = vmatprep.subr.mxu0 0.0
    %3920 = vmatpush1.msra.mxu0 %v396
    %3921 = vmatprep.subr.mxu0 0.0
    %3922 = vmatpush1.msra.mxu0 %v399
    %3923 = vmatprep.subr.mxu0 0.0
    %3924 = vmatpush1.msra.mxu0 %v402
    %3925 = vmatprep.subr.mxu0 0.0
    %3926 = vmatpush1.msra.mxu0 %v405
    %3927 = vmatprep.subr.mxu0 0.0
    %3928 = vmatpush1.msra.mxu0 %v408
    %3929 = vmatprep.subr.mxu0 0.0
    %3930 = vmatpush1.msra.mxu0 %v411
    %3931 = vmatprep.subr.mxu0 0.0
    %3932 = vmatpush1.msra.mxu0 %v414
    %3933 = vmatprep.subr.mxu0 0.0
    %3934 = vmatpush1.msra.mxu0 %v417
    %3935 = vmatprep.subr.mxu0 0.0
    %3936 = vmatpush1.msra.mxu0 %v420
    %3937 = vmatprep.subr.mxu0 0.0
    %3938 = vmatpush1.msra.mxu0 0.0
    %3939 = vmatprep.subr.mxu0 0.0
    %3940 = vmatpush1.msra.mxu0 0.0
    %3941 = vmatprep.subr.mxu0 0.0
    %3942 = vmatpush1.msra.mxu0 0.0
    %3943 = vmatprep.subr.mxu0 0.0
    %3944 = vmatpush1.msra.mxu0 0.0
    %3945 = vmatprep.subr.mxu0 0.0
    %3946 = vmatpush1.msra.mxu0 0.0
    %3947 = vmatprep.subr.mxu0 0.0
    %3948 = vmatpush1.msra.mxu0 0.0
    %3949 = vmatprep.subr.mxu0 0.0
    %3950 = vmatpush1.msra.mxu0 0.0
    %3951 = vmatprep.subr.mxu0 0.0
    %3952 = vmatpush1.msra.mxu0 0.0
    %3953 = vmatprep.subr.mxu0 0.0
    %3954 = vmatpush1.msra.mxu0 0.0
    %3955 = vmatprep.subr.mxu0 0.0
    %3956 = vmatpush1.msra.mxu0 0.0
    %3957 = vmatprep.subr.mxu0 0.0
    %3958 = vmatpush1.msra.mxu0 0.0
    %3959 = vmatprep.subr.mxu0 0.0
    %3960 = vmatpush1.msra.mxu0 0.0
    %3961 = vmatprep.subr.mxu0 0.0
    %3962 = vmatpush1.msra.mxu0 0.0
    %3963 = vmatprep.subr.mxu0 0.0
    %3964 = vmatpush1.msra.mxu0 0.0
    %3965 = vmatprep.subr.mxu0 0.0
    %3966 = vmatpush1.msra.mxu0 0.0
    %3967 = vmatprep.subr.mxu0 0.0
    %3968 = vmatpush1.msra.mxu0 0.0
    %3969 = vmatprep.mubr.f32.mxu0 0.0
    %3970 = vmatmul.mubr.f32.gmra.mrb[0].mxu0 %v3196
    %v3971 = vpop.f32.mrb[0].mxu0
    %v3972 = vadd.f32 %v3830, %v3971
    %v3973 = vpop.f32.mrb[0].mxu0
    %3974 = vdwg.mxu0
    %v3975 = vadd.f32 %v3744, %v3901
    %v3976 = vxor.u32 %v3975, 2147483648
    %v3977 = vmul.f32 %v3976, 1.442695
    %v3978 = vpow.pop %v3977
    %v3979 = vadd.f32 %v3978, 1.0
    %v3980 = vrcp.pop %v3979
    %v3981 = vmul.f32 1.0, %v3980
    %v3982 = vadd.f32 %v3746, %v3903
    %v3983 = vxor.u32 %v3982, 2147483648
    %v3984 = vmul.f32 %v3983, 1.442695
    %v3985 = vpow.pop %v3984
    %v3986 = vadd.f32 %v3985, 1.0
    %v3987 = vrcp.pop %v3986
    %v3988 = vmul.f32 1.0, %v3987
    %v3989 = vmul.f32 %v3981, %v3972
    %v3990 = vadd.f32 %v3815, %v3989
    %v3991 = vtanh.pop %v3990
    %v3992 = vsub.f32 1.0, %v3988
    %v3993 = vmul.f32 %v3992, %v3991
    %v3994 = vmul.f32 %v3988, %v3196
    %v3995 = vadd.f32 %v3993, %v3994
    %3996 = vst [vmem:[#allocation3] sm:$0x3] %v3995
    %3997 = vmatprep.subr.mxu0 0.0
    %3998 = vmatpush1.msra.mxu0 %v440
    %3999 = vmatprep.subr.mxu0 0.0
    %4000 = vmatpush1.msra.mxu0 %v441
    %4001 = vmatprep.subr.mxu0 0.0
    %4002 = vmatpush1.msra.mxu0 %v442
    %4003 = vmatprep.subr.mxu0 0.0
    %4004 = vmatpush1.msra.mxu0 %v443
    %4005 = vmatprep.subr.mxu0 0.0
    %4006 = vmatpush1.msra.mxu0 %v444
    %4007 = vmatprep.subr.mxu0 0.0
    %4008 = vmatpush1.msra.mxu0 %v445
    %4009 = vmatprep.subr.mxu0 0.0
    %4010 = vmatpush1.msra.mxu0 %v446
    %4011 = vmatprep.subr.mxu0 0.0
    %4012 = vmatpush1.msra.mxu0 %v447
    %4013 = vmatprep.subr.mxu0 0.0
    %4014 = vmatpush1.msra.mxu0 %v448
    %4015 = vmatprep.subr.mxu0 0.0
    %4016 = vmatpush1.msra.mxu0 %v449
    %4017 = vmatprep.subr.mxu0 0.0
    %4018 = vmatpush1.msra.mxu0 %v450
    %4019 = vmatprep.subr.mxu0 0.0
    %4020 = vmatpush1.msra.mxu0 %v451
    %4021 = vmatprep.subr.mxu0 0.0
    %4022 = vmatpush1.msra.mxu0 %v452
    %4023 = vmatprep.subr.mxu0 0.0
    %4024 = vmatpush1.msra.mxu0 %v453
    %4025 = vmatprep.subr.mxu0 0.0
    %4026 = vmatpush1.msra.mxu0 %v454
    %4027 = vmatprep.subr.mxu0 0.0
    %4028 = vmatpush1.msra.mxu0 %v455
    %4029 = vmatprep.subr.mxu0 0.0
    %4030 = vmatpush1.msra.mxu0 0.0
    %4031 = vmatprep.subr.mxu0 0.0
    %4032 = vmatpush1.msra.mxu0 0.0
    %4033 = vmatprep.subr.mxu0 0.0
    %4034 = vmatpush1.msra.mxu0 0.0
    %4035 = vmatprep.subr.mxu0 0.0
    %4036 = vmatpush1.msra.mxu0 0.0
    %4037 = vmatprep.subr.mxu0 0.0
    %4038 = vmatpush1.msra.mxu0 0.0
    %4039 = vmatprep.subr.mxu0 0.0
    %4040 = vmatpush1.msra.mxu0 0.0
    %4041 = vmatprep.subr.mxu0 0.0
    %4042 = vmatpush1.msra.mxu0 0.0
    %4043 = vmatprep.subr.mxu0 0.0
    %4044 = vmatpush1.msra.mxu0 0.0
    %4045 = vmatprep.subr.mxu0 0.0
    %4046 = vmatpush1.msra.mxu0 0.0
    %4047 = vmatprep.subr.mxu0 0.0
    %4048 = vmatpush1.msra.mxu0 0.0
    %4049 = vmatprep.subr.mxu0 0.0
    %4050 = vmatpush1.msra.mxu0 0.0
    %4051 = vmatprep.subr.mxu0 0.0
    %4052 = vmatpush1.msra.mxu0 0.0
    %4053 = vmatprep.subr.mxu0 0.0
    %4054 = vmatpush1.msra.mxu0 0.0
    %4055 = vmatprep.subr.mxu0 0.0
    %4056 = vmatpush1.msra.mxu0 0.0
    %4057 = vmatprep.subr.mxu0 0.0
    %4058 = vmatpush1.msra.mxu0 0.0
    %4059 = vmatprep.subr.mxu0 0.0
    %4060 = vmatpush1.msra.mxu0 0.0
    %4061 = vmatprep.mubr.f32.mxu0 0.0
    %4062 = vmatmul.mubr.f32.gmra.mrb[0].mxu0 %v3995
    %v4063 = vpop.f32.mrb[0].mxu0
    %v4064 = vadd.f32 %v3312, %v4063
    %v4065 = vpop.f32.mrb[0].mxu0
    %4066 = vdwg.mxu0
    %v4069 = vunpack.c.l.s4 1966171168
    %v4070 = vunpack.c.0.s8 %v4069
    %v4071 = vlaneseq
    %v4072 = vshrl.u32 %v4071, 7
    %v4073 = vsub.s32 %v4070, %v4072
    %v4074 = vrot.slane %v4064, %v4073
    %v4075 = vcombine.high %v4074, %v4074
    %v4077 = vunpack.c.l.s4 1966171168
    %v4078 = vunpack.c.0.s8 %v4077
    %v4079 = vlaneseq
    %v4080 = vshrl.u32 %v4079, 7
    %v4081 = vsub.s32 %v4078, %v4080
    %v4082 = vrot.slane %v4074, %v4081
    %v4084 = vunpack.c.l.s4 1966171168
    %v4085 = vunpack.c.0.s8 %v4084
    %v4086 = vlaneseq
    %v4087 = vshrl.u32 %v4086, 7
    %v4088 = vsub.s32 %v4085, %v4087
    %v4089 = vrot.slane %v4075, %v4088
    %v4090 = vlaneseq
    %v4091 = vshrl.u32 %v4090, 7
    %v4092 = vsub.s32 0, %v4091
    %v4093 = vrot.slane %v4082, %v4092
    %v4094 = vlaneseq
    %v4095 = vshrl.u32 %v4094, 7
    %v4096 = vsub.s32 0, %v4095
    %v4097 = vrot.slane %v4089, %v4096
    %v4100 = vmul.f32 %v3300, %v4093
    %v4101 = vmul.f32 %v3305, %v4097
    %4102 = vadd.xlane.f32.xlu0 %v4100
    %v4103 = vpop.xlane.xlu0 %4102
    %4104 = vadd.xlane.f32.xlu0 %v4101
    %v4105 = vpop.xlane.xlu0 %4104
    %v4108 = vlaneseq
    %v4109 = vshrl.u32 %v4108, 7
    %v4110 = vsub.s32 %v3426, %v4109
    %v4111 = vrot.slane %v4103, %v4110
    %v4112 = vlaneseq
    %v4113 = vshrl.u32 %v4112, 7
    %v4114 = vsub.s32 %v3426, %v4113
    %v4115 = vrot.slane %v4105, %v4114
    %v4116 = vsel %vm3435, %v4115, %v4111
    %v4118 = vsel %vm3438, %v4116, -inf
    %4119 = vmax.xlane.f32.xlu0 %v4118
    %v4120 = vpop.xlane.xlu0 %4119
    %v4122 = vlaneseq
    %v4123 = vshrl.u32 %v4122, 7
    %v4124 = vsub.s32 0, %v4123
    %v4125 = vrot.slane %v4120, %v4124
    %v4126 = vlaneseq
    %v4127 = vshrl.u32 %v4126, 7
    %v4128 = vsub.s32 1, %v4127
    %v4129 = vrot.slane %v4120, %v4128
    %v4132 = vsub.f32 %v4103, %v4125
    %v4133 = vsub.f32 %v4105, %v4129
    %v4134 = vmul.f32 %v4132, 1.442695
    %v4135 = vpow.pop %v4134
    %v4136 = vmul.f32 %v4133, 1.442695
    %v4137 = vpow.pop %v4136
    %4140 = vset.pattern.permute.xlu0 0
    %4141 = vperm.xlu0 %4140, %v4135
    %v4142 = vpop.permute.xlu0 %4141
    %4143 = vset.pattern.permute.xlu0 0
    %4144 = vperm.xlu0 %4143, %v4137
    %v4145 = vpop.permute.xlu0 %4144
    %v4146 = vlaneseq
    %v4147 = vshrl.u32 %v4146, 7
    %v4148 = vsub.s32 %v3426, %v4147
    %v4149 = vrot.slane %v4142, %v4148
    %v4150 = vlaneseq
    %v4151 = vshrl.u32 %v4150, 7
    %v4152 = vsub.s32 %v3426, %v4151
    %v4153 = vrot.slane %v4145, %v4152
    %v4154 = vsel %vm3435, %v4153, %v4149
    %v4156 = vsel %vm3438, %v4154, 0.0
    %4157 = vadd.xlane.f32.xlu0 %v4156
    %v4158 = vpop.xlane.xlu0 %4157
    %v4159 = vrcp.pop %v4158
    %v4161 = vlaneseq
    %v4162 = vshrl.u32 %v4161, 7
    %v4163 = vsub.s32 0, %v4162
    %v4164 = vrot.slane %v4159, %v4163
    %v4165 = vlaneseq
    %v4166 = vshrl.u32 %v4165, 7
    %v4167 = vsub.s32 1, %v4166
    %v4168 = vrot.slane %v4159, %v4167
    %v4171 = vmul.f32 %v4135, %v4164
    %v4172 = vmul.f32 %v4137, %v4168
    %4174 = vset.pattern.permute.xlu0 0
    %4175 = vperm.xlu0 %4174, %v4171
    %v4176 = vpop.permute.xlu0 %4175
    %v4177 = vlaneseq
    %v4178 = vshrl.u32 %v4177, 7
    %v4179 = vsub.s32 %v3426, %v4178
    %v4180 = vrot.slane %v4176, %v4179
    %v4181 = vsel %vm3502, %v4180, 0
    %4183 = vmatprep.subr.mxu0 0.0
    %4184 = vmatpush1.msra.mxu0 %v3225
    %4185 = vmatprep.subr.mxu0 0.0
    %4186 = vmatpush1.msra.mxu0 0.0
    %4187 = vmatprep.subr.mxu0 0.0
    %4188 = vmatpush1.msra.mxu0 0.0
    %4189 = vmatprep.subr.mxu0 0.0
    %4190 = vmatpush1.msra.mxu0 0.0
    %4191 = vmatprep.subr.mxu0 0.0
    %4192 = vmatpush1.msra.mxu0 0.0
    %4193 = vmatprep.subr.mxu0 0.0
    %4194 = vmatpush1.msra.mxu0 0.0
    %4195 = vmatprep.subr.mxu0 0.0
    %4196 = vmatpush1.msra.mxu0 0.0
    %4197 = vmatprep.subr.mxu0 0.0
    %4198 = vmatpush1.msra.mxu0 0.0
    %4199 = vmatprep.subr.mxu0 0.0
    %4200 = vmatpush1.msra.mxu0 0.0
    %4201 = vmatprep.subr.mxu0 0.0
    %4202 = vmatpush1.msra.mxu0 0.0
    %4203 = vmatprep.subr.mxu0 0.0
    %4204 = vmatpush1.msra.mxu0 0.0
    %4205 = vmatprep.subr.mxu0 0.0
    %4206 = vmatpush1.msra.mxu0 0.0
    %4207 = vmatprep.subr.mxu0 0.0
    %4208 = vmatpush1.msra.mxu0 0.0
    %4209 = vmatprep.subr.mxu0 0.0
    %4210 = vmatpush1.msra.mxu0 0.0
    %4211 = vmatprep.subr.mxu0 0.0
    %4212 = vmatpush1.msra.mxu0 0.0
    %4213 = vmatprep.subr.mxu0 0.0
    %4214 = vmatpush1.msra.mxu0 0.0
    %4215 = vmatprep.subr.mxu0 0.0
    %4216 = vmatpush1.msra.mxu0 0.0
    %4217 = vmatprep.subr.mxu0 0.0
    %4218 = vmatpush1.msra.mxu0 0.0
    %4219 = vmatprep.subr.mxu0 0.0
    %4220 = vmatpush1.msra.mxu0 0.0
    %4221 = vmatprep.subr.mxu0 0.0
    %4222 = vmatpush1.msra.mxu0 0.0
    %4223 = vmatprep.subr.mxu0 0.0
    %4224 = vmatpush1.msra.mxu0 0.0
    %4225 = vmatprep.subr.mxu0 0.0
    %4226 = vmatpush1.msra.mxu0 0.0
    %4227 = vmatprep.subr.mxu0 0.0
    %4228 = vmatpush1.msra.mxu0 0.0
    %4229 = vmatprep.subr.mxu0 0.0
    %4230 = vmatpush1.msra.mxu0 0.0
    %4231 = vmatprep.subr.mxu0 0.0
    %4232 = vmatpush1.msra.mxu0 0.0
    %4233 = vmatprep.subr.mxu0 0.0
    %4234 = vmatpush1.msra.mxu0 0.0
    %4235 = vmatprep.subr.mxu0 0.0
    %4236 = vmatpush1.msra.mxu0 0.0
    %4237 = vmatprep.subr.mxu0 0.0
    %4238 = vmatpush1.msra.mxu0 0.0
    %4239 = vmatprep.subr.mxu0 0.0
    %4240 = vmatpush1.msra.mxu0 0.0
    %4241 = vmatprep.subr.mxu0 0.0
    %4242 = vmatpush1.msra.mxu0 0.0
    %4243 = vmatprep.subr.mxu0 0.0
    %4244 = vmatpush1.msra.mxu0 0.0
    %4245 = vmatprep.subr.mxu0 0.0
    %4246 = vmatpush1.msra.mxu0 0.0
    %4247 = vmatprep.mubr.f32.mxu0 0.0
    %4248 = vmatmul.mubr.f32.gmra.mrb[0].mxu0 %v4181
    %v4249 = vpop.f32.mrb[0].mxu0
    %v4250 = vadd.f32 0.0, %v4249
    %v4251 = vpop.f32.mrb[0].mxu0
    %4252 = vdwg.mxu0
    %4254 = vset.pattern.permute.xlu0 0
    %4255 = vperm.xlu0 %4254, %v4172
    %v4256 = vpop.permute.xlu0 %4255
    %v4257 = vlaneseq
    %v4258 = vshrl.u32 %v4257, 7
    %v4259 = vsub.s32 %v3426, %v4258
    %v4260 = vrot.slane %v4256, %v4259
    %v4261 = vsel %vm3502, %v4260, 0
    %4263 = vmatprep.subr.mxu0 0.0
    %4264 = vmatpush1.msra.mxu0 %v3226
    %4265 = vmatprep.subr.mxu0 0.0
    %4266 = vmatpush1.msra.mxu0 0.0
    %4267 = vmatprep.subr.mxu0 0.0
    %4268 = vmatpush1.msra.mxu0 0.0
    %4269 = vmatprep.subr.mxu0 0.0
    %4270 = vmatpush1.msra.mxu0 0.0
    %4271 = vmatprep.subr.mxu0 0.0
    %4272 = vmatpush1.msra.mxu0 0.0
    %4273 = vmatprep.subr.mxu0 0.0
    %4274 = vmatpush1.msra.mxu0 0.0
    %4275 = vmatprep.subr.mxu0 0.0
    %4276 = vmatpush1.msra.mxu0 0.0
    %4277 = vmatprep.subr.mxu0 0.0
    %4278 = vmatpush1.msra.mxu0 0.0
    %4279 = vmatprep.subr.mxu0 0.0
    %4280 = vmatpush1.msra.mxu0 0.0
    %4281 = vmatprep.subr.mxu0 0.0
    %4282 = vmatpush1.msra.mxu0 0.0
    %4283 = vmatprep.subr.mxu0 0.0
    %4284 = vmatpush1.msra.mxu0 0.0
    %4285 = vmatprep.subr.mxu0 0.0
    %4286 = vmatpush1.msra.mxu0 0.0
    %4287 = vmatprep.subr.mxu0 0.0
    %4288 = vmatpush1.msra.mxu0 0.0
    %4289 = vmatprep.subr.mxu0 0.0
    %4290 = vmatpush1.msra.mxu0 0.0
    %4291 = vmatprep.subr.mxu0 0.0
    %4292 = vmatpush1.msra.mxu0 0.0
    %4293 = vmatprep.subr.mxu0 0.0
    %4294 = vmatpush1.msra.mxu0 0.0
    %4295 = vmatprep.subr.mxu0 0.0
    %4296 = vmatpush1.msra.mxu0 0.0
    %4297 = vmatprep.subr.mxu0 0.0
    %4298 = vmatpush1.msra.mxu0 0.0
    %4299 = vmatprep.subr.mxu0 0.0
    %4300 = vmatpush1.msra.mxu0 0.0
    %4301 = vmatprep.subr.mxu0 0.0
    %4302 = vmatpush1.msra.mxu0 0.0
    %4303 = vmatprep.subr.mxu0 0.0
    %4304 = vmatpush1.msra.mxu0 0.0
    %4305 = vmatprep.subr.mxu0 0.0
    %4306 = vmatpush1.msra.mxu0 0.0
    %4307 = vmatprep.subr.mxu0 0.0
    %4308 = vmatpush1.msra.mxu0 0.0
    %4309 = vmatprep.subr.mxu0 0.0
    %4310 = vmatpush1.msra.mxu0 0.0
    %4311 = vmatprep.subr.mxu0 0.0
    %4312 = vmatpush1.msra.mxu0 0.0
    %4313 = vmatprep.subr.mxu0 0.0
    %4314 = vmatpush1.msra.mxu0 0.0
    %4315 = vmatprep.subr.mxu0 0.0
    %4316 = vmatpush1.msra.mxu0 0.0
    %4317 = vmatprep.subr.mxu0 0.0
    %4318 = vmatpush1.msra.mxu0 0.0
    %4319 = vmatprep.subr.mxu0 0.0
    %4320 = vmatpush1.msra.mxu0 0.0
    %4321 = vmatprep.subr.mxu0 0.0
    %4322 = vmatpush1.msra.mxu0 0.0
    %4323 = vmatprep.subr.mxu0 0.0
    %4324 = vmatpush1.msra.mxu0 0.0
    %4325 = vmatprep.subr.mxu0 0.0
    %4326 = vmatpush1.msra.mxu0 0.0
    %4327 = vmatprep.mubr.f32.mxu0 0.0
    %4328 = vmatmul.mubr.f32.gmra.mrb[0].mxu0 %v4261
    %v4329 = vpop.f32.mrb[0].mxu0
    %v4330 = vadd.f32 0.0, %v4329
    %v4331 = vpop.f32.mrb[0].mxu0
    %4332 = vdwg.mxu0
    %s4333 = scalar_lea.vmem [#allocation7], 2
    %v4334 = vld [vmem:[%s4333] sm:$0x3]
    %v4337 = vrot.slane %v4330, 7
    %v4338 = vsel %vm3435, %v4337, %v4250
    %4340 = vmatprep.subr.mxu0 %v278
    %4341 = vmatpush1.msra.mxu0 %v277
    %4342 = vmatprep.subr.mxu0 %v281
    %4343 = vmatpush1.msra.mxu0 %v280
    %4344 = vmatprep.subr.mxu0 %v284
    %4345 = vmatpush1.msra.mxu0 %v283
    %4346 = vmatprep.subr.mxu0 %v287
    %4347 = vmatpush1.msra.mxu0 %v286
    %4348 = vmatprep.subr.mxu0 %v290
    %4349 = vmatpush1.msra.mxu0 %v289
    %4350 = vmatprep.subr.mxu0 %v293
    %4351 = vmatpush1.msra.mxu0 %v292
    %4352 = vmatprep.subr.mxu0 %v296
    %4353 = vmatpush1.msra.mxu0 %v295
    %4354 = vmatprep.subr.mxu0 %v299
    %4355 = vmatpush1.msra.mxu0 %v298
    %4356 = vmatprep.subr.mxu0 %v302
    %4357 = vmatpush1.msra.mxu0 %v301
    %4358 = vmatprep.subr.mxu0 %v305
    %4359 = vmatpush1.msra.mxu0 %v304
    %4360 = vmatprep.subr.mxu0 %v308
    %4361 = vmatpush1.msra.mxu0 %v307
    %4362 = vmatprep.subr.mxu0 %v311
    %4363 = vmatpush1.msra.mxu0 %v310
    %4364 = vmatprep.subr.mxu0 %v314
    %4365 = vmatpush1.msra.mxu0 %v313
    %4366 = vmatprep.subr.mxu0 %v317
    %4367 = vmatpush1.msra.mxu0 %v316
    %4368 = vmatprep.subr.mxu0 %v320
    %4369 = vmatpush1.msra.mxu0 %v319
    %4370 = vmatprep.subr.mxu0 %v323
    %4371 = vmatpush1.msra.mxu0 %v322
    %4372 = vmatprep.subr.mxu0 %v326
    %4373 = vmatpush1.msra.mxu0 %v325
    %4374 = vmatprep.subr.mxu0 %v329
    %4375 = vmatpush1.msra.mxu0 %v328
    %4376 = vmatprep.subr.mxu0 %v332
    %4377 = vmatpush1.msra.mxu0 %v331
    %4378 = vmatprep.subr.mxu0 %v335
    %4379 = vmatpush1.msra.mxu0 %v334
    %4380 = vmatprep.subr.mxu0 %v338
    %4381 = vmatpush1.msra.mxu0 %v337
    %4382 = vmatprep.subr.mxu0 %v341
    %4383 = vmatpush1.msra.mxu0 %v340
    %4384 = vmatprep.subr.mxu0 %v344
    %4385 = vmatpush1.msra.mxu0 %v343
    %4386 = vmatprep.subr.mxu0 %v347
    %4387 = vmatpush1.msra.mxu0 %v346
    %4388 = vmatprep.subr.mxu0 %v350
    %4389 = vmatpush1.msra.mxu0 %v349
    %4390 = vmatprep.subr.mxu0 %v353
    %4391 = vmatpush1.msra.mxu0 %v352
    %4392 = vmatprep.subr.mxu0 %v356
    %4393 = vmatpush1.msra.mxu0 %v355
    %4394 = vmatprep.subr.mxu0 %v359
    %4395 = vmatpush1.msra.mxu0 %v358
    %4396 = vmatprep.subr.mxu0 %v362
    %4397 = vmatpush1.msra.mxu0 %v361
    %4398 = vmatprep.subr.mxu0 %v365
    %4399 = vmatpush1.msra.mxu0 %v364
    %4400 = vmatprep.subr.mxu0 %v368
    %4401 = vmatpush1.msra.mxu0 %v367
    %4402 = vmatprep.subr.mxu0 %v371
    %4403 = vmatpush1.msra.mxu0 %v370
    %4404 = vmatprep.mubr.f32.mxu0 %v4338
    %4405 = vmatmul.mubr.f32.gmra.mrb[0].mxu0 %v4334
    %v4406 = vpop.f32.mrb[0].mxu0
    %v4407 = vadd.f32 %v3665, %v4406
    %v4408 = vpop.f32.mrb[0].mxu0
    %v4409 = vadd.f32 %v3669, %v4408
    %4410 = vdwg.mxu0
    %4411 = vmatprep.subr.mxu0 0.0
    %4412 = vmatpush1.msra.mxu0 %v279
    %4413 = vmatprep.subr.mxu0 0.0
    %4414 = vmatpush1.msra.mxu0 %v282
    %4415 = vmatprep.subr.mxu0 0.0
    %4416 = vmatpush1.msra.mxu0 %v285
    %4417 = vmatprep.subr.mxu0 0.0
    %4418 = vmatpush1.msra.mxu0 %v288
    %4419 = vmatprep.subr.mxu0 0.0
    %4420 = vmatpush1.msra.mxu0 %v291
    %4421 = vmatprep.subr.mxu0 0.0
    %4422 = vmatpush1.msra.mxu0 %v294
    %4423 = vmatprep.subr.mxu0 0.0
    %4424 = vmatpush1.msra.mxu0 %v297
    %4425 = vmatprep.subr.mxu0 0.0
    %4426 = vmatpush1.msra.mxu0 %v300
    %4427 = vmatprep.subr.mxu0 0.0
    %4428 = vmatpush1.msra.mxu0 %v303
    %4429 = vmatprep.subr.mxu0 0.0
    %4430 = vmatpush1.msra.mxu0 %v306
    %4431 = vmatprep.subr.mxu0 0.0
    %4432 = vmatpush1.msra.mxu0 %v309
    %4433 = vmatprep.subr.mxu0 0.0
    %4434 = vmatpush1.msra.mxu0 %v312
    %4435 = vmatprep.subr.mxu0 0.0
    %4436 = vmatpush1.msra.mxu0 %v315
    %4437 = vmatprep.subr.mxu0 0.0
    %4438 = vmatpush1.msra.mxu0 %v318
    %4439 = vmatprep.subr.mxu0 0.0
    %4440 = vmatpush1.msra.mxu0 %v321
    %4441 = vmatprep.subr.mxu0 0.0
    %4442 = vmatpush1.msra.mxu0 %v324
    %4443 = vmatprep.subr.mxu0 0.0
    %4444 = vmatpush1.msra.mxu0 %v327
    %4445 = vmatprep.subr.mxu0 0.0
    %4446 = vmatpush1.msra.mxu0 %v330
    %4447 = vmatprep.subr.mxu0 0.0
    %4448 = vmatpush1.msra.mxu0 %v333
    %4449 = vmatprep.subr.mxu0 0.0
    %4450 = vmatpush1.msra.mxu0 %v336
    %4451 = vmatprep.subr.mxu0 0.0
    %4452 = vmatpush1.msra.mxu0 %v339
    %4453 = vmatprep.subr.mxu0 0.0
    %4454 = vmatpush1.msra.mxu0 %v342
    %4455 = vmatprep.subr.mxu0 0.0
    %4456 = vmatpush1.msra.mxu0 %v345
    %4457 = vmatprep.subr.mxu0 0.0
    %4458 = vmatpush1.msra.mxu0 %v348
    %4459 = vmatprep.subr.mxu0 0.0
    %4460 = vmatpush1.msra.mxu0 %v351
    %4461 = vmatprep.subr.mxu0 0.0
    %4462 = vmatpush1.msra.mxu0 %v354
    %4463 = vmatprep.subr.mxu0 0.0
    %4464 = vmatpush1.msra.mxu0 %v357
    %4465 = vmatprep.subr.mxu0 0.0
    %4466 = vmatpush1.msra.mxu0 %v360
    %4467 = vmatprep.subr.mxu0 0.0
    %4468 = vmatpush1.msra.mxu0 %v363
    %4469 = vmatprep.subr.mxu0 0.0
    %4470 = vmatpush1.msra.mxu0 %v366
    %4471 = vmatprep.subr.mxu0 0.0
    %4472 = vmatpush1.msra.mxu0 %v369
    %4473 = vmatprep.subr.mxu0 0.0
    %4474 = vmatpush1.msra.mxu0 %v372
    %4475 = vmatprep.mubr.f32.mxu0 %v4338
    %4476 = vmatmul.mubr.f32.gmra.mrb[0].mxu0 %v4334
    %v4477 = vpop.f32.mrb[0].mxu0
    %v4478 = vadd.f32 %v3673, %v4477
    %v4479 = vpop.f32.mrb[0].mxu0
    %4480 = vdwg.mxu0
    %4481 = vmatprep.subr.mxu0 %v374
    %4482 = vmatpush1.msra.mxu0 %v373
    %4483 = vmatprep.subr.mxu0 %v377
    %4484 = vmatpush1.msra.mxu0 %v376
    %4485 = vmatprep.subr.mxu0 %v380
    %4486 = vmatpush1.msra.mxu0 %v379
    %4487 = vmatprep.subr.mxu0 %v383
    %4488 = vmatpush1.msra.mxu0 %v382
    %4489 = vmatprep.subr.mxu0 %v386
    %4490 = vmatpush1.msra.mxu0 %v385
    %4491 = vmatprep.subr.mxu0 %v389
    %4492 = vmatpush1.msra.mxu0 %v388
    %4493 = vmatprep.subr.mxu0 %v392
    %4494 = vmatpush1.msra.mxu0 %v391
    %4495 = vmatprep.subr.mxu0 %v395
    %4496 = vmatpush1.msra.mxu0 %v394
    %4497 = vmatprep.subr.mxu0 %v398
    %4498 = vmatpush1.msra.mxu0 %v397
    %4499 = vmatprep.subr.mxu0 %v401
    %4500 = vmatpush1.msra.mxu0 %v400
    %4501 = vmatprep.subr.mxu0 %v404
    %4502 = vmatpush1.msra.mxu0 %v403
    %4503 = vmatprep.subr.mxu0 %v407
    %4504 = vmatpush1.msra.mxu0 %v406
    %4505 = vmatprep.subr.mxu0 %v410
    %4506 = vmatpush1.msra.mxu0 %v409
    %4507 = vmatprep.subr.mxu0 %v413
    %4508 = vmatpush1.msra.mxu0 %v412
    %4509 = vmatprep.subr.mxu0 %v416
    %4510 = vmatpush1.msra.mxu0 %v415
    %4511 = vmatprep.subr.mxu0 %v419
    %4512 = vmatpush1.msra.mxu0 %v418
    %4513 = vmatprep.subr.mxu0 0.0
    %4514 = vmatpush1.msra.mxu0 0.0
    %4515 = vmatprep.subr.mxu0 0.0
    %4516 = vmatpush1.msra.mxu0 0.0
    %4517 = vmatprep.subr.mxu0 0.0
    %4518 = vmatpush1.msra.mxu0 0.0
    %4519 = vmatprep.subr.mxu0 0.0
    %4520 = vmatpush1.msra.mxu0 0.0
    %4521 = vmatprep.subr.mxu0 0.0
    %4522 = vmatpush1.msra.mxu0 0.0
    %4523 = vmatprep.subr.mxu0 0.0
    %4524 = vmatpush1.msra.mxu0 0.0
    %4525 = vmatprep.subr.mxu0 0.0
    %4526 = vmatpush1.msra.mxu0 0.0
    %4527 = vmatprep.subr.mxu0 0.0
    %4528 = vmatpush1.msra.mxu0 0.0
    %4529 = vmatprep.subr.mxu0 0.0
    %4530 = vmatpush1.msra.mxu0 0.0
    %4531 = vmatprep.subr.mxu0 0.0
    %4532 = vmatpush1.msra.mxu0 0.0
    %4533 = vmatprep.subr.mxu0 0.0
    %4534 = vmatpush1.msra.mxu0 0.0
    %4535 = vmatprep.subr.mxu0 0.0
    %4536 = vmatpush1.msra.mxu0 0.0
    %4537 = vmatprep.subr.mxu0 0.0
    %4538 = vmatpush1.msra.mxu0 0.0
    %4539 = vmatprep.subr.mxu0 0.0
    %4540 = vmatpush1.msra.mxu0 0.0
    %4541 = vmatprep.subr.mxu0 0.0
    %4542 = vmatpush1.msra.mxu0 0.0
    %4543 = vmatprep.subr.mxu0 0.0
    %4544 = vmatpush1.msra.mxu0 0.0
    %4545 = vmatprep.mubr.f32.mxu0 0.0
    %4546 = vmatmul.mubr.f32.gmra.mrb[0].mxu0 %v3995
    %v4547 = vpop.f32.mrb[0].mxu0
    %v4548 = vadd.f32 %v3822, %v4547
    %v4549 = vpop.f32.mrb[0].mxu0
    %v4550 = vadd.f32 %v3826, %v4549
    %4551 = vdwg.mxu0
    %4552 = vmatprep.subr.mxu0 0.0
    %4553 = vmatpush1.msra.mxu0 %v375
    %4554 = vmatprep.subr.mxu0 0.0
    %4555 = vmatpush1.msra.mxu0 %v378
    %4556 = vmatprep.subr.mxu0 0.0
    %4557 = vmatpush1.msra.mxu0 %v381
    %4558 = vmatprep.subr.mxu0 0.0
    %4559 = vmatpush1.msra.mxu0 %v384
    %4560 = vmatprep.subr.mxu0 0.0
    %4561 = vmatpush1.msra.mxu0 %v387
    %4562 = vmatprep.subr.mxu0 0.0
    %4563 = vmatpush1.msra.mxu0 %v390
    %4564 = vmatprep.subr.mxu0 0.0
    %4565 = vmatpush1.msra.mxu0 %v393
    %4566 = vmatprep.subr.mxu0 0.0
    %4567 = vmatpush1.msra.mxu0 %v396
    %4568 = vmatprep.subr.mxu0 0.0
    %4569 = vmatpush1.msra.mxu0 %v399
    %4570 = vmatprep.subr.mxu0 0.0
    %4571 = vmatpush1.msra.mxu0 %v402
    %4572 = vmatprep.subr.mxu0 0.0
    %4573 = vmatpush1.msra.mxu0 %v405
    %4574 = vmatprep.subr.mxu0 0.0
    %4575 = vmatpush1.msra.mxu0 %v408
    %4576 = vmatprep.subr.mxu0 0.0
    %4577 = vmatpush1.msra.mxu0 %v411
    %4578 = vmatprep.subr.mxu0 0.0
    %4579 = vmatpush1.msra.mxu0 %v414
    %4580 = vmatprep.subr.mxu0 0.0
    %4581 = vmatpush1.msra.mxu0 %v417
    %4582 = vmatprep.subr.mxu0 0.0
    %4583 = vmatpush1.msra.mxu0 %v420
    %4584 = vmatprep.subr.mxu0 0.0
    %4585 = vmatpush1.msra.mxu0 0.0
    %4586 = vmatprep.subr.mxu0 0.0
    %4587 = vmatpush1.msra.mxu0 0.0
    %4588 = vmatprep.subr.mxu0 0.0
    %4589 = vmatpush1.msra.mxu0 0.0
    %4590 = vmatprep.subr.mxu0 0.0
    %4591 = vmatpush1.msra.mxu0 0.0
    %4592 = vmatprep.subr.mxu0 0.0
    %4593 = vmatpush1.msra.mxu0 0.0
    %4594 = vmatprep.subr.mxu0 0.0
    %4595 = vmatpush1.msra.mxu0 0.0
    %4596 = vmatprep.subr.mxu0 0.0
    %4597 = vmatpush1.msra.mxu0 0.0
    %4598 = vmatprep.subr.mxu0 0.0
    %4599 = vmatpush1.msra.mxu0 0.0
    %4600 = vmatprep.subr.mxu0 0.0
    %4601 = vmatpush1.msra.mxu0 0.0
    %4602 = vmatprep.subr.mxu0 0.0
    %4603 = vmatpush1.msra.mxu0 0.0
    %4604 = vmatprep.subr.mxu0 0.0
    %4605 = vmatpush1.msra.mxu0 0.0
    %4606 = vmatprep.subr.mxu0 0.0
    %4607 = vmatpush1.msra.mxu0 0.0
    %4608 = vmatprep.subr.mxu0 0.0
    %4609 = vmatpush1.msra.mxu0 0.0
    %4610 = vmatprep.subr.mxu0 0.0
    %4611 = vmatpush1.msra.mxu0 0.0
    %4612 = vmatprep.subr.mxu0 0.0
    %4613 = vmatpush1.msra.mxu0 0.0
    %4614 = vmatprep.subr.mxu0 0.0
    %4615 = vmatpush1.msra.mxu0 0.0
    %4616 = vmatprep.mubr.f32.mxu0 0.0
    %4617 = vmatmul.mubr.f32.gmra.mrb[0].mxu0 %v3995
    %v4618 = vpop.f32.mrb[0].mxu0
    %v4619 = vadd.f32 %v3830, %v4618
    %v4620 = vpop.f32.mrb[0].mxu0
    %4621 = vdwg.mxu0
    %v4622 = vadd.f32 %v4407, %v4548
    %v4623 = vxor.u32 %v4622, 2147483648
    %v4624 = vmul.f32 %v4623, 1.442695
    %v4625 = vpow.pop %v4624
    %v4626 = vadd.f32 %v4625, 1.0
    %v4627 = vrcp.pop %v4626
    %v4628 = vmul.f32 1.0, %v4627
    %v4629 = vadd.f32 %v4409, %v4550
    %v4630 = vxor.u32 %v4629, 2147483648
    %v4631 = vmul.f32 %v4630, 1.442695
    %v4632 = vpow.pop %v4631
    %v4633 = vadd.f32 %v4632, 1.0
    %v4634 = vrcp.pop %v4633
    %v4635 = vmul.f32 1.0, %v4634
    %v4636 = vmul.f32 %v4628, %v4619
    %v4637 = vadd.f32 %v4478, %v4636
    %v4638 = vtanh.pop %v4637
    %v4639 = vsub.f32 1.0, %v4635
    %v4640 = vmul.f32 %v4639, %v4638
    %v4641 = vmul.f32 %v4635, %v3995
    %v4642 = vadd.f32 %v4640, %v4641
    %4643 = vst [vmem:[#allocation3 + $0x2] sm:$0x3] %v4642
    %4644 = vmatprep.subr.mxu0 0.0
    %4645 = vmatpush1.msra.mxu0 %v440
    %4646 = vmatprep.subr.mxu0 0.0
    %4647 = vmatpush1.msra.mxu0 %v441
    %4648 = vmatprep.subr.mxu0 0.0
    %4649 = vmatpush1.msra.mxu0 %v442
    %4650 = vmatprep.subr.mxu0 0.0
    %4651 = vmatpush1.msra.mxu0 %v443
    %4652 = vmatprep.subr.mxu0 0.0
    %4653 = vmatpush1.msra.mxu0 %v444
    %4654 = vmatprep.subr.mxu0 0.0
    %4655 = vmatpush1.msra.mxu0 %v445
    %4656 = vmatprep.subr.mxu0 0.0
    %4657 = vmatpush1.msra.mxu0 %v446
    %4658 = vmatprep.subr.mxu0 0.0
    %4659 = vmatpush1.msra.mxu0 %v447
    %4660 = vmatprep.subr.mxu0 0.0
    %4661 = vmatpush1.msra.mxu0 %v448
    %4662 = vmatprep.subr.mxu0 0.0
    %4663 = vmatpush1.msra.mxu0 %v449
    %4664 = vmatprep.subr.mxu0 0.0
    %4665 = vmatpush1.msra.mxu0 %v450
    %4666 = vmatprep.subr.mxu0 0.0
    %4667 = vmatpush1.msra.mxu0 %v451
    %4668 = vmatprep.subr.mxu0 0.0
    %4669 = vmatpush1.msra.mxu0 %v452
    %4670 = vmatprep.subr.mxu0 0.0
    %4671 = vmatpush1.msra.mxu0 %v453
    %4672 = vmatprep.subr.mxu0 0.0
    %4673 = vmatpush1.msra.mxu0 %v454
    %4674 = vmatprep.subr.mxu0 0.0
    %4675 = vmatpush1.msra.mxu0 %v455
    %4676 = vmatprep.subr.mxu0 0.0
    %4677 = vmatpush1.msra.mxu0 0.0
    %4678 = vmatprep.subr.mxu0 0.0
    %4679 = vmatpush1.msra.mxu0 0.0
    %4680 = vmatprep.subr.mxu0 0.0
    %4681 = vmatpush1.msra.mxu0 0.0
    %4682 = vmatprep.subr.mxu0 0.0
    %4683 = vmatpush1.msra.mxu0 0.0
    %4684 = vmatprep.subr.mxu0 0.0
    %4685 = vmatpush1.msra.mxu0 0.0
    %4686 = vmatprep.subr.mxu0 0.0
    %4687 = vmatpush1.msra.mxu0 0.0
    %4688 = vmatprep.subr.mxu0 0.0
    %4689 = vmatpush1.msra.mxu0 0.0
    %4690 = vmatprep.subr.mxu0 0.0
    %4691 = vmatpush1.msra.mxu0 0.0
    %4692 = vmatprep.subr.mxu0 0.0
    %4693 = vmatpush1.msra.mxu0 0.0
    %4694 = vmatprep.subr.mxu0 0.0
    %4695 = vmatpush1.msra.mxu0 0.0
    %4696 = vmatprep.subr.mxu0 0.0
    %4697 = vmatpush1.msra.mxu0 0.0
    %4698 = vmatprep.subr.mxu0 0.0
    %4699 = vmatpush1.msra.mxu0 0.0
    %4700 = vmatprep.subr.mxu0 0.0
    %4701 = vmatpush1.msra.mxu0 0.0
    %4702 = vmatprep.subr.mxu0 0.0
    %4703 = vmatpush1.msra.mxu0 0.0
    %4704 = vmatprep.subr.mxu0 0.0
    %4705 = vmatpush1.msra.mxu0 0.0
    %4706 = vmatprep.subr.mxu0 0.0
    %4707 = vmatpush1.msra.mxu0 0.0
    %4708 = vmatprep.mubr.f32.mxu0 0.0
    %4709 = vmatmul.mubr.f32.gmra.mrb[0].mxu0 %v4642
    %v4710 = vpop.f32.mrb[0].mxu0
    %v4711 = vadd.f32 %v3312, %v4710
    %v4712 = vpop.f32.mrb[0].mxu0
    %4713 = vdwg.mxu0
    %v4716 = vunpack.c.l.s4 1966171168
    %v4717 = vunpack.c.0.s8 %v4716
    %v4718 = vlaneseq
    %v4719 = vshrl.u32 %v4718, 7
    %v4720 = vsub.s32 %v4717, %v4719
    %v4721 = vrot.slane %v4711, %v4720
    %v4722 = vcombine.high %v4721, %v4721
    %v4724 = vunpack.c.l.s4 1966171168
    %v4725 = vunpack.c.0.s8 %v4724
    %v4726 = vlaneseq
    %v4727 = vshrl.u32 %v4726, 7
    %v4728 = vsub.s32 %v4725, %v4727
    %v4729 = vrot.slane %v4721, %v4728
    %v4731 = vunpack.c.l.s4 1966171168
    %v4732 = vunpack.c.0.s8 %v4731
    %v4733 = vlaneseq
    %v4734 = vshrl.u32 %v4733, 7
    %v4735 = vsub.s32 %v4732, %v4734
    %v4736 = vrot.slane %v4722, %v4735
    %v4737 = vlaneseq
    %v4738 = vshrl.u32 %v4737, 7
    %v4739 = vsub.s32 0, %v4738
    %v4740 = vrot.slane %v4729, %v4739
    %v4741 = vlaneseq
    %v4742 = vshrl.u32 %v4741, 7
    %v4743 = vsub.s32 0, %v4742
    %v4744 = vrot.slane %v4736, %v4743
    %v4747 = vmul.f32 %v3300, %v4740
    %v4748 = vmul.f32 %v3305, %v4744
    %4749 = vadd.xlane.f32.xlu0 %v4747
    %v4750 = vpop.xlane.xlu0 %4749
    %4751 = vadd.xlane.f32.xlu0 %v4748
    %v4752 = vpop.xlane.xlu0 %4751
    %v4755 = vlaneseq
    %v4756 = vshrl.u32 %v4755, 7
    %v4757 = vsub.s32 %v3426, %v4756
    %v4758 = vrot.slane %v4750, %v4757
    %v4759 = vlaneseq
    %v4760 = vshrl.u32 %v4759, 7
    %v4761 = vsub.s32 %v3426, %v4760
    %v4762 = vrot.slane %v4752, %v4761
    %v4763 = vsel %vm3435, %v4762, %v4758
    %v4765 = vsel %vm3438, %v4763, -inf
    %4766 = vmax.xlane.f32.xlu0 %v4765
    %v4767 = vpop.xlane.xlu0 %4766
    %v4769 = vlaneseq
    %v4770 = vshrl.u32 %v4769, 7
    %v4771 = vsub.s32 0, %v4770
    %v4772 = vrot.slane %v4767, %v4771
    %v4773 = vlaneseq
    %v4774 = vshrl.u32 %v4773, 7
    %v4775 = vsub.s32 1, %v4774
    %v4776 = vrot.slane %v4767, %v4775
    %v4779 = vsub.f32 %v4750, %v4772
    %v4780 = vsub.f32 %v4752, %v4776
    %v4781 = vmul.f32 %v4779, 1.442695
    %v4782 = vpow.pop %v4781
    %v4783 = vmul.f32 %v4780, 1.442695
    %v4784 = vpow.pop %v4783
    %4787 = vset.pattern.permute.xlu0 0
    %4788 = vperm.xlu0 %4787, %v4782
    %v4789 = vpop.permute.xlu0 %4788
    %4790 = vset.pattern.permute.xlu0 0
    %4791 = vperm.xlu0 %4790, %v4784
    %v4792 = vpop.permute.xlu0 %4791
    %v4793 = vlaneseq
    %v4794 = vshrl.u32 %v4793, 7
    %v4795 = vsub.s32 %v3426, %v4794
    %v4796 = vrot.slane %v4789, %v4795
    %v4797 = vlaneseq
    %v4798 = vshrl.u32 %v4797, 7
    %v4799 = vsub.s32 %v3426, %v4798
    %v4800 = vrot.slane %v4792, %v4799
    %v4801 = vsel %vm3435, %v4800, %v4796
    %v4803 = vsel %vm3438, %v4801, 0.0
    %4804 = vadd.xlane.f32.xlu0 %v4803
    %v4805 = vpop.xlane.xlu0 %4804
    %v4806 = vrcp.pop %v4805
    %v4808 = vlaneseq
    %v4809 = vshrl.u32 %v4808, 7
    %v4810 = vsub.s32 0, %v4809
    %v4811 = vrot.slane %v4806, %v4810
    %v4812 = vlaneseq
    %v4813 = vshrl.u32 %v4812, 7
    %v4814 = vsub.s32 1, %v4813
    %v4815 = vrot.slane %v4806, %v4814
    %v4818 = vmul.f32 %v4782, %v4811
    %v4819 = vmul.f32 %v4784, %v4815
    %4821 = vset.pattern.permute.xlu0 0
    %4822 = vperm.xlu0 %4821, %v4818
    %v4823 = vpop.permute.xlu0 %4822
    %v4824 = vlaneseq
    %v4825 = vshrl.u32 %v4824, 7
    %v4826 = vsub.s32 %v3426, %v4825
    %v4827 = vrot.slane %v4823, %v4826
    %v4828 = vsel %vm3502, %v4827, 0
    %4830 = vmatprep.subr.mxu0 0.0
    %4831 = vmatpush1.msra.mxu0 %v3225
    %4832 = vmatprep.subr.mxu0 0.0
    %4833 = vmatpush1.msra.mxu0 0.0
    %4834 = vmatprep.subr.mxu0 0.0
    %4835 = vmatpush1.msra.mxu0 0.0
    %4836 = vmatprep.subr.mxu0 0.0
    %4837 = vmatpush1.msra.mxu0 0.0
    %4838 = vmatprep.subr.mxu0 0.0
    %4839 = vmatpush1.msra.mxu0 0.0
    %4840 = vmatprep.subr.mxu0 0.0
    %4841 = vmatpush1.msra.mxu0 0.0
    %4842 = vmatprep.subr.mxu0 0.0
    %4843 = vmatpush1.msra.mxu0 0.0
    %4844 = vmatprep.subr.mxu0 0.0
    %4845 = vmatpush1.msra.mxu0 0.0
    %4846 = vmatprep.subr.mxu0 0.0
    %4847 = vmatpush1.msra.mxu0 0.0
    %4848 = vmatprep.subr.mxu0 0.0
    %4849 = vmatpush1.msra.mxu0 0.0
    %4850 = vmatprep.subr.mxu0 0.0
    %4851 = vmatpush1.msra.mxu0 0.0
    %4852 = vmatprep.subr.mxu0 0.0
    %4853 = vmatpush1.msra.mxu0 0.0
    %4854 = vmatprep.subr.mxu0 0.0
    %4855 = vmatpush1.msra.mxu0 0.0
    %4856 = vmatprep.subr.mxu0 0.0
    %4857 = vmatpush1.msra.mxu0 0.0
    %4858 = vmatprep.subr.mxu0 0.0
    %4859 = vmatpush1.msra.mxu0 0.0
    %4860 = vmatprep.subr.mxu0 0.0
    %4861 = vmatpush1.msra.mxu0 0.0
    %4862 = vmatprep.subr.mxu0 0.0
    %4863 = vmatpush1.msra.mxu0 0.0
    %4864 = vmatprep.subr.mxu0 0.0
    %4865 = vmatpush1.msra.mxu0 0.0
    %4866 = vmatprep.subr.mxu0 0.0
    %4867 = vmatpush1.msra.mxu0 0.0
    %4868 = vmatprep.subr.mxu0 0.0
    %4869 = vmatpush1.msra.mxu0 0.0
    %4870 = vmatprep.subr.mxu0 0.0
    %4871 = vmatpush1.msra.mxu0 0.0
    %4872 = vmatprep.subr.mxu0 0.0
    %4873 = vmatpush1.msra.mxu0 0.0
    %4874 = vmatprep.subr.mxu0 0.0
    %4875 = vmatpush1.msra.mxu0 0.0
    %4876 = vmatprep.subr.mxu0 0.0
    %4877 = vmatpush1.msra.mxu0 0.0
    %4878 = vmatprep.subr.mxu0 0.0
    %4879 = vmatpush1.msra.mxu0 0.0
    %4880 = vmatprep.subr.mxu0 0.0
    %4881 = vmatpush1.msra.mxu0 0.0
    %4882 = vmatprep.subr.mxu0 0.0
    %4883 = vmatpush1.msra.mxu0 0.0
    %4884 = vmatprep.subr.mxu0 0.0
    %4885 = vmatpush1.msra.mxu0 0.0
    %4886 = vmatprep.subr.mxu0 0.0
    %4887 = vmatpush1.msra.mxu0 0.0
    %4888 = vmatprep.subr.mxu0 0.0
    %4889 = vmatpush1.msra.mxu0 0.0
    %4890 = vmatprep.subr.mxu0 0.0
    %4891 = vmatpush1.msra.mxu0 0.0
    %4892 = vmatprep.subr.mxu0 0.0
    %4893 = vmatpush1.msra.mxu0 0.0
    %4894 = vmatprep.mubr.f32.mxu0 0.0
    %4895 = vmatmul.mubr.f32.gmra.mrb[0].mxu0 %v4828
    %v4896 = vpop.f32.mrb[0].mxu0
    %v4897 = vadd.f32 0.0, %v4896
    %v4898 = vpop.f32.mrb[0].mxu0
    %4899 = vdwg.mxu0
    %4901 = vset.pattern.permute.xlu0 0
    %4902 = vperm.xlu0 %4901, %v4819
    %v4903 = vpop.permute.xlu0 %4902
    %v4904 = vlaneseq
    %v4905 = vshrl.u32 %v4904, 7
    %v4906 = vsub.s32 %v3426, %v4905
    %v4907 = vrot.slane %v4903, %v4906
    %v4908 = vsel %vm3502, %v4907, 0
    %4910 = vmatprep.subr.mxu0 0.0
    %4911 = vmatpush1.msra.mxu0 %v3226
    %4912 = vmatprep.subr.mxu0 0.0
    %4913 = vmatpush1.msra.mxu0 0.0
    %4914 = vmatprep.subr.mxu0 0.0
    %4915 = vmatpush1.msra.mxu0 0.0
    %4916 = vmatprep.subr.mxu0 0.0
    %4917 = vmatpush1.msra.mxu0 0.0
    %4918 = vmatprep.subr.mxu0 0.0
    %4919 = vmatpush1.msra.mxu0 0.0
    %4920 = vmatprep.subr.mxu0 0.0
    %4921 = vmatpush1.msra.mxu0 0.0
    %4922 = vmatprep.subr.mxu0 0.0
    %4923 = vmatpush1.msra.mxu0 0.0
    %4924 = vmatprep.subr.mxu0 0.0
    %4925 = vmatpush1.msra.mxu0 0.0
    %4926 = vmatprep.subr.mxu0 0.0
    %4927 = vmatpush1.msra.mxu0 0.0
    %4928 = vmatprep.subr.mxu0 0.0
    %4929 = vmatpush1.msra.mxu0 0.0
    %4930 = vmatprep.subr.mxu0 0.0
    %4931 = vmatpush1.msra.mxu0 0.0
    %4932 = vmatprep.subr.mxu0 0.0
    %4933 = vmatpush1.msra.mxu0 0.0
    %4934 = vmatprep.subr.mxu0 0.0
    %4935 = vmatpush1.msra.mxu0 0.0
    %4936 = vmatprep.subr.mxu0 0.0
    %4937 = vmatpush1.msra.mxu0 0.0
    %4938 = vmatprep.subr.mxu0 0.0
    %4939 = vmatpush1.msra.mxu0 0.0
    %4940 = vmatprep.subr.mxu0 0.0
    %4941 = vmatpush1.msra.mxu0 0.0
    %4942 = vmatprep.subr.mxu0 0.0
    %4943 = vmatpush1.msra.mxu0 0.0
    %4944 = vmatprep.subr.mxu0 0.0
    %4945 = vmatpush1.msra.mxu0 0.0
    %4946 = vmatprep.subr.mxu0 0.0
    %4947 = vmatpush1.msra.mxu0 0.0
    %4948 = vmatprep.subr.mxu0 0.0
    %4949 = vmatpush1.msra.mxu0 0.0
    %4950 = vmatprep.subr.mxu0 0.0
    %4951 = vmatpush1.msra.mxu0 0.0
    %4952 = vmatprep.subr.mxu0 0.0
    %4953 = vmatpush1.msra.mxu0 0.0
    %4954 = vmatprep.subr.mxu0 0.0
    %4955 = vmatpush1.msra.mxu0 0.0
    %4956 = vmatprep.subr.mxu0 0.0
    %4957 = vmatpush1.msra.mxu0 0.0
    %4958 = vmatprep.subr.mxu0 0.0
    %4959 = vmatpush1.msra.mxu0 0.0
    %4960 = vmatprep.subr.mxu0 0.0
    %4961 = vmatpush1.msra.mxu0 0.0
    %4962 = vmatprep.subr.mxu0 0.0
    %4963 = vmatpush1.msra.mxu0 0.0
    %4964 = vmatprep.subr.mxu0 0.0
    %4965 = vmatpush1.msra.mxu0 0.0
    %4966 = vmatprep.subr.mxu0 0.0
    %4967 = vmatpush1.msra.mxu0 0.0
    %4968 = vmatprep.subr.mxu0 0.0
    %4969 = vmatpush1.msra.mxu0 0.0
    %4970 = vmatprep.subr.mxu0 0.0
    %4971 = vmatpush1.msra.mxu0 0.0
    %4972 = vmatprep.subr.mxu0 0.0
    %4973 = vmatpush1.msra.mxu0 0.0
    %4974 = vmatprep.mubr.f32.mxu0 0.0
    %4975 = vmatmul.mubr.f32.gmra.mrb[0].mxu0 %v4908
    %v4976 = vpop.f32.mrb[0].mxu0
    %v4977 = vadd.f32 0.0, %v4976
    %v4978 = vpop.f32.mrb[0].mxu0
    %4979 = vdwg.mxu0
    %s4980 = scalar_lea.vmem [#allocation7], 4
    %v4981 = vld [vmem:[%s4980] sm:$0x3]
    %v4984 = vrot.slane %v4977, 7
    %v4985 = vsel %vm3435, %v4984, %v4897
    %4987 = vmatprep.subr.mxu0 %v278
    %4988 = vmatpush1.msra.mxu0 %v277
    %4989 = vmatprep.subr.mxu0 %v281
    %4990 = vmatpush1.msra.mxu0 %v280
    %4991 = vmatprep.subr.mxu0 %v284
    %4992 = vmatpush1.msra.mxu0 %v283
    %4993 = vmatprep.subr.mxu0 %v287
    %4994 = vmatpush1.msra.mxu0 %v286
    %4995 = vmatprep.subr.mxu0 %v290
    %4996 = vmatpush1.msra.mxu0 %v289
    %4997 = vmatprep.subr.mxu0 %v293
    %4998 = vmatpush1.msra.mxu0 %v292
    %4999 = vmatprep.subr.mxu0 %v296
    %5000 = vmatpush1.msra.mxu0 %v295
    %5001 = vmatprep.subr.mxu0 %v299
    %5002 = vmatpush1.msra.mxu0 %v298
    %5003 = vmatprep.subr.mxu0 %v302
    %5004 = vmatpush1.msra.mxu0 %v301
    %5005 = vmatprep.subr.mxu0 %v305
    %5006 = vmatpush1.msra.mxu0 %v304
    %5007 = vmatprep.subr.mxu0 %v308
    %5008 = vmatpush1.msra.mxu0 %v307
    %5009 = vmatprep.subr.mxu0 %v311
    %5010 = vmatpush1.msra.mxu0 %v310
    %5011 = vmatprep.subr.mxu0 %v314
    %5012 = vmatpush1.msra.mxu0 %v313
    %5013 = vmatprep.subr.mxu0 %v317
    %5014 = vmatpush1.msra.mxu0 %v316
    %5015 = vmatprep.subr.mxu0 %v320
    %5016 = vmatpush1.msra.mxu0 %v319
    %5017 = vmatprep.subr.mxu0 %v323
    %5018 = vmatpush1.msra.mxu0 %v322
    %5019 = vmatprep.subr.mxu0 %v326
    %5020 = vmatpush1.msra.mxu0 %v325
    %5021 = vmatprep.subr.mxu0 %v329
    %5022 = vmatpush1.msra.mxu0 %v328
    %5023 = vmatprep.subr.mxu0 %v332
    %5024 = vmatpush1.msra.mxu0 %v331
    %5025 = vmatprep.subr.mxu0 %v335
    %5026 = vmatpush1.msra.mxu0 %v334
    %5027 = vmatprep.subr.mxu0 %v338
    %5028 = vmatpush1.msra.mxu0 %v337
    %5029 = vmatprep.subr.mxu0 %v341
    %5030 = vmatpush1.msra.mxu0 %v340
    %5031 = vmatprep.subr.mxu0 %v344
    %5032 = vmatpush1.msra.mxu0 %v343
    %5033 = vmatprep.subr.mxu0 %v347
    %5034 = vmatpush1.msra.mxu0 %v346
    %5035 = vmatprep.subr.mxu0 %v350
    %5036 = vmatpush1.msra.mxu0 %v349
    %5037 = vmatprep.subr.mxu0 %v353
    %5038 = vmatpush1.msra.mxu0 %v352
    %5039 = vmatprep.subr.mxu0 %v356
    %5040 = vmatpush1.msra.mxu0 %v355
    %5041 = vmatprep.subr.mxu0 %v359
    %5042 = vmatpush1.msra.mxu0 %v358
    %5043 = vmatprep.subr.mxu0 %v362
    %5044 = vmatpush1.msra.mxu0 %v361
    %5045 = vmatprep.subr.mxu0 %v365
    %5046 = vmatpush1.msra.mxu0 %v364
    %5047 = vmatprep.subr.mxu0 %v368
    %5048 = vmatpush1.msra.mxu0 %v367
    %5049 = vmatprep.subr.mxu0 %v371
    %5050 = vmatpush1.msra.mxu0 %v370
    %5051 = vmatprep.mubr.f32.mxu0 %v4985
    %5052 = vmatmul.mubr.f32.gmra.mrb[0].mxu0 %v4981
    %v5053 = vpop.f32.mrb[0].mxu0
    %v5054 = vadd.f32 %v3665, %v5053
    %v5055 = vpop.f32.mrb[0].mxu0
    %v5056 = vadd.f32 %v3669, %v5055
    %5057 = vdwg.mxu0
    %5058 = vmatprep.subr.mxu0 0.0
    %5059 = vmatpush1.msra.mxu0 %v279
    %5060 = vmatprep.subr.mxu0 0.0
    %5061 = vmatpush1.msra.mxu0 %v282
    %5062 = vmatprep.subr.mxu0 0.0
    %5063 = vmatpush1.msra.mxu0 %v285
    %5064 = vmatprep.subr.mxu0 0.0
    %5065 = vmatpush1.msra.mxu0 %v288
    %5066 = vmatprep.subr.mxu0 0.0
    %5067 = vmatpush1.msra.mxu0 %v291
    %5068 = vmatprep.subr.mxu0 0.0
    %5069 = vmatpush1.msra.mxu0 %v294
    %5070 = vmatprep.subr.mxu0 0.0
    %5071 = vmatpush1.msra.mxu0 %v297
    %5072 = vmatprep.subr.mxu0 0.0
    %5073 = vmatpush1.msra.mxu0 %v300
    %5074 = vmatprep.subr.mxu0 0.0
    %5075 = vmatpush1.msra.mxu0 %v303
    %5076 = vmatprep.subr.mxu0 0.0
    %5077 = vmatpush1.msra.mxu0 %v306
    %5078 = vmatprep.subr.mxu0 0.0
    %5079 = vmatpush1.msra.mxu0 %v309
    %5080 = vmatprep.subr.mxu0 0.0
    %5081 = vmatpush1.msra.mxu0 %v312
    %5082 = vmatprep.subr.mxu0 0.0
    %5083 = vmatpush1.msra.mxu0 %v315
    %5084 = vmatprep.subr.mxu0 0.0
    %5085 = vmatpush1.msra.mxu0 %v318
    %5086 = vmatprep.subr.mxu0 0.0
    %5087 = vmatpush1.msra.mxu0 %v321
    %5088 = vmatprep.subr.mxu0 0.0
    %5089 = vmatpush1.msra.mxu0 %v324
    %5090 = vmatprep.subr.mxu0 0.0
    %5091 = vmatpush1.msra.mxu0 %v327
    %5092 = vmatprep.subr.mxu0 0.0
    %5093 = vmatpush1.msra.mxu0 %v330
    %5094 = vmatprep.subr.mxu0 0.0
    %5095 = vmatpush1.msra.mxu0 %v333
    %5096 = vmatprep.subr.mxu0 0.0
    %5097 = vmatpush1.msra.mxu0 %v336
    %5098 = vmatprep.subr.mxu0 0.0
    %5099 = vmatpush1.msra.mxu0 %v339
    %5100 = vmatprep.subr.mxu0 0.0
    %5101 = vmatpush1.msra.mxu0 %v342
    %5102 = vmatprep.subr.mxu0 0.0
    %5103 = vmatpush1.msra.mxu0 %v345
    %5104 = vmatprep.subr.mxu0 0.0
    %5105 = vmatpush1.msra.mxu0 %v348
    %5106 = vmatprep.subr.mxu0 0.0
    %5107 = vmatpush1.msra.mxu0 %v351
    %5108 = vmatprep.subr.mxu0 0.0
    %5109 = vmatpush1.msra.mxu0 %v354
    %5110 = vmatprep.subr.mxu0 0.0
    %5111 = vmatpush1.msra.mxu0 %v357
    %5112 = vmatprep.subr.mxu0 0.0
    %5113 = vmatpush1.msra.mxu0 %v360
    %5114 = vmatprep.subr.mxu0 0.0
    %5115 = vmatpush1.msra.mxu0 %v363
    %5116 = vmatprep.subr.mxu0 0.0
    %5117 = vmatpush1.msra.mxu0 %v366
    %5118 = vmatprep.subr.mxu0 0.0
    %5119 = vmatpush1.msra.mxu0 %v369
    %5120 = vmatprep.subr.mxu0 0.0
    %5121 = vmatpush1.msra.mxu0 %v372
    %5122 = vmatprep.mubr.f32.mxu0 %v4985
    %5123 = vmatmul.mubr.f32.gmra.mrb[0].mxu0 %v4981
    %v5124 = vpop.f32.mrb[0].mxu0
    %v5125 = vadd.f32 %v3673, %v5124
    %v5126 = vpop.f32.mrb[0].mxu0
    %5127 = vdwg.mxu0
    %5128 = vmatprep.subr.mxu0 %v374
    %5129 = vmatpush1.msra.mxu0 %v373
    %5130 = vmatprep.subr.mxu0 %v377
    %5131 = vmatpush1.msra.mxu0 %v376
    %5132 = vmatprep.subr.mxu0 %v380
    %5133 = vmatpush1.msra.mxu0 %v379
    %5134 = vmatprep.subr.mxu0 %v383
    %5135 = vmatpush1.msra.mxu0 %v382
    %5136 = vmatprep.subr.mxu0 %v386
    %5137 = vmatpush1.msra.mxu0 %v385
    %5138 = vmatprep.subr.mxu0 %v389
    %5139 = vmatpush1.msra.mxu0 %v388
    %5140 = vmatprep.subr.mxu0 %v392
    %5141 = vmatpush1.msra.mxu0 %v391
    %5142 = vmatprep.subr.mxu0 %v395
    %5143 = vmatpush1.msra.mxu0 %v394
    %5144 = vmatprep.subr.mxu0 %v398
    %5145 = vmatpush1.msra.mxu0 %v397
    %5146 = vmatprep.subr.mxu0 %v401
    %5147 = vmatpush1.msra.mxu0 %v400
    %5148 = vmatprep.subr.mxu0 %v404
    %5149 = vmatpush1.msra.mxu0 %v403
    %5150 = vmatprep.subr.mxu0 %v407
    %5151 = vmatpush1.msra.mxu0 %v406
    %5152 = vmatprep.subr.mxu0 %v410
    %5153 = vmatpush1.msra.mxu0 %v409
    %5154 = vmatprep.subr.mxu0 %v413
    %5155 = vmatpush1.msra.mxu0 %v412
    %5156 = vmatprep.subr.mxu0 %v416
    %5157 = vmatpush1.msra.mxu0 %v415
    %5158 = vmatprep.subr.mxu0 %v419
    %5159 = vmatpush1.msra.mxu0 %v418
    %5160 = vmatprep.subr.mxu0 0.0
    %5161 = vmatpush1.msra.mxu0 0.0
    %5162 = vmatprep.subr.mxu0 0.0
    %5163 = vmatpush1.msra.mxu0 0.0
    %5164 = vmatprep.subr.mxu0 0.0
    %5165 = vmatpush1.msra.mxu0 0.0
    %5166 = vmatprep.subr.mxu0 0.0
    %5167 = vmatpush1.msra.mxu0 0.0
    %5168 = vmatprep.subr.mxu0 0.0
    %5169 = vmatpush1.msra.mxu0 0.0
    %5170 = vmatprep.subr.mxu0 0.0
    %5171 = vmatpush1.msra.mxu0 0.0
    %5172 = vmatprep.subr.mxu0 0.0
    %5173 = vmatpush1.msra.mxu0 0.0
    %5174 = vmatprep.subr.mxu0 0.0
    %5175 = vmatpush1.msra.mxu0 0.0
    %5176 = vmatprep.subr.mxu0 0.0
    %5177 = vmatpush1.msra.mxu0 0.0
    %5178 = vmatprep.subr.mxu0 0.0
    %5179 = vmatpush1.msra.mxu0 0.0
    %5180 = vmatprep.subr.mxu0 0.0
    %5181 = vmatpush1.msra.mxu0 0.0
    %5182 = vmatprep.subr.mxu0 0.0
    %5183 = vmatpush1.msra.mxu0 0.0
    %5184 = vmatprep.subr.mxu0 0.0
    %5185 = vmatpush1.msra.mxu0 0.0
    %5186 = vmatprep.subr.mxu0 0.0
    %5187 = vmatpush1.msra.mxu0 0.0
    %5188 = vmatprep.subr.mxu0 0.0
    %5189 = vmatpush1.msra.mxu0 0.0
    %5190 = vmatprep.subr.mxu0 0.0
    %5191 = vmatpush1.msra.mxu0 0.0
    %5192 = vmatprep.mubr.f32.mxu0 0.0
    %5193 = vmatmul.mubr.f32.gmra.mrb[0].mxu0 %v4642
    %v5194 = vpop.f32.mrb[0].mxu0
    %v5195 = vadd.f32 %v3822, %v5194
    %v5196 = vpop.f32.mrb[0].mxu0
    %v5197 = vadd.f32 %v3826, %v5196
    %5198 = vdwg.mxu0
    %5199 = vmatprep.subr.mxu0 0.0
    %5200 = vmatpush1.msra.mxu0 %v375
    %5201 = vmatprep.subr.mxu0 0.0
    %5202 = vmatpush1.msra.mxu0 %v378
    %5203 = vmatprep.subr.mxu0 0.0
    %5204 = vmatpush1.msra.mxu0 %v381
    %5205 = vmatprep.subr.mxu0 0.0
    %5206 = vmatpush1.msra.mxu0 %v384
    %5207 = vmatprep.subr.mxu0 0.0
    %5208 = vmatpush1.msra.mxu0 %v387
    %5209 = vmatprep.subr.mxu0 0.0
    %5210 = vmatpush1.msra.mxu0 %v390
    %5211 = vmatprep.subr.mxu0 0.0
    %5212 = vmatpush1.msra.mxu0 %v393
    %5213 = vmatprep.subr.mxu0 0.0
    %5214 = vmatpush1.msra.mxu0 %v396
    %5215 = vmatprep.subr.mxu0 0.0
    %5216 = vmatpush1.msra.mxu0 %v399
    %5217 = vmatprep.subr.mxu0 0.0
    %5218 = vmatpush1.msra.mxu0 %v402
    %5219 = vmatprep.subr.mxu0 0.0
    %5220 = vmatpush1.msra.mxu0 %v405
    %5221 = vmatprep.subr.mxu0 0.0
    %5222 = vmatpush1.msra.mxu0 %v408
    %5223 = vmatprep.subr.mxu0 0.0
    %5224 = vmatpush1.msra.mxu0 %v411
    %5225 = vmatprep.subr.mxu0 0.0
    %5226 = vmatpush1.msra.mxu0 %v414
    %5227 = vmatprep.subr.mxu0 0.0
    %5228 = vmatpush1.msra.mxu0 %v417
    %5229 = vmatprep.subr.mxu0 0.0
    %5230 = vmatpush1.msra.mxu0 %v420
    %5231 = vmatprep.subr.mxu0 0.0
    %5232 = vmatpush1.msra.mxu0 0.0
    %5233 = vmatprep.subr.mxu0 0.0
    %5234 = vmatpush1.msra.mxu0 0.0
    %5235 = vmatprep.subr.mxu0 0.0
    %5236 = vmatpush1.msra.mxu0 0.0
    %5237 = vmatprep.subr.mxu0 0.0
    %5238 = vmatpush1.msra.mxu0 0.0
    %5239 = vmatprep.subr.mxu0 0.0
    %5240 = vmatpush1.msra.mxu0 0.0
    %5241 = vmatprep.subr.mxu0 0.0
    %5242 = vmatpush1.msra.mxu0 0.0
    %5243 = vmatprep.subr.mxu0 0.0
    %5244 = vmatpush1.msra.mxu0 0.0
    %5245 = vmatprep.subr.mxu0 0.0
    %5246 = vmatpush1.msra.mxu0 0.0
    %5247 = vmatprep.subr.mxu0 0.0
    %5248 = vmatpush1.msra.mxu0 0.0
    %5249 = vmatprep.subr.mxu0 0.0
    %5250 = vmatpush1.msra.mxu0 0.0
    %5251 = vmatprep.subr.mxu0 0.0
    %5252 = vmatpush1.msra.mxu0 0.0
    %5253 = vmatprep.subr.mxu0 0.0
    %5254 = vmatpush1.msra.mxu0 0.0
    %5255 = vmatprep.subr.mxu0 0.0
    %5256 = vmatpush1.msra.mxu0 0.0
    %5257 = vmatprep.subr.mxu0 0.0
    %5258 = vmatpush1.msra.mxu0 0.0
    %5259 = vmatprep.subr.mxu0 0.0
    %5260 = vmatpush1.msra.mxu0 0.0
    %5261 = vmatprep.subr.mxu0 0.0
    %5262 = vmatpush1.msra.mxu0 0.0
    %5263 = vmatprep.mubr.f32.mxu0 0.0
    %5264 = vmatmul.mubr.f32.gmra.mrb[0].mxu0 %v4642
    %v5265 = vpop.f32.mrb[0].mxu0
    %v5266 = vadd.f32 %v3830, %v5265
    %v5267 = vpop.f32.mrb[0].mxu0
    %5268 = vdwg.mxu0
    %v5269 = vadd.f32 %v5054, %v5195
    %v5270 = vxor.u32 %v5269, 2147483648
    %v5271 = vmul.f32 %v5270, 1.442695
    %v5272 = vpow.pop %v5271
    %v5273 = vadd.f32 %v5272, 1.0
    %v5274 = vrcp.pop %v5273
    %v5275 = vmul.f32 1.0, %v5274
    %v5276 = vadd.f32 %v5056, %v5197
    %v5277 = vxor.u32 %v5276, 2147483648
    %v5278 = vmul.f32 %v5277, 1.442695
    %v5279 = vpow.pop %v5278
    %v5280 = vadd.f32 %v5279, 1.0
    %v5281 = vrcp.pop %v5280
    %v5282 = vmul.f32 1.0, %v5281
    %v5283 = vmul.f32 %v5275, %v5266
    %v5284 = vadd.f32 %v5125, %v5283
    %v5285 = vtanh.pop %v5284
    %v5286 = vsub.f32 1.0, %v5282
    %v5287 = vmul.f32 %v5286, %v5285
    %v5288 = vmul.f32 %v5282, %v4642
    %v5289 = vadd.f32 %v5287, %v5288
    %5290 = vst [vmem:[#allocation3 + $0x4] sm:$0x3] %v5289
    %5291 = vmatprep.subr.mxu0 0.0
    %5292 = vmatpush1.msra.mxu0 %v440
    %5293 = vmatprep.subr.mxu0 0.0
    %5294 = vmatpush1.msra.mxu0 %v441
    %5295 = vmatprep.subr.mxu0 0.0
    %5296 = vmatpush1.msra.mxu0 %v442
    %5297 = vmatprep.subr.mxu0 0.0
    %5298 = vmatpush1.msra.mxu0 %v443
    %5299 = vmatprep.subr.mxu0 0.0
    %5300 = vmatpush1.msra.mxu0 %v444
    %5301 = vmatprep.subr.mxu0 0.0
    %5302 = vmatpush1.msra.mxu0 %v445
    %5303 = vmatprep.subr.mxu0 0.0
    %5304 = vmatpush1.msra.mxu0 %v446
    %5305 = vmatprep.subr.mxu0 0.0
    %5306 = vmatpush1.msra.mxu0 %v447
    %5307 = vmatprep.subr.mxu0 0.0
    %5308 = vmatpush1.msra.mxu0 %v448
    %5309 = vmatprep.subr.mxu0 0.0
    %5310 = vmatpush1.msra.mxu0 %v449
    %5311 = vmatprep.subr.mxu0 0.0
    %5312 = vmatpush1.msra.mxu0 %v450
    %5313 = vmatprep.subr.mxu0 0.0
    %5314 = vmatpush1.msra.mxu0 %v451
    %5315 = vmatprep.subr.mxu0 0.0
    %5316 = vmatpush1.msra.mxu0 %v452
    %5317 = vmatprep.subr.mxu0 0.0
    %5318 = vmatpush1.msra.mxu0 %v453
    %5319 = vmatprep.subr.mxu0 0.0
    %5320 = vmatpush1.msra.mxu0 %v454
    %5321 = vmatprep.subr.mxu0 0.0
    %5322 = vmatpush1.msra.mxu0 %v455
    %5323 = vmatprep.subr.mxu0 0.0
    %5324 = vmatpush1.msra.mxu0 0.0
    %5325 = vmatprep.subr.mxu0 0.0
    %5326 = vmatpush1.msra.mxu0 0.0
    %5327 = vmatprep.subr.mxu0 0.0
    %5328 = vmatpush1.msra.mxu0 0.0
    %5329 = vmatprep.subr.mxu0 0.0
    %5330 = vmatpush1.msra.mxu0 0.0
    %5331 = vmatprep.subr.mxu0 0.0
    %5332 = vmatpush1.msra.mxu0 0.0
    %5333 = vmatprep.subr.mxu0 0.0
    %5334 = vmatpush1.msra.mxu0 0.0
    %5335 = vmatprep.subr.mxu0 0.0
    %5336 = vmatpush1.msra.mxu0 0.0
    %5337 = vmatprep.subr.mxu0 0.0
    %5338 = vmatpush1.msra.mxu0 0.0
    %5339 = vmatprep.subr.mxu0 0.0
    %5340 = vmatpush1.msra.mxu0 0.0
    %5341 = vmatprep.subr.mxu0 0.0
    %5342 = vmatpush1.msra.mxu0 0.0
    %5343 = vmatprep.subr.mxu0 0.0
    %5344 = vmatpush1.msra.mxu0 0.0
    %5345 = vmatprep.subr.mxu0 0.0
    %5346 = vmatpush1.msra.mxu0 0.0
    %5347 = vmatprep.subr.mxu0 0.0
    %5348 = vmatpush1.msra.mxu0 0.0
    %5349 = vmatprep.subr.mxu0 0.0
    %5350 = vmatpush1.msra.mxu0 0.0
    %5351 = vmatprep.subr.mxu0 0.0
    %5352 = vmatpush1.msra.mxu0 0.0
    %5353 = vmatprep.subr.mxu0 0.0
    %5354 = vmatpush1.msra.mxu0 0.0
    %5355 = vmatprep.mubr.f32.mxu0 0.0
    %5356 = vmatmul.mubr.f32.gmra.mrb[0].mxu0 %v5289
    %v5357 = vpop.f32.mrb[0].mxu0
    %v5358 = vadd.f32 %v3312, %v5357
    %v5359 = vpop.f32.mrb[0].mxu0
    %5360 = vdwg.mxu0
    %v5363 = vunpack.c.l.s4 1966171168
    %v5364 = vunpack.c.0.s8 %v5363
    %v5365 = vlaneseq
    %v5366 = vshrl.u32 %v5365, 7
    %v5367 = vsub.s32 %v5364, %v5366
    %v5368 = vrot.slane %v5358, %v5367
    %v5369 = vcombine.high %v5368, %v5368
    %v5371 = vunpack.c.l.s4 1966171168
    %v5372 = vunpack.c.0.s8 %v5371
    %v5373 = vlaneseq
    %v5374 = vshrl.u32 %v5373, 7
    %v5375 = vsub.s32 %v5372, %v5374
    %v5376 = vrot.slane %v5368, %v5375
    %v5378 = vunpack.c.l.s4 1966171168
    %v5379 = vunpack.c.0.s8 %v5378
    %v5380 = vlaneseq
    %v5381 = vshrl.u32 %v5380, 7
    %v5382 = vsub.s32 %v5379, %v5381
    %v5383 = vrot.slane %v5369, %v5382
    %v5384 = vlaneseq
    %v5385 = vshrl.u32 %v5384, 7
    %v5386 = vsub.s32 0, %v5385
    %v5387 = vrot.slane %v5376, %v5386
    %v5388 = vlaneseq
    %v5389 = vshrl.u32 %v5388, 7
    %v5390 = vsub.s32 0, %v5389
    %v5391 = vrot.slane %v5383, %v5390
    %v5394 = vmul.f32 %v3300, %v5387
    %v5395 = vmul.f32 %v3305, %v5391
    %5396 = vadd.xlane.f32.xlu0 %v5394
    %v5397 = vpop.xlane.xlu0 %5396
    %5398 = vadd.xlane.f32.xlu0 %v5395
    %v5399 = vpop.xlane.xlu0 %5398
    %v5402 = vlaneseq
    %v5403 = vshrl.u32 %v5402, 7
    %v5404 = vsub.s32 %v3426, %v5403
    %v5405 = vrot.slane %v5397, %v5404
    %v5406 = vlaneseq
    %v5407 = vshrl.u32 %v5406, 7
    %v5408 = vsub.s32 %v3426, %v5407
    %v5409 = vrot.slane %v5399, %v5408
    %v5410 = vsel %vm3435, %v5409, %v5405
    %v5412 = vsel %vm3438, %v5410, -inf
    %5413 = vmax.xlane.f32.xlu0 %v5412
    %v5414 = vpop.xlane.xlu0 %5413
    %v5416 = vlaneseq
    %v5417 = vshrl.u32 %v5416, 7
    %v5418 = vsub.s32 0, %v5417
    %v5419 = vrot.slane %v5414, %v5418
    %v5420 = vlaneseq
    %v5421 = vshrl.u32 %v5420, 7
    %v5422 = vsub.s32 1, %v5421
    %v5423 = vrot.slane %v5414, %v5422
    %v5426 = vsub.f32 %v5397, %v5419
    %v5427 = vsub.f32 %v5399, %v5423
    %v5428 = vmul.f32 %v5426, 1.442695
    %v5429 = vpow.pop %v5428
    %v5430 = vmul.f32 %v5427, 1.442695
    %v5431 = vpow.pop %v5430
    %5434 = vset.pattern.permute.xlu0 0
    %5435 = vperm.xlu0 %5434, %v5429
    %v5436 = vpop.permute.xlu0 %5435
    %5437 = vset.pattern.permute.xlu0 0
    %5438 = vperm.xlu0 %5437, %v5431
    %v5439 = vpop.permute.xlu0 %5438
    %v5440 = vlaneseq
    %v5441 = vshrl.u32 %v5440, 7
    %v5442 = vsub.s32 %v3426, %v5441
    %v5443 = vrot.slane %v5436, %v5442
    %v5444 = vlaneseq
    %v5445 = vshrl.u32 %v5444, 7
    %v5446 = vsub.s32 %v3426, %v5445
    %v5447 = vrot.slane %v5439, %v5446
    %v5448 = vsel %vm3435, %v5447, %v5443
    %v5450 = vsel %vm3438, %v5448, 0.0
    %5451 = vadd.xlane.f32.xlu0 %v5450
    %v5452 = vpop.xlane.xlu0 %5451
    %v5453 = vrcp.pop %v5452
    %v5455 = vlaneseq
    %v5456 = vshrl.u32 %v5455, 7
    %v5457 = vsub.s32 0, %v5456
    %v5458 = vrot.slane %v5453, %v5457
    %v5459 = vlaneseq
    %v5460 = vshrl.u32 %v5459, 7
    %v5461 = vsub.s32 1, %v5460
    %v5462 = vrot.slane %v5453, %v5461
    %v5465 = vmul.f32 %v5429, %v5458
    %v5466 = vmul.f32 %v5431, %v5462
    %5468 = vset.pattern.permute.xlu0 0
    %5469 = vperm.xlu0 %5468, %v5465
    %v5470 = vpop.permute.xlu0 %5469
    %v5471 = vlaneseq
    %v5472 = vshrl.u32 %v5471, 7
    %v5473 = vsub.s32 %v3426, %v5472
    %v5474 = vrot.slane %v5470, %v5473
    %v5475 = vsel %vm3502, %v5474, 0
    %5477 = vmatprep.subr.mxu0 0.0
    %5478 = vmatpush1.msra.mxu0 %v3225
    %5479 = vmatprep.subr.mxu0 0.0
    %5480 = vmatpush1.msra.mxu0 0.0
    %5481 = vmatprep.subr.mxu0 0.0
    %5482 = vmatpush1.msra.mxu0 0.0
    %5483 = vmatprep.subr.mxu0 0.0
    %5484 = vmatpush1.msra.mxu0 0.0
    %5485 = vmatprep.subr.mxu0 0.0
    %5486 = vmatpush1.msra.mxu0 0.0
    %5487 = vmatprep.subr.mxu0 0.0
    %5488 = vmatpush1.msra.mxu0 0.0
    %5489 = vmatprep.subr.mxu0 0.0
    %5490 = vmatpush1.msra.mxu0 0.0
    %5491 = vmatprep.subr.mxu0 0.0
    %5492 = vmatpush1.msra.mxu0 0.0
    %5493 = vmatprep.subr.mxu0 0.0
    %5494 = vmatpush1.msra.mxu0 0.0
    %5495 = vmatprep.subr.mxu0 0.0
    %5496 = vmatpush1.msra.mxu0 0.0
    %5497 = vmatprep.subr.mxu0 0.0
    %5498 = vmatpush1.msra.mxu0 0.0
    %5499 = vmatprep.subr.mxu0 0.0
    %5500 = vmatpush1.msra.mxu0 0.0
    %5501 = vmatprep.subr.mxu0 0.0
    %5502 = vmatpush1.msra.mxu0 0.0
    %5503 = vmatprep.subr.mxu0 0.0
    %5504 = vmatpush1.msra.mxu0 0.0
    %5505 = vmatprep.subr.mxu0 0.0
    %5506 = vmatpush1.msra.mxu0 0.0
    %5507 = vmatprep.subr.mxu0 0.0
    %5508 = vmatpush1.msra.mxu0 0.0
    %5509 = vmatprep.subr.mxu0 0.0
    %5510 = vmatpush1.msra.mxu0 0.0
    %5511 = vmatprep.subr.mxu0 0.0
    %5512 = vmatpush1.msra.mxu0 0.0
    %5513 = vmatprep.subr.mxu0 0.0
    %5514 = vmatpush1.msra.mxu0 0.0
    %5515 = vmatprep.subr.mxu0 0.0
    %5516 = vmatpush1.msra.mxu0 0.0
    %5517 = vmatprep.subr.mxu0 0.0
    %5518 = vmatpush1.msra.mxu0 0.0
    %5519 = vmatprep.subr.mxu0 0.0
    %5520 = vmatpush1.msra.mxu0 0.0
    %5521 = vmatprep.subr.mxu0 0.0
    %5522 = vmatpush1.msra.mxu0 0.0
    %5523 = vmatprep.subr.mxu0 0.0
    %5524 = vmatpush1.msra.mxu0 0.0
    %5525 = vmatprep.subr.mxu0 0.0
    %5526 = vmatpush1.msra.mxu0 0.0
    %5527 = vmatprep.subr.mxu0 0.0
    %5528 = vmatpush1.msra.mxu0 0.0
    %5529 = vmatprep.subr.mxu0 0.0
    %5530 = vmatpush1.msra.mxu0 0.0
    %5531 = vmatprep.subr.mxu0 0.0
    %5532 = vmatpush1.msra.mxu0 0.0
    %5533 = vmatprep.subr.mxu0 0.0
    %5534 = vmatpush1.msra.mxu0 0.0
    %5535 = vmatprep.subr.mxu0 0.0
    %5536 = vmatpush1.msra.mxu0 0.0
    %5537 = vmatprep.subr.mxu0 0.0
    %5538 = vmatpush1.msra.mxu0 0.0
    %5539 = vmatprep.subr.mxu0 0.0
    %5540 = vmatpush1.msra.mxu0 0.0
    %5541 = vmatprep.mubr.f32.mxu0 0.0
    %5542 = vmatmul.mubr.f32.gmra.mrb[0].mxu0 %v5475
    %v5543 = vpop.f32.mrb[0].mxu0
    %v5544 = vadd.f32 0.0, %v5543
    %v5545 = vpop.f32.mrb[0].mxu0
    %5546 = vdwg.mxu0
    %5548 = vset.pattern.permute.xlu0 0
    %5549 = vperm.xlu0 %5548, %v5466
    %v5550 = vpop.permute.xlu0 %5549
    %v5551 = vlaneseq
    %v5552 = vshrl.u32 %v5551, 7
    %v5553 = vsub.s32 %v3426, %v5552
    %v5554 = vrot.slane %v5550, %v5553
    %v5555 = vsel %vm3502, %v5554, 0
    %5557 = vmatprep.subr.mxu0 0.0
    %5558 = vmatpush1.msra.mxu0 %v3226
    %5559 = vmatprep.subr.mxu0 0.0
    %5560 = vmatpush1.msra.mxu0 0.0
    %5561 = vmatprep.subr.mxu0 0.0
    %5562 = vmatpush1.msra.mxu0 0.0
    %5563 = vmatprep.subr.mxu0 0.0
    %5564 = vmatpush1.msra.mxu0 0.0
    %5565 = vmatprep.subr.mxu0 0.0
    %5566 = vmatpush1.msra.mxu0 0.0
    %5567 = vmatprep.subr.mxu0 0.0
    %5568 = vmatpush1.msra.mxu0 0.0
    %5569 = vmatprep.subr.mxu0 0.0
    %5570 = vmatpush1.msra.mxu0 0.0
    %5571 = vmatprep.subr.mxu0 0.0
    %5572 = vmatpush1.msra.mxu0 0.0
    %5573 = vmatprep.subr.mxu0 0.0
    %5574 = vmatpush1.msra.mxu0 0.0
    %5575 = vmatprep.subr.mxu0 0.0
    %5576 = vmatpush1.msra.mxu0 0.0
    %5577 = vmatprep.subr.mxu0 0.0
    %5578 = vmatpush1.msra.mxu0 0.0
    %5579 = vmatprep.subr.mxu0 0.0
    %5580 = vmatpush1.msra.mxu0 0.0
    %5581 = vmatprep.subr.mxu0 0.0
    %5582 = vmatpush1.msra.mxu0 0.0
    %5583 = vmatprep.subr.mxu0 0.0
    %5584 = vmatpush1.msra.mxu0 0.0
    %5585 = vmatprep.subr.mxu0 0.0
    %5586 = vmatpush1.msra.mxu0 0.0
    %5587 = vmatprep.subr.mxu0 0.0
    %5588 = vmatpush1.msra.mxu0 0.0
    %5589 = vmatprep.subr.mxu0 0.0
    %5590 = vmatpush1.msra.mxu0 0.0
    %5591 = vmatprep.subr.mxu0 0.0
    %5592 = vmatpush1.msra.mxu0 0.0
    %5593 = vmatprep.subr.mxu0 0.0
    %5594 = vmatpush1.msra.mxu0 0.0
    %5595 = vmatprep.subr.mxu0 0.0
    %5596 = vmatpush1.msra.mxu0 0.0
    %5597 = vmatprep.subr.mxu0 0.0
    %5598 = vmatpush1.msra.mxu0 0.0
    %5599 = vmatprep.subr.mxu0 0.0
    %5600 = vmatpush1.msra.mxu0 0.0
    %5601 = vmatprep.subr.mxu0 0.0
    %5602 = vmatpush1.msra.mxu0 0.0
    %5603 = vmatprep.subr.mxu0 0.0
    %5604 = vmatpush1.msra.mxu0 0.0
    %5605 = vmatprep.subr.mxu0 0.0
    %5606 = vmatpush1.msra.mxu0 0.0
    %5607 = vmatprep.subr.mxu0 0.0
    %5608 = vmatpush1.msra.mxu0 0.0
    %5609 = vmatprep.subr.mxu0 0.0
    %5610 = vmatpush1.msra.mxu0 0.0
    %5611 = vmatprep.subr.mxu0 0.0
    %5612 = vmatpush1.msra.mxu0 0.0
    %5613 = vmatprep.subr.mxu0 0.0
    %5614 = vmatpush1.msra.mxu0 0.0
    %5615 = vmatprep.subr.mxu0 0.0
    %5616 = vmatpush1.msra.mxu0 0.0
    %5617 = vmatprep.subr.mxu0 0.0
    %5618 = vmatpush1.msra.mxu0 0.0
    %5619 = vmatprep.subr.mxu0 0.0
    %5620 = vmatpush1.msra.mxu0 0.0
    %5621 = vmatprep.mubr.f32.mxu0 0.0
    %5622 = vmatmul.mubr.f32.gmra.mrb[0].mxu0 %v5555
    %v5623 = vpop.f32.mrb[0].mxu0
    %v5624 = vadd.f32 0.0, %v5623
    %v5625 = vpop.f32.mrb[0].mxu0
    %5626 = vdwg.mxu0
    %s5627 = scalar_lea.vmem [#allocation7], 6
    %v5628 = vld [vmem:[%s5627] sm:$0x3]
    %v5631 = vrot.slane %v5624, 7
    %v5632 = vsel %vm3435, %v5631, %v5544
    %5634 = vmatprep.subr.mxu0 %v278
    %5635 = vmatpush1.msra.mxu0 %v277
    %5636 = vmatprep.subr.mxu0 %v281
    %5637 = vmatpush1.msra.mxu0 %v280
    %5638 = vmatprep.subr.mxu0 %v284
    %5639 = vmatpush1.msra.mxu0 %v283
    %5640 = vmatprep.subr.mxu0 %v287
    %5641 = vmatpush1.msra.mxu0 %v286
    %5642 = vmatprep.subr.mxu0 %v290
    %5643 = vmatpush1.msra.mxu0 %v289
    %5644 = vmatprep.subr.mxu0 %v293
    %5645 = vmatpush1.msra.mxu0 %v292
    %5646 = vmatprep.subr.mxu0 %v296
    %5647 = vmatpush1.msra.mxu0 %v295
    %5648 = vmatprep.subr.mxu0 %v299
    %5649 = vmatpush1.msra.mxu0 %v298
    %5650 = vmatprep.subr.mxu0 %v302
    %5651 = vmatpush1.msra.mxu0 %v301
    %5652 = vmatprep.subr.mxu0 %v305
    %5653 = vmatpush1.msra.mxu0 %v304
    %5654 = vmatprep.subr.mxu0 %v308
    %5655 = vmatpush1.msra.mxu0 %v307
    %5656 = vmatprep.subr.mxu0 %v311
    %5657 = vmatpush1.msra.mxu0 %v310
    %5658 = vmatprep.subr.mxu0 %v314
    %5659 = vmatpush1.msra.mxu0 %v313
    %5660 = vmatprep.subr.mxu0 %v317
    %5661 = vmatpush1.msra.mxu0 %v316
    %5662 = vmatprep.subr.mxu0 %v320
    %5663 = vmatpush1.msra.mxu0 %v319
    %5664 = vmatprep.subr.mxu0 %v323
    %5665 = vmatpush1.msra.mxu0 %v322
    %5666 = vmatprep.subr.mxu0 %v326
    %5667 = vmatpush1.msra.mxu0 %v325
    %5668 = vmatprep.subr.mxu0 %v329
    %5669 = vmatpush1.msra.mxu0 %v328
    %5670 = vmatprep.subr.mxu0 %v332
    %5671 = vmatpush1.msra.mxu0 %v331
    %5672 = vmatprep.subr.mxu0 %v335
    %5673 = vmatpush1.msra.mxu0 %v334
    %5674 = vmatprep.subr.mxu0 %v338
    %5675 = vmatpush1.msra.mxu0 %v337
    %5676 = vmatprep.subr.mxu0 %v341
    %5677 = vmatpush1.msra.mxu0 %v340
    %5678 = vmatprep.subr.mxu0 %v344
    %5679 = vmatpush1.msra.mxu0 %v343
    %5680 = vmatprep.subr.mxu0 %v347
    %5681 = vmatpush1.msra.mxu0 %v346
    %5682 = vmatprep.subr.mxu0 %v350
    %5683 = vmatpush1.msra.mxu0 %v349
    %5684 = vmatprep.subr.mxu0 %v353
    %5685 = vmatpush1.msra.mxu0 %v352
    %5686 = vmatprep.subr.mxu0 %v356
    %5687 = vmatpush1.msra.mxu0 %v355
    %5688 = vmatprep.subr.mxu0 %v359
    %5689 = vmatpush1.msra.mxu0 %v358
    %5690 = vmatprep.subr.mxu0 %v362
    %5691 = vmatpush1.msra.mxu0 %v361
    %5692 = vmatprep.subr.mxu0 %v365
    %5693 = vmatpush1.msra.mxu0 %v364
    %5694 = vmatprep.subr.mxu0 %v368
    %5695 = vmatpush1.msra.mxu0 %v367
    %5696 = vmatprep.subr.mxu0 %v371
    %5697 = vmatpush1.msra.mxu0 %v370
    %5698 = vmatprep.mubr.f32.mxu0 %v5632
    %5699 = vmatmul.mubr.f32.gmra.mrb[0].mxu0 %v5628
    %v5700 = vpop.f32.mrb[0].mxu0
    %v5701 = vadd.f32 %v3665, %v5700
    %v5702 = vpop.f32.mrb[0].mxu0
    %v5703 = vadd.f32 %v3669, %v5702
    %5704 = vdwg.mxu0
    %5705 = vmatprep.subr.mxu0 0.0
    %5706 = vmatpush1.msra.mxu0 %v279
    %5707 = vmatprep.subr.mxu0 0.0
    %5708 = vmatpush1.msra.mxu0 %v282
    %5709 = vmatprep.subr.mxu0 0.0
    %5710 = vmatpush1.msra.mxu0 %v285
    %5711 = vmatprep.subr.mxu0 0.0
    %5712 = vmatpush1.msra.mxu0 %v288
    %5713 = vmatprep.subr.mxu0 0.0
    %5714 = vmatpush1.msra.mxu0 %v291
    %5715 = vmatprep.subr.mxu0 0.0
    %5716 = vmatpush1.msra.mxu0 %v294
    %5717 = vmatprep.subr.mxu0 0.0
    %5718 = vmatpush1.msra.mxu0 %v297
    %5719 = vmatprep.subr.mxu0 0.0
    %5720 = vmatpush1.msra.mxu0 %v300
    %5721 = vmatprep.subr.mxu0 0.0
    %5722 = vmatpush1.msra.mxu0 %v303
    %5723 = vmatprep.subr.mxu0 0.0
    %5724 = vmatpush1.msra.mxu0 %v306
    %5725 = vmatprep.subr.mxu0 0.0
    %5726 = vmatpush1.msra.mxu0 %v309
    %5727 = vmatprep.subr.mxu0 0.0
    %5728 = vmatpush1.msra.mxu0 %v312
    %5729 = vmatprep.subr.mxu0 0.0
    %5730 = vmatpush1.msra.mxu0 %v315
    %5731 = vmatprep.subr.mxu0 0.0
    %5732 = vmatpush1.msra.mxu0 %v318
    %5733 = vmatprep.subr.mxu0 0.0
    %5734 = vmatpush1.msra.mxu0 %v321
    %5735 = vmatprep.subr.mxu0 0.0
    %5736 = vmatpush1.msra.mxu0 %v324
    %5737 = vmatprep.subr.mxu0 0.0
    %5738 = vmatpush1.msra.mxu0 %v327
    %5739 = vmatprep.subr.mxu0 0.0
    %5740 = vmatpush1.msra.mxu0 %v330
    %5741 = vmatprep.subr.mxu0 0.0
    %5742 = vmatpush1.msra.mxu0 %v333
    %5743 = vmatprep.subr.mxu0 0.0
    %5744 = vmatpush1.msra.mxu0 %v336
    %5745 = vmatprep.subr.mxu0 0.0
    %5746 = vmatpush1.msra.mxu0 %v339
    %5747 = vmatprep.subr.mxu0 0.0
    %5748 = vmatpush1.msra.mxu0 %v342
    %5749 = vmatprep.subr.mxu0 0.0
    %5750 = vmatpush1.msra.mxu0 %v345
    %5751 = vmatprep.subr.mxu0 0.0
    %5752 = vmatpush1.msra.mxu0 %v348
    %5753 = vmatprep.subr.mxu0 0.0
    %5754 = vmatpush1.msra.mxu0 %v351
    %5755 = vmatprep.subr.mxu0 0.0
    %5756 = vmatpush1.msra.mxu0 %v354
    %5757 = vmatprep.subr.mxu0 0.0
    %5758 = vmatpush1.msra.mxu0 %v357
    %5759 = vmatprep.subr.mxu0 0.0
    %5760 = vmatpush1.msra.mxu0 %v360
    %5761 = vmatprep.subr.mxu0 0.0
    %5762 = vmatpush1.msra.mxu0 %v363
    %5763 = vmatprep.subr.mxu0 0.0
    %5764 = vmatpush1.msra.mxu0 %v366
    %5765 = vmatprep.subr.mxu0 0.0
    %5766 = vmatpush1.msra.mxu0 %v369
    %5767 = vmatprep.subr.mxu0 0.0
    %5768 = vmatpush1.msra.mxu0 %v372
    %5769 = vmatprep.mubr.f32.mxu0 %v5632
    %5770 = vmatmul.mubr.f32.gmra.mrb[0].mxu0 %v5628
    %v5771 = vpop.f32.mrb[0].mxu0
    %v5772 = vadd.f32 %v3673, %v5771
    %v5773 = vpop.f32.mrb[0].mxu0
    %5774 = vdwg.mxu0
    %5775 = vmatprep.subr.mxu0 %v374
    %5776 = vmatpush1.msra.mxu0 %v373
    %5777 = vmatprep.subr.mxu0 %v377
    %5778 = vmatpush1.msra.mxu0 %v376
    %5779 = vmatprep.subr.mxu0 %v380
    %5780 = vmatpush1.msra.mxu0 %v379
    %5781 = vmatprep.subr.mxu0 %v383
    %5782 = vmatpush1.msra.mxu0 %v382
    %5783 = vmatprep.subr.mxu0 %v386
    %5784 = vmatpush1.msra.mxu0 %v385
    %5785 = vmatprep.subr.mxu0 %v389
    %5786 = vmatpush1.msra.mxu0 %v388
    %5787 = vmatprep.subr.mxu0 %v392
    %5788 = vmatpush1.msra.mxu0 %v391
    %5789 = vmatprep.subr.mxu0 %v395
    %5790 = vmatpush1.msra.mxu0 %v394
    %5791 = vmatprep.subr.mxu0 %v398
    %5792 = vmatpush1.msra.mxu0 %v397
    %5793 = vmatprep.subr.mxu0 %v401
    %5794 = vmatpush1.msra.mxu0 %v400
    %5795 = vmatprep.subr.mxu0 %v404
    %5796 = vmatpush1.msra.mxu0 %v403
    %5797 = vmatprep.subr.mxu0 %v407
    %5798 = vmatpush1.msra.mxu0 %v406
    %5799 = vmatprep.subr.mxu0 %v410
    %5800 = vmatpush1.msra.mxu0 %v409
    %5801 = vmatprep.subr.mxu0 %v413
    %5802 = vmatpush1.msra.mxu0 %v412
    %5803 = vmatprep.subr.mxu0 %v416
    %5804 = vmatpush1.msra.mxu0 %v415
    %5805 = vmatprep.subr.mxu0 %v419
    %5806 = vmatpush1.msra.mxu0 %v418
    %5807 = vmatprep.subr.mxu0 0.0
    %5808 = vmatpush1.msra.mxu0 0.0
    %5809 = vmatprep.subr.mxu0 0.0
    %5810 = vmatpush1.msra.mxu0 0.0
    %5811 = vmatprep.subr.mxu0 0.0
    %5812 = vmatpush1.msra.mxu0 0.0
    %5813 = vmatprep.subr.mxu0 0.0
    %5814 = vmatpush1.msra.mxu0 0.0
    %5815 = vmatprep.subr.mxu0 0.0
    %5816 = vmatpush1.msra.mxu0 0.0
    %5817 = vmatprep.subr.mxu0 0.0
    %5818 = vmatpush1.msra.mxu0 0.0
    %5819 = vmatprep.subr.mxu0 0.0
    %5820 = vmatpush1.msra.mxu0 0.0
    %5821 = vmatprep.subr.mxu0 0.0
    %5822 = vmatpush1.msra.mxu0 0.0
    %5823 = vmatprep.subr.mxu0 0.0
    %5824 = vmatpush1.msra.mxu0 0.0
    %5825 = vmatprep.subr.mxu0 0.0
    %5826 = vmatpush1.msra.mxu0 0.0
    %5827 = vmatprep.subr.mxu0 0.0
    %5828 = vmatpush1.msra.mxu0 0.0
    %5829 = vmatprep.subr.mxu0 0.0
    %5830 = vmatpush1.msra.mxu0 0.0
    %5831 = vmatprep.subr.mxu0 0.0
    %5832 = vmatpush1.msra.mxu0 0.0
    %5833 = vmatprep.subr.mxu0 0.0
    %5834 = vmatpush1.msra.mxu0 0.0
    %5835 = vmatprep.subr.mxu0 0.0
    %5836 = vmatpush1.msra.mxu0 0.0
    %5837 = vmatprep.subr.mxu0 0.0
    %5838 = vmatpush1.msra.mxu0 0.0
    %5839 = vmatprep.mubr.f32.mxu0 0.0
    %5840 = vmatmul.mubr.f32.gmra.mrb[0].mxu0 %v5289
    %v5841 = vpop.f32.mrb[0].mxu0
    %v5842 = vadd.f32 %v3822, %v5841
    %v5843 = vpop.f32.mrb[0].mxu0
    %v5844 = vadd.f32 %v3826, %v5843
    %5845 = vdwg.mxu0
    %5846 = vmatprep.subr.mxu0 0.0
    %5847 = vmatpush1.msra.mxu0 %v375
    %5848 = vmatprep.subr.mxu0 0.0
    %5849 = vmatpush1.msra.mxu0 %v378
    %5850 = vmatprep.subr.mxu0 0.0
    %5851 = vmatpush1.msra.mxu0 %v381
    %5852 = vmatprep.subr.mxu0 0.0
    %5853 = vmatpush1.msra.mxu0 %v384
    %5854 = vmatprep.subr.mxu0 0.0
    %5855 = vmatpush1.msra.mxu0 %v387
    %5856 = vmatprep.subr.mxu0 0.0
    %5857 = vmatpush1.msra.mxu0 %v390
    %5858 = vmatprep.subr.mxu0 0.0
    %5859 = vmatpush1.msra.mxu0 %v393
    %5860 = vmatprep.subr.mxu0 0.0
    %5861 = vmatpush1.msra.mxu0 %v396
    %5862 = vmatprep.subr.mxu0 0.0
    %5863 = vmatpush1.msra.mxu0 %v399
    %5864 = vmatprep.subr.mxu0 0.0
    %5865 = vmatpush1.msra.mxu0 %v402
    %5866 = vmatprep.subr.mxu0 0.0
    %5867 = vmatpush1.msra.mxu0 %v405
    %5868 = vmatprep.subr.mxu0 0.0
    %5869 = vmatpush1.msra.mxu0 %v408
    %5870 = vmatprep.subr.mxu0 0.0
    %5871 = vmatpush1.msra.mxu0 %v411
    %5872 = vmatprep.subr.mxu0 0.0
    %5873 = vmatpush1.msra.mxu0 %v414
    %5874 = vmatprep.subr.mxu0 0.0
    %5875 = vmatpush1.msra.mxu0 %v417
    %5876 = vmatprep.subr.mxu0 0.0
    %5877 = vmatpush1.msra.mxu0 %v420
    %5878 = vmatprep.subr.mxu0 0.0
    %5879 = vmatpush1.msra.mxu0 0.0
    %5880 = vmatprep.subr.mxu0 0.0
    %5881 = vmatpush1.msra.mxu0 0.0
    %5882 = vmatprep.subr.mxu0 0.0
    %5883 = vmatpush1.msra.mxu0 0.0
    %5884 = vmatprep.subr.mxu0 0.0
    %5885 = vmatpush1.msra.mxu0 0.0
    %5886 = vmatprep.subr.mxu0 0.0
    %5887 = vmatpush1.msra.mxu0 0.0
    %5888 = vmatprep.subr.mxu0 0.0
    %5889 = vmatpush1.msra.mxu0 0.0
    %5890 = vmatprep.subr.mxu0 0.0
    %5891 = vmatpush1.msra.mxu0 0.0
    %5892 = vmatprep.subr.mxu0 0.0
    %5893 = vmatpush1.msra.mxu0 0.0
    %5894 = vmatprep.subr.mxu0 0.0
    %5895 = vmatpush1.msra.mxu0 0.0
    %5896 = vmatprep.subr.mxu0 0.0
    %5897 = vmatpush1.msra.mxu0 0.0
    %5898 = vmatprep.subr.mxu0 0.0
    %5899 = vmatpush1.msra.mxu0 0.0
    %5900 = vmatprep.subr.mxu0 0.0
    %5901 = vmatpush1.msra.mxu0 0.0
    %5902 = vmatprep.subr.mxu0 0.0
    %5903 = vmatpush1.msra.mxu0 0.0
    %5904 = vmatprep.subr.mxu0 0.0
    %5905 = vmatpush1.msra.mxu0 0.0
    %5906 = vmatprep.subr.mxu0 0.0
    %5907 = vmatpush1.msra.mxu0 0.0
    %5908 = vmatprep.subr.mxu0 0.0
    %5909 = vmatpush1.msra.mxu0 0.0
    %5910 = vmatprep.mubr.f32.mxu0 0.0
    %5911 = vmatmul.mubr.f32.gmra.mrb[0].mxu0 %v5289
    %v5912 = vpop.f32.mrb[0].mxu0
    %v5913 = vadd.f32 %v3830, %v5912
    %v5914 = vpop.f32.mrb[0].mxu0
    %5915 = vdwg.mxu0
    %v5916 = vadd.f32 %v5701, %v5842
    %v5917 = vxor.u32 %v5916, 2147483648
    %v5918 = vmul.f32 %v5917, 1.442695
    %v5919 = vpow.pop %v5918
    %v5920 = vadd.f32 %v5919, 1.0
    %v5921 = vrcp.pop %v5920
    %v5922 = vmul.f32 1.0, %v5921
    %v5923 = vadd.f32 %v5703, %v5844
    %v5924 = vxor.u32 %v5923, 2147483648
    %v5925 = vmul.f32 %v5924, 1.442695
    %v5926 = vpow.pop %v5925
    %v5927 = vadd.f32 %v5926, 1.0
    %v5928 = vrcp.pop %v5927
    %v5929 = vmul.f32 1.0, %v5928
    %v5930 = vmul.f32 %v5922, %v5913
    %v5931 = vadd.f32 %v5772, %v5930
    %v5932 = vtanh.pop %v5931
    %v5933 = vsub.f32 1.0, %v5929
    %v5934 = vmul.f32 %v5933, %v5932
    %v5935 = vmul.f32 %v5929, %v5289
    %v5936 = vadd.f32 %v5934, %v5935
    %5937 = vst [vmem:[#allocation3 + $0x6] sm:$0x3] %v5936
    %5938 = vmatprep.subr.mxu0 0.0
    %5939 = vmatpush1.msra.mxu0 %v440
    %5940 = vmatprep.subr.mxu0 0.0
    %5941 = vmatpush1.msra.mxu0 %v441
    %5942 = vmatprep.subr.mxu0 0.0
    %5943 = vmatpush1.msra.mxu0 %v442
    %5944 = vmatprep.subr.mxu0 0.0
    %5945 = vmatpush1.msra.mxu0 %v443
    %5946 = vmatprep.subr.mxu0 0.0
    %5947 = vmatpush1.msra.mxu0 %v444
    %5948 = vmatprep.subr.mxu0 0.0
    %5949 = vmatpush1.msra.mxu0 %v445
    %5950 = vmatprep.subr.mxu0 0.0
    %5951 = vmatpush1.msra.mxu0 %v446
    %5952 = vmatprep.subr.mxu0 0.0
    %5953 = vmatpush1.msra.mxu0 %v447
    %5954 = vmatprep.subr.mxu0 0.0
    %5955 = vmatpush1.msra.mxu0 %v448
    %5956 = vmatprep.subr.mxu0 0.0
    %5957 = vmatpush1.msra.mxu0 %v449
    %5958 = vmatprep.subr.mxu0 0.0
    %5959 = vmatpush1.msra.mxu0 %v450
    %5960 = vmatprep.subr.mxu0 0.0
    %5961 = vmatpush1.msra.mxu0 %v451
    %5962 = vmatprep.subr.mxu0 0.0
    %5963 = vmatpush1.msra.mxu0 %v452
    %5964 = vmatprep.subr.mxu0 0.0
    %5965 = vmatpush1.msra.mxu0 %v453
    %5966 = vmatprep.subr.mxu0 0.0
    %5967 = vmatpush1.msra.mxu0 %v454
    %5968 = vmatprep.subr.mxu0 0.0
    %5969 = vmatpush1.msra.mxu0 %v455
    %5970 = vmatprep.subr.mxu0 0.0
    %5971 = vmatpush1.msra.mxu0 0.0
    %5972 = vmatprep.subr.mxu0 0.0
    %5973 = vmatpush1.msra.mxu0 0.0
    %5974 = vmatprep.subr.mxu0 0.0
    %5975 = vmatpush1.msra.mxu0 0.0
    %5976 = vmatprep.subr.mxu0 0.0
    %5977 = vmatpush1.msra.mxu0 0.0
    %5978 = vmatprep.subr.mxu0 0.0
    %5979 = vmatpush1.msra.mxu0 0.0
    %5980 = vmatprep.subr.mxu0 0.0
    %5981 = vmatpush1.msra.mxu0 0.0
    %5982 = vmatprep.subr.mxu0 0.0
    %5983 = vmatpush1.msra.mxu0 0.0
    %5984 = vmatprep.subr.mxu0 0.0
    %5985 = vmatpush1.msra.mxu0 0.0
    %5986 = vmatprep.subr.mxu0 0.0
    %5987 = vmatpush1.msra.mxu0 0.0
    %5988 = vmatprep.subr.mxu0 0.0
    %5989 = vmatpush1.msra.mxu0 0.0
    %5990 = vmatprep.subr.mxu0 0.0
    %5991 = vmatpush1.msra.mxu0 0.0
    %5992 = vmatprep.subr.mxu0 0.0
    %5993 = vmatpush1.msra.mxu0 0.0
    %5994 = vmatprep.subr.mxu0 0.0
    %5995 = vmatpush1.msra.mxu0 0.0
    %5996 = vmatprep.subr.mxu0 0.0
    %5997 = vmatpush1.msra.mxu0 0.0
    %5998 = vmatprep.subr.mxu0 0.0
    %5999 = vmatpush1.msra.mxu0 0.0
    %6000 = vmatprep.subr.mxu0 0.0
    %6001 = vmatpush1.msra.mxu0 0.0
    %6002 = vmatprep.mubr.f32.mxu0 0.0
    %6003 = vmatmul.mubr.f32.gmra.mrb[0].mxu0 %v5936
    %v6004 = vpop.f32.mrb[0].mxu0
    %v6005 = vadd.f32 %v3312, %v6004
    %v6006 = vpop.f32.mrb[0].mxu0
    %6007 = vdwg.mxu0
    %v6010 = vunpack.c.l.s4 1966171168
    %v6011 = vunpack.c.0.s8 %v6010
    %v6012 = vlaneseq
    %v6013 = vshrl.u32 %v6012, 7
    %v6014 = vsub.s32 %v6011, %v6013
    %v6015 = vrot.slane %v6005, %v6014
    %v6016 = vcombine.high %v6015, %v6015
    %v6018 = vunpack.c.l.s4 1966171168
    %v6019 = vunpack.c.0.s8 %v6018
    %v6020 = vlaneseq
    %v6021 = vshrl.u32 %v6020, 7
    %v6022 = vsub.s32 %v6019, %v6021
    %v6023 = vrot.slane %v6015, %v6022
    %v6025 = vunpack.c.l.s4 1966171168
    %v6026 = vunpack.c.0.s8 %v6025
    %v6027 = vlaneseq
    %v6028 = vshrl.u32 %v6027, 7
    %v6029 = vsub.s32 %v6026, %v6028
    %v6030 = vrot.slane %v6016, %v6029
    %v6031 = vlaneseq
    %v6032 = vshrl.u32 %v6031, 7
    %v6033 = vsub.s32 0, %v6032
    %v6034 = vrot.slane %v6023, %v6033
    %v6035 = vlaneseq
    %v6036 = vshrl.u32 %v6035, 7
    %v6037 = vsub.s32 0, %v6036
    %v6038 = vrot.slane %v6030, %v6037
    %v6041 = vmul.f32 %v3300, %v6034
    %v6042 = vmul.f32 %v3305, %v6038
    %6043 = vadd.xlane.f32.xlu0 %v6041
    %v6044 = vpop.xlane.xlu0 %6043
    %6045 = vadd.xlane.f32.xlu0 %v6042
    %v6046 = vpop.xlane.xlu0 %6045
    %v6049 = vlaneseq
    %v6050 = vshrl.u32 %v6049, 7
    %v6051 = vsub.s32 %v3426, %v6050
    %v6052 = vrot.slane %v6044, %v6051
    %v6053 = vlaneseq
    %v6054 = vshrl.u32 %v6053, 7
    %v6055 = vsub.s32 %v3426, %v6054
    %v6056 = vrot.slane %v6046, %v6055
    %v6057 = vsel %vm3435, %v6056, %v6052
    %v6059 = vsel %vm3438, %v6057, -inf
    %6060 = vmax.xlane.f32.xlu0 %v6059
    %v6061 = vpop.xlane.xlu0 %6060
    %v6063 = vlaneseq
    %v6064 = vshrl.u32 %v6063, 7
    %v6065 = vsub.s32 0, %v6064
    %v6066 = vrot.slane %v6061, %v6065
    %v6067 = vlaneseq
    %v6068 = vshrl.u32 %v6067, 7
    %v6069 = vsub.s32 1, %v6068
    %v6070 = vrot.slane %v6061, %v6069
    %v6073 = vsub.f32 %v6044, %v6066
    %v6074 = vsub.f32 %v6046, %v6070
    %v6075 = vmul.f32 %v6073, 1.442695
    %v6076 = vpow.pop %v6075
    %v6077 = vmul.f32 %v6074, 1.442695
    %v6078 = vpow.pop %v6077
    %6081 = vset.pattern.permute.xlu0 0
    %6082 = vperm.xlu0 %6081, %v6076
    %v6083 = vpop.permute.xlu0 %6082
    %6084 = vset.pattern.permute.xlu0 0
    %6085 = vperm.xlu0 %6084, %v6078
    %v6086 = vpop.permute.xlu0 %6085
    %v6087 = vlaneseq
    %v6088 = vshrl.u32 %v6087, 7
    %v6089 = vsub.s32 %v3426, %v6088
    %v6090 = vrot.slane %v6083, %v6089
    %v6091 = vlaneseq
    %v6092 = vshrl.u32 %v6091, 7
    %v6093 = vsub.s32 %v3426, %v6092
    %v6094 = vrot.slane %v6086, %v6093
    %v6095 = vsel %vm3435, %v6094, %v6090
    %v6097 = vsel %vm3438, %v6095, 0.0
    %6098 = vadd.xlane.f32.xlu0 %v6097
    %v6099 = vpop.xlane.xlu0 %6098
    %v6100 = vrcp.pop %v6099
    %v6102 = vlaneseq
    %v6103 = vshrl.u32 %v6102, 7
    %v6104 = vsub.s32 0, %v6103
    %v6105 = vrot.slane %v6100, %v6104
    %v6106 = vlaneseq
    %v6107 = vshrl.u32 %v6106, 7
    %v6108 = vsub.s32 1, %v6107
    %v6109 = vrot.slane %v6100, %v6108
    %v6112 = vmul.f32 %v6076, %v6105
    %v6113 = vmul.f32 %v6078, %v6109
    %6115 = vset.pattern.permute.xlu0 0
    %6116 = vperm.xlu0 %6115, %v6112
    %v6117 = vpop.permute.xlu0 %6116
    %v6118 = vlaneseq
    %v6119 = vshrl.u32 %v6118, 7
    %v6120 = vsub.s32 %v3426, %v6119
    %v6121 = vrot.slane %v6117, %v6120
    %v6122 = vsel %vm3502, %v6121, 0
    %6124 = vmatprep.subr.mxu0 0.0
    %6125 = vmatpush1.msra.mxu0 %v3225
    %6126 = vmatprep.subr.mxu0 0.0
    %6127 = vmatpush1.msra.mxu0 0.0
    %6128 = vmatprep.subr.mxu0 0.0
    %6129 = vmatpush1.msra.mxu0 0.0
    %6130 = vmatprep.subr.mxu0 0.0
    %6131 = vmatpush1.msra.mxu0 0.0
    %6132 = vmatprep.subr.mxu0 0.0
    %6133 = vmatpush1.msra.mxu0 0.0
    %6134 = vmatprep.subr.mxu0 0.0
    %6135 = vmatpush1.msra.mxu0 0.0
    %6136 = vmatprep.subr.mxu0 0.0
    %6137 = vmatpush1.msra.mxu0 0.0
    %6138 = vmatprep.subr.mxu0 0.0
    %6139 = vmatpush1.msra.mxu0 0.0
    %6140 = vmatprep.subr.mxu0 0.0
    %6141 = vmatpush1.msra.mxu0 0.0
    %6142 = vmatprep.subr.mxu0 0.0
    %6143 = vmatpush1.msra.mxu0 0.0
    %6144 = vmatprep.subr.mxu0 0.0
    %6145 = vmatpush1.msra.mxu0 0.0
    %6146 = vmatprep.subr.mxu0 0.0
    %6147 = vmatpush1.msra.mxu0 0.0
    %6148 = vmatprep.subr.mxu0 0.0
    %6149 = vmatpush1.msra.mxu0 0.0
    %6150 = vmatprep.subr.mxu0 0.0
    %6151 = vmatpush1.msra.mxu0 0.0
    %6152 = vmatprep.subr.mxu0 0.0
    %6153 = vmatpush1.msra.mxu0 0.0
    %6154 = vmatprep.subr.mxu0 0.0
    %6155 = vmatpush1.msra.mxu0 0.0
    %6156 = vmatprep.subr.mxu0 0.0
    %6157 = vmatpush1.msra.mxu0 0.0
    %6158 = vmatprep.subr.mxu0 0.0
    %6159 = vmatpush1.msra.mxu0 0.0
    %6160 = vmatprep.subr.mxu0 0.0
    %6161 = vmatpush1.msra.mxu0 0.0
    %6162 = vmatprep.subr.mxu0 0.0
    %6163 = vmatpush1.msra.mxu0 0.0
    %6164 = vmatprep.subr.mxu0 0.0
    %6165 = vmatpush1.msra.mxu0 0.0
    %6166 = vmatprep.subr.mxu0 0.0
    %6167 = vmatpush1.msra.mxu0 0.0
    %6168 = vmatprep.subr.mxu0 0.0
    %6169 = vmatpush1.msra.mxu0 0.0
    %6170 = vmatprep.subr.mxu0 0.0
    %6171 = vmatpush1.msra.mxu0 0.0
    %6172 = vmatprep.subr.mxu0 0.0
    %6173 = vmatpush1.msra.mxu0 0.0
    %6174 = vmatprep.subr.mxu0 0.0
    %6175 = vmatpush1.msra.mxu0 0.0
    %6176 = vmatprep.subr.mxu0 0.0
    %6177 = vmatpush1.msra.mxu0 0.0
    %6178 = vmatprep.subr.mxu0 0.0
    %6179 = vmatpush1.msra.mxu0 0.0
    %6180 = vmatprep.subr.mxu0 0.0
    %6181 = vmatpush1.msra.mxu0 0.0
    %6182 = vmatprep.subr.mxu0 0.0
    %6183 = vmatpush1.msra.mxu0 0.0
    %6184 = vmatprep.subr.mxu0 0.0
    %6185 = vmatpush1.msra.mxu0 0.0
    %6186 = vmatprep.subr.mxu0 0.0
    %6187 = vmatpush1.msra.mxu0 0.0
    %6188 = vmatprep.mubr.f32.mxu0 0.0
    %6189 = vmatmul.mubr.f32.gmra.mrb[0].mxu0 %v6122
    %v6190 = vpop.f32.mrb[0].mxu0
    %v6191 = vadd.f32 0.0, %v6190
    %v6192 = vpop.f32.mrb[0].mxu0
    %6193 = vdwg.mxu0
    %6195 = vset.pattern.permute.xlu0 0
    %6196 = vperm.xlu0 %6195, %v6113
    %v6197 = vpop.permute.xlu0 %6196
    %v6198 = vlaneseq
    %v6199 = vshrl.u32 %v6198, 7
    %v6200 = vsub.s32 %v3426, %v6199
    %v6201 = vrot.slane %v6197, %v6200
    %v6202 = vsel %vm3502, %v6201, 0
    %6204 = vmatprep.subr.mxu0 0.0
    %6205 = vmatpush1.msra.mxu0 %v3226
    %6206 = vmatprep.subr.mxu0 0.0
    %6207 = vmatpush1.msra.mxu0 0.0
    %6208 = vmatprep.subr.mxu0 0.0
    %6209 = vmatpush1.msra.mxu0 0.0
    %6210 = vmatprep.subr.mxu0 0.0
    %6211 = vmatpush1.msra.mxu0 0.0
    %6212 = vmatprep.subr.mxu0 0.0
    %6213 = vmatpush1.msra.mxu0 0.0
    %6214 = vmatprep.subr.mxu0 0.0
    %6215 = vmatpush1.msra.mxu0 0.0
    %6216 = vmatprep.subr.mxu0 0.0
    %6217 = vmatpush1.msra.mxu0 0.0
    %6218 = vmatprep.subr.mxu0 0.0
    %6219 = vmatpush1.msra.mxu0 0.0
    %6220 = vmatprep.subr.mxu0 0.0
    %6221 = vmatpush1.msra.mxu0 0.0
    %6222 = vmatprep.subr.mxu0 0.0
    %6223 = vmatpush1.msra.mxu0 0.0
    %6224 = vmatprep.subr.mxu0 0.0
    %6225 = vmatpush1.msra.mxu0 0.0
    %6226 = vmatprep.subr.mxu0 0.0
    %6227 = vmatpush1.msra.mxu0 0.0
    %6228 = vmatprep.subr.mxu0 0.0
    %6229 = vmatpush1.msra.mxu0 0.0
    %6230 = vmatprep.subr.mxu0 0.0
    %6231 = vmatpush1.msra.mxu0 0.0
    %6232 = vmatprep.subr.mxu0 0.0
    %6233 = vmatpush1.msra.mxu0 0.0
    %6234 = vmatprep.subr.mxu0 0.0
    %6235 = vmatpush1.msra.mxu0 0.0
    %6236 = vmatprep.subr.mxu0 0.0
    %6237 = vmatpush1.msra.mxu0 0.0
    %6238 = vmatprep.subr.mxu0 0.0
    %6239 = vmatpush1.msra.mxu0 0.0
    %6240 = vmatprep.subr.mxu0 0.0
    %6241 = vmatpush1.msra.mxu0 0.0
    %6242 = vmatprep.subr.mxu0 0.0
    %6243 = vmatpush1.msra.mxu0 0.0
    %6244 = vmatprep.subr.mxu0 0.0
    %6245 = vmatpush1.msra.mxu0 0.0
    %6246 = vmatprep.subr.mxu0 0.0
    %6247 = vmatpush1.msra.mxu0 0.0
    %6248 = vmatprep.subr.mxu0 0.0
    %6249 = vmatpush1.msra.mxu0 0.0
    %6250 = vmatprep.subr.mxu0 0.0
    %6251 = vmatpush1.msra.mxu0 0.0
    %6252 = vmatprep.subr.mxu0 0.0
    %6253 = vmatpush1.msra.mxu0 0.0
    %6254 = vmatprep.subr.mxu0 0.0
    %6255 = vmatpush1.msra.mxu0 0.0
    %6256 = vmatprep.subr.mxu0 0.0
    %6257 = vmatpush1.msra.mxu0 0.0
    %6258 = vmatprep.subr.mxu0 0.0
    %6259 = vmatpush1.msra.mxu0 0.0
    %6260 = vmatprep.subr.mxu0 0.0
    %6261 = vmatpush1.msra.mxu0 0.0
    %6262 = vmatprep.subr.mxu0 0.0
    %6263 = vmatpush1.msra.mxu0 0.0
    %6264 = vmatprep.subr.mxu0 0.0
    %6265 = vmatpush1.msra.mxu0 0.0
    %6266 = vmatprep.subr.mxu0 0.0
    %6267 = vmatpush1.msra.mxu0 0.0
    %6268 = vmatprep.mubr.f32.mxu0 0.0
    %6269 = vmatmul.mubr.f32.gmra.mrb[0].mxu0 %v6202
    %v6270 = vpop.f32.mrb[0].mxu0
    %v6271 = vadd.f32 0.0, %v6270
    %v6272 = vpop.f32.mrb[0].mxu0
    %6273 = vdwg.mxu0
    %s6274 = scalar_lea.vmem [#allocation7], 8
    %v6275 = vld [vmem:[%s6274] sm:$0x3]
    %v6278 = vrot.slane %v6271, 7
    %v6279 = vsel %vm3435, %v6278, %v6191
    %6281 = vmatprep.subr.mxu0 %v278
    %6282 = vmatpush1.msra.mxu0 %v277
    %6283 = vmatprep.subr.mxu0 %v281
    %6284 = vmatpush1.msra.mxu0 %v280
    %6285 = vmatprep.subr.mxu0 %v284
    %6286 = vmatpush1.msra.mxu0 %v283
    %6287 = vmatprep.subr.mxu0 %v287
    %6288 = vmatpush1.msra.mxu0 %v286
    %6289 = vmatprep.subr.mxu0 %v290
    %6290 = vmatpush1.msra.mxu0 %v289
    %6291 = vmatprep.subr.mxu0 %v293
    %6292 = vmatpush1.msra.mxu0 %v292
    %6293 = vmatprep.subr.mxu0 %v296
    %6294 = vmatpush1.msra.mxu0 %v295
    %6295 = vmatprep.subr.mxu0 %v299
    %6296 = vmatpush1.msra.mxu0 %v298
    %6297 = vmatprep.subr.mxu0 %v302
    %6298 = vmatpush1.msra.mxu0 %v301
    %6299 = vmatprep.subr.mxu0 %v305
    %6300 = vmatpush1.msra.mxu0 %v304
    %6301 = vmatprep.subr.mxu0 %v308
    %6302 = vmatpush1.msra.mxu0 %v307
    %6303 = vmatprep.subr.mxu0 %v311
    %6304 = vmatpush1.msra.mxu0 %v310
    %6305 = vmatprep.subr.mxu0 %v314
    %6306 = vmatpush1.msra.mxu0 %v313
    %6307 = vmatprep.subr.mxu0 %v317
    %6308 = vmatpush1.msra.mxu0 %v316
    %6309 = vmatprep.subr.mxu0 %v320
    %6310 = vmatpush1.msra.mxu0 %v319
    %6311 = vmatprep.subr.mxu0 %v323
    %6312 = vmatpush1.msra.mxu0 %v322
    %6313 = vmatprep.subr.mxu0 %v326
    %6314 = vmatpush1.msra.mxu0 %v325
    %6315 = vmatprep.subr.mxu0 %v329
    %6316 = vmatpush1.msra.mxu0 %v328
    %6317 = vmatprep.subr.mxu0 %v332
    %6318 = vmatpush1.msra.mxu0 %v331
    %6319 = vmatprep.subr.mxu0 %v335
    %6320 = vmatpush1.msra.mxu0 %v334
    %6321 = vmatprep.subr.mxu0 %v338
    %6322 = vmatpush1.msra.mxu0 %v337
    %6323 = vmatprep.subr.mxu0 %v341
    %6324 = vmatpush1.msra.mxu0 %v340
    %6325 = vmatprep.subr.mxu0 %v344
    %6326 = vmatpush1.msra.mxu0 %v343
    %6327 = vmatprep.subr.mxu0 %v347
    %6328 = vmatpush1.msra.mxu0 %v346
    %6329 = vmatprep.subr.mxu0 %v350
    %6330 = vmatpush1.msra.mxu0 %v349
    %6331 = vmatprep.subr.mxu0 %v353
    %6332 = vmatpush1.msra.mxu0 %v352
    %6333 = vmatprep.subr.mxu0 %v356
    %6334 = vmatpush1.msra.mxu0 %v355
    %6335 = vmatprep.subr.mxu0 %v359
    %6336 = vmatpush1.msra.mxu0 %v358
    %6337 = vmatprep.subr.mxu0 %v362
    %6338 = vmatpush1.msra.mxu0 %v361
    %6339 = vmatprep.subr.mxu0 %v365
    %6340 = vmatpush1.msra.mxu0 %v364
    %6341 = vmatprep.subr.mxu0 %v368
    %6342 = vmatpush1.msra.mxu0 %v367
    %6343 = vmatprep.subr.mxu0 %v371
    %6344 = vmatpush1.msra.mxu0 %v370
    %6345 = vmatprep.mubr.f32.mxu0 %v6279
    %6346 = vmatmul.mubr.f32.gmra.mrb[0].mxu0 %v6275
    %v6347 = vpop.f32.mrb[0].mxu0
    %v6348 = vadd.f32 %v3665, %v6347
    %v6349 = vpop.f32.mrb[0].mxu0
    %v6350 = vadd.f32 %v3669, %v6349
    %6351 = vdwg.mxu0
    %6352 = vmatprep.subr.mxu0 0.0
    %6353 = vmatpush1.msra.mxu0 %v279
    %6354 = vmatprep.subr.mxu0 0.0
    %6355 = vmatpush1.msra.mxu0 %v282
    %6356 = vmatprep.subr.mxu0 0.0
    %6357 = vmatpush1.msra.mxu0 %v285
    %6358 = vmatprep.subr.mxu0 0.0
    %6359 = vmatpush1.msra.mxu0 %v288
    %6360 = vmatprep.subr.mxu0 0.0
    %6361 = vmatpush1.msra.mxu0 %v291
    %6362 = vmatprep.subr.mxu0 0.0
    %6363 = vmatpush1.msra.mxu0 %v294
    %6364 = vmatprep.subr.mxu0 0.0
    %6365 = vmatpush1.msra.mxu0 %v297
    %6366 = vmatprep.subr.mxu0 0.0
    %6367 = vmatpush1.msra.mxu0 %v300
    %6368 = vmatprep.subr.mxu0 0.0
    %6369 = vmatpush1.msra.mxu0 %v303
    %6370 = vmatprep.subr.mxu0 0.0
    %6371 = vmatpush1.msra.mxu0 %v306
    %6372 = vmatprep.subr.mxu0 0.0
    %6373 = vmatpush1.msra.mxu0 %v309
    %6374 = vmatprep.subr.mxu0 0.0
    %6375 = vmatpush1.msra.mxu0 %v312
    %6376 = vmatprep.subr.mxu0 0.0
    %6377 = vmatpush1.msra.mxu0 %v315
    %6378 = vmatprep.subr.mxu0 0.0
    %6379 = vmatpush1.msra.mxu0 %v318
    %6380 = vmatprep.subr.mxu0 0.0
    %6381 = vmatpush1.msra.mxu0 %v321
    %6382 = vmatprep.subr.mxu0 0.0
    %6383 = vmatpush1.msra.mxu0 %v324
    %6384 = vmatprep.subr.mxu0 0.0
    %6385 = vmatpush1.msra.mxu0 %v327
    %6386 = vmatprep.subr.mxu0 0.0
    %6387 = vmatpush1.msra.mxu0 %v330
    %6388 = vmatprep.subr.mxu0 0.0
    %6389 = vmatpush1.msra.mxu0 %v333
    %6390 = vmatprep.subr.mxu0 0.0
    %6391 = vmatpush1.msra.mxu0 %v336
    %6392 = vmatprep.subr.mxu0 0.0
    %6393 = vmatpush1.msra.mxu0 %v339
    %6394 = vmatprep.subr.mxu0 0.0
    %6395 = vmatpush1.msra.mxu0 %v342
    %6396 = vmatprep.subr.mxu0 0.0
    %6397 = vmatpush1.msra.mxu0 %v345
    %6398 = vmatprep.subr.mxu0 0.0
    %6399 = vmatpush1.msra.mxu0 %v348
    %6400 = vmatprep.subr.mxu0 0.0
    %6401 = vmatpush1.msra.mxu0 %v351
    %6402 = vmatprep.subr.mxu0 0.0
    %6403 = vmatpush1.msra.mxu0 %v354
    %6404 = vmatprep.subr.mxu0 0.0
    %6405 = vmatpush1.msra.mxu0 %v357
    %6406 = vmatprep.subr.mxu0 0.0
    %6407 = vmatpush1.msra.mxu0 %v360
    %6408 = vmatprep.subr.mxu0 0.0
    %6409 = vmatpush1.msra.mxu0 %v363
    %6410 = vmatprep.subr.mxu0 0.0
    %6411 = vmatpush1.msra.mxu0 %v366
    %6412 = vmatprep.subr.mxu0 0.0
    %6413 = vmatpush1.msra.mxu0 %v369
    %6414 = vmatprep.subr.mxu0 0.0
    %6415 = vmatpush1.msra.mxu0 %v372
    %6416 = vmatprep.mubr.f32.mxu0 %v6279
    %6417 = vmatmul.mubr.f32.gmra.mrb[0].mxu0 %v6275
    %v6418 = vpop.f32.mrb[0].mxu0
    %v6419 = vadd.f32 %v3673, %v6418
    %v6420 = vpop.f32.mrb[0].mxu0
    %6421 = vdwg.mxu0
    %6422 = vmatprep.subr.mxu0 %v374
    %6423 = vmatpush1.msra.mxu0 %v373
    %6424 = vmatprep.subr.mxu0 %v377
    %6425 = vmatpush1.msra.mxu0 %v376
    %6426 = vmatprep.subr.mxu0 %v380
    %6427 = vmatpush1.msra.mxu0 %v379
    %6428 = vmatprep.subr.mxu0 %v383
    %6429 = vmatpush1.msra.mxu0 %v382
    %6430 = vmatprep.subr.mxu0 %v386
    %6431 = vmatpush1.msra.mxu0 %v385
    %6432 = vmatprep.subr.mxu0 %v389
    %6433 = vmatpush1.msra.mxu0 %v388
    %6434 = vmatprep.subr.mxu0 %v392
    %6435 = vmatpush1.msra.mxu0 %v391
    %6436 = vmatprep.subr.mxu0 %v395
    %6437 = vmatpush1.msra.mxu0 %v394
    %6438 = vmatprep.subr.mxu0 %v398
    %6439 = vmatpush1.msra.mxu0 %v397
    %6440 = vmatprep.subr.mxu0 %v401
    %6441 = vmatpush1.msra.mxu0 %v400
    %6442 = vmatprep.subr.mxu0 %v404
    %6443 = vmatpush1.msra.mxu0 %v403
    %6444 = vmatprep.subr.mxu0 %v407
    %6445 = vmatpush1.msra.mxu0 %v406
    %6446 = vmatprep.subr.mxu0 %v410
    %6447 = vmatpush1.msra.mxu0 %v409
    %6448 = vmatprep.subr.mxu0 %v413
    %6449 = vmatpush1.msra.mxu0 %v412
    %6450 = vmatprep.subr.mxu0 %v416
    %6451 = vmatpush1.msra.mxu0 %v415
    %6452 = vmatprep.subr.mxu0 %v419
    %6453 = vmatpush1.msra.mxu0 %v418
    %6454 = vmatprep.subr.mxu0 0.0
    %6455 = vmatpush1.msra.mxu0 0.0
    %6456 = vmatprep.subr.mxu0 0.0
    %6457 = vmatpush1.msra.mxu0 0.0
    %6458 = vmatprep.subr.mxu0 0.0
    %6459 = vmatpush1.msra.mxu0 0.0
    %6460 = vmatprep.subr.mxu0 0.0
    %6461 = vmatpush1.msra.mxu0 0.0
    %6462 = vmatprep.subr.mxu0 0.0
    %6463 = vmatpush1.msra.mxu0 0.0
    %6464 = vmatprep.subr.mxu0 0.0
    %6465 = vmatpush1.msra.mxu0 0.0
    %6466 = vmatprep.subr.mxu0 0.0
    %6467 = vmatpush1.msra.mxu0 0.0
    %6468 = vmatprep.subr.mxu0 0.0
    %6469 = vmatpush1.msra.mxu0 0.0
    %6470 = vmatprep.subr.mxu0 0.0
    %6471 = vmatpush1.msra.mxu0 0.0
    %6472 = vmatprep.subr.mxu0 0.0
    %6473 = vmatpush1.msra.mxu0 0.0
    %6474 = vmatprep.subr.mxu0 0.0
    %6475 = vmatpush1.msra.mxu0 0.0
    %6476 = vmatprep.subr.mxu0 0.0
    %6477 = vmatpush1.msra.mxu0 0.0
    %6478 = vmatprep.subr.mxu0 0.0
    %6479 = vmatpush1.msra.mxu0 0.0
    %6480 = vmatprep.subr.mxu0 0.0
    %6481 = vmatpush1.msra.mxu0 0.0
    %6482 = vmatprep.subr.mxu0 0.0
    %6483 = vmatpush1.msra.mxu0 0.0
    %6484 = vmatprep.subr.mxu0 0.0
    %6485 = vmatpush1.msra.mxu0 0.0
    %6486 = vmatprep.mubr.f32.mxu0 0.0
    %6487 = vmatmul.mubr.f32.gmra.mrb[0].mxu0 %v5936
    %v6488 = vpop.f32.mrb[0].mxu0
    %v6489 = vadd.f32 %v3822, %v6488
    %v6490 = vpop.f32.mrb[0].mxu0
    %v6491 = vadd.f32 %v3826, %v6490
    %6492 = vdwg.mxu0
    %6493 = vmatprep.subr.mxu0 0.0
    %6494 = vmatpush1.msra.mxu0 %v375
    %6495 = vmatprep.subr.mxu0 0.0
    %6496 = vmatpush1.msra.mxu0 %v378
    %6497 = vmatprep.subr.mxu0 0.0
    %6498 = vmatpush1.msra.mxu0 %v381
    %6499 = vmatprep.subr.mxu0 0.0
    %6500 = vmatpush1.msra.mxu0 %v384
    %6501 = vmatprep.subr.mxu0 0.0
    %6502 = vmatpush1.msra.mxu0 %v387
    %6503 = vmatprep.subr.mxu0 0.0
    %6504 = vmatpush1.msra.mxu0 %v390
    %6505 = vmatprep.subr.mxu0 0.0
    %6506 = vmatpush1.msra.mxu0 %v393
    %6507 = vmatprep.subr.mxu0 0.0
    %6508 = vmatpush1.msra.mxu0 %v396
    %6509 = vmatprep.subr.mxu0 0.0
    %6510 = vmatpush1.msra.mxu0 %v399
    %6511 = vmatprep.subr.mxu0 0.0
    %6512 = vmatpush1.msra.mxu0 %v402
    %6513 = vmatprep.subr.mxu0 0.0
    %6514 = vmatpush1.msra.mxu0 %v405
    %6515 = vmatprep.subr.mxu0 0.0
    %6516 = vmatpush1.msra.mxu0 %v408
    %6517 = vmatprep.subr.mxu0 0.0
    %6518 = vmatpush1.msra.mxu0 %v411
    %6519 = vmatprep.subr.mxu0 0.0
    %6520 = vmatpush1.msra.mxu0 %v414
    %6521 = vmatprep.subr.mxu0 0.0
    %6522 = vmatpush1.msra.mxu0 %v417
    %6523 = vmatprep.subr.mxu0 0.0
    %6524 = vmatpush1.msra.mxu0 %v420
    %6525 = vmatprep.subr.mxu0 0.0
    %6526 = vmatpush1.msra.mxu0 0.0
    %6527 = vmatprep.subr.mxu0 0.0
    %6528 = vmatpush1.msra.mxu0 0.0
    %6529 = vmatprep.subr.mxu0 0.0
    %6530 = vmatpush1.msra.mxu0 0.0
    %6531 = vmatprep.subr.mxu0 0.0
    %6532 = vmatpush1.msra.mxu0 0.0
    %6533 = vmatprep.subr.mxu0 0.0
    %6534 = vmatpush1.msra.mxu0 0.0
    %6535 = vmatprep.subr.mxu0 0.0
    %6536 = vmatpush1.msra.mxu0 0.0
    %6537 = vmatprep.subr.mxu0 0.0
    %6538 = vmatpush1.msra.mxu0 0.0
    %6539 = vmatprep.subr.mxu0 0.0
    %6540 = vmatpush1.msra.mxu0 0.0
    %6541 = vmatprep.subr.mxu0 0.0
    %6542 = vmatpush1.msra.mxu0 0.0
    %6543 = vmatprep.subr.mxu0 0.0
    %6544 = vmatpush1.msra.mxu0 0.0
    %6545 = vmatprep.subr.mxu0 0.0
    %6546 = vmatpush1.msra.mxu0 0.0
    %6547 = vmatprep.subr.mxu0 0.0
    %6548 = vmatpush1.msra.mxu0 0.0
    %6549 = vmatprep.subr.mxu0 0.0
    %6550 = vmatpush1.msra.mxu0 0.0
    %6551 = vmatprep.subr.mxu0 0.0
    %6552 = vmatpush1.msra.mxu0 0.0
    %6553 = vmatprep.subr.mxu0 0.0
    %6554 = vmatpush1.msra.mxu0 0.0
    %6555 = vmatprep.subr.mxu0 0.0
    %6556 = vmatpush1.msra.mxu0 0.0
    %6557 = vmatprep.mubr.f32.mxu0 0.0
    %6558 = vmatmul.mubr.f32.gmra.mrb[0].mxu0 %v5936
    %v6559 = vpop.f32.mrb[0].mxu0
    %v6560 = vadd.f32 %v3830, %v6559
    %v6561 = vpop.f32.mrb[0].mxu0
    %6562 = vdwg.mxu0
    %v6563 = vadd.f32 %v6348, %v6489
    %v6564 = vxor.u32 %v6563, 2147483648
    %v6565 = vmul.f32 %v6564, 1.442695
    %v6566 = vpow.pop %v6565
    %v6567 = vadd.f32 %v6566, 1.0
    %v6568 = vrcp.pop %v6567
    %v6569 = vmul.f32 1.0, %v6568
    %v6570 = vadd.f32 %v6350, %v6491
    %v6571 = vxor.u32 %v6570, 2147483648
    %v6572 = vmul.f32 %v6571, 1.442695
    %v6573 = vpow.pop %v6572
    %v6574 = vadd.f32 %v6573, 1.0
    %v6575 = vrcp.pop %v6574
    %v6576 = vmul.f32 1.0, %v6575
    %v6577 = vmul.f32 %v6569, %v6560
    %v6578 = vadd.f32 %v6419, %v6577
    %v6579 = vtanh.pop %v6578
    %v6580 = vsub.f32 1.0, %v6576
    %v6581 = vmul.f32 %v6580, %v6579
    %v6582 = vmul.f32 %v6576, %v5936
    %v6583 = vadd.f32 %v6581, %v6582
    %6584 = vst [vmem:[#allocation3 + $0x8] sm:$0x3] %v6583
    %6585 = vmatprep.subr.mxu0 0.0
    %6586 = vmatpush1.msra.mxu0 %v440
    %6587 = vmatprep.subr.mxu0 0.0
    %6588 = vmatpush1.msra.mxu0 %v441
    %6589 = vmatprep.subr.mxu0 0.0
    %6590 = vmatpush1.msra.mxu0 %v442
    %6591 = vmatprep.subr.mxu0 0.0
    %6592 = vmatpush1.msra.mxu0 %v443
    %6593 = vmatprep.subr.mxu0 0.0
    %6594 = vmatpush1.msra.mxu0 %v444
    %6595 = vmatprep.subr.mxu0 0.0
    %6596 = vmatpush1.msra.mxu0 %v445
    %6597 = vmatprep.subr.mxu0 0.0
    %6598 = vmatpush1.msra.mxu0 %v446
    %6599 = vmatprep.subr.mxu0 0.0
    %6600 = vmatpush1.msra.mxu0 %v447
    %6601 = vmatprep.subr.mxu0 0.0
    %6602 = vmatpush1.msra.mxu0 %v448
    %6603 = vmatprep.subr.mxu0 0.0
    %6604 = vmatpush1.msra.mxu0 %v449
    %6605 = vmatprep.subr.mxu0 0.0
    %6606 = vmatpush1.msra.mxu0 %v450
    %6607 = vmatprep.subr.mxu0 0.0
    %6608 = vmatpush1.msra.mxu0 %v451
    %6609 = vmatprep.subr.mxu0 0.0
    %6610 = vmatpush1.msra.mxu0 %v452
    %6611 = vmatprep.subr.mxu0 0.0
    %6612 = vmatpush1.msra.mxu0 %v453
    %6613 = vmatprep.subr.mxu0 0.0
    %6614 = vmatpush1.msra.mxu0 %v454
    %6615 = vmatprep.subr.mxu0 0.0
    %6616 = vmatpush1.msra.mxu0 %v455
    %6617 = vmatprep.subr.mxu0 0.0
    %6618 = vmatpush1.msra.mxu0 0.0
    %6619 = vmatprep.subr.mxu0 0.0
    %6620 = vmatpush1.msra.mxu0 0.0
    %6621 = vmatprep.subr.mxu0 0.0
    %6622 = vmatpush1.msra.mxu0 0.0
    %6623 = vmatprep.subr.mxu0 0.0
    %6624 = vmatpush1.msra.mxu0 0.0
    %6625 = vmatprep.subr.mxu0 0.0
    %6626 = vmatpush1.msra.mxu0 0.0
    %6627 = vmatprep.subr.mxu0 0.0
    %6628 = vmatpush1.msra.mxu0 0.0
    %6629 = vmatprep.subr.mxu0 0.0
    %6630 = vmatpush1.msra.mxu0 0.0
    %6631 = vmatprep.subr.mxu0 0.0
    %6632 = vmatpush1.msra.mxu0 0.0
    %6633 = vmatprep.subr.mxu0 0.0
    %6634 = vmatpush1.msra.mxu0 0.0
    %6635 = vmatprep.subr.mxu0 0.0
    %6636 = vmatpush1.msra.mxu0 0.0
    %6637 = vmatprep.subr.mxu0 0.0
    %6638 = vmatpush1.msra.mxu0 0.0
    %6639 = vmatprep.subr.mxu0 0.0
    %6640 = vmatpush1.msra.mxu0 0.0
    %6641 = vmatprep.subr.mxu0 0.0
    %6642 = vmatpush1.msra.mxu0 0.0
    %6643 = vmatprep.subr.mxu0 0.0
    %6644 = vmatpush1.msra.mxu0 0.0
    %6645 = vmatprep.subr.mxu0 0.0
    %6646 = vmatpush1.msra.mxu0 0.0
    %6647 = vmatprep.subr.mxu0 0.0
    %6648 = vmatpush1.msra.mxu0 0.0
    %6649 = vmatprep.mubr.f32.mxu0 0.0
    %6650 = vmatmul.mubr.f32.gmra.mrb[0].mxu0 %v6583
    %v6651 = vpop.f32.mrb[0].mxu0
    %v6652 = vadd.f32 %v3312, %v6651
    %v6653 = vpop.f32.mrb[0].mxu0
    %6654 = vdwg.mxu0
    %v6657 = vunpack.c.l.s4 1966171168
    %v6658 = vunpack.c.0.s8 %v6657
    %v6659 = vlaneseq
    %v6660 = vshrl.u32 %v6659, 7
    %v6661 = vsub.s32 %v6658, %v6660
    %v6662 = vrot.slane %v6652, %v6661
    %v6663 = vcombine.high %v6662, %v6662
    %v6665 = vunpack.c.l.s4 1966171168
    %v6666 = vunpack.c.0.s8 %v6665
    %v6667 = vlaneseq
    %v6668 = vshrl.u32 %v6667, 7
    %v6669 = vsub.s32 %v6666, %v6668
    %v6670 = vrot.slane %v6662, %v6669
    %v6672 = vunpack.c.l.s4 1966171168
    %v6673 = vunpack.c.0.s8 %v6672
    %v6674 = vlaneseq
    %v6675 = vshrl.u32 %v6674, 7
    %v6676 = vsub.s32 %v6673, %v6675
    %v6677 = vrot.slane %v6663, %v6676
    %v6678 = vlaneseq
    %v6679 = vshrl.u32 %v6678, 7
    %v6680 = vsub.s32 0, %v6679
    %v6681 = vrot.slane %v6670, %v6680
    %v6682 = vlaneseq
    %v6683 = vshrl.u32 %v6682, 7
    %v6684 = vsub.s32 0, %v6683
    %v6685 = vrot.slane %v6677, %v6684
    %v6688 = vmul.f32 %v3300, %v6681
    %v6689 = vmul.f32 %v3305, %v6685
    %6690 = vadd.xlane.f32.xlu0 %v6688
    %v6691 = vpop.xlane.xlu0 %6690
    %6692 = vadd.xlane.f32.xlu0 %v6689
    %v6693 = vpop.xlane.xlu0 %6692
    %v6696 = vlaneseq
    %v6697 = vshrl.u32 %v6696, 7
    %v6698 = vsub.s32 %v3426, %v6697
    %v6699 = vrot.slane %v6691, %v6698
    %v6700 = vlaneseq
    %v6701 = vshrl.u32 %v6700, 7
    %v6702 = vsub.s32 %v3426, %v6701
    %v6703 = vrot.slane %v6693, %v6702
    %v6704 = vsel %vm3435, %v6703, %v6699
    %v6706 = vsel %vm3438, %v6704, -inf
    %6707 = vmax.xlane.f32.xlu0 %v6706
    %v6708 = vpop.xlane.xlu0 %6707
    %v6710 = vlaneseq
    %v6711 = vshrl.u32 %v6710, 7
    %v6712 = vsub.s32 0, %v6711
    %v6713 = vrot.slane %v6708, %v6712
    %v6714 = vlaneseq
    %v6715 = vshrl.u32 %v6714, 7
    %v6716 = vsub.s32 1, %v6715
    %v6717 = vrot.slane %v6708, %v6716
    %v6720 = vsub.f32 %v6691, %v6713
    %v6721 = vsub.f32 %v6693, %v6717
    %v6722 = vmul.f32 %v6720, 1.442695
    %v6723 = vpow.pop %v6722
    %v6724 = vmul.f32 %v6721, 1.442695
    %v6725 = vpow.pop %v6724
    %6728 = vset.pattern.permute.xlu0 0
    %6729 = vperm.xlu0 %6728, %v6723
    %v6730 = vpop.permute.xlu0 %6729
    %6731 = vset.pattern.permute.xlu0 0
    %6732 = vperm.xlu0 %6731, %v6725
    %v6733 = vpop.permute.xlu0 %6732
    %v6734 = vlaneseq
    %v6735 = vshrl.u32 %v6734, 7
    %v6736 = vsub.s32 %v3426, %v6735
    %v6737 = vrot.slane %v6730, %v6736
    %v6738 = vlaneseq
    %v6739 = vshrl.u32 %v6738, 7
    %v6740 = vsub.s32 %v3426, %v6739
    %v6741 = vrot.slane %v6733, %v6740
    %v6742 = vsel %vm3435, %v6741, %v6737
    %v6744 = vsel %vm3438, %v6742, 0.0
    %6745 = vadd.xlane.f32.xlu0 %v6744
    %v6746 = vpop.xlane.xlu0 %6745
    %v6747 = vrcp.pop %v6746
    %v6749 = vlaneseq
    %v6750 = vshrl.u32 %v6749, 7
    %v6751 = vsub.s32 0, %v6750
    %v6752 = vrot.slane %v6747, %v6751
    %v6753 = vlaneseq
    %v6754 = vshrl.u32 %v6753, 7
    %v6755 = vsub.s32 1, %v6754
    %v6756 = vrot.slane %v6747, %v6755
    %v6759 = vmul.f32 %v6723, %v6752
    %v6760 = vmul.f32 %v6725, %v6756
    %6762 = vset.pattern.permute.xlu0 0
    %6763 = vperm.xlu0 %6762, %v6759
    %v6764 = vpop.permute.xlu0 %6763
    %v6765 = vlaneseq
    %v6766 = vshrl.u32 %v6765, 7
    %v6767 = vsub.s32 %v3426, %v6766
    %v6768 = vrot.slane %v6764, %v6767
    %v6769 = vsel %vm3502, %v6768, 0
    %6771 = vmatprep.subr.mxu0 0.0
    %6772 = vmatpush1.msra.mxu0 %v3225
    %6773 = vmatprep.subr.mxu0 0.0
    %6774 = vmatpush1.msra.mxu0 0.0
    %6775 = vmatprep.subr.mxu0 0.0
    %6776 = vmatpush1.msra.mxu0 0.0
    %6777 = vmatprep.subr.mxu0 0.0
    %6778 = vmatpush1.msra.mxu0 0.0
    %6779 = vmatprep.subr.mxu0 0.0
    %6780 = vmatpush1.msra.mxu0 0.0
    %6781 = vmatprep.subr.mxu0 0.0
    %6782 = vmatpush1.msra.mxu0 0.0
    %6783 = vmatprep.subr.mxu0 0.0
    %6784 = vmatpush1.msra.mxu0 0.0
    %6785 = vmatprep.subr.mxu0 0.0
    %6786 = vmatpush1.msra.mxu0 0.0
    %6787 = vmatprep.subr.mxu0 0.0
    %6788 = vmatpush1.msra.mxu0 0.0
    %6789 = vmatprep.subr.mxu0 0.0
    %6790 = vmatpush1.msra.mxu0 0.0
    %6791 = vmatprep.subr.mxu0 0.0
    %6792 = vmatpush1.msra.mxu0 0.0
    %6793 = vmatprep.subr.mxu0 0.0
    %6794 = vmatpush1.msra.mxu0 0.0
    %6795 = vmatprep.subr.mxu0 0.0
    %6796 = vmatpush1.msra.mxu0 0.0
    %6797 = vmatprep.subr.mxu0 0.0
    %6798 = vmatpush1.msra.mxu0 0.0
    %6799 = vmatprep.subr.mxu0 0.0
    %6800 = vmatpush1.msra.mxu0 0.0
    %6801 = vmatprep.subr.mxu0 0.0
    %6802 = vmatpush1.msra.mxu0 0.0
    %6803 = vmatprep.subr.mxu0 0.0
    %6804 = vmatpush1.msra.mxu0 0.0
    %6805 = vmatprep.subr.mxu0 0.0
    %6806 = vmatpush1.msra.mxu0 0.0
    %6807 = vmatprep.subr.mxu0 0.0
    %6808 = vmatpush1.msra.mxu0 0.0
    %6809 = vmatprep.subr.mxu0 0.0
    %6810 = vmatpush1.msra.mxu0 0.0
    %6811 = vmatprep.subr.mxu0 0.0
    %6812 = vmatpush1.msra.mxu0 0.0
    %6813 = vmatprep.subr.mxu0 0.0
    %6814 = vmatpush1.msra.mxu0 0.0
    %6815 = vmatprep.subr.mxu0 0.0
    %6816 = vmatpush1.msra.mxu0 0.0
    %6817 = vmatprep.subr.mxu0 0.0
    %6818 = vmatpush1.msra.mxu0 0.0
    %6819 = vmatprep.subr.mxu0 0.0
    %6820 = vmatpush1.msra.mxu0 0.0
    %6821 = vmatprep.subr.mxu0 0.0
    %6822 = vmatpush1.msra.mxu0 0.0
    %6823 = vmatprep.subr.mxu0 0.0
    %6824 = vmatpush1.msra.mxu0 0.0
    %6825 = vmatprep.subr.mxu0 0.0
    %6826 = vmatpush1.msra.mxu0 0.0
    %6827 = vmatprep.subr.mxu0 0.0
    %6828 = vmatpush1.msra.mxu0 0.0
    %6829 = vmatprep.subr.mxu0 0.0
    %6830 = vmatpush1.msra.mxu0 0.0
    %6831 = vmatprep.subr.mxu0 0.0
    %6832 = vmatpush1.msra.mxu0 0.0
    %6833 = vmatprep.subr.mxu0 0.0
    %6834 = vmatpush1.msra.mxu0 0.0
    %6835 = vmatprep.mubr.f32.mxu0 0.0
    %6836 = vmatmul.mubr.f32.gmra.mrb[0].mxu0 %v6769
    %v6837 = vpop.f32.mrb[0].mxu0
    %v6838 = vadd.f32 0.0, %v6837
    %v6839 = vpop.f32.mrb[0].mxu0
    %6840 = vdwg.mxu0
    %6842 = vset.pattern.permute.xlu0 0
    %6843 = vperm.xlu0 %6842, %v6760
    %v6844 = vpop.permute.xlu0 %6843
    %v6845 = vlaneseq
    %v6846 = vshrl.u32 %v6845, 7
    %v6847 = vsub.s32 %v3426, %v6846
    %v6848 = vrot.slane %v6844, %v6847
    %v6849 = vsel %vm3502, %v6848, 0
    %6851 = vmatprep.subr.mxu0 0.0
    %6852 = vmatpush1.msra.mxu0 %v3226
    %6853 = vmatprep.subr.mxu0 0.0
    %6854 = vmatpush1.msra.mxu0 0.0
    %6855 = vmatprep.subr.mxu0 0.0
    %6856 = vmatpush1.msra.mxu0 0.0
    %6857 = vmatprep.subr.mxu0 0.0
    %6858 = vmatpush1.msra.mxu0 0.0
    %6859 = vmatprep.subr.mxu0 0.0
    %6860 = vmatpush1.msra.mxu0 0.0
    %6861 = vmatprep.subr.mxu0 0.0
    %6862 = vmatpush1.msra.mxu0 0.0
    %6863 = vmatprep.subr.mxu0 0.0
    %6864 = vmatpush1.msra.mxu0 0.0
    %6865 = vmatprep.subr.mxu0 0.0
    %6866 = vmatpush1.msra.mxu0 0.0
    %6867 = vmatprep.subr.mxu0 0.0
    %6868 = vmatpush1.msra.mxu0 0.0
    %6869 = vmatprep.subr.mxu0 0.0
    %6870 = vmatpush1.msra.mxu0 0.0
    %6871 = vmatprep.subr.mxu0 0.0
    %6872 = vmatpush1.msra.mxu0 0.0
    %6873 = vmatprep.subr.mxu0 0.0
    %6874 = vmatpush1.msra.mxu0 0.0
    %6875 = vmatprep.subr.mxu0 0.0
    %6876 = vmatpush1.msra.mxu0 0.0
    %6877 = vmatprep.subr.mxu0 0.0
    %6878 = vmatpush1.msra.mxu0 0.0
    %6879 = vmatprep.subr.mxu0 0.0
    %6880 = vmatpush1.msra.mxu0 0.0
    %6881 = vmatprep.subr.mxu0 0.0
    %6882 = vmatpush1.msra.mxu0 0.0
    %6883 = vmatprep.subr.mxu0 0.0
    %6884 = vmatpush1.msra.mxu0 0.0
    %6885 = vmatprep.subr.mxu0 0.0
    %6886 = vmatpush1.msra.mxu0 0.0
    %6887 = vmatprep.subr.mxu0 0.0
    %6888 = vmatpush1.msra.mxu0 0.0
    %6889 = vmatprep.subr.mxu0 0.0
    %6890 = vmatpush1.msra.mxu0 0.0
    %6891 = vmatprep.subr.mxu0 0.0
    %6892 = vmatpush1.msra.mxu0 0.0
    %6893 = vmatprep.subr.mxu0 0.0
    %6894 = vmatpush1.msra.mxu0 0.0
    %6895 = vmatprep.subr.mxu0 0.0
    %6896 = vmatpush1.msra.mxu0 0.0
    %6897 = vmatprep.subr.mxu0 0.0
    %6898 = vmatpush1.msra.mxu0 0.0
    %6899 = vmatprep.subr.mxu0 0.0
    %6900 = vmatpush1.msra.mxu0 0.0
    %6901 = vmatprep.subr.mxu0 0.0
    %6902 = vmatpush1.msra.mxu0 0.0
    %6903 = vmatprep.subr.mxu0 0.0
    %6904 = vmatpush1.msra.mxu0 0.0
    %6905 = vmatprep.subr.mxu0 0.0
    %6906 = vmatpush1.msra.mxu0 0.0
    %6907 = vmatprep.subr.mxu0 0.0
    %6908 = vmatpush1.msra.mxu0 0.0
    %6909 = vmatprep.subr.mxu0 0.0
    %6910 = vmatpush1.msra.mxu0 0.0
    %6911 = vmatprep.subr.mxu0 0.0
    %6912 = vmatpush1.msra.mxu0 0.0
    %6913 = vmatprep.subr.mxu0 0.0
    %6914 = vmatpush1.msra.mxu0 0.0
    %6915 = vmatprep.mubr.f32.mxu0 0.0
    %6916 = vmatmul.mubr.f32.gmra.mrb[0].mxu0 %v6849
    %v6917 = vpop.f32.mrb[0].mxu0
    %v6918 = vadd.f32 0.0, %v6917
    %v6919 = vpop.f32.mrb[0].mxu0
    %6920 = vdwg.mxu0
    %s6921 = scalar_lea.vmem [#allocation7], 10
    %v6922 = vld [vmem:[%s6921] sm:$0x3]
    %v6925 = vrot.slane %v6918, 7
    %v6926 = vsel %vm3435, %v6925, %v6838
    %6928 = vmatprep.subr.mxu0 %v278
    %6929 = vmatpush1.msra.mxu0 %v277
    %6930 = vmatprep.subr.mxu0 %v281
    %6931 = vmatpush1.msra.mxu0 %v280
    %6932 = vmatprep.subr.mxu0 %v284
    %6933 = vmatpush1.msra.mxu0 %v283
    %6934 = vmatprep.subr.mxu0 %v287
    %6935 = vmatpush1.msra.mxu0 %v286
    %6936 = vmatprep.subr.mxu0 %v290
    %6937 = vmatpush1.msra.mxu0 %v289
    %6938 = vmatprep.subr.mxu0 %v293
    %6939 = vmatpush1.msra.mxu0 %v292
    %6940 = vmatprep.subr.mxu0 %v296
    %6941 = vmatpush1.msra.mxu0 %v295
    %6942 = vmatprep.subr.mxu0 %v299
    %6943 = vmatpush1.msra.mxu0 %v298
    %6944 = vmatprep.subr.mxu0 %v302
    %6945 = vmatpush1.msra.mxu0 %v301
    %6946 = vmatprep.subr.mxu0 %v305
    %6947 = vmatpush1.msra.mxu0 %v304
    %6948 = vmatprep.subr.mxu0 %v308
    %6949 = vmatpush1.msra.mxu0 %v307
    %6950 = vmatprep.subr.mxu0 %v311
    %6951 = vmatpush1.msra.mxu0 %v310
    %6952 = vmatprep.subr.mxu0 %v314
    %6953 = vmatpush1.msra.mxu0 %v313
    %6954 = vmatprep.subr.mxu0 %v317
    %6955 = vmatpush1.msra.mxu0 %v316
    %6956 = vmatprep.subr.mxu0 %v320
    %6957 = vmatpush1.msra.mxu0 %v319
    %6958 = vmatprep.subr.mxu0 %v323
    %6959 = vmatpush1.msra.mxu0 %v322
    %6960 = vmatprep.subr.mxu0 %v326
    %6961 = vmatpush1.msra.mxu0 %v325
    %6962 = vmatprep.subr.mxu0 %v329
    %6963 = vmatpush1.msra.mxu0 %v328
    %6964 = vmatprep.subr.mxu0 %v332
    %6965 = vmatpush1.msra.mxu0 %v331
    %6966 = vmatprep.subr.mxu0 %v335
    %6967 = vmatpush1.msra.mxu0 %v334
    %6968 = vmatprep.subr.mxu0 %v338
    %6969 = vmatpush1.msra.mxu0 %v337
    %6970 = vmatprep.subr.mxu0 %v341
    %6971 = vmatpush1.msra.mxu0 %v340
    %6972 = vmatprep.subr.mxu0 %v344
    %6973 = vmatpush1.msra.mxu0 %v343
    %6974 = vmatprep.subr.mxu0 %v347
    %6975 = vmatpush1.msra.mxu0 %v346
    %6976 = vmatprep.subr.mxu0 %v350
    %6977 = vmatpush1.msra.mxu0 %v349
    %6978 = vmatprep.subr.mxu0 %v353
    %6979 = vmatpush1.msra.mxu0 %v352
    %6980 = vmatprep.subr.mxu0 %v356
    %6981 = vmatpush1.msra.mxu0 %v355
    %6982 = vmatprep.subr.mxu0 %v359
    %6983 = vmatpush1.msra.mxu0 %v358
    %6984 = vmatprep.subr.mxu0 %v362
    %6985 = vmatpush1.msra.mxu0 %v361
    %6986 = vmatprep.subr.mxu0 %v365
    %6987 = vmatpush1.msra.mxu0 %v364
    %6988 = vmatprep.subr.mxu0 %v368
    %6989 = vmatpush1.msra.mxu0 %v367
    %6990 = vmatprep.subr.mxu0 %v371
    %6991 = vmatpush1.msra.mxu0 %v370
    %6992 = vmatprep.mubr.f32.mxu0 %v6926
    %6993 = vmatmul.mubr.f32.gmra.mrb[0].mxu0 %v6922
    %v6994 = vpop.f32.mrb[0].mxu0
    %v6995 = vadd.f32 %v3665, %v6994
    %v6996 = vpop.f32.mrb[0].mxu0
    %v6997 = vadd.f32 %v3669, %v6996
    %6998 = vdwg.mxu0
    %6999 = vmatprep.subr.mxu0 0.0
    %7000 = vmatpush1.msra.mxu0 %v279
    %7001 = vmatprep.subr.mxu0 0.0
    %7002 = vmatpush1.msra.mxu0 %v282
    %7003 = vmatprep.subr.mxu0 0.0
    %7004 = vmatpush1.msra.mxu0 %v285
    %7005 = vmatprep.subr.mxu0 0.0
    %7006 = vmatpush1.msra.mxu0 %v288
    %7007 = vmatprep.subr.mxu0 0.0
    %7008 = vmatpush1.msra.mxu0 %v291
    %7009 = vmatprep.subr.mxu0 0.0
    %7010 = vmatpush1.msra.mxu0 %v294
    %7011 = vmatprep.subr.mxu0 0.0
    %7012 = vmatpush1.msra.mxu0 %v297
    %7013 = vmatprep.subr.mxu0 0.0
    %7014 = vmatpush1.msra.mxu0 %v300
    %7015 = vmatprep.subr.mxu0 0.0
    %7016 = vmatpush1.msra.mxu0 %v303
    %7017 = vmatprep.subr.mxu0 0.0
    %7018 = vmatpush1.msra.mxu0 %v306
    %7019 = vmatprep.subr.mxu0 0.0
    %7020 = vmatpush1.msra.mxu0 %v309
    %7021 = vmatprep.subr.mxu0 0.0
    %7022 = vmatpush1.msra.mxu0 %v312
    %7023 = vmatprep.subr.mxu0 0.0
    %7024 = vmatpush1.msra.mxu0 %v315
    %7025 = vmatprep.subr.mxu0 0.0
    %7026 = vmatpush1.msra.mxu0 %v318
    %7027 = vmatprep.subr.mxu0 0.0
    %7028 = vmatpush1.msra.mxu0 %v321
    %7029 = vmatprep.subr.mxu0 0.0
    %7030 = vmatpush1.msra.mxu0 %v324
    %7031 = vmatprep.subr.mxu0 0.0
    %7032 = vmatpush1.msra.mxu0 %v327
    %7033 = vmatprep.subr.mxu0 0.0
    %7034 = vmatpush1.msra.mxu0 %v330
    %7035 = vmatprep.subr.mxu0 0.0
    %7036 = vmatpush1.msra.mxu0 %v333
    %7037 = vmatprep.subr.mxu0 0.0
    %7038 = vmatpush1.msra.mxu0 %v336
    %7039 = vmatprep.subr.mxu0 0.0
    %7040 = vmatpush1.msra.mxu0 %v339
    %7041 = vmatprep.subr.mxu0 0.0
    %7042 = vmatpush1.msra.mxu0 %v342
    %7043 = vmatprep.subr.mxu0 0.0
    %7044 = vmatpush1.msra.mxu0 %v345
    %7045 = vmatprep.subr.mxu0 0.0
    %7046 = vmatpush1.msra.mxu0 %v348
    %7047 = vmatprep.subr.mxu0 0.0
    %7048 = vmatpush1.msra.mxu0 %v351
    %7049 = vmatprep.subr.mxu0 0.0
    %7050 = vmatpush1.msra.mxu0 %v354
    %7051 = vmatprep.subr.mxu0 0.0
    %7052 = vmatpush1.msra.mxu0 %v357
    %7053 = vmatprep.subr.mxu0 0.0
    %7054 = vmatpush1.msra.mxu0 %v360
    %7055 = vmatprep.subr.mxu0 0.0
    %7056 = vmatpush1.msra.mxu0 %v363
    %7057 = vmatprep.subr.mxu0 0.0
    %7058 = vmatpush1.msra.mxu0 %v366
    %7059 = vmatprep.subr.mxu0 0.0
    %7060 = vmatpush1.msra.mxu0 %v369
    %7061 = vmatprep.subr.mxu0 0.0
    %7062 = vmatpush1.msra.mxu0 %v372
    %7063 = vmatprep.mubr.f32.mxu0 %v6926
    %7064 = vmatmul.mubr.f32.gmra.mrb[0].mxu0 %v6922
    %v7065 = vpop.f32.mrb[0].mxu0
    %v7066 = vadd.f32 %v3673, %v7065
    %v7067 = vpop.f32.mrb[0].mxu0
    %7068 = vdwg.mxu0
    %7069 = vmatprep.subr.mxu0 %v374
    %7070 = vmatpush1.msra.mxu0 %v373
    %7071 = vmatprep.subr.mxu0 %v377
    %7072 = vmatpush1.msra.mxu0 %v376
    %7073 = vmatprep.subr.mxu0 %v380
    %7074 = vmatpush1.msra.mxu0 %v379
    %7075 = vmatprep.subr.mxu0 %v383
    %7076 = vmatpush1.msra.mxu0 %v382
    %7077 = vmatprep.subr.mxu0 %v386
    %7078 = vmatpush1.msra.mxu0 %v385
    %7079 = vmatprep.subr.mxu0 %v389
    %7080 = vmatpush1.msra.mxu0 %v388
    %7081 = vmatprep.subr.mxu0 %v392
    %7082 = vmatpush1.msra.mxu0 %v391
    %7083 = vmatprep.subr.mxu0 %v395
    %7084 = vmatpush1.msra.mxu0 %v394
    %7085 = vmatprep.subr.mxu0 %v398
    %7086 = vmatpush1.msra.mxu0 %v397
    %7087 = vmatprep.subr.mxu0 %v401
    %7088 = vmatpush1.msra.mxu0 %v400
    %7089 = vmatprep.subr.mxu0 %v404
    %7090 = vmatpush1.msra.mxu0 %v403
    %7091 = vmatprep.subr.mxu0 %v407
    %7092 = vmatpush1.msra.mxu0 %v406
    %7093 = vmatprep.subr.mxu0 %v410
    %7094 = vmatpush1.msra.mxu0 %v409
    %7095 = vmatprep.subr.mxu0 %v413
    %7096 = vmatpush1.msra.mxu0 %v412
    %7097 = vmatprep.subr.mxu0 %v416
    %7098 = vmatpush1.msra.mxu0 %v415
    %7099 = vmatprep.subr.mxu0 %v419
    %7100 = vmatpush1.msra.mxu0 %v418
    %7101 = vmatprep.subr.mxu0 0.0
    %7102 = vmatpush1.msra.mxu0 0.0
    %7103 = vmatprep.subr.mxu0 0.0
    %7104 = vmatpush1.msra.mxu0 0.0
    %7105 = vmatprep.subr.mxu0 0.0
    %7106 = vmatpush1.msra.mxu0 0.0
    %7107 = vmatprep.subr.mxu0 0.0
    %7108 = vmatpush1.msra.mxu0 0.0
    %7109 = vmatprep.subr.mxu0 0.0
    %7110 = vmatpush1.msra.mxu0 0.0
    %7111 = vmatprep.subr.mxu0 0.0
    %7112 = vmatpush1.msra.mxu0 0.0
    %7113 = vmatprep.subr.mxu0 0.0
    %7114 = vmatpush1.msra.mxu0 0.0
    %7115 = vmatprep.subr.mxu0 0.0
    %7116 = vmatpush1.msra.mxu0 0.0
    %7117 = vmatprep.subr.mxu0 0.0
    %7118 = vmatpush1.msra.mxu0 0.0
    %7119 = vmatprep.subr.mxu0 0.0
    %7120 = vmatpush1.msra.mxu0 0.0
    %7121 = vmatprep.subr.mxu0 0.0
    %7122 = vmatpush1.msra.mxu0 0.0
    %7123 = vmatprep.subr.mxu0 0.0
    %7124 = vmatpush1.msra.mxu0 0.0
    %7125 = vmatprep.subr.mxu0 0.0
    %7126 = vmatpush1.msra.mxu0 0.0
    %7127 = vmatprep.subr.mxu0 0.0
    %7128 = vmatpush1.msra.mxu0 0.0
    %7129 = vmatprep.subr.mxu0 0.0
    %7130 = vmatpush1.msra.mxu0 0.0
    %7131 = vmatprep.subr.mxu0 0.0
    %7132 = vmatpush1.msra.mxu0 0.0
    %7133 = vmatprep.mubr.f32.mxu0 0.0
    %7134 = vmatmul.mubr.f32.gmra.mrb[0].mxu0 %v6583
    %v7135 = vpop.f32.mrb[0].mxu0
    %v7136 = vadd.f32 %v3822, %v7135
    %v7137 = vpop.f32.mrb[0].mxu0
    %v7138 = vadd.f32 %v3826, %v7137
    %7139 = vdwg.mxu0
    %7140 = vmatprep.subr.mxu0 0.0
    %7141 = vmatpush1.msra.mxu0 %v375
    %7142 = vmatprep.subr.mxu0 0.0
    %7143 = vmatpush1.msra.mxu0 %v378
    %7144 = vmatprep.subr.mxu0 0.0
    %7145 = vmatpush1.msra.mxu0 %v381
    %7146 = vmatprep.subr.mxu0 0.0
    %7147 = vmatpush1.msra.mxu0 %v384
    %7148 = vmatprep.subr.mxu0 0.0
    %7149 = vmatpush1.msra.mxu0 %v387
    %7150 = vmatprep.subr.mxu0 0.0
    %7151 = vmatpush1.msra.mxu0 %v390
    %7152 = vmatprep.subr.mxu0 0.0
    %7153 = vmatpush1.msra.mxu0 %v393
    %7154 = vmatprep.subr.mxu0 0.0
    %7155 = vmatpush1.msra.mxu0 %v396
    %7156 = vmatprep.subr.mxu0 0.0
    %7157 = vmatpush1.msra.mxu0 %v399
    %7158 = vmatprep.subr.mxu0 0.0
    %7159 = vmatpush1.msra.mxu0 %v402
    %7160 = vmatprep.subr.mxu0 0.0
    %7161 = vmatpush1.msra.mxu0 %v405
    %7162 = vmatprep.subr.mxu0 0.0
    %7163 = vmatpush1.msra.mxu0 %v408
    %7164 = vmatprep.subr.mxu0 0.0
    %7165 = vmatpush1.msra.mxu0 %v411
    %7166 = vmatprep.subr.mxu0 0.0
    %7167 = vmatpush1.msra.mxu0 %v414
    %7168 = vmatprep.subr.mxu0 0.0
    %7169 = vmatpush1.msra.mxu0 %v417
    %7170 = vmatprep.subr.mxu0 0.0
    %7171 = vmatpush1.msra.mxu0 %v420
    %7172 = vmatprep.subr.mxu0 0.0
    %7173 = vmatpush1.msra.mxu0 0.0
    %7174 = vmatprep.subr.mxu0 0.0
    %7175 = vmatpush1.msra.mxu0 0.0
    %7176 = vmatprep.subr.mxu0 0.0
    %7177 = vmatpush1.msra.mxu0 0.0
    %7178 = vmatprep.subr.mxu0 0.0
    %7179 = vmatpush1.msra.mxu0 0.0
    %7180 = vmatprep.subr.mxu0 0.0
    %7181 = vmatpush1.msra.mxu0 0.0
    %7182 = vmatprep.subr.mxu0 0.0
    %7183 = vmatpush1.msra.mxu0 0.0
    %7184 = vmatprep.subr.mxu0 0.0
    %7185 = vmatpush1.msra.mxu0 0.0
    %7186 = vmatprep.subr.mxu0 0.0
    %7187 = vmatpush1.msra.mxu0 0.0
    %7188 = vmatprep.subr.mxu0 0.0
    %7189 = vmatpush1.msra.mxu0 0.0
    %7190 = vmatprep.subr.mxu0 0.0
    %7191 = vmatpush1.msra.mxu0 0.0
    %7192 = vmatprep.subr.mxu0 0.0
    %7193 = vmatpush1.msra.mxu0 0.0
    %7194 = vmatprep.subr.mxu0 0.0
    %7195 = vmatpush1.msra.mxu0 0.0
    %7196 = vmatprep.subr.mxu0 0.0
    %7197 = vmatpush1.msra.mxu0 0.0
    %7198 = vmatprep.subr.mxu0 0.0
    %7199 = vmatpush1.msra.mxu0 0.0
    %7200 = vmatprep.subr.mxu0 0.0
    %7201 = vmatpush1.msra.mxu0 0.0
    %7202 = vmatprep.subr.mxu0 0.0
    %7203 = vmatpush1.msra.mxu0 0.0
    %7204 = vmatprep.mubr.f32.mxu0 0.0
    %7205 = vmatmul.mubr.f32.gmra.mrb[0].mxu0 %v6583
    %v7206 = vpop.f32.mrb[0].mxu0
    %v7207 = vadd.f32 %v3830, %v7206
    %v7208 = vpop.f32.mrb[0].mxu0
    %7209 = vdwg.mxu0
    %v7210 = vadd.f32 %v6995, %v7136
    %v7211 = vxor.u32 %v7210, 2147483648
    %v7212 = vmul.f32 %v7211, 1.442695
    %v7213 = vpow.pop %v7212
    %v7214 = vadd.f32 %v7213, 1.0
    %v7215 = vrcp.pop %v7214
    %v7216 = vmul.f32 1.0, %v7215
    %v7217 = vadd.f32 %v6997, %v7138
    %v7218 = vxor.u32 %v7217, 2147483648
    %v7219 = vmul.f32 %v7218, 1.442695
    %v7220 = vpow.pop %v7219
    %v7221 = vadd.f32 %v7220, 1.0
    %v7222 = vrcp.pop %v7221
    %v7223 = vmul.f32 1.0, %v7222
    %v7224 = vmul.f32 %v7216, %v7207
    %v7225 = vadd.f32 %v7066, %v7224
    %v7226 = vtanh.pop %v7225
    %v7227 = vsub.f32 1.0, %v7223
    %v7228 = vmul.f32 %v7227, %v7226
    %v7229 = vmul.f32 %v7223, %v6583
    %v7230 = vadd.f32 %v7228, %v7229
    %7231 = vst [vmem:[#allocation3 + $0xa] sm:$0x3] %v7230
    %7232 = vmatprep.subr.mxu0 0.0
    %7233 = vmatpush1.msra.mxu0 %v440
    %7234 = vmatprep.subr.mxu0 0.0
    %7235 = vmatpush1.msra.mxu0 %v441
    %7236 = vmatprep.subr.mxu0 0.0
    %7237 = vmatpush1.msra.mxu0 %v442
    %7238 = vmatprep.subr.mxu0 0.0
    %7239 = vmatpush1.msra.mxu0 %v443
    %7240 = vmatprep.subr.mxu0 0.0
    %7241 = vmatpush1.msra.mxu0 %v444
    %7242 = vmatprep.subr.mxu0 0.0
    %7243 = vmatpush1.msra.mxu0 %v445
    %7244 = vmatprep.subr.mxu0 0.0
    %7245 = vmatpush1.msra.mxu0 %v446
    %7246 = vmatprep.subr.mxu0 0.0
    %7247 = vmatpush1.msra.mxu0 %v447
    %7248 = vmatprep.subr.mxu0 0.0
    %7249 = vmatpush1.msra.mxu0 %v448
    %7250 = vmatprep.subr.mxu0 0.0
    %7251 = vmatpush1.msra.mxu0 %v449
    %7252 = vmatprep.subr.mxu0 0.0
    %7253 = vmatpush1.msra.mxu0 %v450
    %7254 = vmatprep.subr.mxu0 0.0
    %7255 = vmatpush1.msra.mxu0 %v451
    %7256 = vmatprep.subr.mxu0 0.0
    %7257 = vmatpush1.msra.mxu0 %v452
    %7258 = vmatprep.subr.mxu0 0.0
    %7259 = vmatpush1.msra.mxu0 %v453
    %7260 = vmatprep.subr.mxu0 0.0
    %7261 = vmatpush1.msra.mxu0 %v454
    %7262 = vmatprep.subr.mxu0 0.0
    %7263 = vmatpush1.msra.mxu0 %v455
    %7264 = vmatprep.subr.mxu0 0.0
    %7265 = vmatpush1.msra.mxu0 0.0
    %7266 = vmatprep.subr.mxu0 0.0
    %7267 = vmatpush1.msra.mxu0 0.0
    %7268 = vmatprep.subr.mxu0 0.0
    %7269 = vmatpush1.msra.mxu0 0.0
    %7270 = vmatprep.subr.mxu0 0.0
    %7271 = vmatpush1.msra.mxu0 0.0
    %7272 = vmatprep.subr.mxu0 0.0
    %7273 = vmatpush1.msra.mxu0 0.0
    %7274 = vmatprep.subr.mxu0 0.0
    %7275 = vmatpush1.msra.mxu0 0.0
    %7276 = vmatprep.subr.mxu0 0.0
    %7277 = vmatpush1.msra.mxu0 0.0
    %7278 = vmatprep.subr.mxu0 0.0
    %7279 = vmatpush1.msra.mxu0 0.0
    %7280 = vmatprep.subr.mxu0 0.0
    %7281 = vmatpush1.msra.mxu0 0.0
    %7282 = vmatprep.subr.mxu0 0.0
    %7283 = vmatpush1.msra.mxu0 0.0
    %7284 = vmatprep.subr.mxu0 0.0
    %7285 = vmatpush1.msra.mxu0 0.0
    %7286 = vmatprep.subr.mxu0 0.0
    %7287 = vmatpush1.msra.mxu0 0.0
    %7288 = vmatprep.subr.mxu0 0.0
    %7289 = vmatpush1.msra.mxu0 0.0
    %7290 = vmatprep.subr.mxu0 0.0
    %7291 = vmatpush1.msra.mxu0 0.0
    %7292 = vmatprep.subr.mxu0 0.0
    %7293 = vmatpush1.msra.mxu0 0.0
    %7294 = vmatprep.subr.mxu0 0.0
    %7295 = vmatpush1.msra.mxu0 0.0
    %7296 = vmatprep.mubr.f32.mxu0 0.0
    %7297 = vmatmul.mubr.f32.gmra.mrb[0].mxu0 %v7230
    %v7298 = vpop.f32.mrb[0].mxu0
    %v7299 = vadd.f32 %v3312, %v7298
    %v7300 = vpop.f32.mrb[0].mxu0
    %7301 = vdwg.mxu0
    %v7304 = vunpack.c.l.s4 1966171168
    %v7305 = vunpack.c.0.s8 %v7304
    %v7306 = vlaneseq
    %v7307 = vshrl.u32 %v7306, 7
    %v7308 = vsub.s32 %v7305, %v7307
    %v7309 = vrot.slane %v7299, %v7308
    %v7310 = vcombine.high %v7309, %v7309
    %v7312 = vunpack.c.l.s4 1966171168
    %v7313 = vunpack.c.0.s8 %v7312
    %v7314 = vlaneseq
    %v7315 = vshrl.u32 %v7314, 7
    %v7316 = vsub.s32 %v7313, %v7315
    %v7317 = vrot.slane %v7309, %v7316
    %v7319 = vunpack.c.l.s4 1966171168
    %v7320 = vunpack.c.0.s8 %v7319
    %v7321 = vlaneseq
    %v7322 = vshrl.u32 %v7321, 7
    %v7323 = vsub.s32 %v7320, %v7322
    %v7324 = vrot.slane %v7310, %v7323
    %v7325 = vlaneseq
    %v7326 = vshrl.u32 %v7325, 7
    %v7327 = vsub.s32 0, %v7326
    %v7328 = vrot.slane %v7317, %v7327
    %v7329 = vlaneseq
    %v7330 = vshrl.u32 %v7329, 7
    %v7331 = vsub.s32 0, %v7330
    %v7332 = vrot.slane %v7324, %v7331
    %v7335 = vmul.f32 %v3300, %v7328
    %v7336 = vmul.f32 %v3305, %v7332
    %7337 = vadd.xlane.f32.xlu0 %v7335
    %v7338 = vpop.xlane.xlu0 %7337
    %7339 = vadd.xlane.f32.xlu0 %v7336
    %v7340 = vpop.xlane.xlu0 %7339
    %v7343 = vlaneseq
    %v7344 = vshrl.u32 %v7343, 7
    %v7345 = vsub.s32 %v3426, %v7344
    %v7346 = vrot.slane %v7338, %v7345
    %v7347 = vlaneseq
    %v7348 = vshrl.u32 %v7347, 7
    %v7349 = vsub.s32 %v3426, %v7348
    %v7350 = vrot.slane %v7340, %v7349
    %v7351 = vsel %vm3435, %v7350, %v7346
    %v7353 = vsel %vm3438, %v7351, -inf
    %7354 = vmax.xlane.f32.xlu0 %v7353
    %v7355 = vpop.xlane.xlu0 %7354
    %v7357 = vlaneseq
    %v7358 = vshrl.u32 %v7357, 7
    %v7359 = vsub.s32 0, %v7358
    %v7360 = vrot.slane %v7355, %v7359
    %v7361 = vlaneseq
    %v7362 = vshrl.u32 %v7361, 7
    %v7363 = vsub.s32 1, %v7362
    %v7364 = vrot.slane %v7355, %v7363
    %v7367 = vsub.f32 %v7338, %v7360
    %v7368 = vsub.f32 %v7340, %v7364
    %v7369 = vmul.f32 %v7367, 1.442695
    %v7370 = vpow.pop %v7369
    %v7371 = vmul.f32 %v7368, 1.442695
    %v7372 = vpow.pop %v7371
    %7375 = vset.pattern.permute.xlu0 0
    %7376 = vperm.xlu0 %7375, %v7370
    %v7377 = vpop.permute.xlu0 %7376
    %7378 = vset.pattern.permute.xlu0 0
    %7379 = vperm.xlu0 %7378, %v7372
    %v7380 = vpop.permute.xlu0 %7379
    %v7381 = vlaneseq
    %v7382 = vshrl.u32 %v7381, 7
    %v7383 = vsub.s32 %v3426, %v7382
    %v7384 = vrot.slane %v7377, %v7383
    %v7385 = vlaneseq
    %v7386 = vshrl.u32 %v7385, 7
    %v7387 = vsub.s32 %v3426, %v7386
    %v7388 = vrot.slane %v7380, %v7387
    %v7389 = vsel %vm3435, %v7388, %v7384
    %v7391 = vsel %vm3438, %v7389, 0.0
    %7392 = vadd.xlane.f32.xlu0 %v7391
    %v7393 = vpop.xlane.xlu0 %7392
    %v7394 = vrcp.pop %v7393
    %v7396 = vlaneseq
    %v7397 = vshrl.u32 %v7396, 7
    %v7398 = vsub.s32 0, %v7397
    %v7399 = vrot.slane %v7394, %v7398
    %v7400 = vlaneseq
    %v7401 = vshrl.u32 %v7400, 7
    %v7402 = vsub.s32 1, %v7401
    %v7403 = vrot.slane %v7394, %v7402
    %v7406 = vmul.f32 %v7370, %v7399
    %v7407 = vmul.f32 %v7372, %v7403
    %7409 = vset.pattern.permute.xlu0 0
    %7410 = vperm.xlu0 %7409, %v7406
    %v7411 = vpop.permute.xlu0 %7410
    %v7412 = vlaneseq
    %v7413 = vshrl.u32 %v7412, 7
    %v7414 = vsub.s32 %v3426, %v7413
    %v7415 = vrot.slane %v7411, %v7414
    %v7416 = vsel %vm3502, %v7415, 0
    %7418 = vmatprep.subr.mxu0 0.0
    %7419 = vmatpush1.msra.mxu0 %v3225
    %7420 = vmatprep.subr.mxu0 0.0
    %7421 = vmatpush1.msra.mxu0 0.0
    %7422 = vmatprep.subr.mxu0 0.0
    %7423 = vmatpush1.msra.mxu0 0.0
    %7424 = vmatprep.subr.mxu0 0.0
    %7425 = vmatpush1.msra.mxu0 0.0
    %7426 = vmatprep.subr.mxu0 0.0
    %7427 = vmatpush1.msra.mxu0 0.0
    %7428 = vmatprep.subr.mxu0 0.0
    %7429 = vmatpush1.msra.mxu0 0.0
    %7430 = vmatprep.subr.mxu0 0.0
    %7431 = vmatpush1.msra.mxu0 0.0
    %7432 = vmatprep.subr.mxu0 0.0
    %7433 = vmatpush1.msra.mxu0 0.0
    %7434 = vmatprep.subr.mxu0 0.0
    %7435 = vmatpush1.msra.mxu0 0.0
    %7436 = vmatprep.subr.mxu0 0.0
    %7437 = vmatpush1.msra.mxu0 0.0
    %7438 = vmatprep.subr.mxu0 0.0
    %7439 = vmatpush1.msra.mxu0 0.0
    %7440 = vmatprep.subr.mxu0 0.0
    %7441 = vmatpush1.msra.mxu0 0.0
    %7442 = vmatprep.subr.mxu0 0.0
    %7443 = vmatpush1.msra.mxu0 0.0
    %7444 = vmatprep.subr.mxu0 0.0
    %7445 = vmatpush1.msra.mxu0 0.0
    %7446 = vmatprep.subr.mxu0 0.0
    %7447 = vmatpush1.msra.mxu0 0.0
    %7448 = vmatprep.subr.mxu0 0.0
    %7449 = vmatpush1.msra.mxu0 0.0
    %7450 = vmatprep.subr.mxu0 0.0
    %7451 = vmatpush1.msra.mxu0 0.0
    %7452 = vmatprep.subr.mxu0 0.0
    %7453 = vmatpush1.msra.mxu0 0.0
    %7454 = vmatprep.subr.mxu0 0.0
    %7455 = vmatpush1.msra.mxu0 0.0
    %7456 = vmatprep.subr.mxu0 0.0
    %7457 = vmatpush1.msra.mxu0 0.0
    %7458 = vmatprep.subr.mxu0 0.0
    %7459 = vmatpush1.msra.mxu0 0.0
    %7460 = vmatprep.subr.mxu0 0.0
    %7461 = vmatpush1.msra.mxu0 0.0
    %7462 = vmatprep.subr.mxu0 0.0
    %7463 = vmatpush1.msra.mxu0 0.0
    %7464 = vmatprep.subr.mxu0 0.0
    %7465 = vmatpush1.msra.mxu0 0.0
    %7466 = vmatprep.subr.mxu0 0.0
    %7467 = vmatpush1.msra.mxu0 0.0
    %7468 = vmatprep.subr.mxu0 0.0
    %7469 = vmatpush1.msra.mxu0 0.0
    %7470 = vmatprep.subr.mxu0 0.0
    %7471 = vmatpush1.msra.mxu0 0.0
    %7472 = vmatprep.subr.mxu0 0.0
    %7473 = vmatpush1.msra.mxu0 0.0
    %7474 = vmatprep.subr.mxu0 0.0
    %7475 = vmatpush1.msra.mxu0 0.0
    %7476 = vmatprep.subr.mxu0 0.0
    %7477 = vmatpush1.msra.mxu0 0.0
    %7478 = vmatprep.subr.mxu0 0.0
    %7479 = vmatpush1.msra.mxu0 0.0
    %7480 = vmatprep.subr.mxu0 0.0
    %7481 = vmatpush1.msra.mxu0 0.0
    %7482 = vmatprep.mubr.f32.mxu0 0.0
    %7483 = vmatmul.mubr.f32.gmra.mrb[0].mxu0 %v7416
    %v7484 = vpop.f32.mrb[0].mxu0
    %v7485 = vadd.f32 0.0, %v7484
    %v7486 = vpop.f32.mrb[0].mxu0
    %7487 = vdwg.mxu0
    %7489 = vset.pattern.permute.xlu0 0
    %7490 = vperm.xlu0 %7489, %v7407
    %v7491 = vpop.permute.xlu0 %7490
    %v7492 = vlaneseq
    %v7493 = vshrl.u32 %v7492, 7
    %v7494 = vsub.s32 %v3426, %v7493
    %v7495 = vrot.slane %v7491, %v7494
    %v7496 = vsel %vm3502, %v7495, 0
    %7498 = vmatprep.subr.mxu0 0.0
    %7499 = vmatpush1.msra.mxu0 %v3226
    %7500 = vmatprep.subr.mxu0 0.0
    %7501 = vmatpush1.msra.mxu0 0.0
    %7502 = vmatprep.subr.mxu0 0.0
    %7503 = vmatpush1.msra.mxu0 0.0
    %7504 = vmatprep.subr.mxu0 0.0
    %7505 = vmatpush1.msra.mxu0 0.0
    %7506 = vmatprep.subr.mxu0 0.0
    %7507 = vmatpush1.msra.mxu0 0.0
    %7508 = vmatprep.subr.mxu0 0.0
    %7509 = vmatpush1.msra.mxu0 0.0
    %7510 = vmatprep.subr.mxu0 0.0
    %7511 = vmatpush1.msra.mxu0 0.0
    %7512 = vmatprep.subr.mxu0 0.0
    %7513 = vmatpush1.msra.mxu0 0.0
    %7514 = vmatprep.subr.mxu0 0.0
    %7515 = vmatpush1.msra.mxu0 0.0
    %7516 = vmatprep.subr.mxu0 0.0
    %7517 = vmatpush1.msra.mxu0 0.0
    %7518 = vmatprep.subr.mxu0 0.0
    %7519 = vmatpush1.msra.mxu0 0.0
    %7520 = vmatprep.subr.mxu0 0.0
    %7521 = vmatpush1.msra.mxu0 0.0
    %7522 = vmatprep.subr.mxu0 0.0
    %7523 = vmatpush1.msra.mxu0 0.0
    %7524 = vmatprep.subr.mxu0 0.0
    %7525 = vmatpush1.msra.mxu0 0.0
    %7526 = vmatprep.subr.mxu0 0.0
    %7527 = vmatpush1.msra.mxu0 0.0
    %7528 = vmatprep.subr.mxu0 0.0
    %7529 = vmatpush1.msra.mxu0 0.0
    %7530 = vmatprep.subr.mxu0 0.0
    %7531 = vmatpush1.msra.mxu0 0.0
    %7532 = vmatprep.subr.mxu0 0.0
    %7533 = vmatpush1.msra.mxu0 0.0
    %7534 = vmatprep.subr.mxu0 0.0
    %7535 = vmatpush1.msra.mxu0 0.0
    %7536 = vmatprep.subr.mxu0 0.0
    %7537 = vmatpush1.msra.mxu0 0.0
    %7538 = vmatprep.subr.mxu0 0.0
    %7539 = vmatpush1.msra.mxu0 0.0
    %7540 = vmatprep.subr.mxu0 0.0
    %7541 = vmatpush1.msra.mxu0 0.0
    %7542 = vmatprep.subr.mxu0 0.0
    %7543 = vmatpush1.msra.mxu0 0.0
    %7544 = vmatprep.subr.mxu0 0.0
    %7545 = vmatpush1.msra.mxu0 0.0
    %7546 = vmatprep.subr.mxu0 0.0
    %7547 = vmatpush1.msra.mxu0 0.0
    %7548 = vmatprep.subr.mxu0 0.0
    %7549 = vmatpush1.msra.mxu0 0.0
    %7550 = vmatprep.subr.mxu0 0.0
    %7551 = vmatpush1.msra.mxu0 0.0
    %7552 = vmatprep.subr.mxu0 0.0
    %7553 = vmatpush1.msra.mxu0 0.0
    %7554 = vmatprep.subr.mxu0 0.0
    %7555 = vmatpush1.msra.mxu0 0.0
    %7556 = vmatprep.subr.mxu0 0.0
    %7557 = vmatpush1.msra.mxu0 0.0
    %7558 = vmatprep.subr.mxu0 0.0
    %7559 = vmatpush1.msra.mxu0 0.0
    %7560 = vmatprep.subr.mxu0 0.0
    %7561 = vmatpush1.msra.mxu0 0.0
    %7562 = vmatprep.mubr.f32.mxu0 0.0
    %7563 = vmatmul.mubr.f32.gmra.mrb[0].mxu0 %v7496
    %v7564 = vpop.f32.mrb[0].mxu0
    %v7565 = vadd.f32 0.0, %v7564
    %v7566 = vpop.f32.mrb[0].mxu0
    %7567 = vdwg.mxu0
    %s7568 = scalar_lea.vmem [#allocation7], 12
    %v7569 = vld [vmem:[%s7568] sm:$0x3]
    %v7572 = vrot.slane %v7565, 7
    %v7573 = vsel %vm3435, %v7572, %v7485
    %7575 = vmatprep.subr.mxu0 %v278
    %7576 = vmatpush1.msra.mxu0 %v277
    %7577 = vmatprep.subr.mxu0 %v281
    %7578 = vmatpush1.msra.mxu0 %v280
    %7579 = vmatprep.subr.mxu0 %v284
    %7580 = vmatpush1.msra.mxu0 %v283
    %7581 = vmatprep.subr.mxu0 %v287
    %7582 = vmatpush1.msra.mxu0 %v286
    %7583 = vmatprep.subr.mxu0 %v290
    %7584 = vmatpush1.msra.mxu0 %v289
    %7585 = vmatprep.subr.mxu0 %v293
    %7586 = vmatpush1.msra.mxu0 %v292
    %7587 = vmatprep.subr.mxu0 %v296
    %7588 = vmatpush1.msra.mxu0 %v295
    %7589 = vmatprep.subr.mxu0 %v299
    %7590 = vmatpush1.msra.mxu0 %v298
    %7591 = vmatprep.subr.mxu0 %v302
    %7592 = vmatpush1.msra.mxu0 %v301
    %7593 = vmatprep.subr.mxu0 %v305
    %7594 = vmatpush1.msra.mxu0 %v304
    %7595 = vmatprep.subr.mxu0 %v308
    %7596 = vmatpush1.msra.mxu0 %v307
    %7597 = vmatprep.subr.mxu0 %v311
    %7598 = vmatpush1.msra.mxu0 %v310
    %7599 = vmatprep.subr.mxu0 %v314
    %7600 = vmatpush1.msra.mxu0 %v313
    %7601 = vmatprep.subr.mxu0 %v317
    %7602 = vmatpush1.msra.mxu0 %v316
    %7603 = vmatprep.subr.mxu0 %v320
    %7604 = vmatpush1.msra.mxu0 %v319
    %7605 = vmatprep.subr.mxu0 %v323
    %7606 = vmatpush1.msra.mxu0 %v322
    %7607 = vmatprep.subr.mxu0 %v326
    %7608 = vmatpush1.msra.mxu0 %v325
    %7609 = vmatprep.subr.mxu0 %v329
    %7610 = vmatpush1.msra.mxu0 %v328
    %7611 = vmatprep.subr.mxu0 %v332
    %7612 = vmatpush1.msra.mxu0 %v331
    %7613 = vmatprep.subr.mxu0 %v335
    %7614 = vmatpush1.msra.mxu0 %v334
    %7615 = vmatprep.subr.mxu0 %v338
    %7616 = vmatpush1.msra.mxu0 %v337
    %7617 = vmatprep.subr.mxu0 %v341
    %7618 = vmatpush1.msra.mxu0 %v340
    %7619 = vmatprep.subr.mxu0 %v344
    %7620 = vmatpush1.msra.mxu0 %v343
    %7621 = vmatprep.subr.mxu0 %v347
    %7622 = vmatpush1.msra.mxu0 %v346
    %7623 = vmatprep.subr.mxu0 %v350
    %7624 = vmatpush1.msra.mxu0 %v349
    %7625 = vmatprep.subr.mxu0 %v353
    %7626 = vmatpush1.msra.mxu0 %v352
    %7627 = vmatprep.subr.mxu0 %v356
    %7628 = vmatpush1.msra.mxu0 %v355
    %7629 = vmatprep.subr.mxu0 %v359
    %7630 = vmatpush1.msra.mxu0 %v358
    %7631 = vmatprep.subr.mxu0 %v362
    %7632 = vmatpush1.msra.mxu0 %v361
    %7633 = vmatprep.subr.mxu0 %v365
    %7634 = vmatpush1.msra.mxu0 %v364
    %7635 = vmatprep.subr.mxu0 %v368
    %7636 = vmatpush1.msra.mxu0 %v367
    %7637 = vmatprep.subr.mxu0 %v371
    %7638 = vmatpush1.msra.mxu0 %v370
    %7639 = vmatprep.mubr.f32.mxu0 %v7573
    %7640 = vmatmul.mubr.f32.gmra.mrb[0].mxu0 %v7569
    %v7641 = vpop.f32.mrb[0].mxu0
    %v7642 = vadd.f32 %v3665, %v7641
    %v7643 = vpop.f32.mrb[0].mxu0
    %v7644 = vadd.f32 %v3669, %v7643
    %7645 = vdwg.mxu0
    %7646 = vmatprep.subr.mxu0 0.0
    %7647 = vmatpush1.msra.mxu0 %v279
    %7648 = vmatprep.subr.mxu0 0.0
    %7649 = vmatpush1.msra.mxu0 %v282
    %7650 = vmatprep.subr.mxu0 0.0
    %7651 = vmatpush1.msra.mxu0 %v285
    %7652 = vmatprep.subr.mxu0 0.0
    %7653 = vmatpush1.msra.mxu0 %v288
    %7654 = vmatprep.subr.mxu0 0.0
    %7655 = vmatpush1.msra.mxu0 %v291
    %7656 = vmatprep.subr.mxu0 0.0
    %7657 = vmatpush1.msra.mxu0 %v294
    %7658 = vmatprep.subr.mxu0 0.0
    %7659 = vmatpush1.msra.mxu0 %v297
    %7660 = vmatprep.subr.mxu0 0.0
    %7661 = vmatpush1.msra.mxu0 %v300
    %7662 = vmatprep.subr.mxu0 0.0
    %7663 = vmatpush1.msra.mxu0 %v303
    %7664 = vmatprep.subr.mxu0 0.0
    %7665 = vmatpush1.msra.mxu0 %v306
    %7666 = vmatprep.subr.mxu0 0.0
    %7667 = vmatpush1.msra.mxu0 %v309
    %7668 = vmatprep.subr.mxu0 0.0
    %7669 = vmatpush1.msra.mxu0 %v312
    %7670 = vmatprep.subr.mxu0 0.0
    %7671 = vmatpush1.msra.mxu0 %v315
    %7672 = vmatprep.subr.mxu0 0.0
    %7673 = vmatpush1.msra.mxu0 %v318
    %7674 = vmatprep.subr.mxu0 0.0
    %7675 = vmatpush1.msra.mxu0 %v321
    %7676 = vmatprep.subr.mxu0 0.0
    %7677 = vmatpush1.msra.mxu0 %v324
    %7678 = vmatprep.subr.mxu0 0.0
    %7679 = vmatpush1.msra.mxu0 %v327
    %7680 = vmatprep.subr.mxu0 0.0
    %7681 = vmatpush1.msra.mxu0 %v330
    %7682 = vmatprep.subr.mxu0 0.0
    %7683 = vmatpush1.msra.mxu0 %v333
    %7684 = vmatprep.subr.mxu0 0.0
    %7685 = vmatpush1.msra.mxu0 %v336
    %7686 = vmatprep.subr.mxu0 0.0
    %7687 = vmatpush1.msra.mxu0 %v339
    %7688 = vmatprep.subr.mxu0 0.0
    %7689 = vmatpush1.msra.mxu0 %v342
    %7690 = vmatprep.subr.mxu0 0.0
    %7691 = vmatpush1.msra.mxu0 %v345
    %7692 = vmatprep.subr.mxu0 0.0
    %7693 = vmatpush1.msra.mxu0 %v348
    %7694 = vmatprep.subr.mxu0 0.0
    %7695 = vmatpush1.msra.mxu0 %v351
    %7696 = vmatprep.subr.mxu0 0.0
    %7697 = vmatpush1.msra.mxu0 %v354
    %7698 = vmatprep.subr.mxu0 0.0
    %7699 = vmatpush1.msra.mxu0 %v357
    %7700 = vmatprep.subr.mxu0 0.0
    %7701 = vmatpush1.msra.mxu0 %v360
    %7702 = vmatprep.subr.mxu0 0.0
    %7703 = vmatpush1.msra.mxu0 %v363
    %7704 = vmatprep.subr.mxu0 0.0
    %7705 = vmatpush1.msra.mxu0 %v366
    %7706 = vmatprep.subr.mxu0 0.0
    %7707 = vmatpush1.msra.mxu0 %v369
    %7708 = vmatprep.subr.mxu0 0.0
    %7709 = vmatpush1.msra.mxu0 %v372
    %7710 = vmatprep.mubr.f32.mxu0 %v7573
    %7711 = vmatmul.mubr.f32.gmra.mrb[0].mxu0 %v7569
    %v7712 = vpop.f32.mrb[0].mxu0
    %v7713 = vadd.f32 %v3673, %v7712
    %v7714 = vpop.f32.mrb[0].mxu0
    %7715 = vdwg.mxu0
    %7716 = vmatprep.subr.mxu0 %v374
    %7717 = vmatpush1.msra.mxu0 %v373
    %7718 = vmatprep.subr.mxu0 %v377
    %7719 = vmatpush1.msra.mxu0 %v376
    %7720 = vmatprep.subr.mxu0 %v380
    %7721 = vmatpush1.msra.mxu0 %v379
    %7722 = vmatprep.subr.mxu0 %v383
    %7723 = vmatpush1.msra.mxu0 %v382
    %7724 = vmatprep.subr.mxu0 %v386
    %7725 = vmatpush1.msra.mxu0 %v385
    %7726 = vmatprep.subr.mxu0 %v389
    %7727 = vmatpush1.msra.mxu0 %v388
    %7728 = vmatprep.subr.mxu0 %v392
    %7729 = vmatpush1.msra.mxu0 %v391
    %7730 = vmatprep.subr.mxu0 %v395
    %7731 = vmatpush1.msra.mxu0 %v394
    %7732 = vmatprep.subr.mxu0 %v398
    %7733 = vmatpush1.msra.mxu0 %v397
    %7734 = vmatprep.subr.mxu0 %v401
    %7735 = vmatpush1.msra.mxu0 %v400
    %7736 = vmatprep.subr.mxu0 %v404
    %7737 = vmatpush1.msra.mxu0 %v403
    %7738 = vmatprep.subr.mxu0 %v407
    %7739 = vmatpush1.msra.mxu0 %v406
    %7740 = vmatprep.subr.mxu0 %v410
    %7741 = vmatpush1.msra.mxu0 %v409
    %7742 = vmatprep.subr.mxu0 %v413
    %7743 = vmatpush1.msra.mxu0 %v412
    %7744 = vmatprep.subr.mxu0 %v416
    %7745 = vmatpush1.msra.mxu0 %v415
    %7746 = vmatprep.subr.mxu0 %v419
    %7747 = vmatpush1.msra.mxu0 %v418
    %7748 = vmatprep.subr.mxu0 0.0
    %7749 = vmatpush1.msra.mxu0 0.0
    %7750 = vmatprep.subr.mxu0 0.0
    %7751 = vmatpush1.msra.mxu0 0.0
    %7752 = vmatprep.subr.mxu0 0.0
    %7753 = vmatpush1.msra.mxu0 0.0
    %7754 = vmatprep.subr.mxu0 0.0
    %7755 = vmatpush1.msra.mxu0 0.0
    %7756 = vmatprep.subr.mxu0 0.0
    %7757 = vmatpush1.msra.mxu0 0.0
    %7758 = vmatprep.subr.mxu0 0.0
    %7759 = vmatpush1.msra.mxu0 0.0
    %7760 = vmatprep.subr.mxu0 0.0
    %7761 = vmatpush1.msra.mxu0 0.0
    %7762 = vmatprep.subr.mxu0 0.0
    %7763 = vmatpush1.msra.mxu0 0.0
    %7764 = vmatprep.subr.mxu0 0.0
    %7765 = vmatpush1.msra.mxu0 0.0
    %7766 = vmatprep.subr.mxu0 0.0
    %7767 = vmatpush1.msra.mxu0 0.0
    %7768 = vmatprep.subr.mxu0 0.0
    %7769 = vmatpush1.msra.mxu0 0.0
    %7770 = vmatprep.subr.mxu0 0.0
    %7771 = vmatpush1.msra.mxu0 0.0
    %7772 = vmatprep.subr.mxu0 0.0
    %7773 = vmatpush1.msra.mxu0 0.0
    %7774 = vmatprep.subr.mxu0 0.0
    %7775 = vmatpush1.msra.mxu0 0.0
    %7776 = vmatprep.subr.mxu0 0.0
    %7777 = vmatpush1.msra.mxu0 0.0
    %7778 = vmatprep.subr.mxu0 0.0
    %7779 = vmatpush1.msra.mxu0 0.0
    %7780 = vmatprep.mubr.f32.mxu0 0.0
    %7781 = vmatmul.mubr.f32.gmra.mrb[0].mxu0 %v7230
    %v7782 = vpop.f32.mrb[0].mxu0
    %v7783 = vadd.f32 %v3822, %v7782
    %v7784 = vpop.f32.mrb[0].mxu0
    %v7785 = vadd.f32 %v3826, %v7784
    %7786 = vdwg.mxu0
    %7787 = vmatprep.subr.mxu0 0.0
    %7788 = vmatpush1.msra.mxu0 %v375
    %7789 = vmatprep.subr.mxu0 0.0
    %7790 = vmatpush1.msra.mxu0 %v378
    %7791 = vmatprep.subr.mxu0 0.0
    %7792 = vmatpush1.msra.mxu0 %v381
    %7793 = vmatprep.subr.mxu0 0.0
    %7794 = vmatpush1.msra.mxu0 %v384
    %7795 = vmatprep.subr.mxu0 0.0
    %7796 = vmatpush1.msra.mxu0 %v387
    %7797 = vmatprep.subr.mxu0 0.0
    %7798 = vmatpush1.msra.mxu0 %v390
    %7799 = vmatprep.subr.mxu0 0.0
    %7800 = vmatpush1.msra.mxu0 %v393
    %7801 = vmatprep.subr.mxu0 0.0
    %7802 = vmatpush1.msra.mxu0 %v396
    %7803 = vmatprep.subr.mxu0 0.0
    %7804 = vmatpush1.msra.mxu0 %v399
    %7805 = vmatprep.subr.mxu0 0.0
    %7806 = vmatpush1.msra.mxu0 %v402
    %7807 = vmatprep.subr.mxu0 0.0
    %7808 = vmatpush1.msra.mxu0 %v405
    %7809 = vmatprep.subr.mxu0 0.0
    %7810 = vmatpush1.msra.mxu0 %v408
    %7811 = vmatprep.subr.mxu0 0.0
    %7812 = vmatpush1.msra.mxu0 %v411
    %7813 = vmatprep.subr.mxu0 0.0
    %7814 = vmatpush1.msra.mxu0 %v414
    %7815 = vmatprep.subr.mxu0 0.0
    %7816 = vmatpush1.msra.mxu0 %v417
    %7817 = vmatprep.subr.mxu0 0.0
    %7818 = vmatpush1.msra.mxu0 %v420
    %7819 = vmatprep.subr.mxu0 0.0
    %7820 = vmatpush1.msra.mxu0 0.0
    %7821 = vmatprep.subr.mxu0 0.0
    %7822 = vmatpush1.msra.mxu0 0.0
    %7823 = vmatprep.subr.mxu0 0.0
    %7824 = vmatpush1.msra.mxu0 0.0
    %7825 = vmatprep.subr.mxu0 0.0
    %7826 = vmatpush1.msra.mxu0 0.0
    %7827 = vmatprep.subr.mxu0 0.0
    %7828 = vmatpush1.msra.mxu0 0.0
    %7829 = vmatprep.subr.mxu0 0.0
    %7830 = vmatpush1.msra.mxu0 0.0
    %7831 = vmatprep.subr.mxu0 0.0
    %7832 = vmatpush1.msra.mxu0 0.0
    %7833 = vmatprep.subr.mxu0 0.0
    %7834 = vmatpush1.msra.mxu0 0.0
    %7835 = vmatprep.subr.mxu0 0.0
    %7836 = vmatpush1.msra.mxu0 0.0
    %7837 = vmatprep.subr.mxu0 0.0
    %7838 = vmatpush1.msra.mxu0 0.0
    %7839 = vmatprep.subr.mxu0 0.0
    %7840 = vmatpush1.msra.mxu0 0.0
    %7841 = vmatprep.subr.mxu0 0.0
    %7842 = vmatpush1.msra.mxu0 0.0
    %7843 = vmatprep.subr.mxu0 0.0
    %7844 = vmatpush1.msra.mxu0 0.0
    %7845 = vmatprep.subr.mxu0 0.0
    %7846 = vmatpush1.msra.mxu0 0.0
    %7847 = vmatprep.subr.mxu0 0.0
    %7848 = vmatpush1.msra.mxu0 0.0
    %7849 = vmatprep.subr.mxu0 0.0
    %7850 = vmatpush1.msra.mxu0 0.0
    %7851 = vmatprep.mubr.f32.mxu0 0.0
    %7852 = vmatmul.mubr.f32.gmra.mrb[0].mxu0 %v7230
    %v7853 = vpop.f32.mrb[0].mxu0
    %v7854 = vadd.f32 %v3830, %v7853
    %v7855 = vpop.f32.mrb[0].mxu0
    %7856 = vdwg.mxu0
    %v7857 = vadd.f32 %v7642, %v7783
    %v7858 = vxor.u32 %v7857, 2147483648
    %v7859 = vmul.f32 %v7858, 1.442695
    %v7860 = vpow.pop %v7859
    %v7861 = vadd.f32 %v7860, 1.0
    %v7862 = vrcp.pop %v7861
    %v7863 = vmul.f32 1.0, %v7862
    %v7864 = vadd.f32 %v7644, %v7785
    %v7865 = vxor.u32 %v7864, 2147483648
    %v7866 = vmul.f32 %v7865, 1.442695
    %v7867 = vpow.pop %v7866
    %v7868 = vadd.f32 %v7867, 1.0
    %v7869 = vrcp.pop %v7868
    %v7870 = vmul.f32 1.0, %v7869
    %v7871 = vmul.f32 %v7863, %v7854
    %v7872 = vadd.f32 %v7713, %v7871
    %v7873 = vtanh.pop %v7872
    %v7874 = vsub.f32 1.0, %v7870
    %v7875 = vmul.f32 %v7874, %v7873
    %v7876 = vmul.f32 %v7870, %v7230
    %v7877 = vadd.f32 %v7875, %v7876
    %7878 = vst [vmem:[#allocation3 + $0xc] sm:$0x3] %v7877
    %7879 = vmatprep.subr.mxu0 0.0
    %7880 = vmatpush1.msra.mxu0 %v440
    %7881 = vmatprep.subr.mxu0 0.0
    %7882 = vmatpush1.msra.mxu0 %v441
    %7883 = vmatprep.subr.mxu0 0.0
    %7884 = vmatpush1.msra.mxu0 %v442
    %7885 = vmatprep.subr.mxu0 0.0
    %7886 = vmatpush1.msra.mxu0 %v443
    %7887 = vmatprep.subr.mxu0 0.0
    %7888 = vmatpush1.msra.mxu0 %v444
    %7889 = vmatprep.subr.mxu0 0.0
    %7890 = vmatpush1.msra.mxu0 %v445
    %7891 = vmatprep.subr.mxu0 0.0
    %7892 = vmatpush1.msra.mxu0 %v446
    %7893 = vmatprep.subr.mxu0 0.0
    %7894 = vmatpush1.msra.mxu0 %v447
    %7895 = vmatprep.subr.mxu0 0.0
    %7896 = vmatpush1.msra.mxu0 %v448
    %7897 = vmatprep.subr.mxu0 0.0
    %7898 = vmatpush1.msra.mxu0 %v449
    %7899 = vmatprep.subr.mxu0 0.0
    %7900 = vmatpush1.msra.mxu0 %v450
    %7901 = vmatprep.subr.mxu0 0.0
    %7902 = vmatpush1.msra.mxu0 %v451
    %7903 = vmatprep.subr.mxu0 0.0
    %7904 = vmatpush1.msra.mxu0 %v452
    %7905 = vmatprep.subr.mxu0 0.0
    %7906 = vmatpush1.msra.mxu0 %v453
    %7907 = vmatprep.subr.mxu0 0.0
    %7908 = vmatpush1.msra.mxu0 %v454
    %7909 = vmatprep.subr.mxu0 0.0
    %7910 = vmatpush1.msra.mxu0 %v455
    %7911 = vmatprep.subr.mxu0 0.0
    %7912 = vmatpush1.msra.mxu0 0.0
    %7913 = vmatprep.subr.mxu0 0.0
    %7914 = vmatpush1.msra.mxu0 0.0
    %7915 = vmatprep.subr.mxu0 0.0
    %7916 = vmatpush1.msra.mxu0 0.0
    %7917 = vmatprep.subr.mxu0 0.0
    %7918 = vmatpush1.msra.mxu0 0.0
    %7919 = vmatprep.subr.mxu0 0.0
    %7920 = vmatpush1.msra.mxu0 0.0
    %7921 = vmatprep.subr.mxu0 0.0
    %7922 = vmatpush1.msra.mxu0 0.0
    %7923 = vmatprep.subr.mxu0 0.0
    %7924 = vmatpush1.msra.mxu0 0.0
    %7925 = vmatprep.subr.mxu0 0.0
    %7926 = vmatpush1.msra.mxu0 0.0
    %7927 = vmatprep.subr.mxu0 0.0
    %7928 = vmatpush1.msra.mxu0 0.0
    %7929 = vmatprep.subr.mxu0 0.0
    %7930 = vmatpush1.msra.mxu0 0.0
    %7931 = vmatprep.subr.mxu0 0.0
    %7932 = vmatpush1.msra.mxu0 0.0
    %7933 = vmatprep.subr.mxu0 0.0
    %7934 = vmatpush1.msra.mxu0 0.0
    %7935 = vmatprep.subr.mxu0 0.0
    %7936 = vmatpush1.msra.mxu0 0.0
    %7937 = vmatprep.subr.mxu0 0.0
    %7938 = vmatpush1.msra.mxu0 0.0
    %7939 = vmatprep.subr.mxu0 0.0
    %7940 = vmatpush1.msra.mxu0 0.0
    %7941 = vmatprep.subr.mxu0 0.0
    %7942 = vmatpush1.msra.mxu0 0.0
    %7943 = vmatprep.mubr.f32.mxu0 0.0
    %7944 = vmatmul.mubr.f32.gmra.mrb[0].mxu0 %v7877
    %v7945 = vpop.f32.mrb[0].mxu0
    %v7946 = vadd.f32 %v3312, %v7945
    %v7947 = vpop.f32.mrb[0].mxu0
    %7948 = vdwg.mxu0
    %v7951 = vunpack.c.l.s4 1966171168
    %v7952 = vunpack.c.0.s8 %v7951
    %v7953 = vlaneseq
    %v7954 = vshrl.u32 %v7953, 7
    %v7955 = vsub.s32 %v7952, %v7954
    %v7956 = vrot.slane %v7946, %v7955
    %v7957 = vcombine.high %v7956, %v7956
    %v7959 = vunpack.c.l.s4 1966171168
    %v7960 = vunpack.c.0.s8 %v7959
    %v7961 = vlaneseq
    %v7962 = vshrl.u32 %v7961, 7
    %v7963 = vsub.s32 %v7960, %v7962
    %v7964 = vrot.slane %v7956, %v7963
    %v7966 = vunpack.c.l.s4 1966171168
    %v7967 = vunpack.c.0.s8 %v7966
    %v7968 = vlaneseq
    %v7969 = vshrl.u32 %v7968, 7
    %v7970 = vsub.s32 %v7967, %v7969
    %v7971 = vrot.slane %v7957, %v7970
    %v7972 = vlaneseq
    %v7973 = vshrl.u32 %v7972, 7
    %v7974 = vsub.s32 0, %v7973
    %v7975 = vrot.slane %v7964, %v7974
    %v7976 = vlaneseq
    %v7977 = vshrl.u32 %v7976, 7
    %v7978 = vsub.s32 0, %v7977
    %v7979 = vrot.slane %v7971, %v7978
    %v7982 = vmul.f32 %v3300, %v7975
    %v7983 = vmul.f32 %v3305, %v7979
    %7984 = vadd.xlane.f32.xlu0 %v7982
    %v7985 = vpop.xlane.xlu0 %7984
    %7986 = vadd.xlane.f32.xlu0 %v7983
    %v7987 = vpop.xlane.xlu0 %7986
    %v7990 = vlaneseq
    %v7991 = vshrl.u32 %v7990, 7
    %v7992 = vsub.s32 %v3426, %v7991
    %v7993 = vrot.slane %v7985, %v7992
    %v7994 = vlaneseq
    %v7995 = vshrl.u32 %v7994, 7
    %v7996 = vsub.s32 %v3426, %v7995
    %v7997 = vrot.slane %v7987, %v7996
    %v7998 = vsel %vm3435, %v7997, %v7993
    %v8000 = vsel %vm3438, %v7998, -inf
    %8001 = vmax.xlane.f32.xlu0 %v8000
    %v8002 = vpop.xlane.xlu0 %8001
    %v8004 = vlaneseq
    %v8005 = vshrl.u32 %v8004, 7
    %v8006 = vsub.s32 0, %v8005
    %v8007 = vrot.slane %v8002, %v8006
    %v8008 = vlaneseq
    %v8009 = vshrl.u32 %v8008, 7
    %v8010 = vsub.s32 1, %v8009
    %v8011 = vrot.slane %v8002, %v8010
    %v8014 = vsub.f32 %v7985, %v8007
    %v8015 = vsub.f32 %v7987, %v8011
    %v8016 = vmul.f32 %v8014, 1.442695
    %v8017 = vpow.pop %v8016
    %v8018 = vmul.f32 %v8015, 1.442695
    %v8019 = vpow.pop %v8018
    %8022 = vset.pattern.permute.xlu0 0
    %8023 = vperm.xlu0 %8022, %v8017
    %v8024 = vpop.permute.xlu0 %8023
    %8025 = vset.pattern.permute.xlu0 0
    %8026 = vperm.xlu0 %8025, %v8019
    %v8027 = vpop.permute.xlu0 %8026
    %v8028 = vlaneseq
    %v8029 = vshrl.u32 %v8028, 7
    %v8030 = vsub.s32 %v3426, %v8029
    %v8031 = vrot.slane %v8024, %v8030
    %v8032 = vlaneseq
    %v8033 = vshrl.u32 %v8032, 7
    %v8034 = vsub.s32 %v3426, %v8033
    %v8035 = vrot.slane %v8027, %v8034
    %v8036 = vsel %vm3435, %v8035, %v8031
    %v8038 = vsel %vm3438, %v8036, 0.0
    %8039 = vadd.xlane.f32.xlu0 %v8038
    %v8040 = vpop.xlane.xlu0 %8039
    %v8041 = vrcp.pop %v8040
    %v8043 = vlaneseq
    %v8044 = vshrl.u32 %v8043, 7
    %v8045 = vsub.s32 0, %v8044
    %v8046 = vrot.slane %v8041, %v8045
    %v8047 = vlaneseq
    %v8048 = vshrl.u32 %v8047, 7
    %v8049 = vsub.s32 1, %v8048
    %v8050 = vrot.slane %v8041, %v8049
    %v8053 = vmul.f32 %v8017, %v8046
    %v8054 = vmul.f32 %v8019, %v8050
    %8056 = vset.pattern.permute.xlu0 0
    %8057 = vperm.xlu0 %8056, %v8053
    %v8058 = vpop.permute.xlu0 %8057
    %v8059 = vlaneseq
    %v8060 = vshrl.u32 %v8059, 7
    %v8061 = vsub.s32 %v3426, %v8060
    %v8062 = vrot.slane %v8058, %v8061
    %v8063 = vsel %vm3502, %v8062, 0
    %8065 = vmatprep.subr.mxu0 0.0
    %8066 = vmatpush1.msra.mxu0 %v3225
    %8067 = vmatprep.subr.mxu0 0.0
    %8068 = vmatpush1.msra.mxu0 0.0
    %8069 = vmatprep.subr.mxu0 0.0
    %8070 = vmatpush1.msra.mxu0 0.0
    %8071 = vmatprep.subr.mxu0 0.0
    %8072 = vmatpush1.msra.mxu0 0.0
    %8073 = vmatprep.subr.mxu0 0.0
    %8074 = vmatpush1.msra.mxu0 0.0
    %8075 = vmatprep.subr.mxu0 0.0
    %8076 = vmatpush1.msra.mxu0 0.0
    %8077 = vmatprep.subr.mxu0 0.0
    %8078 = vmatpush1.msra.mxu0 0.0
    %8079 = vmatprep.subr.mxu0 0.0
    %8080 = vmatpush1.msra.mxu0 0.0
    %8081 = vmatprep.subr.mxu0 0.0
    %8082 = vmatpush1.msra.mxu0 0.0
    %8083 = vmatprep.subr.mxu0 0.0
    %8084 = vmatpush1.msra.mxu0 0.0
    %8085 = vmatprep.subr.mxu0 0.0
    %8086 = vmatpush1.msra.mxu0 0.0
    %8087 = vmatprep.subr.mxu0 0.0
    %8088 = vmatpush1.msra.mxu0 0.0
    %8089 = vmatprep.subr.mxu0 0.0
    %8090 = vmatpush1.msra.mxu0 0.0
    %8091 = vmatprep.subr.mxu0 0.0
    %8092 = vmatpush1.msra.mxu0 0.0
    %8093 = vmatprep.subr.mxu0 0.0
    %8094 = vmatpush1.msra.mxu0 0.0
    %8095 = vmatprep.subr.mxu0 0.0
    %8096 = vmatpush1.msra.mxu0 0.0
    %8097 = vmatprep.subr.mxu0 0.0
    %8098 = vmatpush1.msra.mxu0 0.0
    %8099 = vmatprep.subr.mxu0 0.0
    %8100 = vmatpush1.msra.mxu0 0.0
    %8101 = vmatprep.subr.mxu0 0.0
    %8102 = vmatpush1.msra.mxu0 0.0
    %8103 = vmatprep.subr.mxu0 0.0
    %8104 = vmatpush1.msra.mxu0 0.0
    %8105 = vmatprep.subr.mxu0 0.0
    %8106 = vmatpush1.msra.mxu0 0.0
    %8107 = vmatprep.subr.mxu0 0.0
    %8108 = vmatpush1.msra.mxu0 0.0
    %8109 = vmatprep.subr.mxu0 0.0
    %8110 = vmatpush1.msra.mxu0 0.0
    %8111 = vmatprep.subr.mxu0 0.0
    %8112 = vmatpush1.msra.mxu0 0.0
    %8113 = vmatprep.subr.mxu0 0.0
    %8114 = vmatpush1.msra.mxu0 0.0
    %8115 = vmatprep.subr.mxu0 0.0
    %8116 = vmatpush1.msra.mxu0 0.0
    %8117 = vmatprep.subr.mxu0 0.0
    %8118 = vmatpush1.msra.mxu0 0.0
    %8119 = vmatprep.subr.mxu0 0.0
    %8120 = vmatpush1.msra.mxu0 0.0
    %8121 = vmatprep.subr.mxu0 0.0
    %8122 = vmatpush1.msra.mxu0 0.0
    %8123 = vmatprep.subr.mxu0 0.0
    %8124 = vmatpush1.msra.mxu0 0.0
    %8125 = vmatprep.subr.mxu0 0.0
    %8126 = vmatpush1.msra.mxu0 0.0
    %8127 = vmatprep.subr.mxu0 0.0
    %8128 = vmatpush1.msra.mxu0 0.0
    %8129 = vmatprep.mubr.f32.mxu0 0.0
    %8130 = vmatmul.mubr.f32.gmra.mrb[0].mxu0 %v8063
    %v8131 = vpop.f32.mrb[0].mxu0
    %v8132 = vadd.f32 0.0, %v8131
    %v8133 = vpop.f32.mrb[0].mxu0
    %8134 = vdwg.mxu0
    %8136 = vset.pattern.permute.xlu0 0
    %8137 = vperm.xlu0 %8136, %v8054
    %v8138 = vpop.permute.xlu0 %8137
    %v8139 = vlaneseq
    %v8140 = vshrl.u32 %v8139, 7
    %v8141 = vsub.s32 %v3426, %v8140
    %v8142 = vrot.slane %v8138, %v8141
    %v8143 = vsel %vm3502, %v8142, 0
    %8145 = vmatprep.subr.mxu0 0.0
    %8146 = vmatpush1.msra.mxu0 %v3226
    %8147 = vmatprep.subr.mxu0 0.0
    %8148 = vmatpush1.msra.mxu0 0.0
    %8149 = vmatprep.subr.mxu0 0.0
    %8150 = vmatpush1.msra.mxu0 0.0
    %8151 = vmatprep.subr.mxu0 0.0
    %8152 = vmatpush1.msra.mxu0 0.0
    %8153 = vmatprep.subr.mxu0 0.0
    %8154 = vmatpush1.msra.mxu0 0.0
    %8155 = vmatprep.subr.mxu0 0.0
    %8156 = vmatpush1.msra.mxu0 0.0
    %8157 = vmatprep.subr.mxu0 0.0
    %8158 = vmatpush1.msra.mxu0 0.0
    %8159 = vmatprep.subr.mxu0 0.0
    %8160 = vmatpush1.msra.mxu0 0.0
    %8161 = vmatprep.subr.mxu0 0.0
    %8162 = vmatpush1.msra.mxu0 0.0
    %8163 = vmatprep.subr.mxu0 0.0
    %8164 = vmatpush1.msra.mxu0 0.0
    %8165 = vmatprep.subr.mxu0 0.0
    %8166 = vmatpush1.msra.mxu0 0.0
    %8167 = vmatprep.subr.mxu0 0.0
    %8168 = vmatpush1.msra.mxu0 0.0
    %8169 = vmatprep.subr.mxu0 0.0
    %8170 = vmatpush1.msra.mxu0 0.0
    %8171 = vmatprep.subr.mxu0 0.0
    %8172 = vmatpush1.msra.mxu0 0.0
    %8173 = vmatprep.subr.mxu0 0.0
    %8174 = vmatpush1.msra.mxu0 0.0
    %8175 = vmatprep.subr.mxu0 0.0
    %8176 = vmatpush1.msra.mxu0 0.0
    %8177 = vmatprep.subr.mxu0 0.0
    %8178 = vmatpush1.msra.mxu0 0.0
    %8179 = vmatprep.subr.mxu0 0.0
    %8180 = vmatpush1.msra.mxu0 0.0
    %8181 = vmatprep.subr.mxu0 0.0
    %8182 = vmatpush1.msra.mxu0 0.0
    %8183 = vmatprep.subr.mxu0 0.0
    %8184 = vmatpush1.msra.mxu0 0.0
    %8185 = vmatprep.subr.mxu0 0.0
    %8186 = vmatpush1.msra.mxu0 0.0
    %8187 = vmatprep.subr.mxu0 0.0
    %8188 = vmatpush1.msra.mxu0 0.0
    %8189 = vmatprep.subr.mxu0 0.0
    %8190 = vmatpush1.msra.mxu0 0.0
    %8191 = vmatprep.subr.mxu0 0.0
    %8192 = vmatpush1.msra.mxu0 0.0
    %8193 = vmatprep.subr.mxu0 0.0
    %8194 = vmatpush1.msra.mxu0 0.0
    %8195 = vmatprep.subr.mxu0 0.0
    %8196 = vmatpush1.msra.mxu0 0.0
    %8197 = vmatprep.subr.mxu0 0.0
    %8198 = vmatpush1.msra.mxu0 0.0
    %8199 = vmatprep.subr.mxu0 0.0
    %8200 = vmatpush1.msra.mxu0 0.0
    %8201 = vmatprep.subr.mxu0 0.0
    %8202 = vmatpush1.msra.mxu0 0.0
    %8203 = vmatprep.subr.mxu0 0.0
    %8204 = vmatpush1.msra.mxu0 0.0
    %8205 = vmatprep.subr.mxu0 0.0
    %8206 = vmatpush1.msra.mxu0 0.0
    %8207 = vmatprep.subr.mxu0 0.0
    %8208 = vmatpush1.msra.mxu0 0.0
    %8209 = vmatprep.mubr.f32.mxu0 0.0
    %8210 = vmatmul.mubr.f32.gmra.mrb[0].mxu0 %v8143
    %v8211 = vpop.f32.mrb[0].mxu0
    %v8212 = vadd.f32 0.0, %v8211
    %v8213 = vpop.f32.mrb[0].mxu0
    %8214 = vdwg.mxu0
    %s8215 = scalar_lea.vmem [#allocation7], 14
    %v8216 = vld [vmem:[%s8215] sm:$0x3]
    %v8219 = vrot.slane %v8212, 7
    %v8220 = vsel %vm3435, %v8219, %v8132
    %8222 = vmatprep.subr.mxu0 %v278
    %8223 = vmatpush1.msra.mxu0 %v277
    %8224 = vmatprep.subr.mxu0 %v281
    %8225 = vmatpush1.msra.mxu0 %v280
    %8226 = vmatprep.subr.mxu0 %v284
    %8227 = vmatpush1.msra.mxu0 %v283
    %8228 = vmatprep.subr.mxu0 %v287
    %8229 = vmatpush1.msra.mxu0 %v286
    %8230 = vmatprep.subr.mxu0 %v290
    %8231 = vmatpush1.msra.mxu0 %v289
    %8232 = vmatprep.subr.mxu0 %v293
    %8233 = vmatpush1.msra.mxu0 %v292
    %8234 = vmatprep.subr.mxu0 %v296
    %8235 = vmatpush1.msra.mxu0 %v295
    %8236 = vmatprep.subr.mxu0 %v299
    %8237 = vmatpush1.msra.mxu0 %v298
    %8238 = vmatprep.subr.mxu0 %v302
    %8239 = vmatpush1.msra.mxu0 %v301
    %8240 = vmatprep.subr.mxu0 %v305
    %8241 = vmatpush1.msra.mxu0 %v304
    %8242 = vmatprep.subr.mxu0 %v308
    %8243 = vmatpush1.msra.mxu0 %v307
    %8244 = vmatprep.subr.mxu0 %v311
    %8245 = vmatpush1.msra.mxu0 %v310
    %8246 = vmatprep.subr.mxu0 %v314
    %8247 = vmatpush1.msra.mxu0 %v313
    %8248 = vmatprep.subr.mxu0 %v317
    %8249 = vmatpush1.msra.mxu0 %v316
    %8250 = vmatprep.subr.mxu0 %v320
    %8251 = vmatpush1.msra.mxu0 %v319
    %8252 = vmatprep.subr.mxu0 %v323
    %8253 = vmatpush1.msra.mxu0 %v322
    %8254 = vmatprep.subr.mxu0 %v326
    %8255 = vmatpush1.msra.mxu0 %v325
    %8256 = vmatprep.subr.mxu0 %v329
    %8257 = vmatpush1.msra.mxu0 %v328
    %8258 = vmatprep.subr.mxu0 %v332
    %8259 = vmatpush1.msra.mxu0 %v331
    %8260 = vmatprep.subr.mxu0 %v335
    %8261 = vmatpush1.msra.mxu0 %v334
    %8262 = vmatprep.subr.mxu0 %v338
    %8263 = vmatpush1.msra.mxu0 %v337
    %8264 = vmatprep.subr.mxu0 %v341
    %8265 = vmatpush1.msra.mxu0 %v340
    %8266 = vmatprep.subr.mxu0 %v344
    %8267 = vmatpush1.msra.mxu0 %v343
    %8268 = vmatprep.subr.mxu0 %v347
    %8269 = vmatpush1.msra.mxu0 %v346
    %8270 = vmatprep.subr.mxu0 %v350
    %8271 = vmatpush1.msra.mxu0 %v349
    %8272 = vmatprep.subr.mxu0 %v353
    %8273 = vmatpush1.msra.mxu0 %v352
    %8274 = vmatprep.subr.mxu0 %v356
    %8275 = vmatpush1.msra.mxu0 %v355
    %8276 = vmatprep.subr.mxu0 %v359
    %8277 = vmatpush1.msra.mxu0 %v358
    %8278 = vmatprep.subr.mxu0 %v362
    %8279 = vmatpush1.msra.mxu0 %v361
    %8280 = vmatprep.subr.mxu0 %v365
    %8281 = vmatpush1.msra.mxu0 %v364
    %8282 = vmatprep.subr.mxu0 %v368
    %8283 = vmatpush1.msra.mxu0 %v367
    %8284 = vmatprep.subr.mxu0 %v371
    %8285 = vmatpush1.msra.mxu0 %v370
    %8286 = vmatprep.mubr.f32.mxu0 %v8220
    %8287 = vmatmul.mubr.f32.gmra.mrb[0].mxu0 %v8216
    %v8288 = vpop.f32.mrb[0].mxu0
    %v8289 = vadd.f32 %v3665, %v8288
    %v8290 = vpop.f32.mrb[0].mxu0
    %v8291 = vadd.f32 %v3669, %v8290
    %8292 = vdwg.mxu0
    %8293 = vmatprep.subr.mxu0 0.0
    %8294 = vmatpush1.msra.mxu0 %v279
    %8295 = vmatprep.subr.mxu0 0.0
    %8296 = vmatpush1.msra.mxu0 %v282
    %8297 = vmatprep.subr.mxu0 0.0
    %8298 = vmatpush1.msra.mxu0 %v285
    %8299 = vmatprep.subr.mxu0 0.0
    %8300 = vmatpush1.msra.mxu0 %v288
    %8301 = vmatprep.subr.mxu0 0.0
    %8302 = vmatpush1.msra.mxu0 %v291
    %8303 = vmatprep.subr.mxu0 0.0
    %8304 = vmatpush1.msra.mxu0 %v294
    %8305 = vmatprep.subr.mxu0 0.0
    %8306 = vmatpush1.msra.mxu0 %v297
    %8307 = vmatprep.subr.mxu0 0.0
    %8308 = vmatpush1.msra.mxu0 %v300
    %8309 = vmatprep.subr.mxu0 0.0
    %8310 = vmatpush1.msra.mxu0 %v303
    %8311 = vmatprep.subr.mxu0 0.0
    %8312 = vmatpush1.msra.mxu0 %v306
    %8313 = vmatprep.subr.mxu0 0.0
    %8314 = vmatpush1.msra.mxu0 %v309
    %8315 = vmatprep.subr.mxu0 0.0
    %8316 = vmatpush1.msra.mxu0 %v312
    %8317 = vmatprep.subr.mxu0 0.0
    %8318 = vmatpush1.msra.mxu0 %v315
    %8319 = vmatprep.subr.mxu0 0.0
    %8320 = vmatpush1.msra.mxu0 %v318
    %8321 = vmatprep.subr.mxu0 0.0
    %8322 = vmatpush1.msra.mxu0 %v321
    %8323 = vmatprep.subr.mxu0 0.0
    %8324 = vmatpush1.msra.mxu0 %v324
    %8325 = vmatprep.subr.mxu0 0.0
    %8326 = vmatpush1.msra.mxu0 %v327
    %8327 = vmatprep.subr.mxu0 0.0
    %8328 = vmatpush1.msra.mxu0 %v330
    %8329 = vmatprep.subr.mxu0 0.0
    %8330 = vmatpush1.msra.mxu0 %v333
    %8331 = vmatprep.subr.mxu0 0.0
    %8332 = vmatpush1.msra.mxu0 %v336
    %8333 = vmatprep.subr.mxu0 0.0
    %8334 = vmatpush1.msra.mxu0 %v339
    %8335 = vmatprep.subr.mxu0 0.0
    %8336 = vmatpush1.msra.mxu0 %v342
    %8337 = vmatprep.subr.mxu0 0.0
    %8338 = vmatpush1.msra.mxu0 %v345
    %8339 = vmatprep.subr.mxu0 0.0
    %8340 = vmatpush1.msra.mxu0 %v348
    %8341 = vmatprep.subr.mxu0 0.0
    %8342 = vmatpush1.msra.mxu0 %v351
    %8343 = vmatprep.subr.mxu0 0.0
    %8344 = vmatpush1.msra.mxu0 %v354
    %8345 = vmatprep.subr.mxu0 0.0
    %8346 = vmatpush1.msra.mxu0 %v357
    %8347 = vmatprep.subr.mxu0 0.0
    %8348 = vmatpush1.msra.mxu0 %v360
    %8349 = vmatprep.subr.mxu0 0.0
    %8350 = vmatpush1.msra.mxu0 %v363
    %8351 = vmatprep.subr.mxu0 0.0
    %8352 = vmatpush1.msra.mxu0 %v366
    %8353 = vmatprep.subr.mxu0 0.0
    %8354 = vmatpush1.msra.mxu0 %v369
    %8355 = vmatprep.subr.mxu0 0.0
    %8356 = vmatpush1.msra.mxu0 %v372
    %8357 = vmatprep.mubr.f32.mxu0 %v8220
    %8358 = vmatmul.mubr.f32.gmra.mrb[0].mxu0 %v8216
    %v8359 = vpop.f32.mrb[0].mxu0
    %v8360 = vadd.f32 %v3673, %v8359
    %v8361 = vpop.f32.mrb[0].mxu0
    %8362 = vdwg.mxu0
    %8363 = vmatprep.subr.mxu0 %v374
    %8364 = vmatpush1.msra.mxu0 %v373
    %8365 = vmatprep.subr.mxu0 %v377
    %8366 = vmatpush1.msra.mxu0 %v376
    %8367 = vmatprep.subr.mxu0 %v380
    %8368 = vmatpush1.msra.mxu0 %v379
    %8369 = vmatprep.subr.mxu0 %v383
    %8370 = vmatpush1.msra.mxu0 %v382
    %8371 = vmatprep.subr.mxu0 %v386
    %8372 = vmatpush1.msra.mxu0 %v385
    %8373 = vmatprep.subr.mxu0 %v389
    %8374 = vmatpush1.msra.mxu0 %v388
    %8375 = vmatprep.subr.mxu0 %v392
    %8376 = vmatpush1.msra.mxu0 %v391
    %8377 = vmatprep.subr.mxu0 %v395
    %8378 = vmatpush1.msra.mxu0 %v394
    %8379 = vmatprep.subr.mxu0 %v398
    %8380 = vmatpush1.msra.mxu0 %v397
    %8381 = vmatprep.subr.mxu0 %v401
    %8382 = vmatpush1.msra.mxu0 %v400
    %8383 = vmatprep.subr.mxu0 %v404
    %8384 = vmatpush1.msra.mxu0 %v403
    %8385 = vmatprep.subr.mxu0 %v407
    %8386 = vmatpush1.msra.mxu0 %v406
    %8387 = vmatprep.subr.mxu0 %v410
    %8388 = vmatpush1.msra.mxu0 %v409
    %8389 = vmatprep.subr.mxu0 %v413
    %8390 = vmatpush1.msra.mxu0 %v412
    %8391 = vmatprep.subr.mxu0 %v416
    %8392 = vmatpush1.msra.mxu0 %v415
    %8393 = vmatprep.subr.mxu0 %v419
    %8394 = vmatpush1.msra.mxu0 %v418
    %8395 = vmatprep.subr.mxu0 0.0
    %8396 = vmatpush1.msra.mxu0 0.0
    %8397 = vmatprep.subr.mxu0 0.0
    %8398 = vmatpush1.msra.mxu0 0.0
    %8399 = vmatprep.subr.mxu0 0.0
    %8400 = vmatpush1.msra.mxu0 0.0
    %8401 = vmatprep.subr.mxu0 0.0
    %8402 = vmatpush1.msra.mxu0 0.0
    %8403 = vmatprep.subr.mxu0 0.0
    %8404 = vmatpush1.msra.mxu0 0.0
    %8405 = vmatprep.subr.mxu0 0.0
    %8406 = vmatpush1.msra.mxu0 0.0
    %8407 = vmatprep.subr.mxu0 0.0
    %8408 = vmatpush1.msra.mxu0 0.0
    %8409 = vmatprep.subr.mxu0 0.0
    %8410 = vmatpush1.msra.mxu0 0.0
    %8411 = vmatprep.subr.mxu0 0.0
    %8412 = vmatpush1.msra.mxu0 0.0
    %8413 = vmatprep.subr.mxu0 0.0
    %8414 = vmatpush1.msra.mxu0 0.0
    %8415 = vmatprep.subr.mxu0 0.0
    %8416 = vmatpush1.msra.mxu0 0.0
    %8417 = vmatprep.subr.mxu0 0.0
    %8418 = vmatpush1.msra.mxu0 0.0
    %8419 = vmatprep.subr.mxu0 0.0
    %8420 = vmatpush1.msra.mxu0 0.0
    %8421 = vmatprep.subr.mxu0 0.0
    %8422 = vmatpush1.msra.mxu0 0.0
    %8423 = vmatprep.subr.mxu0 0.0
    %8424 = vmatpush1.msra.mxu0 0.0
    %8425 = vmatprep.subr.mxu0 0.0
    %8426 = vmatpush1.msra.mxu0 0.0
    %8427 = vmatprep.mubr.f32.mxu0 0.0
    %8428 = vmatmul.mubr.f32.gmra.mrb[0].mxu0 %v7877
    %v8429 = vpop.f32.mrb[0].mxu0
    %v8430 = vadd.f32 %v3822, %v8429
    %v8431 = vpop.f32.mrb[0].mxu0
    %v8432 = vadd.f32 %v3826, %v8431
    %8433 = vdwg.mxu0
    %8434 = vmatprep.subr.mxu0 0.0
    %8435 = vmatpush1.msra.mxu0 %v375
    %8436 = vmatprep.subr.mxu0 0.0
    %8437 = vmatpush1.msra.mxu0 %v378
    %8438 = vmatprep.subr.mxu0 0.0
    %8439 = vmatpush1.msra.mxu0 %v381
    %8440 = vmatprep.subr.mxu0 0.0
    %8441 = vmatpush1.msra.mxu0 %v384
    %8442 = vmatprep.subr.mxu0 0.0
    %8443 = vmatpush1.msra.mxu0 %v387
    %8444 = vmatprep.subr.mxu0 0.0
    %8445 = vmatpush1.msra.mxu0 %v390
    %8446 = vmatprep.subr.mxu0 0.0
    %8447 = vmatpush1.msra.mxu0 %v393
    %8448 = vmatprep.subr.mxu0 0.0
    %8449 = vmatpush1.msra.mxu0 %v396
    %8450 = vmatprep.subr.mxu0 0.0
    %8451 = vmatpush1.msra.mxu0 %v399
    %8452 = vmatprep.subr.mxu0 0.0
    %8453 = vmatpush1.msra.mxu0 %v402
    %8454 = vmatprep.subr.mxu0 0.0
    %8455 = vmatpush1.msra.mxu0 %v405
    %8456 = vmatprep.subr.mxu0 0.0
    %8457 = vmatpush1.msra.mxu0 %v408
    %8458 = vmatprep.subr.mxu0 0.0
    %8459 = vmatpush1.msra.mxu0 %v411
    %8460 = vmatprep.subr.mxu0 0.0
    %8461 = vmatpush1.msra.mxu0 %v414
    %8462 = vmatprep.subr.mxu0 0.0
    %8463 = vmatpush1.msra.mxu0 %v417
    %8464 = vmatprep.subr.mxu0 0.0
    %8465 = vmatpush1.msra.mxu0 %v420
    %8466 = vmatprep.subr.mxu0 0.0
    %8467 = vmatpush1.msra.mxu0 0.0
    %8468 = vmatprep.subr.mxu0 0.0
    %8469 = vmatpush1.msra.mxu0 0.0
    %8470 = vmatprep.subr.mxu0 0.0
    %8471 = vmatpush1.msra.mxu0 0.0
    %8472 = vmatprep.subr.mxu0 0.0
    %8473 = vmatpush1.msra.mxu0 0.0
    %8474 = vmatprep.subr.mxu0 0.0
    %8475 = vmatpush1.msra.mxu0 0.0
    %8476 = vmatprep.subr.mxu0 0.0
    %8477 = vmatpush1.msra.mxu0 0.0
    %8478 = vmatprep.subr.mxu0 0.0
    %8479 = vmatpush1.msra.mxu0 0.0
    %8480 = vmatprep.subr.mxu0 0.0
    %8481 = vmatpush1.msra.mxu0 0.0
    %8482 = vmatprep.subr.mxu0 0.0
    %8483 = vmatpush1.msra.mxu0 0.0
    %8484 = vmatprep.subr.mxu0 0.0
    %8485 = vmatpush1.msra.mxu0 0.0
    %8486 = vmatprep.subr.mxu0 0.0
    %8487 = vmatpush1.msra.mxu0 0.0
    %8488 = vmatprep.subr.mxu0 0.0
    %8489 = vmatpush1.msra.mxu0 0.0
    %8490 = vmatprep.subr.mxu0 0.0
    %8491 = vmatpush1.msra.mxu0 0.0
    %8492 = vmatprep.subr.mxu0 0.0
    %8493 = vmatpush1.msra.mxu0 0.0
    %8494 = vmatprep.subr.mxu0 0.0
    %8495 = vmatpush1.msra.mxu0 0.0
    %8496 = vmatprep.subr.mxu0 0.0
    %8497 = vmatpush1.msra.mxu0 0.0
    %8498 = vmatprep.mubr.f32.mxu0 0.0
    %8499 = vmatmul.mubr.f32.gmra.mrb[0].mxu0 %v7877
    %v8500 = vpop.f32.mrb[0].mxu0
    %v8501 = vadd.f32 %v3830, %v8500
    %v8502 = vpop.f32.mrb[0].mxu0
    %8503 = vdwg.mxu0
    %v8504 = vadd.f32 %v8289, %v8430
    %v8505 = vxor.u32 %v8504, 2147483648
    %v8506 = vmul.f32 %v8505, 1.442695
    %v8507 = vpow.pop %v8506
    %v8508 = vadd.f32 %v8507, 1.0
    %v8509 = vrcp.pop %v8508
    %v8510 = vmul.f32 1.0, %v8509
    %v8511 = vadd.f32 %v8291, %v8432
    %v8512 = vxor.u32 %v8511, 2147483648
    %v8513 = vmul.f32 %v8512, 1.442695
    %v8514 = vpow.pop %v8513
    %v8515 = vadd.f32 %v8514, 1.0
    %v8516 = vrcp.pop %v8515
    %v8517 = vmul.f32 1.0, %v8516
    %v8518 = vmul.f32 %v8510, %v8501
    %v8519 = vadd.f32 %v8360, %v8518
    %v8520 = vtanh.pop %v8519
    %v8521 = vsub.f32 1.0, %v8517
    %v8522 = vmul.f32 %v8521, %v8520
    %v8523 = vmul.f32 %v8517, %v7877
    %v8524 = vadd.f32 %v8522, %v8523
    %8525 = vst [vmem:[#allocation3 + $0xe] sm:$0x3] %v8524
    %v8526 = vld [vmem:[#allocation3] sm:$0xff]
    %v8527 = vld [vmem:[#allocation3 + $0x8] sm:$0xff]
    %v8529 = vlaneseq
    %v8530 = vshrl.u32 %v8529, 7
    %v8531 = vsub.s32 0, %v8530
    %v8532 = vrot.slane %v473, %v8531
    %8534 = vmatprep.subr.mxu0 0.0
    %8535 = vmatpush1.msra.mxu0 %v457
    %8536 = vmatprep.subr.mxu0 0.0
    %8537 = vmatpush1.msra.mxu0 %v458
    %8538 = vmatprep.subr.mxu0 0.0
    %8539 = vmatpush1.msra.mxu0 %v459
    %8540 = vmatprep.subr.mxu0 0.0
    %8541 = vmatpush1.msra.mxu0 %v460
    %8542 = vmatprep.subr.mxu0 0.0
    %8543 = vmatpush1.msra.mxu0 %v461
    %8544 = vmatprep.subr.mxu0 0.0
    %8545 = vmatpush1.msra.mxu0 %v462
    %8546 = vmatprep.subr.mxu0 0.0
    %8547 = vmatpush1.msra.mxu0 %v463
    %8548 = vmatprep.subr.mxu0 0.0
    %8549 = vmatpush1.msra.mxu0 %v464
    %8550 = vmatprep.subr.mxu0 0.0
    %8551 = vmatpush1.msra.mxu0 %v465
    %8552 = vmatprep.subr.mxu0 0.0
    %8553 = vmatpush1.msra.mxu0 %v466
    %8554 = vmatprep.subr.mxu0 0.0
    %8555 = vmatpush1.msra.mxu0 %v467
    %8556 = vmatprep.subr.mxu0 0.0
    %8557 = vmatpush1.msra.mxu0 %v468
    %8558 = vmatprep.subr.mxu0 0.0
    %8559 = vmatpush1.msra.mxu0 %v469
    %8560 = vmatprep.subr.mxu0 0.0
    %8561 = vmatpush1.msra.mxu0 %v470
    %8562 = vmatprep.subr.mxu0 0.0
    %8563 = vmatpush1.msra.mxu0 %v471
    %8564 = vmatprep.subr.mxu0 0.0
    %8565 = vmatpush1.msra.mxu0 %v472
    %8566 = vmatprep.subr.mxu0 0.0
    %8567 = vmatpush1.msra.mxu0 0.0
    %8568 = vmatprep.subr.mxu0 0.0
    %8569 = vmatpush1.msra.mxu0 0.0
    %8570 = vmatprep.subr.mxu0 0.0
    %8571 = vmatpush1.msra.mxu0 0.0
    %8572 = vmatprep.subr.mxu0 0.0
    %8573 = vmatpush1.msra.mxu0 0.0
    %8574 = vmatprep.subr.mxu0 0.0
    %8575 = vmatpush1.msra.mxu0 0.0
    %8576 = vmatprep.subr.mxu0 0.0
    %8577 = vmatpush1.msra.mxu0 0.0
    %8578 = vmatprep.subr.mxu0 0.0
    %8579 = vmatpush1.msra.mxu0 0.0
    %8580 = vmatprep.subr.mxu0 0.0
    %8581 = vmatpush1.msra.mxu0 0.0
    %8582 = vmatprep.subr.mxu0 0.0
    %8583 = vmatpush1.msra.mxu0 0.0
    %8584 = vmatprep.subr.mxu0 0.0
    %8585 = vmatpush1.msra.mxu0 0.0
    %8586 = vmatprep.subr.mxu0 0.0
    %8587 = vmatpush1.msra.mxu0 0.0
    %8588 = vmatprep.subr.mxu0 0.0
    %8589 = vmatpush1.msra.mxu0 0.0
    %8590 = vmatprep.subr.mxu0 0.0
    %8591 = vmatpush1.msra.mxu0 0.0
    %8592 = vmatprep.subr.mxu0 0.0
    %8593 = vmatpush1.msra.mxu0 0.0
    %8594 = vmatprep.subr.mxu0 0.0
    %8595 = vmatpush1.msra.mxu0 0.0
    %8596 = vmatprep.subr.mxu0 0.0
    %8597 = vmatpush1.msra.mxu0 0.0
    %8598 = vmatprep.mubr.f32.mxu0 0.0
    %8599 = vmatmul.mubr.f32.gmra.mrb[0].mxu0 %v8526
    %v8600 = vpop.f32.mrb[0].mxu0
    %v8601 = vadd.f32 %v8532, %v8600
    %v8602 = vpop.f32.mrb[0].mxu0
    %8603 = vmatprep.mubr.f32.mxu0 0.0
    %8604 = vmatmul.mubr.f32.gmra.mrb[0].mxu0 %v8527
    %v8605 = vpop.f32.mrb[0].mxu0
    %v8606 = vadd.f32 %v8532, %v8605
    %v8607 = vpop.f32.mrb[0].mxu0
    %8608 = vdwg.mxu0
    %8609 = vst [vmem:[#allocation19] sm:$0xff] %v8601
    %8610 = vst [vmem:[#allocation19 + $0x8] sm:$0xff] %v8606
    // Predicated region
    $region106: #{tpu_custom_call.1} parent=1 // pred_check
      _
    $region107: #{tpu_custom_call.1} parent=1 // pred_check_branch
      %8612 = sbr.rel (0) target = $region109
    $region108: #{tpu_custom_call.1} parent=1 // pred_region
      %s8614 = ssub.s32 256, 256
      %8615 = vsyncadd [#allocation6], %s8614
      %s8616 = sshll.u32 [#allocation19], 4
      %s8617 = int_to_ptr.vmem [resolvable:$true] %s8616
      %8622 = dma.vmem_to_hbm [thread:$0]  %s8617, 256, %s17, [#allocation6], 128, 128, 8
    $region109: #{tpu_custom_call.1} parent=1 // pred_fallthru
      _
    // Predicated region
    $region110: #{tpu_custom_call.1} parent=1 // pred_check
      _
    $region111: #{tpu_custom_call.1} parent=1 // pred_check_branch
      %8624 = sbr.rel (0) target = $region113
    $region112: #{tpu_custom_call.1} parent=1 // pred_region
      %8625 = dma.done [#allocation6], 256
    $region113: #{tpu_custom_call.1} parent=1 // pred_fallthru
      _
    %8626 = vsyncpa [#allocation5], 1
    %8627 = vsyncpa [#allocation8], 1
    %8628 = vsyncpa [#allocation11], 1
    %8629 = vsyncpa [#allocation14], 1
    %8630 = vsyncpa [#allocation17], 1
    %8631 = vsyncpa [#allocation6], 1

</llo_original>
